<compile_context>
chip_gen: v7x
topology: tpu7x:2x2x1
jax: 0.10.0
libtpu: 0.0.40
codegen_flags: <defaults>
</compile_context>

<pallas_src>
import numpy as np
import jax
import jax.numpy as jnp
from jax import lax
from jax.experimental import pallas as pl
from jax.experimental.pallas import tpu as pltpu

SQRT_HALF = 1.0 / np.sqrt(2.0)
LN_EPS = 1e-5  # torch nn.LayerNorm default


def _gelu(v):
    # Exact GELU (torch nn.GELU default, erf-based), computed in f32.
    return 0.5 * v * (1.0 + lax.erf(v * SQRT_HALF))


def fusion_encoder_kernel(
    x2_ref, x3_ref,                   # (TM, D2) f32, (TM, D3) f32
    w_in2_ref, w_in3_ref, b_in_ref,   # (D2, H) bf16, (D3, H) bf16, (1, H) f32
    w_h_ref, b_h_ref,                 # (H, H) bf16, (1, H) f32
    w_out_ref, b_out_ref,             # (H, Dout) bf16, (1, Dout) f32
    gamma_ref, beta_ref,              # (1, H) f32, (1, H) f32
    o_ref,                            # (TM, Dout) bf16
):
    gamma = gamma_ref[...]
    beta = beta_ref[...]

    def layernorm(v):                 # per-row LN over the lane axis, f32
        mu = jnp.mean(v, axis=-1, keepdims=True)
        d = v - mu
        var = jnp.mean(d * d, axis=-1, keepdims=True)
        return d * (lax.rsqrt(var + LN_EPS) * gamma) + beta

    # Cast activation tiles to bf16 on the VPU (hidden under the MXU);
    # accumulation / bias / GELU / LN stay in f32.
    x2 = x2_ref[...].astype(jnp.bfloat16)
    x3 = x3_ref[...].astype(jnp.bfloat16)

    # x = LN(GELU(input_fc(cat(x2, x3))))  -- concat folded into a split matmul.
    h = b_in_ref[...] + jnp.dot(x2, w_in2_ref[...],
                                preferred_element_type=jnp.float32)
    h = h + jnp.dot(x3, w_in3_ref[...], preferred_element_type=jnp.float32)
    h = layernorm(_gelu(h))

    # Hidden layer (num_layers - 1 == 1): LN(GELU(linear(x))).
    h = b_h_ref[...] + jnp.dot(h.astype(jnp.bfloat16), w_h_ref[...],
                               preferred_element_type=jnp.float32)
    h = layernorm(_gelu(h))

    # output_fc
    out = b_out_ref[...] + jnp.dot(h.astype(jnp.bfloat16), w_out_ref[...],
                                   preferred_element_type=jnp.float32)
    o_ref[...] = out.astype(o_ref.dtype)
    # TODO(synk): training-mode dropout (RNG) not implemented; eval path only.


def _round_up(x, m):
    return ((x + m - 1) // m) * m


def _cast(x, dt):
    return x if x.dtype == dt else x.astype(dt)


def prepare_params(params_f32):
    """One-time cast of parameters to kernel dtypes (bf16 weights, f32 rest)."""
    bf, f32 = jnp.bfloat16, jnp.float32
    return {
        "w_in2": _cast(params_f32["w_in2"], bf),
        "w_in3": _cast(params_f32["w_in3"], bf),
        "b_in": _cast(params_f32["b_in"], f32),
        "w_h": _cast(params_f32["w_h"], bf),
        "b_h": _cast(params_f32["b_h"], f32),
        "w_out": _cast(params_f32["w_out"], bf),
        "b_out": _cast(params_f32["b_out"], f32),
        "gamma": _cast(params_f32["gamma"], f32),
        "beta": _cast(params_f32["beta"], f32),
    }


def fusion_encoder(x_2d, x_3d, params, *, tm=512, out_dtype=jnp.bfloat16):
    """x_2d: (B, N, D2) f32, x_3d: (B, N, D3) f32  ->  (B, N, Dout) out_dtype."""
    B, N, D2 = x_2d.shape
    D3 = x_3d.shape[-1]
    M = B * N
    H = params["w_h"].shape[0]
    Dout = params["w_out"].shape[1]

    # Token-tile size: multiple of 256 (MXU height on v6e/v7x; also multiple
    # of 128 for v5e and of 16 for bf16 sublane packing).  Clamp so that the
    # "parallel" M axis has >= 2 grid steps whenever M allows, so both v7x
    # TensorCores get work.
    TM = max(256, min(int(tm), _round_up(M, 256)))
    if _round_up(M, 256) >= 512:
        TM = min(TM, _round_up(pl.cdiv(M, 2), 256))
    grid = (pl.cdiv(M, TM),)

    x2 = _cast(x_2d.reshape(M, D2), jnp.float32)
    x3 = _cast(x_3d.reshape(M, D3), jnp.float32)

    def row_spec(d):                  # tiled over M, auto double-buffered
        return pl.BlockSpec((TM, d), lambda i: (i, 0))

    def const_spec(shape, single_buffer):
        if single_buffer:             # constant block -> one resident buffer
            return pl.BlockSpec(shape, lambda i: (0, 0),
                                pipeline_mode=pl.Buffered(1))
        return pl.BlockSpec(shape, lambda i: (0, 0))

    # VMEM budget: resident weights (+pipeline copies) + activation/output
    # tiles + f32 intermediates, with 2x headroom; capped at 75% of physical
    # VMEM (~96 MiB on v5e/v6e's 128 MiB, ~48 MiB on v7x's 64 MiB).
    bf16_b, f32_b = 2, 4
    weight_bytes = (D2 * H + D3 * H + H * H + H * Dout) * bf16_b \
        + (4 * H + Dout) * f32_b
    io_bytes = 2 * TM * (D2 + D3) * f32_b \
        + 2 * TM * Dout * jnp.dtype(out_dtype).itemsize
    scratch_bytes = 6 * TM * H * f32_b
    est = 2 * weight_bytes + io_bytes + scratch_bytes
    try:
        phys_vmem = pltpu.get_tpu_info().vmem_capacity_bytes
    except Exception:
        phys_vmem = 64 << 20          # conservative (v7x per-core)
    vmem_limit = int(min(max(2 * est, 32 << 20), 0.75 * phys_vmem))

    flops = 2 * M * ((D2 + D3) * H + H * H + H * Dout)
    bytes_accessed = (M * (D2 + D3) * f32_b + weight_bytes
                      + M * Dout * jnp.dtype(out_dtype).itemsize)
    cost = pl.CostEstimate(flops=flops, transcendentals=2 * M * H,
                           bytes_accessed=bytes_accessed)

    def build(single_buffer_consts):
        in_specs = [
            row_spec(D2), row_spec(D3),
            const_spec((D2, H), single_buffer_consts),
            const_spec((D3, H), single_buffer_consts),
            const_spec((1, H), single_buffer_consts),
            const_spec((H, H), single_buffer_consts),
            const_spec((1, H), single_buffer_consts),
            const_spec((H, Dout), single_buffer_consts),
            const_spec((1, Dout), single_buffer_consts),
            const_spec((1, H), single_buffer_consts),
            const_spec((1, H), single_buffer_consts),
        ]
        return pl.pallas_call(
            fusion_encoder_kernel,
            out_shape=jax.ShapeDtypeStruct((M, Dout), out_dtype),
            grid=grid,
            in_specs=in_specs,
            out_specs=row_spec(Dout),
            compiler_params=pltpu.CompilerParams(
                dimension_semantics=("parallel",),
                vmem_limit_bytes=vmem_limit,
            ),
            cost_estimate=cost,
        )

    args = (
        x2, x3,
        _cast(params["w_in2"], jnp.bfloat16), _cast(params["w_in3"], jnp.bfloat16),
        _cast(params["b_in"], jnp.float32),
        _cast(params["w_h"], jnp.bfloat16), _cast(params["b_h"], jnp.float32),
        _cast(params["w_out"], jnp.bfloat16), _cast(params["b_out"], jnp.float32),
        _cast(params["gamma"], jnp.float32), _cast(params["beta"], jnp.float32),
    )
    try:
        out = build(True)(*args)
    except Exception:
        # pipeline_mode=pl.Buffered(1) unsupported on this jax version/chip:
        # fall back to default double-buffered constant blocks.
        out = build(False)(*args)
    return out.reshape(B, N, Dout)


# ----------------------------- init & references -----------------------------

def init_params(key, d2, d3, hidden, out):
    """Deterministic torch-style init: W,b ~ U(-1/sqrt(fan_in), 1/sqrt(fan_in))."""
    ks = jax.random.split(key, 3)

    def lin(k, fan_in, fan_out):
        kw, kb = jax.random.split(k)
        bound = 1.0 / np.sqrt(fan_in)
        w = jax.random.uniform(kw, (fan_in, fan_out), jnp.float32, -bound, bound)
        b = jax.random.uniform(kb, (1, fan_out), jnp.float32, -bound, bound)
        return w, b

    w_in, b_in = lin(ks[0], d2 + d3, hidden)
    w_h, b_h = lin(ks[1], hidden, hidden)
    w_out, b_out = lin(ks[2], hidden, out)
    return {
        "w_in2": w_in[:d2], "w_in3": w_in[d2:], "b_in": b_in,
        "w_h": w_h, "b_h": b_h,
        "w_out": w_out, "b_out": b_out,
        "gamma": jnp.ones((1, hidden), jnp.float32),   # nn.LayerNorm defaults
        "beta": jnp.zeros((1, hidden), jnp.float32),
    }


def _ln_ref(v, gamma, beta):
    mu = jnp.mean(v, -1, keepdims=True)
    var = jnp.mean((v - mu) ** 2, -1, keepdims=True)
    return (v - mu) / jnp.sqrt(var + LN_EPS) * gamma + beta


def reference_f32(x_2d, x_3d, params):
    """Pure-JAX f32 reference of the torch forward (eval mode)."""
    hp = lax.Precision.HIGHEST
    x = jnp.concatenate([x_2d, x_3d], axis=-1)
    w_in = jnp.concatenate([params["w_in2"], params["w_in3"]], axis=0)
    h = _gelu(jnp.dot(x, w_in, precision=hp) + params["b_in"])
    h = _ln_ref(h, params["gamma"], params["beta"])
    h = _gelu(jnp.dot(h, params["w_h"], precision=hp) + params["b_h"])
    h = _ln_ref(h, params["gamma"], params["beta"])
    return jnp.dot(h, params["w_out"], precision=hp) + params["b_out"]


def reference_bf16(x_2d, x_3d, params):
    """Reference mirroring the kernel's bf16-matmul / f32-accumulate math."""
    bf = jnp.bfloat16

    def mm(a, w):
        return jnp.dot(a.astype(bf), w.astype(bf),
                       preferred_element_type=jnp.float32)

    f32 = jnp.float32
    h = (mm(x_2d, params["w_in2"]) + mm(x_3d, params["w_in3"])
         + params["b_in"].astype(f32))
    h = _ln_ref(_gelu(h), params["gamma"].astype(f32), params["beta"].astype(f32))
    h = mm(h, params["w_h"]) + params["b_h"].astype(f32)
    h = _ln_ref(_gelu(h), params["gamma"].astype(f32), params["beta"].astype(f32))
    return mm(h, params["w_out"]) + params["b_out"].astype(f32)


if __name__ == "__main__":
    # Small shapes consistent with the module (768/1152/960 dims scaled down).
    # H and Dout are multiples of 256 to keep the v6e/v7x 256-wide MXU full;
    # M = 512 exercises a 2-step "parallel" grid.
    B, N = 2, 256
    D2, D3, HIDDEN, OUT = 128, 256, 256, 256

    key = jax.random.PRNGKey(0)
    k_x2, k_x3, k_p = jax.random.split(key, 3)
    x_2d = jax.random.normal(k_x2, (B, N, D2), jnp.float32)
    x_3d = jax.random.normal(k_x3, (B, N, D3), jnp.float32)
    params_f32 = init_params(k_p, D2, D3, HIDDEN, OUT)
    params = prepare_params(params_f32)        # bf16 weights cast exactly once

    out = fusion_encoder(x_2d, x_3d, params)
    out = jax.block_until_ready(out)
    assert out.shape == (B, N, OUT), out.shape
    assert out.dtype == jnp.bfloat16, out.dtype

    out_np = np.asarray(out, dtype=np.float32)

    # Tight check vs a reference mirroring the kernel's bf16/f32 math
    # (output bf16 rounding ~0.2% rel is the dominant remaining difference).
    ref_bf16 = np.asarray(reference_bf16(x_2d, x_3d, params), dtype=np.float32)
    assert np.allclose(out_np, ref_bf16, rtol=2e-2, atol=2e-2), \
        float(np.max(np.abs(out_np - ref_bf16)))

    # Looser check vs the pure-f32 torch-semantics reference (bf16 weights /
    # activations change numerics; accumulation, GELU, LayerNorm remain f32).
    ref_f32 = np.asarray(reference_f32(x_2d, x_3d, params_f32), dtype=np.float32)
    assert float(np.max(np.abs(out_np - ref_f32))) < 0.1, \
        float(np.max(np.abs(out_np - ref_f32)))

    print("KERNEL_OK")
</pallas_src>

<mosaic_0001>
module attributes {stable_mosaic.version = 11 : i64} {
  func.func @fusion_encoder_kernel(%arg0: i32, %arg1: memref<256x128xf32, #tpu.memory_space<vmem>>, %arg2: memref<256x256xf32, #tpu.memory_space<vmem>>, %arg3: memref<128x256xbf16, #tpu.memory_space<vmem>>, %arg4: memref<256x256xbf16, #tpu.memory_space<vmem>>, %arg5: memref<1x256xf32, #tpu.memory_space<vmem>>, %arg6: memref<256x256xbf16, #tpu.memory_space<vmem>>, %arg7: memref<1x256xf32, #tpu.memory_space<vmem>>, %arg8: memref<256x256xbf16, #tpu.memory_space<vmem>>, %arg9: memref<1x256xf32, #tpu.memory_space<vmem>>, %arg10: memref<1x256xf32, #tpu.memory_space<vmem>>, %arg11: memref<1x256xf32, #tpu.memory_space<vmem>>, %arg12: memref<256x256xbf16, #tpu.memory_space<vmem>>) attributes {dimension_semantics = [#tpu.dimension_semantics<parallel>], iteration_bounds = array<i64: 2>, scalar_prefetch = 0 : i64, scratch_operands = 0 : i64, tpu.core_type = #tpu.core_type<tc>, window_params = [{transform_indices = @transform_0, window_bounds = array<i64: 256, 128>}, {transform_indices = @transform_1, window_bounds = array<i64: 256, 256>}, {pipeline_mode = #tpu.pipeline_mode<synchronous>, transform_indices = @transform_2, window_bounds = array<i64: 128, 256>}, {pipeline_mode = #tpu.pipeline_mode<synchronous>, transform_indices = @transform_3, window_bounds = array<i64: 256, 256>}, {pipeline_mode = #tpu.pipeline_mode<synchronous>, transform_indices = @transform_4, window_bounds = array<i64: 1, 256>}, {pipeline_mode = #tpu.pipeline_mode<synchronous>, transform_indices = @transform_5, window_bounds = array<i64: 256, 256>}, {pipeline_mode = #tpu.pipeline_mode<synchronous>, transform_indices = @transform_6, window_bounds = array<i64: 1, 256>}, {pipeline_mode = #tpu.pipeline_mode<synchronous>, transform_indices = @transform_7, window_bounds = array<i64: 256, 256>}, {pipeline_mode = #tpu.pipeline_mode<synchronous>, transform_indices = @transform_8, window_bounds = array<i64: 1, 256>}, {pipeline_mode = #tpu.pipeline_mode<synchronous>, transform_indices = @transform_9, window_bounds = array<i64: 1, 256>}, {pipeline_mode = #tpu.pipeline_mode<synchronous>, transform_indices = @transform_10, window_bounds = array<i64: 1, 256>}, {transform_indices = @transform_11, window_bounds = array<i64: 256, 256>}]} {
    %c0 = arith.constant 0 : index
    %c0_0 = arith.constant 0 : index
    %0 = vector.load %arg10[%c0, %c0_0] : memref<1x256xf32, #tpu.memory_space<vmem>>, vector<1x256xf32>
    %c0_1 = arith.constant 0 : index
    %c0_2 = arith.constant 0 : index
    %1 = vector.load %arg11[%c0_1, %c0_2] : memref<1x256xf32, #tpu.memory_space<vmem>>, vector<1x256xf32>
    %c0_3 = arith.constant 0 : index
    %c0_4 = arith.constant 0 : index
    %2 = vector.load %arg1[%c0_3, %c0_4] : memref<256x128xf32, #tpu.memory_space<vmem>>, vector<256x128xf32>
    %3 = arith.truncf %2 : vector<256x128xf32> to vector<256x128xbf16>
    %c0_5 = arith.constant 0 : index
    %c0_6 = arith.constant 0 : index
    %4 = vector.load %arg2[%c0_5, %c0_6] : memref<256x256xf32, #tpu.memory_space<vmem>>, vector<256x256xf32>
    %5 = arith.truncf %4 : vector<256x256xf32> to vector<256x256xbf16>
    %c0_7 = arith.constant 0 : index
    %c0_8 = arith.constant 0 : index
    %6 = vector.load %arg5[%c0_7, %c0_8] : memref<1x256xf32, #tpu.memory_space<vmem>>, vector<1x256xf32>
    %c0_9 = arith.constant 0 : index
    %c0_10 = arith.constant 0 : index
    %7 = vector.load %arg3[%c0_9, %c0_10] : memref<128x256xbf16, #tpu.memory_space<vmem>>, vector<128x256xbf16>
    %cst = arith.constant dense<0.000000e+00> : vector<256x256xf32>
    %8 = tpu.matmul %3, %7, %cst {dimension_numbers = #tpu.dot_dimension_numbers<[1], [0], [0], [1], [0, 0, 1, 1], [], []>} : vector<256x128xbf16>, vector<128x256xbf16>, vector<256x256xf32> -> vector<256x256xf32>
    %9 = vector.broadcast %6 : vector<1x256xf32> to vector<256x256xf32>
    %10 = arith.addf %9, %8 : vector<256x256xf32>
    %c0_11 = arith.constant 0 : index
    %c0_12 = arith.constant 0 : index
    %11 = vector.load %arg4[%c0_11, %c0_12] : memref<256x256xbf16, #tpu.memory_space<vmem>>, vector<256x256xbf16>
    %cst_13 = arith.constant dense<0.000000e+00> : vector<256x256xf32>
    %12 = tpu.matmul %5, %11, %cst_13 {dimension_numbers = #tpu.dot_dimension_numbers<[1], [0], [0], [1], [0, 0, 1, 1], [], []>} : vector<256x256xbf16>, vector<256x256xbf16>, vector<256x256xf32> -> vector<256x256xf32>
    %13 = arith.addf %10, %12 : vector<256x256xf32>
    %cst_14 = arith.constant 5.000000e-01 : f32
    %14 = vector.broadcast %cst_14 : f32 to vector<256x256xf32>
    %15 = arith.mulf %14, %13 : vector<256x256xf32>
    %cst_15 = arith.constant 0.707106769 : f32
    %16 = vector.broadcast %cst_15 : f32 to vector<256x256xf32>
    %17 = arith.mulf %13, %16 : vector<256x256xf32>
    %18 = math.erf %17 : vector<256x256xf32>
    %cst_16 = arith.constant 1.000000e+00 : f32
    %19 = vector.broadcast %cst_16 : f32 to vector<256x256xf32>
    %20 = arith.addf %19, %18 : vector<256x256xf32>
    %21 = arith.mulf %15, %20 : vector<256x256xf32>
    %cst_17 = arith.constant dense<0.000000e+00> : vector<256xf32>
    %22 = vector.multi_reduction <add>, %21, %cst_17 [1] : vector<256x256xf32> to vector<256xf32>
    %23 = vector.shape_cast %22 : vector<256xf32> to vector<256x1xf32>
    %cst_18 = arith.constant 2.560000e+02 : f32
    %24 = vector.broadcast %cst_18 : f32 to vector<256x1xf32>
    %25 = arith.divf %23, %24 : vector<256x1xf32>
    %26 = vector.broadcast %25 : vector<256x1xf32> to vector<256x256xf32>
    %27 = arith.subf %21, %26 : vector<256x256xf32>
    %28 = arith.mulf %27, %27 : vector<256x256xf32>
    %cst_19 = arith.constant dense<0.000000e+00> : vector<256xf32>
    %29 = vector.multi_reduction <add>, %28, %cst_19 [1] : vector<256x256xf32> to vector<256xf32>
    %30 = vector.shape_cast %29 : vector<256xf32> to vector<256x1xf32>
    %cst_20 = arith.constant 2.560000e+02 : f32
    %31 = vector.broadcast %cst_20 : f32 to vector<256x1xf32>
    %32 = arith.divf %30, %31 : vector<256x1xf32>
    %cst_21 = arith.constant 9.99999974E-6 : f32
    %33 = vector.broadcast %cst_21 : f32 to vector<256x1xf32>
    %34 = arith.addf %32, %33 : vector<256x1xf32>
    %35 = math.rsqrt %34 : vector<256x1xf32>
    %36 = vector.broadcast %35 : vector<256x1xf32> to vector<256x256xf32>
    %37 = vector.broadcast %0 : vector<1x256xf32> to vector<256x256xf32>
    %38 = arith.mulf %36, %37 : vector<256x256xf32>
    %39 = arith.mulf %27, %38 : vector<256x256xf32>
    %40 = vector.broadcast %1 : vector<1x256xf32> to vector<256x256xf32>
    %41 = arith.addf %39, %40 : vector<256x256xf32>
    %c0_22 = arith.constant 0 : index
    %c0_23 = arith.constant 0 : index
    %42 = vector.load %arg7[%c0_22, %c0_23] : memref<1x256xf32, #tpu.memory_space<vmem>>, vector<1x256xf32>
    %43 = arith.truncf %41 : vector<256x256xf32> to vector<256x256xbf16>
    %c0_24 = arith.constant 0 : index
    %c0_25 = arith.constant 0 : index
    %44 = vector.load %arg6[%c0_24, %c0_25] : memref<256x256xbf16, #tpu.memory_space<vmem>>, vector<256x256xbf16>
    %cst_26 = arith.constant dense<0.000000e+00> : vector<256x256xf32>
    %45 = tpu.matmul %43, %44, %cst_26 {dimension_numbers = #tpu.dot_dimension_numbers<[1], [0], [0], [1], [0, 0, 1, 1], [], []>} : vector<256x256xbf16>, vector<256x256xbf16>, vector<256x256xf32> -> vector<256x256xf32>
    %46 = vector.broadcast %42 : vector<1x256xf32> to vector<256x256xf32>
    %47 = arith.addf %46, %45 : vector<256x256xf32>
    %cst_27 = arith.constant 5.000000e-01 : f32
    %48 = vector.broadcast %cst_27 : f32 to vector<256x256xf32>
    %49 = arith.mulf %48, %47 : vector<256x256xf32>
    %cst_28 = arith.constant 0.707106769 : f32
    %50 = vector.broadcast %cst_28 : f32 to vector<256x256xf32>
    %51 = arith.mulf %47, %50 : vector<256x256xf32>
    %52 = math.erf %51 : vector<256x256xf32>
    %cst_29 = arith.constant 1.000000e+00 : f32
    %53 = vector.broadcast %cst_29 : f32 to vector<256x256xf32>
    %54 = arith.addf %53, %52 : vector<256x256xf32>
    %55 = arith.mulf %49, %54 : vector<256x256xf32>
    %cst_30 = arith.constant dense<0.000000e+00> : vector<256xf32>
    %56 = vector.multi_reduction <add>, %55, %cst_30 [1] : vector<256x256xf32> to vector<256xf32>
    %57 = vector.shape_cast %56 : vector<256xf32> to vector<256x1xf32>
    %cst_31 = arith.constant 2.560000e+02 : f32
    %58 = vector.broadcast %cst_31 : f32 to vector<256x1xf32>
    %59 = arith.divf %57, %58 : vector<256x1xf32>
    %60 = vector.broadcast %59 : vector<256x1xf32> to vector<256x256xf32>
    %61 = arith.subf %55, %60 : vector<256x256xf32>
    %62 = arith.mulf %61, %61 : vector<256x256xf32>
    %cst_32 = arith.constant dense<0.000000e+00> : vector<256xf32>
    %63 = vector.multi_reduction <add>, %62, %cst_32 [1] : vector<256x256xf32> to vector<256xf32>
    %64 = vector.shape_cast %63 : vector<256xf32> to vector<256x1xf32>
    %cst_33 = arith.constant 2.560000e+02 : f32
    %65 = vector.broadcast %cst_33 : f32 to vector<256x1xf32>
    %66 = arith.divf %64, %65 : vector<256x1xf32>
    %cst_34 = arith.constant 9.99999974E-6 : f32
    %67 = vector.broadcast %cst_34 : f32 to vector<256x1xf32>
    %68 = arith.addf %66, %67 : vector<256x1xf32>
    %69 = math.rsqrt %68 : vector<256x1xf32>
    %70 = vector.broadcast %69 : vector<256x1xf32> to vector<256x256xf32>
    %71 = vector.broadcast %0 : vector<1x256xf32> to vector<256x256xf32>
    %72 = arith.mulf %70, %71 : vector<256x256xf32>
    %73 = arith.mulf %61, %72 : vector<256x256xf32>
    %74 = vector.broadcast %1 : vector<1x256xf32> to vector<256x256xf32>
    %75 = arith.addf %73, %74 : vector<256x256xf32>
    %c0_35 = arith.constant 0 : index
    %c0_36 = arith.constant 0 : index
    %76 = vector.load %arg9[%c0_35, %c0_36] : memref<1x256xf32, #tpu.memory_space<vmem>>, vector<1x256xf32>
    %77 = arith.truncf %75 : vector<256x256xf32> to vector<256x256xbf16>
    %c0_37 = arith.constant 0 : index
    %c0_38 = arith.constant 0 : index
    %78 = vector.load %arg8[%c0_37, %c0_38] : memref<256x256xbf16, #tpu.memory_space<vmem>>, vector<256x256xbf16>
    %cst_39 = arith.constant dense<0.000000e+00> : vector<256x256xf32>
    %79 = tpu.matmul %77, %78, %cst_39 {dimension_numbers = #tpu.dot_dimension_numbers<[1], [0], [0], [1], [0, 0, 1, 1], [], []>} : vector<256x256xbf16>, vector<256x256xbf16>, vector<256x256xf32> -> vector<256x256xf32>
    %80 = vector.broadcast %76 : vector<1x256xf32> to vector<256x256xf32>
    %81 = arith.addf %80, %79 : vector<256x256xf32>
    %82 = arith.truncf %81 : vector<256x256xf32> to vector<256x256xbf16>
    %c0_40 = arith.constant 0 : index
    %c0_41 = arith.constant 0 : index
    %83 = vector.load %arg12[%c0_40, %c0_41] : memref<256x256xbf16, #tpu.memory_space<vmem>>, vector<256x256xbf16>
    tpu.vector_store %arg12[%c0_40, %c0_41], %82 {strides = array<i32>} : memref<256x256xbf16, #tpu.memory_space<vmem>>, vector<256x256xbf16>,
    return
  }
  func.func @transform_0(%arg0: i32) -> (i32, i32) {
    %c0_i32 = arith.constant 0 : i32
    %c0_i32_0 = arith.constant 0 : i32
    return %arg0, %c0_i32 : i32, i32
  }
  func.func @transform_1(%arg0: i32) -> (i32, i32) {
    %c0_i32 = arith.constant 0 : i32
    %c0_i32_0 = arith.constant 0 : i32
    return %arg0, %c0_i32 : i32, i32
  }
  func.func @transform_2(%arg0: i32) -> (i32, i32) {
    %c0_i32 = arith.constant 0 : i32
    %c0_i32_0 = arith.constant 0 : i32
    %c0_i32_1 = arith.constant 0 : i32
    return %c0_i32, %c0_i32_0 : i32, i32
  }
  func.func @transform_3(%arg0: i32) -> (i32, i32) {
    %c0_i32 = arith.constant 0 : i32
    %c0_i32_0 = arith.constant 0 : i32
    %c0_i32_1 = arith.constant 0 : i32
    return %c0_i32, %c0_i32_0 : i32, i32
  }
  func.func @transform_4(%arg0: i32) -> (i32, i32) {
    %c0_i32 = arith.constant 0 : i32
    %c0_i32_0 = arith.constant 0 : i32
    %c0_i32_1 = arith.constant 0 : i32
    return %c0_i32, %c0_i32_0 : i32, i32
  }
  func.func @transform_5(%arg0: i32) -> (i32, i32) {
    %c0_i32 = arith.constant 0 : i32
    %c0_i32_0 = arith.constant 0 : i32
    %c0_i32_1 = arith.constant 0 : i32
    return %c0_i32, %c0_i32_0 : i32, i32
  }
  func.func @transform_6(%arg0: i32) -> (i32, i32) {
    %c0_i32 = arith.constant 0 : i32
    %c0_i32_0 = arith.constant 0 : i32
    %c0_i32_1 = arith.constant 0 : i32
    return %c0_i32, %c0_i32_0 : i32, i32
  }
  func.func @transform_7(%arg0: i32) -> (i32, i32) {
    %c0_i32 = arith.constant 0 : i32
    %c0_i32_0 = arith.constant 0 : i32
    %c0_i32_1 = arith.constant 0 : i32
    return %c0_i32, %c0_i32_0 : i32, i32
  }
  func.func @transform_8(%arg0: i32) -> (i32, i32) {
    %c0_i32 = arith.constant 0 : i32
    %c0_i32_0 = arith.constant 0 : i32
    %c0_i32_1 = arith.constant 0 : i32
    return %c0_i32, %c0_i32_0 : i32, i32
  }
  func.func @transform_9(%arg0: i32) -> (i32, i32) {
    %c0_i32 = arith.constant 0 : i32
    %c0_i32_0 = arith.constant 0 : i32
    %c0_i32_1 = arith.constant 0 : i32
    return %c0_i32, %c0_i32_0 : i32, i32
  }
  func.func @transform_10(%arg0: i32) -> (i32, i32) {
    %c0_i32 = arith.constant 0 : i32
    %c0_i32_0 = arith.constant 0 : i32
    %c0_i32_1 = arith.constant 0 : i32
    return %c0_i32, %c0_i32_0 : i32, i32
  }
  func.func @transform_11(%arg0: i32) -> (i32, i32) {
    %c0_i32 = arith.constant 0 : i32
    %c0_i32_0 = arith.constant 0 : i32
    return %arg0, %c0_i32 : i32, i32
  }
}

module attributes {stable_mosaic.version = 11 : i64} {
  func.func @fusion_encoder_kernel(%arg0: i32, %arg1: memref<256x128xf32, #tpu.memory_space<vmem>>, %arg2: memref<256x256xf32, #tpu.memory_space<vmem>>, %arg3: memref<128x256xbf16, #tpu.memory_space<vmem>>, %arg4: memref<256x256xbf16, #tpu.memory_space<vmem>>, %arg5: memref<1x256xf32, #tpu.memory_space<vmem>>, %arg6: memref<256x256xbf16, #tpu.memory_space<vmem>>, %arg7: memref<1x256xf32, #tpu.memory_space<vmem>>, %arg8: memref<256x256xbf16, #tpu.memory_space<vmem>>, %arg9: memref<1x256xf32, #tpu.memory_space<vmem>>, %arg10: memref<1x256xf32, #tpu.memory_space<vmem>>, %arg11: memref<1x256xf32, #tpu.memory_space<vmem>>, %arg12: memref<256x256xbf16, #tpu.memory_space<vmem>>) attributes {dimension_semantics = [#tpu.dimension_semantics<parallel>], iteration_bounds = array<i64: 2>, scalar_prefetch = 0 : i64, scratch_operands = 0 : i64, tpu.core_type = #tpu.core_type<tc>, window_params = [{transform_indices = @transform_0, window_bounds = array<i64: 256, 128>}, {transform_indices = @transform_1, window_bounds = array<i64: 256, 256>}, {pipeline_mode = #tpu.pipeline_mode<synchronous>, transform_indices = @transform_2, window_bounds = array<i64: 128, 256>}, {pipeline_mode = #tpu.pipeline_mode<synchronous>, transform_indices = @transform_3, window_bounds = array<i64: 256, 256>}, {pipeline_mode = #tpu.pipeline_mode<synchronous>, transform_indices = @transform_4, window_bounds = array<i64: 1, 256>}, {pipeline_mode = #tpu.pipeline_mode<synchronous>, transform_indices = @transform_5, window_bounds = array<i64: 256, 256>}, {pipeline_mode = #tpu.pipeline_mode<synchronous>, transform_indices = @transform_6, window_bounds = array<i64: 1, 256>}, {pipeline_mode = #tpu.pipeline_mode<synchronous>, transform_indices = @transform_7, window_bounds = array<i64: 256, 256>}, {pipeline_mode = #tpu.pipeline_mode<synchronous>, transform_indices = @transform_8, window_bounds = array<i64: 1, 256>}, {pipeline_mode = #tpu.pipeline_mode<synchronous>, transform_indices = @transform_9, window_bounds = array<i64: 1, 256>}, {pipeline_mode = #tpu.pipeline_mode<synchronous>, transform_indices = @transform_10, window_bounds = array<i64: 1, 256>}, {transform_indices = @transform_11, window_bounds = array<i64: 256, 256>}]} {
    %c0 = arith.constant 0 : index
    %c0_0 = arith.constant 0 : index
    %0 = vector.load %arg10[%c0, %c0_0] : memref<1x256xf32, #tpu.memory_space<vmem>>, vector<1x256xf32>
    %c0_1 = arith.constant 0 : index
    %c0_2 = arith.constant 0 : index
    %1 = vector.load %arg11[%c0_1, %c0_2] : memref<1x256xf32, #tpu.memory_space<vmem>>, vector<1x256xf32>
    %c0_3 = arith.constant 0 : index
    %c0_4 = arith.constant 0 : index
    %2 = vector.load %arg1[%c0_3, %c0_4] : memref<256x128xf32, #tpu.memory_space<vmem>>, vector<256x128xf32>
    %3 = arith.truncf %2 : vector<256x128xf32> to vector<256x128xbf16>
    %c0_5 = arith.constant 0 : index
    %c0_6 = arith.constant 0 : index
    %4 = vector.load %arg2[%c0_5, %c0_6] : memref<256x256xf32, #tpu.memory_space<vmem>>, vector<256x256xf32>
    %5 = arith.truncf %4 : vector<256x256xf32> to vector<256x256xbf16>
    %c0_7 = arith.constant 0 : index
    %c0_8 = arith.constant 0 : index
    %6 = vector.load %arg5[%c0_7, %c0_8] : memref<1x256xf32, #tpu.memory_space<vmem>>, vector<1x256xf32>
    %c0_9 = arith.constant 0 : index
    %c0_10 = arith.constant 0 : index
    %7 = vector.load %arg3[%c0_9, %c0_10] : memref<128x256xbf16, #tpu.memory_space<vmem>>, vector<128x256xbf16>
    %cst = arith.constant dense<0.000000e+00> : vector<256x256xf32>
    %8 = tpu.matmul %3, %7, %cst {dimension_numbers = #tpu.dot_dimension_numbers<[1], [0], [0], [1], [0, 0, 1, 1], [], []>} : vector<256x128xbf16>, vector<128x256xbf16>, vector<256x256xf32> -> vector<256x256xf32>
    %9 = vector.broadcast %6 : vector<1x256xf32> to vector<256x256xf32>
    %10 = arith.addf %9, %8 : vector<256x256xf32>
    %c0_11 = arith.constant 0 : index
    %c0_12 = arith.constant 0 : index
    %11 = vector.load %arg4[%c0_11, %c0_12] : memref<256x256xbf16, #tpu.memory_space<vmem>>, vector<256x256xbf16>
    %cst_13 = arith.constant dense<0.000000e+00> : vector<256x256xf32>
    %12 = tpu.matmul %5, %11, %cst_13 {dimension_numbers = #tpu.dot_dimension_numbers<[1], [0], [0], [1], [0, 0, 1, 1], [], []>} : vector<256x256xbf16>, vector<256x256xbf16>, vector<256x256xf32> -> vector<256x256xf32>
    %13 = arith.addf %10, %12 : vector<256x256xf32>
    %cst_14 = arith.constant 5.000000e-01 : f32
    %14 = vector.broadcast %cst_14 : f32 to vector<256x256xf32>
    %15 = arith.mulf %14, %13 : vector<256x256xf32>
    %cst_15 = arith.constant 0.707106769 : f32
    %16 = vector.broadcast %cst_15 : f32 to vector<256x256xf32>
    %17 = arith.mulf %13, %16 : vector<256x256xf32>
    %18 = math.erf %17 : vector<256x256xf32>
    %cst_16 = arith.constant 1.000000e+00 : f32
    %19 = vector.broadcast %cst_16 : f32 to vector<256x256xf32>
    %20 = arith.addf %19, %18 : vector<256x256xf32>
    %21 = arith.mulf %15, %20 : vector<256x256xf32>
    %cst_17 = arith.constant dense<0.000000e+00> : vector<256xf32>
    %22 = vector.multi_reduction <add>, %21, %cst_17 [1] : vector<256x256xf32> to vector<256xf32>
    %23 = vector.shape_cast %22 : vector<256xf32> to vector<256x1xf32>
    %cst_18 = arith.constant 2.560000e+02 : f32
    %24 = vector.broadcast %cst_18 : f32 to vector<256x1xf32>
    %25 = arith.divf %23, %24 : vector<256x1xf32>
    %26 = vector.broadcast %25 : vector<256x1xf32> to vector<256x256xf32>
    %27 = arith.subf %21, %26 : vector<256x256xf32>
    %28 = arith.mulf %27, %27 : vector<256x256xf32>
    %cst_19 = arith.constant dense<0.000000e+00> : vector<256xf32>
    %29 = vector.multi_reduction <add>, %28, %cst_19 [1] : vector<256x256xf32> to vector<256xf32>
    %30 = vector.shape_cast %29 : vector<256xf32> to vector<256x1xf32>
    %cst_20 = arith.constant 2.560000e+02 : f32
    %31 = vector.broadcast %cst_20 : f32 to vector<256x1xf32>
    %32 = arith.divf %30, %31 : vector<256x1xf32>
    %cst_21 = arith.constant 9.99999974E-6 : f32
    %33 = vector.broadcast %cst_21 : f32 to vector<256x1xf32>
    %34 = arith.addf %32, %33 : vector<256x1xf32>
    %35 = math.rsqrt %34 : vector<256x1xf32>
    %36 = vector.broadcast %35 : vector<256x1xf32> to vector<256x256xf32>
    %37 = vector.broadcast %0 : vector<1x256xf32> to vector<256x256xf32>
    %38 = arith.mulf %36, %37 : vector<256x256xf32>
    %39 = arith.mulf %27, %38 : vector<256x256xf32>
    %40 = vector.broadcast %1 : vector<1x256xf32> to vector<256x256xf32>
    %41 = arith.addf %39, %40 : vector<256x256xf32>
    %c0_22 = arith.constant 0 : index
    %c0_23 = arith.constant 0 : index
    %42 = vector.load %arg7[%c0_22, %c0_23] : memref<1x256xf32, #tpu.memory_space<vmem>>, vector<1x256xf32>
    %43 = arith.truncf %41 : vector<256x256xf32> to vector<256x256xbf16>
    %c0_24 = arith.constant 0 : index
    %c0_25 = arith.constant 0 : index
    %44 = vector.load %arg6[%c0_24, %c0_25] : memref<256x256xbf16, #tpu.memory_space<vmem>>, vector<256x256xbf16>
    %cst_26 = arith.constant dense<0.000000e+00> : vector<256x256xf32>
    %45 = tpu.matmul %43, %44, %cst_26 {dimension_numbers = #tpu.dot_dimension_numbers<[1], [0], [0], [1], [0, 0, 1, 1], [], []>} : vector<256x256xbf16>, vector<256x256xbf16>, vector<256x256xf32> -> vector<256x256xf32>
    %46 = vector.broadcast %42 : vector<1x256xf32> to vector<256x256xf32>
    %47 = arith.addf %46, %45 : vector<256x256xf32>
    %cst_27 = arith.constant 5.000000e-01 : f32
    %48 = vector.broadcast %cst_27 : f32 to vector<256x256xf32>
    %49 = arith.mulf %48, %47 : vector<256x256xf32>
    %cst_28 = arith.constant 0.707106769 : f32
    %50 = vector.broadcast %cst_28 : f32 to vector<256x256xf32>
    %51 = arith.mulf %47, %50 : vector<256x256xf32>
    %52 = math.erf %51 : vector<256x256xf32>
    %cst_29 = arith.constant 1.000000e+00 : f32
    %53 = vector.broadcast %cst_29 : f32 to vector<256x256xf32>
    %54 = arith.addf %53, %52 : vector<256x256xf32>
    %55 = arith.mulf %49, %54 : vector<256x256xf32>
    %cst_30 = arith.constant dense<0.000000e+00> : vector<256xf32>
    %56 = vector.multi_reduction <add>, %55, %cst_30 [1] : vector<256x256xf32> to vector<256xf32>
    %57 = vector.shape_cast %56 : vector<256xf32> to vector<256x1xf32>
    %cst_31 = arith.constant 2.560000e+02 : f32
    %58 = vector.broadcast %cst_31 : f32 to vector<256x1xf32>
    %59 = arith.divf %57, %58 : vector<256x1xf32>
    %60 = vector.broadcast %59 : vector<256x1xf32> to vector<256x256xf32>
    %61 = arith.subf %55, %60 : vector<256x256xf32>
    %62 = arith.mulf %61, %61 : vector<256x256xf32>
    %cst_32 = arith.constant dense<0.000000e+00> : vector<256xf32>
    %63 = vector.multi_reduction <add>, %62, %cst_32 [1] : vector<256x256xf32> to vector<256xf32>
    %64 = vector.shape_cast %63 : vector<256xf32> to vector<256x1xf32>
    %cst_33 = arith.constant 2.560000e+02 : f32
    %65 = vector.broadcast %cst_33 : f32 to vector<256x1xf32>
    %66 = arith.divf %64, %65 : vector<256x1xf32>
    %cst_34 = arith.constant 9.99999974E-6 : f32
    %67 = vector.broadcast %cst_34 : f32 to vector<256x1xf32>
    %68 = arith.addf %66, %67 : vector<256x1xf32>
    %69 = math.rsqrt %68 : vector<256x1xf32>
    %70 = vector.broadcast %69 : vector<256x1xf32> to vector<256x256xf32>
    %71 = vector.broadcast %0 : vector<1x256xf32> to vector<256x256xf32>
    %72 = arith.mulf %70, %71 : vector<256x256xf32>
    %73 = arith.mulf %61, %72 : vector<256x256xf32>
    %74 = vector.broadcast %1 : vector<1x256xf32> to vector<256x256xf32>
    %75 = arith.addf %73, %74 : vector<256x256xf32>
    %c0_35 = arith.constant 0 : index
    %c0_36 = arith.constant 0 : index
    %76 = vector.load %arg9[%c0_35, %c0_36] : memref<1x256xf32, #tpu.memory_space<vmem>>, vector<1x256xf32>
    %77 = arith.truncf %75 : vector<256x256xf32> to vector<256x256xbf16>
    %c0_37 = arith.constant 0 : index
    %c0_38 = arith.constant 0 : index
    %78 = vector.load %arg8[%c0_37, %c0_38] : memref<256x256xbf16, #tpu.memory_space<vmem>>, vector<256x256xbf16>
    %cst_39 = arith.constant dense<0.000000e+00> : vector<256x256xf32>
    %79 = tpu.matmul %77, %78, %cst_39 {dimension_numbers = #tpu.dot_dimension_numbers<[1], [0], [0], [1], [0, 0, 1, 1], [], []>} : vector<256x256xbf16>, vector<256x256xbf16>, vector<256x256xf32> -> vector<256x256xf32>
    %80 = vector.broadcast %76 : vector<1x256xf32> to vector<256x256xf32>
    %81 = arith.addf %80, %79 : vector<256x256xf32>
    %82 = arith.truncf %81 : vector<256x256xf32> to vector<256x256xbf16>
    %c0_40 = arith.constant 0 : index
    %c0_41 = arith.constant 0 : index
    %83 = vector.load %arg12[%c0_40, %c0_41] : memref<256x256xbf16, #tpu.memory_space<vmem>>, vector<256x256xbf16>
    tpu.vector_store %arg12[%c0_40, %c0_41], %82 {strides = array<i32>} : memref<256x256xbf16, #tpu.memory_space<vmem>>, vector<256x256xbf16>,
    return
  }
  func.func @transform_0(%arg0: i32) -> (i32, i32) {
    %c0_i32 = arith.constant 0 : i32
    %c0_i32_0 = arith.constant 0 : i32
    return %arg0, %c0_i32 : i32, i32
  }
  func.func @transform_1(%arg0: i32) -> (i32, i32) {
    %c0_i32 = arith.constant 0 : i32
    %c0_i32_0 = arith.constant 0 : i32
    return %arg0, %c0_i32 : i32, i32
  }
  func.func @transform_2(%arg0: i32) -> (i32, i32) {
    %c0_i32 = arith.constant 0 : i32
    %c0_i32_0 = arith.constant 0 : i32
    %c0_i32_1 = arith.constant 0 : i32
    return %c0_i32, %c0_i32_0 : i32, i32
  }
  func.func @transform_3(%arg0: i32) -> (i32, i32) {
    %c0_i32 = arith.constant 0 : i32
    %c0_i32_0 = arith.constant 0 : i32
    %c0_i32_1 = arith.constant 0 : i32
    return %c0_i32, %c0_i32_0 : i32, i32
  }
  func.func @transform_4(%arg0: i32) -> (i32, i32) {
    %c0_i32 = arith.constant 0 : i32
    %c0_i32_0 = arith.constant 0 : i32
    %c0_i32_1 = arith.constant 0 : i32
    return %c0_i32, %c0_i32_0 : i32, i32
  }
  func.func @transform_5(%arg0: i32) -> (i32, i32) {
    %c0_i32 = arith.constant 0 : i32
    %c0_i32_0 = arith.constant 0 : i32
    %c0_i32_1 = arith.constant 0 : i32
    return %c0_i32, %c0_i32_0 : i32, i32
  }
  func.func @transform_6(%arg0: i32) -> (i32, i32) {
    %c0_i32 = arith.constant 0 : i32
    %c0_i32_0 = arith.constant 0 : i32
    %c0_i32_1 = arith.constant 0 : i32
    return %c0_i32, %c0_i32_0 : i32, i32
  }
  func.func @transform_7(%arg0: i32) -> (i32, i32) {
    %c0_i32 = arith.constant 0 : i32
    %c0_i32_0 = arith.constant 0 : i32
    %c0_i32_1 = arith.constant 0 : i32
    return %c0_i32, %c0_i32_0 : i32, i32
  }
  func.func @transform_8(%arg0: i32) -> (i32, i32) {
    %c0_i32 = arith.constant 0 : i32
    %c0_i32_0 = arith.constant 0 : i32
    %c0_i32_1 = arith.constant 0 : i32
    return %c0_i32, %c0_i32_0 : i32, i32
  }
  func.func @transform_9(%arg0: i32) -> (i32, i32) {
    %c0_i32 = arith.constant 0 : i32
    %c0_i32_0 = arith.constant 0 : i32
    %c0_i32_1 = arith.constant 0 : i32
    return %c0_i32, %c0_i32_0 : i32, i32
  }
  func.func @transform_10(%arg0: i32) -> (i32, i32) {
    %c0_i32 = arith.constant 0 : i32
    %c0_i32_0 = arith.constant 0 : i32
    %c0_i32_1 = arith.constant 0 : i32
    return %c0_i32, %c0_i32_0 : i32, i32
  }
  func.func @transform_11(%arg0: i32) -> (i32, i32) {
    %c0_i32 = arith.constant 0 : i32
    %c0_i32_0 = arith.constant 0 : i32
    return %arg0, %c0_i32 : i32, i32
  }
}

</mosaic_0001>

<llo_original>
// kernel: tpu_custom_call.1
$region0: #{tpu_custom_call.1}
  #allocation0 [shape = 'u32[]', space=smem, size = 0x4, offset = 0x4, fixed_abs, tag = 'smem constant byte address 0x4 - core index']
  #allocation1 [shape = 'u32[144,128]{1,0:T(1,128)}', space=vmem, size = 0x12000, scoped, tag = 'internal scratch']
  %s0 = inlined_call_operand.hbm [shape: f32[512,128], index: 0, kind: input, shape index: {}]
  %s1 = inlined_call_operand.hbm [shape: f32[512,256], index: 1, kind: input, shape index: {}]
  %s2 = inlined_call_operand.hbm [shape: bf16[128,256], index: 2, kind: input, shape index: {}]
  %s3 = inlined_call_operand.hbm [shape: bf16[256,256], index: 3, kind: input, shape index: {}]
  %s4 = inlined_call_operand.vmem [shape: f32[1,256], index: 4, kind: input, shape index: {}]
  %s5 = inlined_call_operand.hbm [shape: bf16[256,256], index: 5, kind: input, shape index: {}]
  %s6 = inlined_call_operand.vmem [shape: f32[1,256], index: 6, kind: input, shape index: {}]
  %s7 = inlined_call_operand.hbm [shape: bf16[256,256], index: 7, kind: input, shape index: {}]
  %s8 = inlined_call_operand.vmem [shape: f32[1,256], index: 8, kind: input, shape index: {}]
  %s9 = inlined_call_operand.vmem [shape: f32[1,256], index: 9, kind: input, shape index: {}]
  %s10 = inlined_call_operand.vmem [shape: f32[1,256], index: 10, kind: input, shape index: {}]
  %s11 = inlined_call_operand.hbm [shape: bf16[512,256], index: 11, kind: output, shape index: {}]
  %s12 = sld [smem:[#allocation0]]
  $region101: #{tpu_custom_call.1} parent=0
    _
  %s14 = ssub.s32 1, %s12
  %s15 = scalar_select 0, %s14, %s12
  $region1: #{tpu_custom_call.1} parent=0
    #allocation2 [shape = 'u8[262144]{0}', space=vmem, size = 0x40000, scoped, tag = 'input window, operand 0']
    #allocation3 [shape = 's32[2]{0}', space=sflag, size = 0x8, scoped, tag = 'scoped memory for tpu_custom_call.1']
    #allocation4 [shape = 's32[2]{0}', space=sflag, size = 0x8, scoped, tag = 'scoped memory for tpu_custom_call.1']
    #allocation5 [shape = 'u8[524288]{0}', space=vmem, size = 0x80000, scoped, tag = 'input window, operand 1']
    #allocation6 [shape = 's32[2]{0}', space=sflag, size = 0x8, scoped, tag = 'scoped memory for tpu_custom_call.1']
    #allocation7 [shape = 'u8[65536]{0}', space=vmem, size = 0x10000, scoped, tag = 'input window, operand 2, single buffered']
    #allocation8 [shape = 'u8[131072]{0}', space=vmem, size = 0x20000, scoped, tag = 'input window, operand 3, single buffered']
    #allocation9 [shape = 's32[1]{0}', space=sflag, size = 0x4, scoped, tag = 'scoped memory for tpu_custom_call.1']
    #allocation10 [shape = 'u8[131072]{0}', space=vmem, size = 0x20000, scoped, tag = 'input window, operand 5, single buffered']
    #allocation11 [shape = 'u8[131072]{0}', space=vmem, size = 0x20000, scoped, tag = 'input window, operand 7, single buffered']
    #allocation12 [shape = 's32[1]{0}', space=sflag, size = 0x4, scoped, tag = 'scoped memory for tpu_custom_call.1']
    #allocation13 [shape = 'u8[262144]{0}', space=vmem, size = 0x40000, scoped, tag = 'output window, operand 0']
    %16 = vsyncpa [#allocation3], 0
    %s17 = scalar_lea.sflag [#allocation3], 1
    %18 = vsyncpa %s17, 0
    %19 = vsyncpa [#allocation6], 0
    %s20 = scalar_lea.sflag [#allocation6], 1
    %21 = vsyncpa %s20, 0
    %22 = vsyncpa [#allocation9], 0
    %23 = vsyncpa [#allocation12], 0
    %24 = vsyncpa [#allocation4], 0
    %s25 = scalar_lea.sflag [#allocation4], 1
    %26 = vsyncpa %s25, 0
    loop: start=0, step=1, limit=4
    $region2: #{tpu_custom_call.1} parent=1 // loop_pre_header
      _
    $region3: #{tpu_custom_call.1} parent=1 // loop_header
      %s28 = sphi 0, %s32
      %p29 = scmp.ge.s32.totalorder %s28, 4
      %s38 = sphi 0, %s40
      %s41 = sphi 0, %s38
      %s42 = sphi 0, %s41
      %s58 = sphi 0, %s42
      %s64 = sphi 0, %s66
      %s67 = sphi 0, %s64
      %s68 = sphi 0, %s67
      %s84 = sphi 0, %s68
      %s88 = sphi 0, %s88
      %s90 = sphi 0, %s88
      %s91 = sphi 0, %s90
      %s105 = sphi 0, %s91
      %s109 = sphi 0, %s109
      %s111 = sphi 0, %s109
      %s112 = sphi 0, %s111
      %s126 = sphi 0, %s112
      %s130 = sphi 0, %s130
      %s132 = sphi 0, %s130
      %s133 = sphi 0, %s132
      %s147 = sphi 0, %s133
      %s151 = sphi 0, %s151
      %s153 = sphi 0, %s151
      %s154 = sphi 0, %s153
      %s168 = sphi 0, %s154
      %s172 = sphi 0, %s172
      %s174 = sphi 0, %s172
      %s175 = sphi 0, %s174
      %s189 = sphi 0, %s175
      %s193 = sphi 0, %s193
      %s195 = sphi 0, %s193
      %s196 = sphi 0, %s195
      %s210 = sphi 0, %s196
      %s214 = sphi 0, %s214
      %s216 = sphi 0, %s214
      %s217 = sphi 0, %s216
      %s231 = sphi 0, %s217
      %s235 = sphi 0, %s235
      %s237 = sphi 0, %s235
      %s238 = sphi 0, %s237
      %s252 = sphi 0, %s238
      %s256 = sphi 0, %s256
      %s258 = sphi 0, %s256
      %s259 = sphi 0, %s258
      %s273 = sphi 0, %s259
      %s279 = sphi 0, %s281
      %s282 = sphi 0, %s279
      %s283 = sphi 0, %s282
      %s299 = sphi 0, %s283
    $region4: #{tpu_custom_call.1} parent=1 // loop_header_branch
      %31 = sbr.rel (%p29) target = $region8
    $region5: #{tpu_custom_call.1} parent=1 // loop_body
      %s33 = ssub.s32 %s28, 1
      %s34 = ssub.s32 %s28, 2
      %s35 = sadd.s32 %s28, 1
      %s36 = ssub.s32 %s28, %s35
      %p37 = scmp.eq.s32.totalorder %s36, 0
      %s39 = sadd.s32 %s38, 1
      %s40 = scalar_select %p37, %s38, %s39
      %p43 = pneg %p37
      %p44 = scmp.eq.s32.totalorder %s28, 1
      %p45 = por %p43, %p44
      %p46 = scmp.ne.s32.totalorder %s38, %s41
      %p47 = scmp.eq.s32.totalorder %s28, 0
      %p48 = por %p46, %p47
      %p49 = scmp.ne.s32.totalorder %s38, %s41
      %p50 = scmp.eq.s32.totalorder %s33, 1
      %p51 = por %p49, %p50
      %p52 = scmp.ne.s32.totalorder %s41, %s42
      %p53 = scmp.eq.s32.totalorder %s33, 0
      %p54 = por %p52, %p53
      %p55 = scmp.ne.s32.totalorder %s41, %s42
      %p56 = scmp.eq.s32.totalorder %s34, 1
      %p57 = por %p55, %p56
      %p59 = scmp.ne.s32.totalorder %s42, %s58
      %p60 = scmp.eq.s32.totalorder %s34, 0
      %p61 = por %p59, %p60
      %s62 = ssub.s32 %s28, %s35
      %p63 = scmp.eq.s32.totalorder %s62, 0
      %s65 = sadd.s32 %s64, 1
      %s66 = scalar_select %p63, %s64, %s65
      %p69 = pneg %p63
      %p70 = scmp.eq.s32.totalorder %s28, 1
      %p71 = por %p69, %p70
      %p72 = scmp.ne.s32.totalorder %s64, %s67
      %p73 = scmp.eq.s32.totalorder %s28, 0
      %p74 = por %p72, %p73
      %p75 = scmp.ne.s32.totalorder %s64, %s67
      %p76 = scmp.eq.s32.totalorder %s33, 1
      %p77 = por %p75, %p76
      %p78 = scmp.ne.s32.totalorder %s67, %s68
      %p79 = scmp.eq.s32.totalorder %s33, 0
      %p80 = por %p78, %p79
      %p81 = scmp.ne.s32.totalorder %s67, %s68
      %p82 = scmp.eq.s32.totalorder %s34, 1
      %p83 = por %p81, %p82
      %p85 = scmp.ne.s32.totalorder %s68, %s84
      %p86 = scmp.eq.s32.totalorder %s34, 0
      %p87 = por %p85, %p86
      %s89 = sadd.s32 %s88, 1
      %p92 = scmp.eq.s32.totalorder %s28, 1
      %p93 = scmp.ne.s32.totalorder %s88, %s90
      %p94 = scmp.eq.s32.totalorder %s28, 0
      %p95 = por %p93, %p94
      %p96 = scmp.ne.s32.totalorder %s88, %s90
      %p97 = scmp.eq.s32.totalorder %s33, 1
      %p98 = por %p96, %p97
      %p99 = scmp.ne.s32.totalorder %s90, %s91
      %p100 = scmp.eq.s32.totalorder %s33, 0
      %p101 = por %p99, %p100
      %p102 = scmp.ne.s32.totalorder %s90, %s91
      %p103 = scmp.eq.s32.totalorder %s34, 1
      %p104 = por %p102, %p103
      %p106 = scmp.ne.s32.totalorder %s91, %s105
      %p107 = scmp.eq.s32.totalorder %s34, 0
      %p108 = por %p106, %p107
      %s110 = sadd.s32 %s109, 1
      %p113 = scmp.eq.s32.totalorder %s28, 1
      %p114 = scmp.ne.s32.totalorder %s109, %s111
      %p115 = scmp.eq.s32.totalorder %s28, 0
      %p116 = por %p114, %p115
      %p117 = scmp.ne.s32.totalorder %s109, %s111
      %p118 = scmp.eq.s32.totalorder %s33, 1
      %p119 = por %p117, %p118
      %p120 = scmp.ne.s32.totalorder %s111, %s112
      %p121 = scmp.eq.s32.totalorder %s33, 0
      %p122 = por %p120, %p121
      %p123 = scmp.ne.s32.totalorder %s111, %s112
      %p124 = scmp.eq.s32.totalorder %s34, 1
      %p125 = por %p123, %p124
      %p127 = scmp.ne.s32.totalorder %s112, %s126
      %p128 = scmp.eq.s32.totalorder %s34, 0
      %p129 = por %p127, %p128
      %s131 = sadd.s32 %s130, 1
      %p134 = scmp.eq.s32.totalorder %s28, 1
      %p135 = scmp.ne.s32.totalorder %s130, %s132
      %p136 = scmp.eq.s32.totalorder %s28, 0
      %p137 = por %p135, %p136
      %p138 = scmp.ne.s32.totalorder %s130, %s132
      %p139 = scmp.eq.s32.totalorder %s33, 1
      %p140 = por %p138, %p139
      %p141 = scmp.ne.s32.totalorder %s132, %s133
      %p142 = scmp.eq.s32.totalorder %s33, 0
      %p143 = por %p141, %p142
      %p144 = scmp.ne.s32.totalorder %s132, %s133
      %p145 = scmp.eq.s32.totalorder %s34, 1
      %p146 = por %p144, %p145
      %p148 = scmp.ne.s32.totalorder %s133, %s147
      %p149 = scmp.eq.s32.totalorder %s34, 0
      %p150 = por %p148, %p149
      %s152 = sadd.s32 %s151, 1
      %p155 = scmp.eq.s32.totalorder %s28, 1
      %p156 = scmp.ne.s32.totalorder %s151, %s153
      %p157 = scmp.eq.s32.totalorder %s28, 0
      %p158 = por %p156, %p157
      %p159 = scmp.ne.s32.totalorder %s151, %s153
      %p160 = scmp.eq.s32.totalorder %s33, 1
      %p161 = por %p159, %p160
      %p162 = scmp.ne.s32.totalorder %s153, %s154
      %p163 = scmp.eq.s32.totalorder %s33, 0
      %p164 = por %p162, %p163
      %p165 = scmp.ne.s32.totalorder %s153, %s154
      %p166 = scmp.eq.s32.totalorder %s34, 1
      %p167 = por %p165, %p166
      %p169 = scmp.ne.s32.totalorder %s154, %s168
      %p170 = scmp.eq.s32.totalorder %s34, 0
      %p171 = por %p169, %p170
      %s173 = sadd.s32 %s172, 1
      %p176 = scmp.eq.s32.totalorder %s28, 1
      %p177 = scmp.ne.s32.totalorder %s172, %s174
      %p178 = scmp.eq.s32.totalorder %s28, 0
      %p179 = por %p177, %p178
      %p180 = scmp.ne.s32.totalorder %s172, %s174
      %p181 = scmp.eq.s32.totalorder %s33, 1
      %p182 = por %p180, %p181
      %p183 = scmp.ne.s32.totalorder %s174, %s175
      %p184 = scmp.eq.s32.totalorder %s33, 0
      %p185 = por %p183, %p184
      %p186 = scmp.ne.s32.totalorder %s174, %s175
      %p187 = scmp.eq.s32.totalorder %s34, 1
      %p188 = por %p186, %p187
      %p190 = scmp.ne.s32.totalorder %s175, %s189
      %p191 = scmp.eq.s32.totalorder %s34, 0
      %p192 = por %p190, %p191
      %s194 = sadd.s32 %s193, 1
      %p197 = scmp.eq.s32.totalorder %s28, 1
      %p198 = scmp.ne.s32.totalorder %s193, %s195
      %p199 = scmp.eq.s32.totalorder %s28, 0
      %p200 = por %p198, %p199
      %p201 = scmp.ne.s32.totalorder %s193, %s195
      %p202 = scmp.eq.s32.totalorder %s33, 1
      %p203 = por %p201, %p202
      %p204 = scmp.ne.s32.totalorder %s195, %s196
      %p205 = scmp.eq.s32.totalorder %s33, 0
      %p206 = por %p204, %p205
      %p207 = scmp.ne.s32.totalorder %s195, %s196
      %p208 = scmp.eq.s32.totalorder %s34, 1
      %p209 = por %p207, %p208
      %p211 = scmp.ne.s32.totalorder %s196, %s210
      %p212 = scmp.eq.s32.totalorder %s34, 0
      %p213 = por %p211, %p212
      %s215 = sadd.s32 %s214, 1
      %p218 = scmp.eq.s32.totalorder %s28, 1
      %p219 = scmp.ne.s32.totalorder %s214, %s216
      %p220 = scmp.eq.s32.totalorder %s28, 0
      %p221 = por %p219, %p220
      %p222 = scmp.ne.s32.totalorder %s214, %s216
      %p223 = scmp.eq.s32.totalorder %s33, 1
      %p224 = por %p222, %p223
      %p225 = scmp.ne.s32.totalorder %s216, %s217
      %p226 = scmp.eq.s32.totalorder %s33, 0
      %p227 = por %p225, %p226
      %p228 = scmp.ne.s32.totalorder %s216, %s217
      %p229 = scmp.eq.s32.totalorder %s34, 1
      %p230 = por %p228, %p229
      %p232 = scmp.ne.s32.totalorder %s217, %s231
      %p233 = scmp.eq.s32.totalorder %s34, 0
      %p234 = por %p232, %p233
      %s236 = sadd.s32 %s235, 1
      %p239 = scmp.eq.s32.totalorder %s28, 1
      %p240 = scmp.ne.s32.totalorder %s235, %s237
      %p241 = scmp.eq.s32.totalorder %s28, 0
      %p242 = por %p240, %p241
      %p243 = scmp.ne.s32.totalorder %s235, %s237
      %p244 = scmp.eq.s32.totalorder %s33, 1
      %p245 = por %p243, %p244
      %p246 = scmp.ne.s32.totalorder %s237, %s238
      %p247 = scmp.eq.s32.totalorder %s33, 0
      %p248 = por %p246, %p247
      %p249 = scmp.ne.s32.totalorder %s237, %s238
      %p250 = scmp.eq.s32.totalorder %s34, 1
      %p251 = por %p249, %p250
      %p253 = scmp.ne.s32.totalorder %s238, %s252
      %p254 = scmp.eq.s32.totalorder %s34, 0
      %p255 = por %p253, %p254
      %s257 = sadd.s32 %s256, 1
      %p260 = scmp.eq.s32.totalorder %s28, 1
      %p261 = scmp.ne.s32.totalorder %s256, %s258
      %p262 = scmp.eq.s32.totalorder %s28, 0
      %p263 = por %p261, %p262
      %p264 = scmp.ne.s32.totalorder %s256, %s258
      %p265 = scmp.eq.s32.totalorder %s33, 1
      %p266 = por %p264, %p265
      %p267 = scmp.ne.s32.totalorder %s258, %s259
      %p268 = scmp.eq.s32.totalorder %s33, 0
      %p269 = por %p267, %p268
      %p270 = scmp.ne.s32.totalorder %s258, %s259
      %p271 = scmp.eq.s32.totalorder %s34, 1
      %p272 = por %p270, %p271
      %p274 = scmp.ne.s32.totalorder %s259, %s273
      %p275 = scmp.eq.s32.totalorder %s34, 0
      %p276 = por %p274, %p275
      %s277 = ssub.s32 %s28, %s35
      %p278 = scmp.eq.s32.totalorder %s277, 0
      %s280 = sadd.s32 %s279, 1
      %s281 = scalar_select %p278, %s279, %s280
      %p284 = pneg %p278
      %p285 = scmp.eq.s32.totalorder %s28, 1
      %p286 = por %p284, %p285
      %p287 = scmp.ne.s32.totalorder %s279, %s282
      %p288 = scmp.eq.s32.totalorder %s28, 0
      %p289 = por %p287, %p288
      %p290 = scmp.ne.s32.totalorder %s279, %s282
      %p291 = scmp.eq.s32.totalorder %s33, 1
      %p292 = por %p290, %p291
      %p293 = scmp.ne.s32.totalorder %s282, %s283
      %p294 = scmp.eq.s32.totalorder %s33, 0
      %p295 = por %p293, %p294
      %p296 = scmp.ne.s32.totalorder %s282, %s283
      %p297 = scmp.eq.s32.totalorder %s34, 1
      %p298 = por %p296, %p297
      %p300 = scmp.ne.s32.totalorder %s283, %s299
      %p301 = scmp.eq.s32.totalorder %s34, 0
      %p302 = por %p300, %p301
      %p303 = scmp.le.s32.totalorder 1, %s28
      %p304 = scmp.lt.s32.totalorder %s28, 3
      %p305 = pnand %p303, %p304
      %p306 = pneg %p305
      // Predicated region
      $region9: #{tpu_custom_call.1} parent=5 // pred_check
        _
      $region10: #{tpu_custom_call.1} parent=5 // pred_check_branch
        %308 = sbr.rel (%p305) target = $region12
      $region11: #{tpu_custom_call.1} parent=5 // pred_region
        %s309 = ssub.s32 %s28, 1
        // Predicated region
        $region13: #{tpu_custom_call.1} parent=11 // pred_check
          %p310 = pneg %p101
        $region14: #{tpu_custom_call.1} parent=11 // pred_check_branch
          %312 = sbr.rel (%p310) target = $region16
        $region15: #{tpu_custom_call.1} parent=11 // pred_region
          %s314 = ssub.s32 2048, 2048
          %315 = vsyncadd [#allocation6], %s314
          %s316 = sshll.u32 [#allocation7], 4
          %s317 = int_to_ptr.vmem [resolvable:$true] %s316
          %322 = dma.hbm_to_vmem [thread:$0]  %s2, 2048, %s317, [#allocation6], 128, 128, 8
        $region16: #{tpu_custom_call.1} parent=11 // pred_fallthru
          _
        // Predicated region
        $region17: #{tpu_custom_call.1} parent=11 // pred_check
          %p323 = pneg %p122
        $region18: #{tpu_custom_call.1} parent=11 // pred_check_branch
          %325 = sbr.rel (%p323) target = $region20
        $region19: #{tpu_custom_call.1} parent=11 // pred_region
          %s327 = ssub.s32 4096, 4096
          %328 = vsyncadd [#allocation9], %s327
          %s329 = sshll.u32 [#allocation8], 4
          %s330 = int_to_ptr.vmem [resolvable:$true] %s329
          %335 = dma.hbm_to_vmem [thread:$0]  %s3, 4096, %s330, [#allocation9], 128, 128, 8
        $region20: #{tpu_custom_call.1} parent=11 // pred_fallthru
          _
        // Predicated region
        $region21: #{tpu_custom_call.1} parent=11 // pred_check
          %p336 = pneg %p143
        $region22: #{tpu_custom_call.1} parent=11 // pred_check_branch
          %338 = sbr.rel (%p336) target = $region24
        $region23: #{tpu_custom_call.1} parent=11 // pred_region
          _
        $region24: #{tpu_custom_call.1} parent=11 // pred_fallthru
          _
        // Predicated region
        $region25: #{tpu_custom_call.1} parent=11 // pred_check
          %p339 = pneg %p164
        $region26: #{tpu_custom_call.1} parent=11 // pred_check_branch
          %341 = sbr.rel (%p339) target = $region28
        $region27: #{tpu_custom_call.1} parent=11 // pred_region
          %s343 = ssub.s32 4096, 4096
          %344 = vsyncadd [#allocation9], %s343
          %s345 = sshll.u32 [#allocation10], 4
          %s346 = int_to_ptr.vmem [resolvable:$true] %s345
          %351 = dma.hbm_to_vmem [thread:$0]  %s5, 4096, %s346, [#allocation9], 128, 128, 8
        $region28: #{tpu_custom_call.1} parent=11 // pred_fallthru
          _
        // Predicated region
        $region29: #{tpu_custom_call.1} parent=11 // pred_check
          %p352 = pneg %p185
        $region30: #{tpu_custom_call.1} parent=11 // pred_check_branch
          %354 = sbr.rel (%p352) target = $region32
        $region31: #{tpu_custom_call.1} parent=11 // pred_region
          _
        $region32: #{tpu_custom_call.1} parent=11 // pred_fallthru
          _
        // Predicated region
        $region33: #{tpu_custom_call.1} parent=11 // pred_check
          %p355 = pneg %p206
        $region34: #{tpu_custom_call.1} parent=11 // pred_check_branch
          %357 = sbr.rel (%p355) target = $region36
        $region35: #{tpu_custom_call.1} parent=11 // pred_region
          %s359 = ssub.s32 4096, 4096
          %360 = vsyncadd [#allocation12], %s359
          %s361 = sshll.u32 [#allocation11], 4
          %s362 = int_to_ptr.vmem [resolvable:$true] %s361
          %367 = dma.hbm_to_vmem [thread:$0]  %s7, 4096, %s362, [#allocation12], 128, 128, 8
        $region36: #{tpu_custom_call.1} parent=11 // pred_fallthru
          _
        // Predicated region
        $region37: #{tpu_custom_call.1} parent=11 // pred_check
          %p368 = pneg %p227
        $region38: #{tpu_custom_call.1} parent=11 // pred_check_branch
          %370 = sbr.rel (%p368) target = $region40
        $region39: #{tpu_custom_call.1} parent=11 // pred_region
          _
        $region40: #{tpu_custom_call.1} parent=11 // pred_fallthru
          _
        // Predicated region
        $region41: #{tpu_custom_call.1} parent=11 // pred_check
          %p371 = pneg %p248
        $region42: #{tpu_custom_call.1} parent=11 // pred_check_branch
          %373 = sbr.rel (%p371) target = $region44
        $region43: #{tpu_custom_call.1} parent=11 // pred_region
          _
        $region44: #{tpu_custom_call.1} parent=11 // pred_fallthru
          _
        // Predicated region
        $region45: #{tpu_custom_call.1} parent=11 // pred_check
          %p374 = pneg %p269
        $region46: #{tpu_custom_call.1} parent=11 // pred_check_branch
          %376 = sbr.rel (%p374) target = $region48
        $region47: #{tpu_custom_call.1} parent=11 // pred_region
          _
        $region48: #{tpu_custom_call.1} parent=11 // pred_fallthru
          _
      $region12: #{tpu_custom_call.1} parent=5 // pred_fallthru
        _
      %p377 = scmp.lt.s32.totalorder %s28, 2
      // Predicated region
      $region49: #{tpu_custom_call.1} parent=5 // pred_check
        %p378 = pneg %p377
      $region50: #{tpu_custom_call.1} parent=5 // pred_check_branch
        %380 = sbr.rel (%p378) target = $region52
      $region51: #{tpu_custom_call.1} parent=5 // pred_region
        // Predicated region
        $region53: #{tpu_custom_call.1} parent=51 // pred_check
          %p381 = pneg %p48
        $region54: #{tpu_custom_call.1} parent=51 // pred_check_branch
          %383 = sbr.rel (%p381) target = $region56
        $region55: #{tpu_custom_call.1} parent=51 // pred_region
          %s384 = sand.u32 %s38, 1
          %s385 = scalar_lea.sflag [#allocation3], %s384
          %s386 = sand.u32 %s38, 1
          %s387 = smul.addr %s386, 256
          %s388 = scalar_lea.vmem [#allocation2], %s387
          %s389 = smul.u32 32, %s28
          %s391 = ssub.s32 4096, 4096
          %392 = vsyncadd %s385, %s391
          %s393 = smul.addr %s389, 128
          %s394 = scalar_lea.hbm %s0, %s393
          %s395 = sshll.u32 %s388, 4
          %s396 = int_to_ptr.vmem [resolvable:$true] %s395
          %401 = dma.hbm_to_vmem [thread:$0]  %s394, 4096, %s396, %s385, 128, 128, 8
        $region56: #{tpu_custom_call.1} parent=51 // pred_fallthru
          _
        // Predicated region
        $region57: #{tpu_custom_call.1} parent=51 // pred_check
          %p402 = pneg %p74
        $region58: #{tpu_custom_call.1} parent=51 // pred_check_branch
          %404 = sbr.rel (%p402) target = $region60
        $region59: #{tpu_custom_call.1} parent=51 // pred_region
          %s405 = sand.u32 %s28, 1
          %s406 = scalar_lea.sflag [#allocation6], %s405
          %s407 = sand.u32 %s64, 1
          %s408 = smul.addr %s407, 512
          %s409 = scalar_lea.vmem [#allocation5], %s408
          %s410 = smul.u32 32, %s28
          %s412 = ssub.s32 8192, 8192
          %413 = vsyncadd %s406, %s412
          %s414 = smul.addr %s410, 2
          %s415 = smul.addr %s414, 128
          %s416 = scalar_lea.hbm %s1, %s415
          %s417 = sshll.u32 %s409, 4
          %s418 = int_to_ptr.vmem [resolvable:$true] %s417
          %423 = dma.hbm_to_vmem [thread:$0]  %s416, 8192, %s418, %s406, 256, 256, 16
        $region60: #{tpu_custom_call.1} parent=51 // pred_fallthru
          _
      $region52: #{tpu_custom_call.1} parent=5 // pred_fallthru
        _
      %p424 = scmp.le.s32.totalorder 1, %s28
      %p425 = scmp.lt.s32.totalorder %s28, 3
      %p426 = pnand %p424, %p425
      %p427 = pneg %p426
      // Predicated region
      $region61: #{tpu_custom_call.1} parent=5 // pred_check
        _
      $region62: #{tpu_custom_call.1} parent=5 // pred_check_branch
        %429 = sbr.rel (%p426) target = $region64
      $region63: #{tpu_custom_call.1} parent=5 // pred_region
        %s430 = ssub.s32 %s28, 1
        %s431 = sand.u32 %s41, 1
        %s432 = scalar_lea.sflag [#allocation3], %s431
        %s433 = sand.u32 %s41, 1
        %s434 = smul.addr %s433, 256
        %s435 = scalar_lea.vmem [#allocation2], %s434
        // Predicated region
        $region65: #{tpu_custom_call.1} parent=63 // pred_check
          %p436 = pneg %p54
        $region66: #{tpu_custom_call.1} parent=63 // pred_check_branch
          %438 = sbr.rel (%p436) target = $region68
        $region67: #{tpu_custom_call.1} parent=63 // pred_region
          %439 = dma.done %s432, 4096
        $region68: #{tpu_custom_call.1} parent=63 // pred_fallthru
          _
        %s440 = sand.u32 %s33, 1
        %s441 = scalar_lea.sflag [#allocation6], %s440
        %s442 = sand.u32 %s67, 1
        %s443 = smul.addr %s442, 512
        %s444 = scalar_lea.vmem [#allocation5], %s443
        // Predicated region
        $region69: #{tpu_custom_call.1} parent=63 // pred_check
          %p445 = pneg %p80
        $region70: #{tpu_custom_call.1} parent=63 // pred_check_branch
          %447 = sbr.rel (%p445) target = $region72
        $region71: #{tpu_custom_call.1} parent=63 // pred_region
          %448 = dma.done %s441, 8192
        $region72: #{tpu_custom_call.1} parent=63 // pred_fallthru
          _
        // Predicated region
        $region73: #{tpu_custom_call.1} parent=63 // pred_check
          %p449 = pneg %p101
        $region74: #{tpu_custom_call.1} parent=63 // pred_check_branch
          %451 = sbr.rel (%p449) target = $region76
        $region75: #{tpu_custom_call.1} parent=63 // pred_region
          %452 = dma.done [#allocation6], 2048
        $region76: #{tpu_custom_call.1} parent=63 // pred_fallthru
          _
        // Predicated region
        $region77: #{tpu_custom_call.1} parent=63 // pred_check
          %p453 = pneg %p122
        $region78: #{tpu_custom_call.1} parent=63 // pred_check_branch
          %455 = sbr.rel (%p453) target = $region80
        $region79: #{tpu_custom_call.1} parent=63 // pred_region
          %456 = dma.done [#allocation9], 4096
        $region80: #{tpu_custom_call.1} parent=63 // pred_fallthru
          _
        // Predicated region
        $region81: #{tpu_custom_call.1} parent=63 // pred_check
          %p457 = pneg %p164
        $region82: #{tpu_custom_call.1} parent=63 // pred_check_branch
          %459 = sbr.rel (%p457) target = $region84
        $region83: #{tpu_custom_call.1} parent=63 // pred_region
          %460 = dma.done [#allocation9], 4096
        $region84: #{tpu_custom_call.1} parent=63 // pred_fallthru
          _
        // Predicated region
        $region85: #{tpu_custom_call.1} parent=63 // pred_check
          %p461 = pneg %p206
        $region86: #{tpu_custom_call.1} parent=63 // pred_check_branch
          %463 = sbr.rel (%p461) target = $region88
        $region87: #{tpu_custom_call.1} parent=63 // pred_region
          %464 = dma.done [#allocation12], 4096
        $region88: #{tpu_custom_call.1} parent=63 // pred_fallthru
          _
        %s465 = sand.u32 %s41, 1
        %s466 = scalar_lea.sflag [#allocation3], %s465
        %s467 = sand.u32 %s41, 1
        %s468 = smul.addr %s467, 256
        %s469 = scalar_lea.vmem [#allocation2], %s468
        %p470 = pneg %p54
        %p471 = pneg %p51
        %s472 = sand.u32 %s33, 1
        %s473 = scalar_lea.sflag [#allocation6], %s472
        %s474 = sand.u32 %s67, 1
        %s475 = smul.addr %s474, 512
        %s476 = scalar_lea.vmem [#allocation5], %s475
        %p477 = pneg %p80
        %p478 = pneg %p77
        %p479 = pneg %p101
        %p480 = pneg %p98
        %p481 = pneg %p122
        %p482 = pneg %p119
        %p483 = pneg %p143
        %p484 = pneg %p140
        %p485 = pneg %p164
        %p486 = pneg %p161
        %p487 = pneg %p185
        %p488 = pneg %p182
        %p489 = pneg %p206
        %p490 = pneg %p203
        %p491 = pneg %p227
        %p492 = pneg %p224
        %p493 = pneg %p248
        %p494 = pneg %p245
        %p495 = pneg %p269
        %p496 = pneg %p266
        %p497 = pneg %p295
        %p498 = pneg %p292
        %s499 = sand.u32 %s282, 1
        %s500 = scalar_lea.sflag [#allocation4], %s499
        %s501 = sand.u32 %s282, 1
        %s502 = smul.addr %s501, 256
        %s503 = scalar_lea.vmem [#allocation13], %s502
        %s504 = smul.u32 32, %s33
        %s505 = smul.u32 32, %s33
        %s506 = smul.u32 32, %s33
        %v508 = vld [vmem:[%s9] sm:$0x3]
        %v509 = vld [vmem:[%s10] sm:$0x3]
        %v510 = vld [vmem:[%s435] sm:$0xff]
        %v511 = vld [vmem:[%s435 + $0x8] sm:$0xff]
        %v512 = vld [vmem:[%s435 + $0x10] sm:$0xff]
        %v513 = vld [vmem:[%s435 + $0x18] sm:$0xff]
        %v514 = vld [vmem:[%s435 + $0x20] sm:$0xff]
        %v515 = vld [vmem:[%s435 + $0x28] sm:$0xff]
        %v516 = vld [vmem:[%s435 + $0x30] sm:$0xff]
        %v517 = vld [vmem:[%s435 + $0x38] sm:$0xff]
        %v518 = vld [vmem:[%s435 + $0x40] sm:$0xff]
        %v519 = vld [vmem:[%s435 + $0x48] sm:$0xff]
        %v520 = vld [vmem:[%s435 + $0x50] sm:$0xff]
        %v521 = vld [vmem:[%s435 + $0x58] sm:$0xff]
        %v522 = vld [vmem:[%s435 + $0x60] sm:$0xff]
        %v523 = vld [vmem:[%s435 + $0x68] sm:$0xff]
        %v524 = vld [vmem:[%s435 + $0x70] sm:$0xff]
        %v525 = vld [vmem:[%s435 + $0x78] sm:$0xff]
        %v526 = vld [vmem:[%s435 + $0x80] sm:$0xff]
        %v527 = vld [vmem:[%s435 + $0x88] sm:$0xff]
        %v528 = vld [vmem:[%s435 + $0x90] sm:$0xff]
        %v529 = vld [vmem:[%s435 + $0x98] sm:$0xff]
        %v530 = vld [vmem:[%s435 + $0xa0] sm:$0xff]
        %v531 = vld [vmem:[%s435 + $0xa8] sm:$0xff]
        %v532 = vld [vmem:[%s435 + $0xb0] sm:$0xff]
        %v533 = vld [vmem:[%s435 + $0xb8] sm:$0xff]
        %v534 = vld [vmem:[%s435 + $0xc0] sm:$0xff]
        %v535 = vld [vmem:[%s435 + $0xc8] sm:$0xff]
        %v536 = vld [vmem:[%s435 + $0xd0] sm:$0xff]
        %v537 = vld [vmem:[%s435 + $0xd8] sm:$0xff]
        %v538 = vld [vmem:[%s435 + $0xe0] sm:$0xff]
        %v539 = vld [vmem:[%s435 + $0xe8] sm:$0xff]
        %v540 = vld [vmem:[%s435 + $0xf0] sm:$0xff]
        %v541 = vld [vmem:[%s435 + $0xf8] sm:$0xff]
        %v542 = vpack.c.bf16 %v511, %v510
        %v543 = vpack.c.bf16 %v513, %v512
        %v544 = vpack.c.bf16 %v515, %v514
        %v545 = vpack.c.bf16 %v517, %v516
        %v546 = vpack.c.bf16 %v519, %v518
        %v547 = vpack.c.bf16 %v521, %v520
        %v548 = vpack.c.bf16 %v523, %v522
        %v549 = vpack.c.bf16 %v525, %v524
        %v550 = vpack.c.bf16 %v527, %v526
        %v551 = vpack.c.bf16 %v529, %v528
        %v552 = vpack.c.bf16 %v531, %v530
        %v553 = vpack.c.bf16 %v533, %v532
        %v554 = vpack.c.bf16 %v535, %v534
        %v555 = vpack.c.bf16 %v537, %v536
        %v556 = vpack.c.bf16 %v539, %v538
        %v557 = vpack.c.bf16 %v541, %v540
        %v558 = vld [vmem:[%s444] sm:$0xff]
        %v559 = vld [vmem:[%s444 + $0x8] sm:$0xff]
        %v560 = vld [vmem:[%s444 + $0x10] sm:$0xff]
        %v561 = vld [vmem:[%s444 + $0x18] sm:$0xff]
        %v562 = vld [vmem:[%s444 + $0x20] sm:$0xff]
        %v563 = vld [vmem:[%s444 + $0x28] sm:$0xff]
        %v564 = vld [vmem:[%s444 + $0x30] sm:$0xff]
        %v565 = vld [vmem:[%s444 + $0x38] sm:$0xff]
        %v566 = vld [vmem:[%s444 + $0x40] sm:$0xff]
        %v567 = vld [vmem:[%s444 + $0x48] sm:$0xff]
        %v568 = vld [vmem:[%s444 + $0x50] sm:$0xff]
        %v569 = vld [vmem:[%s444 + $0x58] sm:$0xff]
        %v570 = vld [vmem:[%s444 + $0x60] sm:$0xff]
        %v571 = vld [vmem:[%s444 + $0x68] sm:$0xff]
        %v572 = vld [vmem:[%s444 + $0x70] sm:$0xff]
        %v573 = vld [vmem:[%s444 + $0x78] sm:$0xff]
        %v574 = vld [vmem:[%s444 + $0x80] sm:$0xff]
        %v575 = vld [vmem:[%s444 + $0x88] sm:$0xff]
        %v576 = vld [vmem:[%s444 + $0x90] sm:$0xff]
        %v577 = vld [vmem:[%s444 + $0x98] sm:$0xff]
        %v578 = vld [vmem:[%s444 + $0xa0] sm:$0xff]
        %v579 = vld [vmem:[%s444 + $0xa8] sm:$0xff]
        %v580 = vld [vmem:[%s444 + $0xb0] sm:$0xff]
        %v581 = vld [vmem:[%s444 + $0xb8] sm:$0xff]
        %v582 = vld [vmem:[%s444 + $0xc0] sm:$0xff]
        %v583 = vld [vmem:[%s444 + $0xc8] sm:$0xff]
        %v584 = vld [vmem:[%s444 + $0xd0] sm:$0xff]
        %v585 = vld [vmem:[%s444 + $0xd8] sm:$0xff]
        %v586 = vld [vmem:[%s444 + $0xe0] sm:$0xff]
        %v587 = vld [vmem:[%s444 + $0xe8] sm:$0xff]
        %v588 = vld [vmem:[%s444 + $0xf0] sm:$0xff]
        %v589 = vld [vmem:[%s444 + $0xf8] sm:$0xff]
        %v590 = vld [vmem:[%s444 + $0x100] sm:$0xff]
        %v591 = vld [vmem:[%s444 + $0x108] sm:$0xff]
        %v592 = vld [vmem:[%s444 + $0x110] sm:$0xff]
        %v593 = vld [vmem:[%s444 + $0x118] sm:$0xff]
        %v594 = vld [vmem:[%s444 + $0x120] sm:$0xff]
        %v595 = vld [vmem:[%s444 + $0x128] sm:$0xff]
        %v596 = vld [vmem:[%s444 + $0x130] sm:$0xff]
        %v597 = vld [vmem:[%s444 + $0x138] sm:$0xff]
        %v598 = vld [vmem:[%s444 + $0x140] sm:$0xff]
        %v599 = vld [vmem:[%s444 + $0x148] sm:$0xff]
        %v600 = vld [vmem:[%s444 + $0x150] sm:$0xff]
        %v601 = vld [vmem:[%s444 + $0x158] sm:$0xff]
        %v602 = vld [vmem:[%s444 + $0x160] sm:$0xff]
        %v603 = vld [vmem:[%s444 + $0x168] sm:$0xff]
        %v604 = vld [vmem:[%s444 + $0x170] sm:$0xff]
        %v605 = vld [vmem:[%s444 + $0x178] sm:$0xff]
        %v606 = vld [vmem:[%s444 + $0x180] sm:$0xff]
        %v607 = vld [vmem:[%s444 + $0x188] sm:$0xff]
        %v608 = vld [vmem:[%s444 + $0x190] sm:$0xff]
        %v609 = vld [vmem:[%s444 + $0x198] sm:$0xff]
        %v610 = vld [vmem:[%s444 + $0x1a0] sm:$0xff]
        %v611 = vld [vmem:[%s444 + $0x1a8] sm:$0xff]
        %v612 = vld [vmem:[%s444 + $0x1b0] sm:$0xff]
        %v613 = vld [vmem:[%s444 + $0x1b8] sm:$0xff]
        %v614 = vld [vmem:[%s444 + $0x1c0] sm:$0xff]
        %v615 = vld [vmem:[%s444 + $0x1c8] sm:$0xff]
        %v616 = vld [vmem:[%s444 + $0x1d0] sm:$0xff]
        %v617 = vld [vmem:[%s444 + $0x1d8] sm:$0xff]
        %v618 = vld [vmem:[%s444 + $0x1e0] sm:$0xff]
        %v619 = vld [vmem:[%s444 + $0x1e8] sm:$0xff]
        %v620 = vld [vmem:[%s444 + $0x1f0] sm:$0xff]
        %v621 = vld [vmem:[%s444 + $0x1f8] sm:$0xff]
        %v622 = vpack.c.bf16 %v560, %v558
        %v623 = vpack.c.bf16 %v561, %v559
        %v624 = vpack.c.bf16 %v564, %v562
        %v625 = vpack.c.bf16 %v565, %v563
        %v626 = vpack.c.bf16 %v568, %v566
        %v627 = vpack.c.bf16 %v569, %v567
        %v628 = vpack.c.bf16 %v572, %v570
        %v629 = vpack.c.bf16 %v573, %v571
        %v630 = vpack.c.bf16 %v576, %v574
        %v631 = vpack.c.bf16 %v577, %v575
        %v632 = vpack.c.bf16 %v580, %v578
        %v633 = vpack.c.bf16 %v581, %v579
        %v634 = vpack.c.bf16 %v584, %v582
        %v635 = vpack.c.bf16 %v585, %v583
        %v636 = vpack.c.bf16 %v588, %v586
        %v637 = vpack.c.bf16 %v589, %v587
        %v638 = vpack.c.bf16 %v592, %v590
        %v639 = vpack.c.bf16 %v593, %v591
        %v640 = vpack.c.bf16 %v596, %v594
        %v641 = vpack.c.bf16 %v597, %v595
        %v642 = vpack.c.bf16 %v600, %v598
        %v643 = vpack.c.bf16 %v601, %v599
        %v644 = vpack.c.bf16 %v604, %v602
        %v645 = vpack.c.bf16 %v605, %v603
        %v646 = vpack.c.bf16 %v608, %v606
        %v647 = vpack.c.bf16 %v609, %v607
        %v648 = vpack.c.bf16 %v612, %v610
        %v649 = vpack.c.bf16 %v613, %v611
        %v650 = vpack.c.bf16 %v616, %v614
        %v651 = vpack.c.bf16 %v617, %v615
        %v652 = vpack.c.bf16 %v620, %v618
        %v653 = vpack.c.bf16 %v621, %v619
        %v654 = vld [vmem:[%s4] sm:$0x3]
        %v655 = vld [vmem:[#allocation7] sm:$0xff]
        %v656 = vld [vmem:[#allocation7 + $0x8] sm:$0xff]
        %v657 = vld [vmem:[#allocation7 + $0x10] sm:$0xff]
        %v658 = vld [vmem:[#allocation7 + $0x18] sm:$0xff]
        %v659 = vld [vmem:[#allocation7 + $0x20] sm:$0xff]
        %v660 = vld [vmem:[#allocation7 + $0x28] sm:$0xff]
        %v661 = vld [vmem:[#allocation7 + $0x30] sm:$0xff]
        %v662 = vld [vmem:[#allocation7 + $0x38] sm:$0xff]
        %v663 = vld [vmem:[#allocation7 + $0x40] sm:$0xff]
        %v664 = vld [vmem:[#allocation7 + $0x48] sm:$0xff]
        %v665 = vld [vmem:[#allocation7 + $0x50] sm:$0xff]
        %v666 = vld [vmem:[#allocation7 + $0x58] sm:$0xff]
        %v667 = vld [vmem:[#allocation7 + $0x60] sm:$0xff]
        %v668 = vld [vmem:[#allocation7 + $0x68] sm:$0xff]
        %v669 = vld [vmem:[#allocation7 + $0x70] sm:$0xff]
        %v670 = vld [vmem:[#allocation7 + $0x78] sm:$0xff]
        %v687 = vunpack.c.l.b16 %v655
        %v688 = vunpack.c.h.b16 %v655
        %v689 = vunpack.c.l.b16 %v656
        %v690 = vunpack.c.h.b16 %v656
        %v691 = vunpack.c.l.b16 %v657
        %v692 = vunpack.c.h.b16 %v657
        %v693 = vunpack.c.l.b16 %v658
        %v694 = vunpack.c.h.b16 %v658
        %v695 = vunpack.c.l.b16 %v659
        %v696 = vunpack.c.h.b16 %v659
        %v697 = vunpack.c.l.b16 %v660
        %v698 = vunpack.c.h.b16 %v660
        %v699 = vunpack.c.l.b16 %v661
        %v700 = vunpack.c.h.b16 %v661
        %v701 = vunpack.c.l.b16 %v662
        %v702 = vunpack.c.h.b16 %v662
        %v703 = vunpack.c.l.b16 %v663
        %v704 = vunpack.c.h.b16 %v663
        %v705 = vunpack.c.l.b16 %v664
        %v706 = vunpack.c.h.b16 %v664
        %v707 = vunpack.c.l.b16 %v665
        %v708 = vunpack.c.h.b16 %v665
        %v709 = vunpack.c.l.b16 %v666
        %v710 = vunpack.c.h.b16 %v666
        %v711 = vunpack.c.l.b16 %v667
        %v712 = vunpack.c.h.b16 %v667
        %v713 = vunpack.c.l.b16 %v668
        %v714 = vunpack.c.h.b16 %v668
        %v715 = vunpack.c.l.b16 %v669
        %v716 = vunpack.c.h.b16 %v669
        %v717 = vunpack.c.l.b16 %v670
        %v718 = vunpack.c.h.b16 %v670
        %v719 = vpack.c.b16 %v689, %v687
        %v720 = vpack.c.b16 %v690, %v688
        %v721 = vpack.c.b16 %v693, %v691
        %v722 = vpack.c.b16 %v694, %v692
        %v723 = vpack.c.b16 %v697, %v695
        %v724 = vpack.c.b16 %v698, %v696
        %v725 = vpack.c.b16 %v701, %v699
        %v726 = vpack.c.b16 %v702, %v700
        %v727 = vpack.c.b16 %v705, %v703
        %v728 = vpack.c.b16 %v706, %v704
        %v729 = vpack.c.b16 %v709, %v707
        %v730 = vpack.c.b16 %v710, %v708
        %v731 = vpack.c.b16 %v713, %v711
        %v732 = vpack.c.b16 %v714, %v712
        %v733 = vpack.c.b16 %v717, %v715
        %v734 = vpack.c.b16 %v718, %v716
        %751 = vmatprep.subr.bf16.mxu0 %v720
        %752 = vmatpush1.bf16.msra.mxu0 %v719
        %753 = vmatprep.subr.bf16.mxu0 %v722
        %754 = vmatpush1.bf16.msra.mxu0 %v721
        %755 = vmatprep.subr.bf16.mxu0 %v724
        %756 = vmatpush1.bf16.msra.mxu0 %v723
        %757 = vmatprep.subr.bf16.mxu0 %v726
        %758 = vmatpush1.bf16.msra.mxu0 %v725
        %759 = vmatprep.subr.bf16.mxu0 %v728
        %760 = vmatpush1.bf16.msra.mxu0 %v727
        %761 = vmatprep.subr.bf16.mxu0 %v730
        %762 = vmatpush1.bf16.msra.mxu0 %v729
        %763 = vmatprep.subr.bf16.mxu0 %v732
        %764 = vmatpush1.bf16.msra.mxu0 %v731
        %765 = vmatprep.subr.bf16.mxu0 %v734
        %766 = vmatpush1.bf16.msra.mxu0 %v733
        %767 = vmatprep.subr.bf16.mxu0 0
        %768 = vmatpush1.bf16.msra.mxu0 0
        %769 = vmatprep.subr.bf16.mxu0 0
        %770 = vmatpush1.bf16.msra.mxu0 0
        %771 = vmatprep.subr.bf16.mxu0 0
        %772 = vmatpush1.bf16.msra.mxu0 0
        %773 = vmatprep.subr.bf16.mxu0 0
        %774 = vmatpush1.bf16.msra.mxu0 0
        %775 = vmatprep.subr.bf16.mxu0 0
        %776 = vmatpush1.bf16.msra.mxu0 0
        %777 = vmatprep.subr.bf16.mxu0 0
        %778 = vmatpush1.bf16.msra.mxu0 0
        %779 = vmatprep.subr.bf16.mxu0 0
        %780 = vmatpush1.bf16.msra.mxu0 0
        %781 = vmatprep.subr.bf16.mxu0 0
        %782 = vmatpush1.bf16.msra.mxu0 0
        %783 = vmatprep.mubr.bf16.mxu0 0
        %784 = vmatmul.mubr.bf16.gmra.mrb[0].mxu0 %v542
        %v785 = vpop.f32.mrb[0].mxu0
        %v786 = vadd.f32 0.0, %v785
        %v787 = vpop.f32.mrb[0].mxu0
        %v788 = vadd.f32 0.0, %v787
        %v789 = vpop.f32.mrb[0].mxu0
        %v790 = vadd.f32 0.0, %v789
        %v791 = vpop.f32.mrb[0].mxu0
        %v792 = vadd.f32 0.0, %v791
        %793 = vmatprep.mubr.bf16.mxu0 0
        %794 = vmatmul.mubr.bf16.gmra.mrb[0].mxu0 %v543
        %v795 = vpop.f32.mrb[0].mxu0
        %v796 = vadd.f32 0.0, %v795
        %v797 = vpop.f32.mrb[0].mxu0
        %v798 = vadd.f32 0.0, %v797
        %v799 = vpop.f32.mrb[0].mxu0
        %v800 = vadd.f32 0.0, %v799
        %v801 = vpop.f32.mrb[0].mxu0
        %v802 = vadd.f32 0.0, %v801
        %803 = vmatprep.mubr.bf16.mxu0 0
        %804 = vmatmul.mubr.bf16.gmra.mrb[0].mxu0 %v544
        %v805 = vpop.f32.mrb[0].mxu0
        %v806 = vadd.f32 0.0, %v805
        %v807 = vpop.f32.mrb[0].mxu0
        %v808 = vadd.f32 0.0, %v807
        %v809 = vpop.f32.mrb[0].mxu0
        %v810 = vadd.f32 0.0, %v809
        %v811 = vpop.f32.mrb[0].mxu0
        %v812 = vadd.f32 0.0, %v811
        %813 = vmatprep.mubr.bf16.mxu0 0
        %814 = vmatmul.mubr.bf16.gmra.mrb[0].mxu0 %v545
        %v815 = vpop.f32.mrb[0].mxu0
        %v816 = vadd.f32 0.0, %v815
        %v817 = vpop.f32.mrb[0].mxu0
        %v818 = vadd.f32 0.0, %v817
        %v819 = vpop.f32.mrb[0].mxu0
        %v820 = vadd.f32 0.0, %v819
        %v821 = vpop.f32.mrb[0].mxu0
        %v822 = vadd.f32 0.0, %v821
        %823 = vmatprep.mubr.bf16.mxu0 0
        %824 = vmatmul.mubr.bf16.gmra.mrb[0].mxu0 %v546
        %v825 = vpop.f32.mrb[0].mxu0
        %v826 = vadd.f32 0.0, %v825
        %v827 = vpop.f32.mrb[0].mxu0
        %v828 = vadd.f32 0.0, %v827
        %v829 = vpop.f32.mrb[0].mxu0
        %v830 = vadd.f32 0.0, %v829
        %v831 = vpop.f32.mrb[0].mxu0
        %v832 = vadd.f32 0.0, %v831
        %833 = vmatprep.mubr.bf16.mxu0 0
        %834 = vmatmul.mubr.bf16.gmra.mrb[0].mxu0 %v547
        %v835 = vpop.f32.mrb[0].mxu0
        %v836 = vadd.f32 0.0, %v835
        %v837 = vpop.f32.mrb[0].mxu0
        %v838 = vadd.f32 0.0, %v837
        %v839 = vpop.f32.mrb[0].mxu0
        %v840 = vadd.f32 0.0, %v839
        %v841 = vpop.f32.mrb[0].mxu0
        %v842 = vadd.f32 0.0, %v841
        %843 = vmatprep.mubr.bf16.mxu0 0
        %844 = vmatmul.mubr.bf16.gmra.mrb[0].mxu0 %v548
        %v845 = vpop.f32.mrb[0].mxu0
        %v846 = vadd.f32 0.0, %v845
        %v847 = vpop.f32.mrb[0].mxu0
        %v848 = vadd.f32 0.0, %v847
        %v849 = vpop.f32.mrb[0].mxu0
        %v850 = vadd.f32 0.0, %v849
        %v851 = vpop.f32.mrb[0].mxu0
        %v852 = vadd.f32 0.0, %v851
        %853 = vmatprep.mubr.bf16.mxu0 0
        %854 = vmatmul.mubr.bf16.gmra.mrb[0].mxu0 %v549
        %v855 = vpop.f32.mrb[0].mxu0
        %v856 = vadd.f32 0.0, %v855
        %v857 = vpop.f32.mrb[0].mxu0
        %v858 = vadd.f32 0.0, %v857
        %v859 = vpop.f32.mrb[0].mxu0
        %v860 = vadd.f32 0.0, %v859
        %v861 = vpop.f32.mrb[0].mxu0
        %v862 = vadd.f32 0.0, %v861
        %863 = vmatprep.mubr.bf16.mxu0 0
        %864 = vmatmul.mubr.bf16.gmra.mrb[0].mxu0 %v550
        %v865 = vpop.f32.mrb[0].mxu0
        %v866 = vadd.f32 0.0, %v865
        %v867 = vpop.f32.mrb[0].mxu0
        %v868 = vadd.f32 0.0, %v867
        %v869 = vpop.f32.mrb[0].mxu0
        %v870 = vadd.f32 0.0, %v869
        %v871 = vpop.f32.mrb[0].mxu0
        %v872 = vadd.f32 0.0, %v871
        %873 = vmatprep.mubr.bf16.mxu0 0
        %874 = vmatmul.mubr.bf16.gmra.mrb[0].mxu0 %v551
        %v875 = vpop.f32.mrb[0].mxu0
        %v876 = vadd.f32 0.0, %v875
        %v877 = vpop.f32.mrb[0].mxu0
        %v878 = vadd.f32 0.0, %v877
        %v879 = vpop.f32.mrb[0].mxu0
        %v880 = vadd.f32 0.0, %v879
        %v881 = vpop.f32.mrb[0].mxu0
        %v882 = vadd.f32 0.0, %v881
        %883 = vmatprep.mubr.bf16.mxu0 0
        %884 = vmatmul.mubr.bf16.gmra.mrb[0].mxu0 %v552
        %v885 = vpop.f32.mrb[0].mxu0
        %v886 = vadd.f32 0.0, %v885
        %v887 = vpop.f32.mrb[0].mxu0
        %v888 = vadd.f32 0.0, %v887
        %v889 = vpop.f32.mrb[0].mxu0
        %v890 = vadd.f32 0.0, %v889
        %v891 = vpop.f32.mrb[0].mxu0
        %v892 = vadd.f32 0.0, %v891
        %893 = vmatprep.mubr.bf16.mxu0 0
        %894 = vmatmul.mubr.bf16.gmra.mrb[0].mxu0 %v553
        %v895 = vpop.f32.mrb[0].mxu0
        %v896 = vadd.f32 0.0, %v895
        %v897 = vpop.f32.mrb[0].mxu0
        %v898 = vadd.f32 0.0, %v897
        %v899 = vpop.f32.mrb[0].mxu0
        %v900 = vadd.f32 0.0, %v899
        %v901 = vpop.f32.mrb[0].mxu0
        %v902 = vadd.f32 0.0, %v901
        %903 = vmatprep.mubr.bf16.mxu0 0
        %904 = vmatmul.mubr.bf16.gmra.mrb[0].mxu0 %v554
        %v905 = vpop.f32.mrb[0].mxu0
        %v906 = vadd.f32 0.0, %v905
        %v907 = vpop.f32.mrb[0].mxu0
        %v908 = vadd.f32 0.0, %v907
        %v909 = vpop.f32.mrb[0].mxu0
        %v910 = vadd.f32 0.0, %v909
        %v911 = vpop.f32.mrb[0].mxu0
        %v912 = vadd.f32 0.0, %v911
        %913 = vmatprep.mubr.bf16.mxu0 0
        %914 = vmatmul.mubr.bf16.gmra.mrb[0].mxu0 %v555
        %v915 = vpop.f32.mrb[0].mxu0
        %v916 = vadd.f32 0.0, %v915
        %v917 = vpop.f32.mrb[0].mxu0
        %v918 = vadd.f32 0.0, %v917
        %v919 = vpop.f32.mrb[0].mxu0
        %v920 = vadd.f32 0.0, %v919
        %v921 = vpop.f32.mrb[0].mxu0
        %v922 = vadd.f32 0.0, %v921
        %923 = vmatprep.mubr.bf16.mxu0 0
        %924 = vmatmul.mubr.bf16.gmra.mrb[0].mxu0 %v556
        %v925 = vpop.f32.mrb[0].mxu0
        %v926 = vadd.f32 0.0, %v925
        %v927 = vpop.f32.mrb[0].mxu0
        %v928 = vadd.f32 0.0, %v927
        %v929 = vpop.f32.mrb[0].mxu0
        %v930 = vadd.f32 0.0, %v929
        %v931 = vpop.f32.mrb[0].mxu0
        %v932 = vadd.f32 0.0, %v931
        %933 = vmatprep.mubr.bf16.mxu0 0
        %934 = vmatmul.mubr.bf16.gmra.mrb[0].mxu0 %v557
        %v935 = vpop.f32.mrb[0].mxu0
        %v936 = vadd.f32 0.0, %v935
        %v937 = vpop.f32.mrb[0].mxu0
        %v938 = vadd.f32 0.0, %v937
        %v939 = vpop.f32.mrb[0].mxu0
        %v940 = vadd.f32 0.0, %v939
        %v941 = vpop.f32.mrb[0].mxu0
        %v942 = vadd.f32 0.0, %v941
        %943 = vdwg.mxu0
        %v945 = vlaneseq
        %v946 = vshrl.u32 %v945, 7
        %v947 = vsub.s32 0, %v946
        %v948 = vrot.slane %v654, %v947
        %v949 = vlaneseq
        %v950 = vshrl.u32 %v949, 7
        %v951 = vsub.s32 1, %v950
        %v952 = vrot.slane %v654, %v951
        %v955 = vadd.f32 %v948, %v786
        %v956 = vadd.f32 %v952, %v788
        %v957 = vadd.f32 %v948, %v790
        %v958 = vadd.f32 %v952, %v792
        %v959 = vadd.f32 %v948, %v796
        %v960 = vadd.f32 %v952, %v798
        %v961 = vadd.f32 %v948, %v800
        %v962 = vadd.f32 %v952, %v802
        %v963 = vadd.f32 %v948, %v806
        %v964 = vadd.f32 %v952, %v808
        %v965 = vadd.f32 %v948, %v810
        %v966 = vadd.f32 %v952, %v812
        %v967 = vadd.f32 %v948, %v816
        %v968 = vadd.f32 %v952, %v818
        %v969 = vadd.f32 %v948, %v820
        %v970 = vadd.f32 %v952, %v822
        %v971 = vadd.f32 %v948, %v826
        %v972 = vadd.f32 %v952, %v828
        %v973 = vadd.f32 %v948, %v830
        %v974 = vadd.f32 %v952, %v832
        %v975 = vadd.f32 %v948, %v836
        %v976 = vadd.f32 %v952, %v838
        %v977 = vadd.f32 %v948, %v840
        %v978 = vadd.f32 %v952, %v842
        %v979 = vadd.f32 %v948, %v846
        %v980 = vadd.f32 %v952, %v848
        %v981 = vadd.f32 %v948, %v850
        %v982 = vadd.f32 %v952, %v852
        %v983 = vadd.f32 %v948, %v856
        %v984 = vadd.f32 %v952, %v858
        %v985 = vadd.f32 %v948, %v860
        %v986 = vadd.f32 %v952, %v862
        %v987 = vadd.f32 %v948, %v866
        %v988 = vadd.f32 %v952, %v868
        %v989 = vadd.f32 %v948, %v870
        %v990 = vadd.f32 %v952, %v872
        %v991 = vadd.f32 %v948, %v876
        %v992 = vadd.f32 %v952, %v878
        %v993 = vadd.f32 %v948, %v880
        %v994 = vadd.f32 %v952, %v882
        %v995 = vadd.f32 %v948, %v886
        %v996 = vadd.f32 %v952, %v888
        %v997 = vadd.f32 %v948, %v890
        %v998 = vadd.f32 %v952, %v892
        %v999 = vadd.f32 %v948, %v896
        %v1000 = vadd.f32 %v952, %v898
        %v1001 = vadd.f32 %v948, %v900
        %v1002 = vadd.f32 %v952, %v902
        %v1003 = vadd.f32 %v948, %v906
        %v1004 = vadd.f32 %v952, %v908
        %v1005 = vadd.f32 %v948, %v910
        %v1006 = vadd.f32 %v952, %v912
        %v1007 = vadd.f32 %v948, %v916
        %v1008 = vadd.f32 %v952, %v918
        %v1009 = vadd.f32 %v948, %v920
        %v1010 = vadd.f32 %v952, %v922
        %v1011 = vadd.f32 %v948, %v926
        %v1012 = vadd.f32 %v952, %v928
        %v1013 = vadd.f32 %v948, %v930
        %v1014 = vadd.f32 %v952, %v932
        %v1015 = vadd.f32 %v948, %v936
        %v1016 = vadd.f32 %v952, %v938
        %v1017 = vadd.f32 %v948, %v940
        %v1018 = vadd.f32 %v952, %v942
        %v1019 = vld [vmem:[#allocation8] sm:$0xff]
        %v1020 = vld [vmem:[#allocation8 + $0x8] sm:$0xff]
        %v1021 = vld [vmem:[#allocation8 + $0x10] sm:$0xff]
        %v1022 = vld [vmem:[#allocation8 + $0x18] sm:$0xff]
        %v1023 = vld [vmem:[#allocation8 + $0x20] sm:$0xff]
        %v1024 = vld [vmem:[#allocation8 + $0x28] sm:$0xff]
        %v1025 = vld [vmem:[#allocation8 + $0x30] sm:$0xff]
        %v1026 = vld [vmem:[#allocation8 + $0x38] sm:$0xff]
        %v1027 = vld [vmem:[#allocation8 + $0x40] sm:$0xff]
        %v1028 = vld [vmem:[#allocation8 + $0x48] sm:$0xff]
        %v1029 = vld [vmem:[#allocation8 + $0x50] sm:$0xff]
        %v1030 = vld [vmem:[#allocation8 + $0x58] sm:$0xff]
        %v1031 = vld [vmem:[#allocation8 + $0x60] sm:$0xff]
        %v1032 = vld [vmem:[#allocation8 + $0x68] sm:$0xff]
        %v1033 = vld [vmem:[#allocation8 + $0x70] sm:$0xff]
        %v1034 = vld [vmem:[#allocation8 + $0x78] sm:$0xff]
        %v1035 = vld [vmem:[#allocation8 + $0x80] sm:$0xff]
        %v1036 = vld [vmem:[#allocation8 + $0x88] sm:$0xff]
        %v1037 = vld [vmem:[#allocation8 + $0x90] sm:$0xff]
        %v1038 = vld [vmem:[#allocation8 + $0x98] sm:$0xff]
        %v1039 = vld [vmem:[#allocation8 + $0xa0] sm:$0xff]
        %v1040 = vld [vmem:[#allocation8 + $0xa8] sm:$0xff]
        %v1041 = vld [vmem:[#allocation8 + $0xb0] sm:$0xff]
        %v1042 = vld [vmem:[#allocation8 + $0xb8] sm:$0xff]
        %v1043 = vld [vmem:[#allocation8 + $0xc0] sm:$0xff]
        %v1044 = vld [vmem:[#allocation8 + $0xc8] sm:$0xff]
        %v1045 = vld [vmem:[#allocation8 + $0xd0] sm:$0xff]
        %v1046 = vld [vmem:[#allocation8 + $0xd8] sm:$0xff]
        %v1047 = vld [vmem:[#allocation8 + $0xe0] sm:$0xff]
        %v1048 = vld [vmem:[#allocation8 + $0xe8] sm:$0xff]
        %v1049 = vld [vmem:[#allocation8 + $0xf0] sm:$0xff]
        %v1050 = vld [vmem:[#allocation8 + $0xf8] sm:$0xff]
        %v1083 = vunpack.c.l.b16 %v1019
        %v1084 = vunpack.c.h.b16 %v1019
        %v1085 = vunpack.c.l.b16 %v1020
        %v1086 = vunpack.c.h.b16 %v1020
        %v1087 = vunpack.c.l.b16 %v1021
        %v1088 = vunpack.c.h.b16 %v1021
        %v1089 = vunpack.c.l.b16 %v1022
        %v1090 = vunpack.c.h.b16 %v1022
        %v1091 = vunpack.c.l.b16 %v1023
        %v1092 = vunpack.c.h.b16 %v1023
        %v1093 = vunpack.c.l.b16 %v1024
        %v1094 = vunpack.c.h.b16 %v1024
        %v1095 = vunpack.c.l.b16 %v1025
        %v1096 = vunpack.c.h.b16 %v1025
        %v1097 = vunpack.c.l.b16 %v1026
        %v1098 = vunpack.c.h.b16 %v1026
        %v1099 = vunpack.c.l.b16 %v1027
        %v1100 = vunpack.c.h.b16 %v1027
        %v1101 = vunpack.c.l.b16 %v1028
        %v1102 = vunpack.c.h.b16 %v1028
        %v1103 = vunpack.c.l.b16 %v1029
        %v1104 = vunpack.c.h.b16 %v1029
        %v1105 = vunpack.c.l.b16 %v1030
        %v1106 = vunpack.c.h.b16 %v1030
        %v1107 = vunpack.c.l.b16 %v1031
        %v1108 = vunpack.c.h.b16 %v1031
        %v1109 = vunpack.c.l.b16 %v1032
        %v1110 = vunpack.c.h.b16 %v1032
        %v1111 = vunpack.c.l.b16 %v1033
        %v1112 = vunpack.c.h.b16 %v1033
        %v1113 = vunpack.c.l.b16 %v1034
        %v1114 = vunpack.c.h.b16 %v1034
        %v1115 = vunpack.c.l.b16 %v1035
        %v1116 = vunpack.c.h.b16 %v1035
        %v1117 = vunpack.c.l.b16 %v1036
        %v1118 = vunpack.c.h.b16 %v1036
        %v1119 = vunpack.c.l.b16 %v1037
        %v1120 = vunpack.c.h.b16 %v1037
        %v1121 = vunpack.c.l.b16 %v1038
        %v1122 = vunpack.c.h.b16 %v1038
        %v1123 = vunpack.c.l.b16 %v1039
        %v1124 = vunpack.c.h.b16 %v1039
        %v1125 = vunpack.c.l.b16 %v1040
        %v1126 = vunpack.c.h.b16 %v1040
        %v1127 = vunpack.c.l.b16 %v1041
        %v1128 = vunpack.c.h.b16 %v1041
        %v1129 = vunpack.c.l.b16 %v1042
        %v1130 = vunpack.c.h.b16 %v1042
        %v1131 = vunpack.c.l.b16 %v1043
        %v1132 = vunpack.c.h.b16 %v1043
        %v1133 = vunpack.c.l.b16 %v1044
        %v1134 = vunpack.c.h.b16 %v1044
        %v1135 = vunpack.c.l.b16 %v1045
        %v1136 = vunpack.c.h.b16 %v1045
        %v1137 = vunpack.c.l.b16 %v1046
        %v1138 = vunpack.c.h.b16 %v1046
        %v1139 = vunpack.c.l.b16 %v1047
        %v1140 = vunpack.c.h.b16 %v1047
        %v1141 = vunpack.c.l.b16 %v1048
        %v1142 = vunpack.c.h.b16 %v1048
        %v1143 = vunpack.c.l.b16 %v1049
        %v1144 = vunpack.c.h.b16 %v1049
        %v1145 = vunpack.c.l.b16 %v1050
        %v1146 = vunpack.c.h.b16 %v1050
        %v1147 = vpack.c.b16 %v1085, %v1083
        %v1148 = vpack.c.b16 %v1086, %v1084
        %v1149 = vpack.c.b16 %v1089, %v1087
        %v1150 = vpack.c.b16 %v1090, %v1088
        %v1151 = vpack.c.b16 %v1093, %v1091
        %v1152 = vpack.c.b16 %v1094, %v1092
        %v1153 = vpack.c.b16 %v1097, %v1095
        %v1154 = vpack.c.b16 %v1098, %v1096
        %v1155 = vpack.c.b16 %v1101, %v1099
        %v1156 = vpack.c.b16 %v1102, %v1100
        %v1157 = vpack.c.b16 %v1105, %v1103
        %v1158 = vpack.c.b16 %v1106, %v1104
        %v1159 = vpack.c.b16 %v1109, %v1107
        %v1160 = vpack.c.b16 %v1110, %v1108
        %v1161 = vpack.c.b16 %v1113, %v1111
        %v1162 = vpack.c.b16 %v1114, %v1112
        %v1163 = vpack.c.b16 %v1117, %v1115
        %v1164 = vpack.c.b16 %v1118, %v1116
        %v1165 = vpack.c.b16 %v1121, %v1119
        %v1166 = vpack.c.b16 %v1122, %v1120
        %v1167 = vpack.c.b16 %v1125, %v1123
        %v1168 = vpack.c.b16 %v1126, %v1124
        %v1169 = vpack.c.b16 %v1129, %v1127
        %v1170 = vpack.c.b16 %v1130, %v1128
        %v1171 = vpack.c.b16 %v1133, %v1131
        %v1172 = vpack.c.b16 %v1134, %v1132
        %v1173 = vpack.c.b16 %v1137, %v1135
        %v1174 = vpack.c.b16 %v1138, %v1136
        %v1175 = vpack.c.b16 %v1141, %v1139
        %v1176 = vpack.c.b16 %v1142, %v1140
        %v1177 = vpack.c.b16 %v1145, %v1143
        %v1178 = vpack.c.b16 %v1146, %v1144
        %1211 = vmatprep.subr.bf16.mxu0 %v1148
        %1212 = vmatpush1.bf16.msra.mxu0 %v1147
        %1213 = vmatprep.subr.bf16.mxu0 %v1150
        %1214 = vmatpush1.bf16.msra.mxu0 %v1149
        %1215 = vmatprep.subr.bf16.mxu0 %v1152
        %1216 = vmatpush1.bf16.msra.mxu0 %v1151
        %1217 = vmatprep.subr.bf16.mxu0 %v1154
        %1218 = vmatpush1.bf16.msra.mxu0 %v1153
        %1219 = vmatprep.subr.bf16.mxu0 %v1156
        %1220 = vmatpush1.bf16.msra.mxu0 %v1155
        %1221 = vmatprep.subr.bf16.mxu0 %v1158
        %1222 = vmatpush1.bf16.msra.mxu0 %v1157
        %1223 = vmatprep.subr.bf16.mxu0 %v1160
        %1224 = vmatpush1.bf16.msra.mxu0 %v1159
        %1225 = vmatprep.subr.bf16.mxu0 %v1162
        %1226 = vmatpush1.bf16.msra.mxu0 %v1161
        %1227 = vmatprep.subr.bf16.mxu0 %v1164
        %1228 = vmatpush1.bf16.msra.mxu0 %v1163
        %1229 = vmatprep.subr.bf16.mxu0 %v1166
        %1230 = vmatpush1.bf16.msra.mxu0 %v1165
        %1231 = vmatprep.subr.bf16.mxu0 %v1168
        %1232 = vmatpush1.bf16.msra.mxu0 %v1167
        %1233 = vmatprep.subr.bf16.mxu0 %v1170
        %1234 = vmatpush1.bf16.msra.mxu0 %v1169
        %1235 = vmatprep.subr.bf16.mxu0 %v1172
        %1236 = vmatpush1.bf16.msra.mxu0 %v1171
        %1237 = vmatprep.subr.bf16.mxu0 %v1174
        %1238 = vmatpush1.bf16.msra.mxu0 %v1173
        %1239 = vmatprep.subr.bf16.mxu0 %v1176
        %1240 = vmatpush1.bf16.msra.mxu0 %v1175
        %1241 = vmatprep.subr.bf16.mxu0 %v1178
        %1242 = vmatpush1.bf16.msra.mxu0 %v1177
        %1243 = vmatprep.mubr.bf16.mxu0 %v623
        %1244 = vmatmul.mubr.bf16.gmra.mrb[0].mxu0 %v622
        %v1245 = vpop.f32.mrb[0].mxu0
        %v1246 = vadd.f32 0.0, %v1245
        %v1247 = vpop.f32.mrb[0].mxu0
        %v1248 = vadd.f32 0.0, %v1247
        %v1249 = vpop.f32.mrb[0].mxu0
        %v1250 = vadd.f32 0.0, %v1249
        %v1251 = vpop.f32.mrb[0].mxu0
        %v1252 = vadd.f32 0.0, %v1251
        %1253 = vmatprep.mubr.bf16.mxu0 %v625
        %1254 = vmatmul.mubr.bf16.gmra.mrb[0].mxu0 %v624
        %v1255 = vpop.f32.mrb[0].mxu0
        %v1256 = vadd.f32 0.0, %v1255
        %v1257 = vpop.f32.mrb[0].mxu0
        %v1258 = vadd.f32 0.0, %v1257
        %v1259 = vpop.f32.mrb[0].mxu0
        %v1260 = vadd.f32 0.0, %v1259
        %v1261 = vpop.f32.mrb[0].mxu0
        %v1262 = vadd.f32 0.0, %v1261
        %1263 = vmatprep.mubr.bf16.mxu0 %v627
        %1264 = vmatmul.mubr.bf16.gmra.mrb[0].mxu0 %v626
        %v1265 = vpop.f32.mrb[0].mxu0
        %v1266 = vadd.f32 0.0, %v1265
        %v1267 = vpop.f32.mrb[0].mxu0
        %v1268 = vadd.f32 0.0, %v1267
        %v1269 = vpop.f32.mrb[0].mxu0
        %v1270 = vadd.f32 0.0, %v1269
        %v1271 = vpop.f32.mrb[0].mxu0
        %v1272 = vadd.f32 0.0, %v1271
        %1273 = vmatprep.mubr.bf16.mxu0 %v629
        %1274 = vmatmul.mubr.bf16.gmra.mrb[0].mxu0 %v628
        %v1275 = vpop.f32.mrb[0].mxu0
        %v1276 = vadd.f32 0.0, %v1275
        %v1277 = vpop.f32.mrb[0].mxu0
        %v1278 = vadd.f32 0.0, %v1277
        %v1279 = vpop.f32.mrb[0].mxu0
        %v1280 = vadd.f32 0.0, %v1279
        %v1281 = vpop.f32.mrb[0].mxu0
        %v1282 = vadd.f32 0.0, %v1281
        %1283 = vmatprep.mubr.bf16.mxu0 %v631
        %1284 = vmatmul.mubr.bf16.gmra.mrb[0].mxu0 %v630
        %v1285 = vpop.f32.mrb[0].mxu0
        %v1286 = vadd.f32 0.0, %v1285
        %v1287 = vpop.f32.mrb[0].mxu0
        %v1288 = vadd.f32 0.0, %v1287
        %v1289 = vpop.f32.mrb[0].mxu0
        %v1290 = vadd.f32 0.0, %v1289
        %v1291 = vpop.f32.mrb[0].mxu0
        %v1292 = vadd.f32 0.0, %v1291
        %1293 = vmatprep.mubr.bf16.mxu0 %v633
        %1294 = vmatmul.mubr.bf16.gmra.mrb[0].mxu0 %v632
        %v1295 = vpop.f32.mrb[0].mxu0
        %v1296 = vadd.f32 0.0, %v1295
        %v1297 = vpop.f32.mrb[0].mxu0
        %v1298 = vadd.f32 0.0, %v1297
        %v1299 = vpop.f32.mrb[0].mxu0
        %v1300 = vadd.f32 0.0, %v1299
        %v1301 = vpop.f32.mrb[0].mxu0
        %v1302 = vadd.f32 0.0, %v1301
        %1303 = vmatprep.mubr.bf16.mxu0 %v635
        %1304 = vmatmul.mubr.bf16.gmra.mrb[0].mxu0 %v634
        %v1305 = vpop.f32.mrb[0].mxu0
        %v1306 = vadd.f32 0.0, %v1305
        %v1307 = vpop.f32.mrb[0].mxu0
        %v1308 = vadd.f32 0.0, %v1307
        %v1309 = vpop.f32.mrb[0].mxu0
        %v1310 = vadd.f32 0.0, %v1309
        %v1311 = vpop.f32.mrb[0].mxu0
        %v1312 = vadd.f32 0.0, %v1311
        %1313 = vmatprep.mubr.bf16.mxu0 %v637
        %1314 = vmatmul.mubr.bf16.gmra.mrb[0].mxu0 %v636
        %v1315 = vpop.f32.mrb[0].mxu0
        %v1316 = vadd.f32 0.0, %v1315
        %v1317 = vpop.f32.mrb[0].mxu0
        %v1318 = vadd.f32 0.0, %v1317
        %v1319 = vpop.f32.mrb[0].mxu0
        %v1320 = vadd.f32 0.0, %v1319
        %v1321 = vpop.f32.mrb[0].mxu0
        %v1322 = vadd.f32 0.0, %v1321
        %1323 = vmatprep.mubr.bf16.mxu0 %v639
        %1324 = vmatmul.mubr.bf16.gmra.mrb[0].mxu0 %v638
        %v1325 = vpop.f32.mrb[0].mxu0
        %v1326 = vadd.f32 0.0, %v1325
        %v1327 = vpop.f32.mrb[0].mxu0
        %v1328 = vadd.f32 0.0, %v1327
        %v1329 = vpop.f32.mrb[0].mxu0
        %v1330 = vadd.f32 0.0, %v1329
        %v1331 = vpop.f32.mrb[0].mxu0
        %v1332 = vadd.f32 0.0, %v1331
        %1333 = vmatprep.mubr.bf16.mxu0 %v641
        %1334 = vmatmul.mubr.bf16.gmra.mrb[0].mxu0 %v640
        %v1335 = vpop.f32.mrb[0].mxu0
        %v1336 = vadd.f32 0.0, %v1335
        %v1337 = vpop.f32.mrb[0].mxu0
        %v1338 = vadd.f32 0.0, %v1337
        %v1339 = vpop.f32.mrb[0].mxu0
        %v1340 = vadd.f32 0.0, %v1339
        %v1341 = vpop.f32.mrb[0].mxu0
        %v1342 = vadd.f32 0.0, %v1341
        %1343 = vmatprep.mubr.bf16.mxu0 %v643
        %1344 = vmatmul.mubr.bf16.gmra.mrb[0].mxu0 %v642
        %v1345 = vpop.f32.mrb[0].mxu0
        %v1346 = vadd.f32 0.0, %v1345
        %v1347 = vpop.f32.mrb[0].mxu0
        %v1348 = vadd.f32 0.0, %v1347
        %v1349 = vpop.f32.mrb[0].mxu0
        %v1350 = vadd.f32 0.0, %v1349
        %v1351 = vpop.f32.mrb[0].mxu0
        %v1352 = vadd.f32 0.0, %v1351
        %1353 = vmatprep.mubr.bf16.mxu0 %v645
        %1354 = vmatmul.mubr.bf16.gmra.mrb[0].mxu0 %v644
        %v1355 = vpop.f32.mrb[0].mxu0
        %v1356 = vadd.f32 0.0, %v1355
        %v1357 = vpop.f32.mrb[0].mxu0
        %v1358 = vadd.f32 0.0, %v1357
        %v1359 = vpop.f32.mrb[0].mxu0
        %v1360 = vadd.f32 0.0, %v1359
        %v1361 = vpop.f32.mrb[0].mxu0
        %v1362 = vadd.f32 0.0, %v1361
        %1363 = vmatprep.mubr.bf16.mxu0 %v647
        %1364 = vmatmul.mubr.bf16.gmra.mrb[0].mxu0 %v646
        %v1365 = vpop.f32.mrb[0].mxu0
        %v1366 = vadd.f32 0.0, %v1365
        %v1367 = vpop.f32.mrb[0].mxu0
        %v1368 = vadd.f32 0.0, %v1367
        %v1369 = vpop.f32.mrb[0].mxu0
        %v1370 = vadd.f32 0.0, %v1369
        %v1371 = vpop.f32.mrb[0].mxu0
        %v1372 = vadd.f32 0.0, %v1371
        %1373 = vmatprep.mubr.bf16.mxu0 %v649
        %1374 = vmatmul.mubr.bf16.gmra.mrb[0].mxu0 %v648
        %v1375 = vpop.f32.mrb[0].mxu0
        %v1376 = vadd.f32 0.0, %v1375
        %v1377 = vpop.f32.mrb[0].mxu0
        %v1378 = vadd.f32 0.0, %v1377
        %v1379 = vpop.f32.mrb[0].mxu0
        %v1380 = vadd.f32 0.0, %v1379
        %v1381 = vpop.f32.mrb[0].mxu0
        %v1382 = vadd.f32 0.0, %v1381
        %1383 = vmatprep.mubr.bf16.mxu0 %v651
        %1384 = vmatmul.mubr.bf16.gmra.mrb[0].mxu0 %v650
        %v1385 = vpop.f32.mrb[0].mxu0
        %v1386 = vadd.f32 0.0, %v1385
        %v1387 = vpop.f32.mrb[0].mxu0
        %v1388 = vadd.f32 0.0, %v1387
        %v1389 = vpop.f32.mrb[0].mxu0
        %v1390 = vadd.f32 0.0, %v1389
        %v1391 = vpop.f32.mrb[0].mxu0
        %v1392 = vadd.f32 0.0, %v1391
        %1393 = vmatprep.mubr.bf16.mxu0 %v653
        %1394 = vmatmul.mubr.bf16.gmra.mrb[0].mxu0 %v652
        %v1395 = vpop.f32.mrb[0].mxu0
        %v1396 = vadd.f32 0.0, %v1395
        %v1397 = vpop.f32.mrb[0].mxu0
        %v1398 = vadd.f32 0.0, %v1397
        %v1399 = vpop.f32.mrb[0].mxu0
        %v1400 = vadd.f32 0.0, %v1399
        %v1401 = vpop.f32.mrb[0].mxu0
        %v1402 = vadd.f32 0.0, %v1401
        %1403 = vdwg.mxu0
        %v1404 = vadd.f32 %v955, %v1246
        %v1405 = vadd.f32 %v956, %v1248
        %v1406 = vadd.f32 %v957, %v1250
        %v1407 = vadd.f32 %v958, %v1252
        %v1408 = vadd.f32 %v959, %v1256
        %v1409 = vadd.f32 %v960, %v1258
        %v1410 = vadd.f32 %v961, %v1260
        %v1411 = vadd.f32 %v962, %v1262
        %v1412 = vadd.f32 %v963, %v1266
        %v1413 = vadd.f32 %v964, %v1268
        %v1414 = vadd.f32 %v965, %v1270
        %v1415 = vadd.f32 %v966, %v1272
        %v1416 = vadd.f32 %v967, %v1276
        %v1417 = vadd.f32 %v968, %v1278
        %v1418 = vadd.f32 %v969, %v1280
        %v1419 = vadd.f32 %v970, %v1282
        %v1420 = vadd.f32 %v971, %v1286
        %v1421 = vadd.f32 %v972, %v1288
        %v1422 = vadd.f32 %v973, %v1290
        %v1423 = vadd.f32 %v974, %v1292
        %v1424 = vadd.f32 %v975, %v1296
        %v1425 = vadd.f32 %v976, %v1298
        %v1426 = vadd.f32 %v977, %v1300
        %v1427 = vadd.f32 %v978, %v1302
        %v1428 = vadd.f32 %v979, %v1306
        %v1429 = vadd.f32 %v980, %v1308
        %v1430 = vadd.f32 %v981, %v1310
        %v1431 = vadd.f32 %v982, %v1312
        %v1432 = vadd.f32 %v983, %v1316
        %v1433 = vadd.f32 %v984, %v1318
        %v1434 = vadd.f32 %v985, %v1320
        %v1435 = vadd.f32 %v986, %v1322
        %v1436 = vadd.f32 %v987, %v1326
        %v1437 = vadd.f32 %v988, %v1328
        %v1438 = vadd.f32 %v989, %v1330
        %v1439 = vadd.f32 %v990, %v1332
        %v1440 = vadd.f32 %v991, %v1336
        %v1441 = vadd.f32 %v992, %v1338
        %v1442 = vadd.f32 %v993, %v1340
        %v1443 = vadd.f32 %v994, %v1342
        %v1444 = vadd.f32 %v995, %v1346
        %v1445 = vadd.f32 %v996, %v1348
        %v1446 = vadd.f32 %v997, %v1350
        %v1447 = vadd.f32 %v998, %v1352
        %v1448 = vadd.f32 %v999, %v1356
        %v1449 = vadd.f32 %v1000, %v1358
        %v1450 = vadd.f32 %v1001, %v1360
        %v1451 = vadd.f32 %v1002, %v1362
        %v1452 = vadd.f32 %v1003, %v1366
        %v1453 = vadd.f32 %v1004, %v1368
        %v1454 = vadd.f32 %v1005, %v1370
        %v1455 = vadd.f32 %v1006, %v1372
        %v1456 = vadd.f32 %v1007, %v1376
        %v1457 = vadd.f32 %v1008, %v1378
        %v1458 = vadd.f32 %v1009, %v1380
        %v1459 = vadd.f32 %v1010, %v1382
        %v1460 = vadd.f32 %v1011, %v1386
        %v1461 = vadd.f32 %v1012, %v1388
        %v1462 = vadd.f32 %v1013, %v1390
        %v1463 = vadd.f32 %v1014, %v1392
        %v1464 = vadd.f32 %v1015, %v1396
        %v1465 = vadd.f32 %v1016, %v1398
        %v1466 = vadd.f32 %v1017, %v1400
        %v1467 = vadd.f32 %v1018, %v1402
        %v1468 = vmul.f32 %v1404, 0.5
        %v1469 = vmul.f32 %v1405, 0.5
        %v1470 = vmul.f32 %v1406, 0.5
        %v1471 = vmul.f32 %v1407, 0.5
        %v1472 = vmul.f32 %v1408, 0.5
        %v1473 = vmul.f32 %v1409, 0.5
        %v1474 = vmul.f32 %v1410, 0.5
        %v1475 = vmul.f32 %v1411, 0.5
        %v1476 = vmul.f32 %v1412, 0.5
        %v1477 = vmul.f32 %v1413, 0.5
        %v1478 = vmul.f32 %v1414, 0.5
        %v1479 = vmul.f32 %v1415, 0.5
        %v1480 = vmul.f32 %v1416, 0.5
        %v1481 = vmul.f32 %v1417, 0.5
        %v1482 = vmul.f32 %v1418, 0.5
        %v1483 = vmul.f32 %v1419, 0.5
        %v1484 = vmul.f32 %v1420, 0.5
        %v1485 = vmul.f32 %v1421, 0.5
        %v1486 = vmul.f32 %v1422, 0.5
        %v1487 = vmul.f32 %v1423, 0.5
        %v1488 = vmul.f32 %v1424, 0.5
        %v1489 = vmul.f32 %v1425, 0.5
        %v1490 = vmul.f32 %v1426, 0.5
        %v1491 = vmul.f32 %v1427, 0.5
        %v1492 = vmul.f32 %v1428, 0.5
        %v1493 = vmul.f32 %v1429, 0.5
        %v1494 = vmul.f32 %v1430, 0.5
        %v1495 = vmul.f32 %v1431, 0.5
        %v1496 = vmul.f32 %v1432, 0.5
        %v1497 = vmul.f32 %v1433, 0.5
        %v1498 = vmul.f32 %v1434, 0.5
        %v1499 = vmul.f32 %v1435, 0.5
        %v1500 = vmul.f32 %v1436, 0.5
        %v1501 = vmul.f32 %v1437, 0.5
        %v1502 = vmul.f32 %v1438, 0.5
        %v1503 = vmul.f32 %v1439, 0.5
        %v1504 = vmul.f32 %v1440, 0.5
        %v1505 = vmul.f32 %v1441, 0.5
        %v1506 = vmul.f32 %v1442, 0.5
        %v1507 = vmul.f32 %v1443, 0.5
        %v1508 = vmul.f32 %v1444, 0.5
        %v1509 = vmul.f32 %v1445, 0.5
        %v1510 = vmul.f32 %v1446, 0.5
        %v1511 = vmul.f32 %v1447, 0.5
        %v1512 = vmul.f32 %v1448, 0.5
        %v1513 = vmul.f32 %v1449, 0.5
        %v1514 = vmul.f32 %v1450, 0.5
        %v1515 = vmul.f32 %v1451, 0.5
        %v1516 = vmul.f32 %v1452, 0.5
        %v1517 = vmul.f32 %v1453, 0.5
        %v1518 = vmul.f32 %v1454, 0.5
        %v1519 = vmul.f32 %v1455, 0.5
        %v1520 = vmul.f32 %v1456, 0.5
        %v1521 = vmul.f32 %v1457, 0.5
        %v1522 = vmul.f32 %v1458, 0.5
        %v1523 = vmul.f32 %v1459, 0.5
        %v1524 = vmul.f32 %v1460, 0.5
        %v1525 = vmul.f32 %v1461, 0.5
        %v1526 = vmul.f32 %v1462, 0.5
        %v1527 = vmul.f32 %v1463, 0.5
        %v1528 = vmul.f32 %v1464, 0.5
        %v1529 = vmul.f32 %v1465, 0.5
        %v1530 = vmul.f32 %v1466, 0.5
        %v1531 = vmul.f32 %v1467, 0.5
        %v1532 = vmul.f32 %v1404, 0.70710677
        %v1533 = vmul.f32 %v1405, 0.70710677
        %v1534 = vmul.f32 %v1406, 0.70710677
        %v1535 = vmul.f32 %v1407, 0.70710677
        %v1536 = vmul.f32 %v1408, 0.70710677
        %v1537 = vmul.f32 %v1409, 0.70710677
        %v1538 = vmul.f32 %v1410, 0.70710677
        %v1539 = vmul.f32 %v1411, 0.70710677
        %v1540 = vmul.f32 %v1412, 0.70710677
        %v1541 = vmul.f32 %v1413, 0.70710677
        %v1542 = vmul.f32 %v1414, 0.70710677
        %v1543 = vmul.f32 %v1415, 0.70710677
        %v1544 = vmul.f32 %v1416, 0.70710677
        %v1545 = vmul.f32 %v1417, 0.70710677
        %v1546 = vmul.f32 %v1418, 0.70710677
        %v1547 = vmul.f32 %v1419, 0.70710677
        %v1548 = vmul.f32 %v1420, 0.70710677
        %v1549 = vmul.f32 %v1421, 0.70710677
        %v1550 = vmul.f32 %v1422, 0.70710677
        %v1551 = vmul.f32 %v1423, 0.70710677
        %v1552 = vmul.f32 %v1424, 0.70710677
        %v1553 = vmul.f32 %v1425, 0.70710677
        %v1554 = vmul.f32 %v1426, 0.70710677
        %v1555 = vmul.f32 %v1427, 0.70710677
        %v1556 = vmul.f32 %v1428, 0.70710677
        %v1557 = vmul.f32 %v1429, 0.70710677
        %v1558 = vmul.f32 %v1430, 0.70710677
        %v1559 = vmul.f32 %v1431, 0.70710677
        %v1560 = vmul.f32 %v1432, 0.70710677
        %v1561 = vmul.f32 %v1433, 0.70710677
        %v1562 = vmul.f32 %v1434, 0.70710677
        %v1563 = vmul.f32 %v1435, 0.70710677
        %v1564 = vmul.f32 %v1436, 0.70710677
        %v1565 = vmul.f32 %v1437, 0.70710677
        %v1566 = vmul.f32 %v1438, 0.70710677
        %v1567 = vmul.f32 %v1439, 0.70710677
        %v1568 = vmul.f32 %v1440, 0.70710677
        %v1569 = vmul.f32 %v1441, 0.70710677
        %v1570 = vmul.f32 %v1442, 0.70710677
        %v1571 = vmul.f32 %v1443, 0.70710677
        %v1572 = vmul.f32 %v1444, 0.70710677
        %v1573 = vmul.f32 %v1445, 0.70710677
        %v1574 = vmul.f32 %v1446, 0.70710677
        %v1575 = vmul.f32 %v1447, 0.70710677
        %v1576 = vmul.f32 %v1448, 0.70710677
        %v1577 = vmul.f32 %v1449, 0.70710677
        %v1578 = vmul.f32 %v1450, 0.70710677
        %v1579 = vmul.f32 %v1451, 0.70710677
        %v1580 = vmul.f32 %v1452, 0.70710677
        %v1581 = vmul.f32 %v1453, 0.70710677
        %v1582 = vmul.f32 %v1454, 0.70710677
        %v1583 = vmul.f32 %v1455, 0.70710677
        %v1584 = vmul.f32 %v1456, 0.70710677
        %v1585 = vmul.f32 %v1457, 0.70710677
        %v1586 = vmul.f32 %v1458, 0.70710677
        %v1587 = vmul.f32 %v1459, 0.70710677
        %v1588 = vmul.f32 %v1460, 0.70710677
        %v1589 = vmul.f32 %v1461, 0.70710677
        %v1590 = vmul.f32 %v1462, 0.70710677
        %v1591 = vmul.f32 %v1463, 0.70710677
        %v1592 = vmul.f32 %v1464, 0.70710677
        %v1593 = vmul.f32 %v1465, 0.70710677
        %v1594 = vmul.f32 %v1466, 0.70710677
        %v1595 = vmul.f32 %v1467, 0.70710677
        %v1596 = verf.f32.pop %v1532
        %v1597 = verf.f32.pop %v1533
        %v1598 = verf.f32.pop %v1534
        %v1599 = verf.f32.pop %v1535
        %v1600 = verf.f32.pop %v1536
        %v1601 = verf.f32.pop %v1537
        %v1602 = verf.f32.pop %v1538
        %v1603 = verf.f32.pop %v1539
        %v1604 = verf.f32.pop %v1540
        %v1605 = verf.f32.pop %v1541
        %v1606 = verf.f32.pop %v1542
        %v1607 = verf.f32.pop %v1543
        %v1608 = verf.f32.pop %v1544
        %v1609 = verf.f32.pop %v1545
        %v1610 = verf.f32.pop %v1546
        %v1611 = verf.f32.pop %v1547
        %v1612 = verf.f32.pop %v1548
        %v1613 = verf.f32.pop %v1549
        %v1614 = verf.f32.pop %v1550
        %v1615 = verf.f32.pop %v1551
        %v1616 = verf.f32.pop %v1552
        %v1617 = verf.f32.pop %v1553
        %v1618 = verf.f32.pop %v1554
        %v1619 = verf.f32.pop %v1555
        %v1620 = verf.f32.pop %v1556
        %v1621 = verf.f32.pop %v1557
        %v1622 = verf.f32.pop %v1558
        %v1623 = verf.f32.pop %v1559
        %v1624 = verf.f32.pop %v1560
        %v1625 = verf.f32.pop %v1561
        %v1626 = verf.f32.pop %v1562
        %v1627 = verf.f32.pop %v1563
        %v1628 = verf.f32.pop %v1564
        %v1629 = verf.f32.pop %v1565
        %v1630 = verf.f32.pop %v1566
        %v1631 = verf.f32.pop %v1567
        %v1632 = verf.f32.pop %v1568
        %v1633 = verf.f32.pop %v1569
        %v1634 = verf.f32.pop %v1570
        %v1635 = verf.f32.pop %v1571
        %v1636 = verf.f32.pop %v1572
        %v1637 = verf.f32.pop %v1573
        %v1638 = verf.f32.pop %v1574
        %v1639 = verf.f32.pop %v1575
        %v1640 = verf.f32.pop %v1576
        %v1641 = verf.f32.pop %v1577
        %v1642 = verf.f32.pop %v1578
        %v1643 = verf.f32.pop %v1579
        %v1644 = verf.f32.pop %v1580
        %v1645 = verf.f32.pop %v1581
        %v1646 = verf.f32.pop %v1582
        %v1647 = verf.f32.pop %v1583
        %v1648 = verf.f32.pop %v1584
        %v1649 = verf.f32.pop %v1585
        %v1650 = verf.f32.pop %v1586
        %v1651 = verf.f32.pop %v1587
        %v1652 = verf.f32.pop %v1588
        %v1653 = verf.f32.pop %v1589
        %v1654 = verf.f32.pop %v1590
        %v1655 = verf.f32.pop %v1591
        %v1656 = verf.f32.pop %v1592
        %v1657 = verf.f32.pop %v1593
        %v1658 = verf.f32.pop %v1594
        %v1659 = verf.f32.pop %v1595
        %v1660 = vadd.f32 %v1596, 1.0
        %v1661 = vadd.f32 %v1597, 1.0
        %v1662 = vadd.f32 %v1598, 1.0
        %v1663 = vadd.f32 %v1599, 1.0
        %v1664 = vadd.f32 %v1600, 1.0
        %v1665 = vadd.f32 %v1601, 1.0
        %v1666 = vadd.f32 %v1602, 1.0
        %v1667 = vadd.f32 %v1603, 1.0
        %v1668 = vadd.f32 %v1604, 1.0
        %v1669 = vadd.f32 %v1605, 1.0
        %v1670 = vadd.f32 %v1606, 1.0
        %v1671 = vadd.f32 %v1607, 1.0
        %v1672 = vadd.f32 %v1608, 1.0
        %v1673 = vadd.f32 %v1609, 1.0
        %v1674 = vadd.f32 %v1610, 1.0
        %v1675 = vadd.f32 %v1611, 1.0
        %v1676 = vadd.f32 %v1612, 1.0
        %v1677 = vadd.f32 %v1613, 1.0
        %v1678 = vadd.f32 %v1614, 1.0
        %v1679 = vadd.f32 %v1615, 1.0
        %v1680 = vadd.f32 %v1616, 1.0
        %v1681 = vadd.f32 %v1617, 1.0
        %v1682 = vadd.f32 %v1618, 1.0
        %v1683 = vadd.f32 %v1619, 1.0
        %v1684 = vadd.f32 %v1620, 1.0
        %v1685 = vadd.f32 %v1621, 1.0
        %v1686 = vadd.f32 %v1622, 1.0
        %v1687 = vadd.f32 %v1623, 1.0
        %v1688 = vadd.f32 %v1624, 1.0
        %v1689 = vadd.f32 %v1625, 1.0
        %v1690 = vadd.f32 %v1626, 1.0
        %v1691 = vadd.f32 %v1627, 1.0
        %v1692 = vadd.f32 %v1628, 1.0
        %v1693 = vadd.f32 %v1629, 1.0
        %v1694 = vadd.f32 %v1630, 1.0
        %v1695 = vadd.f32 %v1631, 1.0
        %v1696 = vadd.f32 %v1632, 1.0
        %v1697 = vadd.f32 %v1633, 1.0
        %v1698 = vadd.f32 %v1634, 1.0
        %v1699 = vadd.f32 %v1635, 1.0
        %v1700 = vadd.f32 %v1636, 1.0
        %v1701 = vadd.f32 %v1637, 1.0
        %v1702 = vadd.f32 %v1638, 1.0
        %v1703 = vadd.f32 %v1639, 1.0
        %v1704 = vadd.f32 %v1640, 1.0
        %v1705 = vadd.f32 %v1641, 1.0
        %v1706 = vadd.f32 %v1642, 1.0
        %v1707 = vadd.f32 %v1643, 1.0
        %v1708 = vadd.f32 %v1644, 1.0
        %v1709 = vadd.f32 %v1645, 1.0
        %v1710 = vadd.f32 %v1646, 1.0
        %v1711 = vadd.f32 %v1647, 1.0
        %v1712 = vadd.f32 %v1648, 1.0
        %v1713 = vadd.f32 %v1649, 1.0
        %v1714 = vadd.f32 %v1650, 1.0
        %v1715 = vadd.f32 %v1651, 1.0
        %v1716 = vadd.f32 %v1652, 1.0
        %v1717 = vadd.f32 %v1653, 1.0
        %v1718 = vadd.f32 %v1654, 1.0
        %v1719 = vadd.f32 %v1655, 1.0
        %v1720 = vadd.f32 %v1656, 1.0
        %v1721 = vadd.f32 %v1657, 1.0
        %v1722 = vadd.f32 %v1658, 1.0
        %v1723 = vadd.f32 %v1659, 1.0
        %v1724 = vmul.f32 %v1468, %v1660
        %v1725 = vmul.f32 %v1469, %v1661
        %v1726 = vmul.f32 %v1470, %v1662
        %v1727 = vmul.f32 %v1471, %v1663
        %v1728 = vmul.f32 %v1472, %v1664
        %v1729 = vmul.f32 %v1473, %v1665
        %v1730 = vmul.f32 %v1474, %v1666
        %v1731 = vmul.f32 %v1475, %v1667
        %v1732 = vmul.f32 %v1476, %v1668
        %v1733 = vmul.f32 %v1477, %v1669
        %v1734 = vmul.f32 %v1478, %v1670
        %v1735 = vmul.f32 %v1479, %v1671
        %v1736 = vmul.f32 %v1480, %v1672
        %v1737 = vmul.f32 %v1481, %v1673
        %v1738 = vmul.f32 %v1482, %v1674
        %v1739 = vmul.f32 %v1483, %v1675
        %v1740 = vmul.f32 %v1484, %v1676
        %v1741 = vmul.f32 %v1485, %v1677
        %v1742 = vmul.f32 %v1486, %v1678
        %v1743 = vmul.f32 %v1487, %v1679
        %v1744 = vmul.f32 %v1488, %v1680
        %v1745 = vmul.f32 %v1489, %v1681
        %v1746 = vmul.f32 %v1490, %v1682
        %v1747 = vmul.f32 %v1491, %v1683
        %v1748 = vmul.f32 %v1492, %v1684
        %v1749 = vmul.f32 %v1493, %v1685
        %v1750 = vmul.f32 %v1494, %v1686
        %v1751 = vmul.f32 %v1495, %v1687
        %v1752 = vmul.f32 %v1496, %v1688
        %v1753 = vmul.f32 %v1497, %v1689
        %v1754 = vmul.f32 %v1498, %v1690
        %v1755 = vmul.f32 %v1499, %v1691
        %v1756 = vmul.f32 %v1500, %v1692
        %v1757 = vmul.f32 %v1501, %v1693
        %v1758 = vmul.f32 %v1502, %v1694
        %v1759 = vmul.f32 %v1503, %v1695
        %v1760 = vmul.f32 %v1504, %v1696
        %v1761 = vmul.f32 %v1505, %v1697
        %v1762 = vmul.f32 %v1506, %v1698
        %v1763 = vmul.f32 %v1507, %v1699
        %v1764 = vmul.f32 %v1508, %v1700
        %v1765 = vmul.f32 %v1509, %v1701
        %v1766 = vmul.f32 %v1510, %v1702
        %v1767 = vmul.f32 %v1511, %v1703
        %v1768 = vmul.f32 %v1512, %v1704
        %v1769 = vmul.f32 %v1513, %v1705
        %v1770 = vmul.f32 %v1514, %v1706
        %v1771 = vmul.f32 %v1515, %v1707
        %v1772 = vmul.f32 %v1516, %v1708
        %v1773 = vmul.f32 %v1517, %v1709
        %v1774 = vmul.f32 %v1518, %v1710
        %v1775 = vmul.f32 %v1519, %v1711
        %v1776 = vmul.f32 %v1520, %v1712
        %v1777 = vmul.f32 %v1521, %v1713
        %v1778 = vmul.f32 %v1522, %v1714
        %v1779 = vmul.f32 %v1523, %v1715
        %v1780 = vmul.f32 %v1524, %v1716
        %v1781 = vmul.f32 %v1525, %v1717
        %v1782 = vmul.f32 %v1526, %v1718
        %v1783 = vmul.f32 %v1527, %v1719
        %v1784 = vmul.f32 %v1528, %v1720
        %v1785 = vmul.f32 %v1529, %v1721
        %v1786 = vmul.f32 %v1530, %v1722
        %v1787 = vmul.f32 %v1531, %v1723
        %v1788 = vadd.f32 %v1724, %v1725
        %1789 = vadd.xlane.f32.xlu0 %v1788
        %v1790 = vpop.xlane.xlu0 %1789
        %v1791 = vadd.f32 %v1726, %v1727
        %1792 = vadd.xlane.f32.xlu0 %v1791
        %v1793 = vpop.xlane.xlu0 %1792
        %v1794 = vadd.f32 %v1728, %v1729
        %1795 = vadd.xlane.f32.xlu0 %v1794
        %v1796 = vpop.xlane.xlu0 %1795
        %v1797 = vadd.f32 %v1730, %v1731
        %1798 = vadd.xlane.f32.xlu0 %v1797
        %v1799 = vpop.xlane.xlu0 %1798
        %v1800 = vadd.f32 %v1732, %v1733
        %1801 = vadd.xlane.f32.xlu0 %v1800
        %v1802 = vpop.xlane.xlu0 %1801
        %v1803 = vadd.f32 %v1734, %v1735
        %1804 = vadd.xlane.f32.xlu0 %v1803
        %v1805 = vpop.xlane.xlu0 %1804
        %v1806 = vadd.f32 %v1736, %v1737
        %1807 = vadd.xlane.f32.xlu0 %v1806
        %v1808 = vpop.xlane.xlu0 %1807
        %v1809 = vadd.f32 %v1738, %v1739
        %1810 = vadd.xlane.f32.xlu0 %v1809
        %v1811 = vpop.xlane.xlu0 %1810
        %v1812 = vadd.f32 %v1740, %v1741
        %1813 = vadd.xlane.f32.xlu0 %v1812
        %v1814 = vpop.xlane.xlu0 %1813
        %v1815 = vadd.f32 %v1742, %v1743
        %1816 = vadd.xlane.f32.xlu0 %v1815
        %v1817 = vpop.xlane.xlu0 %1816
        %v1818 = vadd.f32 %v1744, %v1745
        %1819 = vadd.xlane.f32.xlu0 %v1818
        %v1820 = vpop.xlane.xlu0 %1819
        %v1821 = vadd.f32 %v1746, %v1747
        %1822 = vadd.xlane.f32.xlu0 %v1821
        %v1823 = vpop.xlane.xlu0 %1822
        %v1824 = vadd.f32 %v1748, %v1749
        %1825 = vadd.xlane.f32.xlu0 %v1824
        %v1826 = vpop.xlane.xlu0 %1825
        %v1827 = vadd.f32 %v1750, %v1751
        %1828 = vadd.xlane.f32.xlu0 %v1827
        %v1829 = vpop.xlane.xlu0 %1828
        %v1830 = vadd.f32 %v1752, %v1753
        %1831 = vadd.xlane.f32.xlu0 %v1830
        %v1832 = vpop.xlane.xlu0 %1831
        %v1833 = vadd.f32 %v1754, %v1755
        %1834 = vadd.xlane.f32.xlu0 %v1833
        %v1835 = vpop.xlane.xlu0 %1834
        %v1836 = vadd.f32 %v1756, %v1757
        %1837 = vadd.xlane.f32.xlu0 %v1836
        %v1838 = vpop.xlane.xlu0 %1837
        %v1839 = vadd.f32 %v1758, %v1759
        %1840 = vadd.xlane.f32.xlu0 %v1839
        %v1841 = vpop.xlane.xlu0 %1840
        %v1842 = vadd.f32 %v1760, %v1761
        %1843 = vadd.xlane.f32.xlu0 %v1842
        %v1844 = vpop.xlane.xlu0 %1843
        %v1845 = vadd.f32 %v1762, %v1763
        %1846 = vadd.xlane.f32.xlu0 %v1845
        %v1847 = vpop.xlane.xlu0 %1846
        %v1848 = vadd.f32 %v1764, %v1765
        %1849 = vadd.xlane.f32.xlu0 %v1848
        %v1850 = vpop.xlane.xlu0 %1849
        %v1851 = vadd.f32 %v1766, %v1767
        %1852 = vadd.xlane.f32.xlu0 %v1851
        %v1853 = vpop.xlane.xlu0 %1852
        %v1854 = vadd.f32 %v1768, %v1769
        %1855 = vadd.xlane.f32.xlu0 %v1854
        %v1856 = vpop.xlane.xlu0 %1855
        %v1857 = vadd.f32 %v1770, %v1771
        %1858 = vadd.xlane.f32.xlu0 %v1857
        %v1859 = vpop.xlane.xlu0 %1858
        %v1860 = vadd.f32 %v1772, %v1773
        %1861 = vadd.xlane.f32.xlu0 %v1860
        %v1862 = vpop.xlane.xlu0 %1861
        %v1863 = vadd.f32 %v1774, %v1775
        %1864 = vadd.xlane.f32.xlu0 %v1863
        %v1865 = vpop.xlane.xlu0 %1864
        %v1866 = vadd.f32 %v1776, %v1777
        %1867 = vadd.xlane.f32.xlu0 %v1866
        %v1868 = vpop.xlane.xlu0 %1867
        %v1869 = vadd.f32 %v1778, %v1779
        %1870 = vadd.xlane.f32.xlu0 %v1869
        %v1871 = vpop.xlane.xlu0 %1870
        %v1872 = vadd.f32 %v1780, %v1781
        %1873 = vadd.xlane.f32.xlu0 %v1872
        %v1874 = vpop.xlane.xlu0 %1873
        %v1875 = vadd.f32 %v1782, %v1783
        %1876 = vadd.xlane.f32.xlu0 %v1875
        %v1877 = vpop.xlane.xlu0 %1876
        %v1878 = vadd.f32 %v1784, %v1785
        %1879 = vadd.xlane.f32.xlu0 %v1878
        %v1880 = vpop.xlane.xlu0 %1879
        %v1881 = vadd.f32 %v1786, %v1787
        %1882 = vadd.xlane.f32.xlu0 %v1881
        %v1883 = vpop.xlane.xlu0 %1882
        %v1884 = vrcp.pop 256.0
        %v1885 = vmul.f32 %v1790, %v1884
        %v1886 = vmul.f32 %v1793, %v1884
        %v1887 = vmul.f32 %v1796, %v1884
        %v1888 = vmul.f32 %v1799, %v1884
        %v1889 = vmul.f32 %v1802, %v1884
        %v1890 = vmul.f32 %v1805, %v1884
        %v1891 = vmul.f32 %v1808, %v1884
        %v1892 = vmul.f32 %v1811, %v1884
        %v1893 = vmul.f32 %v1814, %v1884
        %v1894 = vmul.f32 %v1817, %v1884
        %v1895 = vmul.f32 %v1820, %v1884
        %v1896 = vmul.f32 %v1823, %v1884
        %v1897 = vmul.f32 %v1826, %v1884
        %v1898 = vmul.f32 %v1829, %v1884
        %v1899 = vmul.f32 %v1832, %v1884
        %v1900 = vmul.f32 %v1835, %v1884
        %v1901 = vmul.f32 %v1838, %v1884
        %v1902 = vmul.f32 %v1841, %v1884
        %v1903 = vmul.f32 %v1844, %v1884
        %v1904 = vmul.f32 %v1847, %v1884
        %v1905 = vmul.f32 %v1850, %v1884
        %v1906 = vmul.f32 %v1853, %v1884
        %v1907 = vmul.f32 %v1856, %v1884
        %v1908 = vmul.f32 %v1859, %v1884
        %v1909 = vmul.f32 %v1862, %v1884
        %v1910 = vmul.f32 %v1865, %v1884
        %v1911 = vmul.f32 %v1868, %v1884
        %v1912 = vmul.f32 %v1871, %v1884
        %v1913 = vmul.f32 %v1874, %v1884
        %v1914 = vmul.f32 %v1877, %v1884
        %v1915 = vmul.f32 %v1880, %v1884
        %v1916 = vmul.f32 %v1883, %v1884
        %v1917 = vsub.f32 %v1724, %v1885
        %v1918 = vsub.f32 %v1725, %v1885
        %v1919 = vsub.f32 %v1726, %v1886
        %v1920 = vsub.f32 %v1727, %v1886
        %v1921 = vsub.f32 %v1728, %v1887
        %v1922 = vsub.f32 %v1729, %v1887
        %v1923 = vsub.f32 %v1730, %v1888
        %v1924 = vsub.f32 %v1731, %v1888
        %v1925 = vsub.f32 %v1732, %v1889
        %v1926 = vsub.f32 %v1733, %v1889
        %v1927 = vsub.f32 %v1734, %v1890
        %v1928 = vsub.f32 %v1735, %v1890
        %v1929 = vsub.f32 %v1736, %v1891
        %v1930 = vsub.f32 %v1737, %v1891
        %v1931 = vsub.f32 %v1738, %v1892
        %v1932 = vsub.f32 %v1739, %v1892
        %v1933 = vsub.f32 %v1740, %v1893
        %v1934 = vsub.f32 %v1741, %v1893
        %v1935 = vsub.f32 %v1742, %v1894
        %v1936 = vsub.f32 %v1743, %v1894
        %v1937 = vsub.f32 %v1744, %v1895
        %v1938 = vsub.f32 %v1745, %v1895
        %v1939 = vsub.f32 %v1746, %v1896
        %v1940 = vsub.f32 %v1747, %v1896
        %v1941 = vsub.f32 %v1748, %v1897
        %v1942 = vsub.f32 %v1749, %v1897
        %v1943 = vsub.f32 %v1750, %v1898
        %v1944 = vsub.f32 %v1751, %v1898
        %v1945 = vsub.f32 %v1752, %v1899
        %v1946 = vsub.f32 %v1753, %v1899
        %v1947 = vsub.f32 %v1754, %v1900
        %v1948 = vsub.f32 %v1755, %v1900
        %v1949 = vsub.f32 %v1756, %v1901
        %v1950 = vsub.f32 %v1757, %v1901
        %v1951 = vsub.f32 %v1758, %v1902
        %v1952 = vsub.f32 %v1759, %v1902
        %v1953 = vsub.f32 %v1760, %v1903
        %v1954 = vsub.f32 %v1761, %v1903
        %v1955 = vsub.f32 %v1762, %v1904
        %v1956 = vsub.f32 %v1763, %v1904
        %v1957 = vsub.f32 %v1764, %v1905
        %v1958 = vsub.f32 %v1765, %v1905
        %v1959 = vsub.f32 %v1766, %v1906
        %v1960 = vsub.f32 %v1767, %v1906
        %v1961 = vsub.f32 %v1768, %v1907
        %v1962 = vsub.f32 %v1769, %v1907
        %v1963 = vsub.f32 %v1770, %v1908
        %v1964 = vsub.f32 %v1771, %v1908
        %v1965 = vsub.f32 %v1772, %v1909
        %v1966 = vsub.f32 %v1773, %v1909
        %v1967 = vsub.f32 %v1774, %v1910
        %v1968 = vsub.f32 %v1775, %v1910
        %v1969 = vsub.f32 %v1776, %v1911
        %v1970 = vsub.f32 %v1777, %v1911
        %v1971 = vsub.f32 %v1778, %v1912
        %v1972 = vsub.f32 %v1779, %v1912
        %v1973 = vsub.f32 %v1780, %v1913
        %v1974 = vsub.f32 %v1781, %v1913
        %v1975 = vsub.f32 %v1782, %v1914
        %v1976 = vsub.f32 %v1783, %v1914
        %v1977 = vsub.f32 %v1784, %v1915
        %v1978 = vsub.f32 %v1785, %v1915
        %v1979 = vsub.f32 %v1786, %v1916
        %v1980 = vsub.f32 %v1787, %v1916
        %v1981 = vmul.f32 %v1917, %v1917
        %v1982 = vmul.f32 %v1918, %v1918
        %v1983 = vmul.f32 %v1919, %v1919
        %v1984 = vmul.f32 %v1920, %v1920
        %v1985 = vmul.f32 %v1921, %v1921
        %v1986 = vmul.f32 %v1922, %v1922
        %v1987 = vmul.f32 %v1923, %v1923
        %v1988 = vmul.f32 %v1924, %v1924
        %v1989 = vmul.f32 %v1925, %v1925
        %v1990 = vmul.f32 %v1926, %v1926
        %v1991 = vmul.f32 %v1927, %v1927
        %v1992 = vmul.f32 %v1928, %v1928
        %v1993 = vmul.f32 %v1929, %v1929
        %v1994 = vmul.f32 %v1930, %v1930
        %v1995 = vmul.f32 %v1931, %v1931
        %v1996 = vmul.f32 %v1932, %v1932
        %v1997 = vmul.f32 %v1933, %v1933
        %v1998 = vmul.f32 %v1934, %v1934
        %v1999 = vmul.f32 %v1935, %v1935
        %v2000 = vmul.f32 %v1936, %v1936
        %v2001 = vmul.f32 %v1937, %v1937
        %v2002 = vmul.f32 %v1938, %v1938
        %v2003 = vmul.f32 %v1939, %v1939
        %v2004 = vmul.f32 %v1940, %v1940
        %v2005 = vmul.f32 %v1941, %v1941
        %v2006 = vmul.f32 %v1942, %v1942
        %v2007 = vmul.f32 %v1943, %v1943
        %v2008 = vmul.f32 %v1944, %v1944
        %v2009 = vmul.f32 %v1945, %v1945
        %v2010 = vmul.f32 %v1946, %v1946
        %v2011 = vmul.f32 %v1947, %v1947
        %v2012 = vmul.f32 %v1948, %v1948
        %v2013 = vmul.f32 %v1949, %v1949
        %v2014 = vmul.f32 %v1950, %v1950
        %v2015 = vmul.f32 %v1951, %v1951
        %v2016 = vmul.f32 %v1952, %v1952
        %v2017 = vmul.f32 %v1953, %v1953
        %v2018 = vmul.f32 %v1954, %v1954
        %v2019 = vmul.f32 %v1955, %v1955
        %v2020 = vmul.f32 %v1956, %v1956
        %v2021 = vmul.f32 %v1957, %v1957
        %v2022 = vmul.f32 %v1958, %v1958
        %v2023 = vmul.f32 %v1959, %v1959
        %v2024 = vmul.f32 %v1960, %v1960
        %v2025 = vmul.f32 %v1961, %v1961
        %v2026 = vmul.f32 %v1962, %v1962
        %v2027 = vmul.f32 %v1963, %v1963
        %v2028 = vmul.f32 %v1964, %v1964
        %v2029 = vmul.f32 %v1965, %v1965
        %v2030 = vmul.f32 %v1966, %v1966
        %v2031 = vmul.f32 %v1967, %v1967
        %v2032 = vmul.f32 %v1968, %v1968
        %v2033 = vmul.f32 %v1969, %v1969
        %v2034 = vmul.f32 %v1970, %v1970
        %v2035 = vmul.f32 %v1971, %v1971
        %v2036 = vmul.f32 %v1972, %v1972
        %v2037 = vmul.f32 %v1973, %v1973
        %v2038 = vmul.f32 %v1974, %v1974
        %v2039 = vmul.f32 %v1975, %v1975
        %v2040 = vmul.f32 %v1976, %v1976
        %v2041 = vmul.f32 %v1977, %v1977
        %v2042 = vmul.f32 %v1978, %v1978
        %v2043 = vmul.f32 %v1979, %v1979
        %v2044 = vmul.f32 %v1980, %v1980
        %v2045 = vadd.f32 %v1981, %v1982
        %2046 = vadd.xlane.f32.xlu0 %v2045
        %v2047 = vpop.xlane.xlu0 %2046
        %v2048 = vadd.f32 %v1983, %v1984
        %2049 = vadd.xlane.f32.xlu0 %v2048
        %v2050 = vpop.xlane.xlu0 %2049
        %v2051 = vadd.f32 %v1985, %v1986
        %2052 = vadd.xlane.f32.xlu0 %v2051
        %v2053 = vpop.xlane.xlu0 %2052
        %v2054 = vadd.f32 %v1987, %v1988
        %2055 = vadd.xlane.f32.xlu0 %v2054
        %v2056 = vpop.xlane.xlu0 %2055
        %v2057 = vadd.f32 %v1989, %v1990
        %2058 = vadd.xlane.f32.xlu0 %v2057
        %v2059 = vpop.xlane.xlu0 %2058
        %v2060 = vadd.f32 %v1991, %v1992
        %2061 = vadd.xlane.f32.xlu0 %v2060
        %v2062 = vpop.xlane.xlu0 %2061
        %v2063 = vadd.f32 %v1993, %v1994
        %2064 = vadd.xlane.f32.xlu0 %v2063
        %v2065 = vpop.xlane.xlu0 %2064
        %v2066 = vadd.f32 %v1995, %v1996
        %2067 = vadd.xlane.f32.xlu0 %v2066
        %v2068 = vpop.xlane.xlu0 %2067
        %v2069 = vadd.f32 %v1997, %v1998
        %2070 = vadd.xlane.f32.xlu0 %v2069
        %v2071 = vpop.xlane.xlu0 %2070
        %v2072 = vadd.f32 %v1999, %v2000
        %2073 = vadd.xlane.f32.xlu0 %v2072
        %v2074 = vpop.xlane.xlu0 %2073
        %v2075 = vadd.f32 %v2001, %v2002
        %2076 = vadd.xlane.f32.xlu0 %v2075
        %v2077 = vpop.xlane.xlu0 %2076
        %v2078 = vadd.f32 %v2003, %v2004
        %2079 = vadd.xlane.f32.xlu0 %v2078
        %v2080 = vpop.xlane.xlu0 %2079
        %v2081 = vadd.f32 %v2005, %v2006
        %2082 = vadd.xlane.f32.xlu0 %v2081
        %v2083 = vpop.xlane.xlu0 %2082
        %v2084 = vadd.f32 %v2007, %v2008
        %2085 = vadd.xlane.f32.xlu0 %v2084
        %v2086 = vpop.xlane.xlu0 %2085
        %v2087 = vadd.f32 %v2009, %v2010
        %2088 = vadd.xlane.f32.xlu0 %v2087
        %v2089 = vpop.xlane.xlu0 %2088
        %v2090 = vadd.f32 %v2011, %v2012
        %2091 = vadd.xlane.f32.xlu0 %v2090
        %v2092 = vpop.xlane.xlu0 %2091
        %v2093 = vadd.f32 %v2013, %v2014
        %2094 = vadd.xlane.f32.xlu0 %v2093
        %v2095 = vpop.xlane.xlu0 %2094
        %v2096 = vadd.f32 %v2015, %v2016
        %2097 = vadd.xlane.f32.xlu0 %v2096
        %v2098 = vpop.xlane.xlu0 %2097
        %v2099 = vadd.f32 %v2017, %v2018
        %2100 = vadd.xlane.f32.xlu0 %v2099
        %v2101 = vpop.xlane.xlu0 %2100
        %v2102 = vadd.f32 %v2019, %v2020
        %2103 = vadd.xlane.f32.xlu0 %v2102
        %v2104 = vpop.xlane.xlu0 %2103
        %v2105 = vadd.f32 %v2021, %v2022
        %2106 = vadd.xlane.f32.xlu0 %v2105
        %v2107 = vpop.xlane.xlu0 %2106
        %v2108 = vadd.f32 %v2023, %v2024
        %2109 = vadd.xlane.f32.xlu0 %v2108
        %v2110 = vpop.xlane.xlu0 %2109
        %v2111 = vadd.f32 %v2025, %v2026
        %2112 = vadd.xlane.f32.xlu0 %v2111
        %v2113 = vpop.xlane.xlu0 %2112
        %v2114 = vadd.f32 %v2027, %v2028
        %2115 = vadd.xlane.f32.xlu0 %v2114
        %v2116 = vpop.xlane.xlu0 %2115
        %v2117 = vadd.f32 %v2029, %v2030
        %2118 = vadd.xlane.f32.xlu0 %v2117
        %v2119 = vpop.xlane.xlu0 %2118
        %v2120 = vadd.f32 %v2031, %v2032
        %2121 = vadd.xlane.f32.xlu0 %v2120
        %v2122 = vpop.xlane.xlu0 %2121
        %v2123 = vadd.f32 %v2033, %v2034
        %2124 = vadd.xlane.f32.xlu0 %v2123
        %v2125 = vpop.xlane.xlu0 %2124
        %v2126 = vadd.f32 %v2035, %v2036
        %2127 = vadd.xlane.f32.xlu0 %v2126
        %v2128 = vpop.xlane.xlu0 %2127
        %v2129 = vadd.f32 %v2037, %v2038
        %2130 = vadd.xlane.f32.xlu0 %v2129
        %v2131 = vpop.xlane.xlu0 %2130
        %v2132 = vadd.f32 %v2039, %v2040
        %2133 = vadd.xlane.f32.xlu0 %v2132
        %v2134 = vpop.xlane.xlu0 %2133
        %v2135 = vadd.f32 %v2041, %v2042
        %2136 = vadd.xlane.f32.xlu0 %v2135
        %v2137 = vpop.xlane.xlu0 %2136
        %v2138 = vadd.f32 %v2043, %v2044
        %2139 = vadd.xlane.f32.xlu0 %v2138
        %v2140 = vpop.xlane.xlu0 %2139
        %v2141 = vmul.f32 %v2047, %v1884
        %v2142 = vmul.f32 %v2050, %v1884
        %v2143 = vmul.f32 %v2053, %v1884
        %v2144 = vmul.f32 %v2056, %v1884
        %v2145 = vmul.f32 %v2059, %v1884
        %v2146 = vmul.f32 %v2062, %v1884
        %v2147 = vmul.f32 %v2065, %v1884
        %v2148 = vmul.f32 %v2068, %v1884
        %v2149 = vmul.f32 %v2071, %v1884
        %v2150 = vmul.f32 %v2074, %v1884
        %v2151 = vmul.f32 %v2077, %v1884
        %v2152 = vmul.f32 %v2080, %v1884
        %v2153 = vmul.f32 %v2083, %v1884
        %v2154 = vmul.f32 %v2086, %v1884
        %v2155 = vmul.f32 %v2089, %v1884
        %v2156 = vmul.f32 %v2092, %v1884
        %v2157 = vmul.f32 %v2095, %v1884
        %v2158 = vmul.f32 %v2098, %v1884
        %v2159 = vmul.f32 %v2101, %v1884
        %v2160 = vmul.f32 %v2104, %v1884
        %v2161 = vmul.f32 %v2107, %v1884
        %v2162 = vmul.f32 %v2110, %v1884
        %v2163 = vmul.f32 %v2113, %v1884
        %v2164 = vmul.f32 %v2116, %v1884
        %v2165 = vmul.f32 %v2119, %v1884
        %v2166 = vmul.f32 %v2122, %v1884
        %v2167 = vmul.f32 %v2125, %v1884
        %v2168 = vmul.f32 %v2128, %v1884
        %v2169 = vmul.f32 %v2131, %v1884
        %v2170 = vmul.f32 %v2134, %v1884
        %v2171 = vmul.f32 %v2137, %v1884
        %v2172 = vmul.f32 %v2140, %v1884
        %v2173 = vadd.f32 %v2141, 1e-05
        %v2174 = vadd.f32 %v2142, 1e-05
        %v2175 = vadd.f32 %v2143, 1e-05
        %v2176 = vadd.f32 %v2144, 1e-05
        %v2177 = vadd.f32 %v2145, 1e-05
        %v2178 = vadd.f32 %v2146, 1e-05
        %v2179 = vadd.f32 %v2147, 1e-05
        %v2180 = vadd.f32 %v2148, 1e-05
        %v2181 = vadd.f32 %v2149, 1e-05
        %v2182 = vadd.f32 %v2150, 1e-05
        %v2183 = vadd.f32 %v2151, 1e-05
        %v2184 = vadd.f32 %v2152, 1e-05
        %v2185 = vadd.f32 %v2153, 1e-05
        %v2186 = vadd.f32 %v2154, 1e-05
        %v2187 = vadd.f32 %v2155, 1e-05
        %v2188 = vadd.f32 %v2156, 1e-05
        %v2189 = vadd.f32 %v2157, 1e-05
        %v2190 = vadd.f32 %v2158, 1e-05
        %v2191 = vadd.f32 %v2159, 1e-05
        %v2192 = vadd.f32 %v2160, 1e-05
        %v2193 = vadd.f32 %v2161, 1e-05
        %v2194 = vadd.f32 %v2162, 1e-05
        %v2195 = vadd.f32 %v2163, 1e-05
        %v2196 = vadd.f32 %v2164, 1e-05
        %v2197 = vadd.f32 %v2165, 1e-05
        %v2198 = vadd.f32 %v2166, 1e-05
        %v2199 = vadd.f32 %v2167, 1e-05
        %v2200 = vadd.f32 %v2168, 1e-05
        %v2201 = vadd.f32 %v2169, 1e-05
        %v2202 = vadd.f32 %v2170, 1e-05
        %v2203 = vadd.f32 %v2171, 1e-05
        %v2204 = vadd.f32 %v2172, 1e-05
        %v2205 = vrsqrt.pop %v2173
        %v2206 = vrsqrt.pop %v2174
        %v2207 = vrsqrt.pop %v2175
        %v2208 = vrsqrt.pop %v2176
        %v2209 = vrsqrt.pop %v2177
        %v2210 = vrsqrt.pop %v2178
        %v2211 = vrsqrt.pop %v2179
        %v2212 = vrsqrt.pop %v2180
        %v2213 = vrsqrt.pop %v2181
        %v2214 = vrsqrt.pop %v2182
        %v2215 = vrsqrt.pop %v2183
        %v2216 = vrsqrt.pop %v2184
        %v2217 = vrsqrt.pop %v2185
        %v2218 = vrsqrt.pop %v2186
        %v2219 = vrsqrt.pop %v2187
        %v2220 = vrsqrt.pop %v2188
        %v2221 = vrsqrt.pop %v2189
        %v2222 = vrsqrt.pop %v2190
        %v2223 = vrsqrt.pop %v2191
        %v2224 = vrsqrt.pop %v2192
        %v2225 = vrsqrt.pop %v2193
        %v2226 = vrsqrt.pop %v2194
        %v2227 = vrsqrt.pop %v2195
        %v2228 = vrsqrt.pop %v2196
        %v2229 = vrsqrt.pop %v2197
        %v2230 = vrsqrt.pop %v2198
        %v2231 = vrsqrt.pop %v2199
        %v2232 = vrsqrt.pop %v2200
        %v2233 = vrsqrt.pop %v2201
        %v2234 = vrsqrt.pop %v2202
        %v2235 = vrsqrt.pop %v2203
        %v2236 = vrsqrt.pop %v2204
        %v2238 = vlaneseq
        %v2239 = vshrl.u32 %v2238, 7
        %v2240 = vsub.s32 0, %v2239
        %v2241 = vrot.slane %v508, %v2240
        %v2242 = vlaneseq
        %v2243 = vshrl.u32 %v2242, 7
        %v2244 = vsub.s32 1, %v2243
        %v2245 = vrot.slane %v508, %v2244
        %v2248 = vmul.f32 %v2205, %v2241
        %v2249 = vmul.f32 %v2205, %v2245
        %v2250 = vmul.f32 %v2206, %v2241
        %v2251 = vmul.f32 %v2206, %v2245
        %v2252 = vmul.f32 %v2207, %v2241
        %v2253 = vmul.f32 %v2207, %v2245
        %v2254 = vmul.f32 %v2208, %v2241
        %v2255 = vmul.f32 %v2208, %v2245
        %v2256 = vmul.f32 %v2209, %v2241
        %v2257 = vmul.f32 %v2209, %v2245
        %v2258 = vmul.f32 %v2210, %v2241
        %v2259 = vmul.f32 %v2210, %v2245
        %v2260 = vmul.f32 %v2211, %v2241
        %v2261 = vmul.f32 %v2211, %v2245
        %v2262 = vmul.f32 %v2212, %v2241
        %v2263 = vmul.f32 %v2212, %v2245
        %v2264 = vmul.f32 %v2213, %v2241
        %v2265 = vmul.f32 %v2213, %v2245
        %v2266 = vmul.f32 %v2214, %v2241
        %v2267 = vmul.f32 %v2214, %v2245
        %v2268 = vmul.f32 %v2215, %v2241
        %v2269 = vmul.f32 %v2215, %v2245
        %v2270 = vmul.f32 %v2216, %v2241
        %v2271 = vmul.f32 %v2216, %v2245
        %v2272 = vmul.f32 %v2217, %v2241
        %v2273 = vmul.f32 %v2217, %v2245
        %v2274 = vmul.f32 %v2218, %v2241
        %v2275 = vmul.f32 %v2218, %v2245
        %v2276 = vmul.f32 %v2219, %v2241
        %v2277 = vmul.f32 %v2219, %v2245
        %v2278 = vmul.f32 %v2220, %v2241
        %v2279 = vmul.f32 %v2220, %v2245
        %v2280 = vmul.f32 %v2221, %v2241
        %v2281 = vmul.f32 %v2221, %v2245
        %v2282 = vmul.f32 %v2222, %v2241
        %v2283 = vmul.f32 %v2222, %v2245
        %v2284 = vmul.f32 %v2223, %v2241
        %v2285 = vmul.f32 %v2223, %v2245
        %v2286 = vmul.f32 %v2224, %v2241
        %v2287 = vmul.f32 %v2224, %v2245
        %v2288 = vmul.f32 %v2225, %v2241
        %v2289 = vmul.f32 %v2225, %v2245
        %v2290 = vmul.f32 %v2226, %v2241
        %v2291 = vmul.f32 %v2226, %v2245
        %v2292 = vmul.f32 %v2227, %v2241
        %v2293 = vmul.f32 %v2227, %v2245
        %v2294 = vmul.f32 %v2228, %v2241
        %v2295 = vmul.f32 %v2228, %v2245
        %v2296 = vmul.f32 %v2229, %v2241
        %v2297 = vmul.f32 %v2229, %v2245
        %v2298 = vmul.f32 %v2230, %v2241
        %v2299 = vmul.f32 %v2230, %v2245
        %v2300 = vmul.f32 %v2231, %v2241
        %v2301 = vmul.f32 %v2231, %v2245
        %v2302 = vmul.f32 %v2232, %v2241
        %v2303 = vmul.f32 %v2232, %v2245
        %v2304 = vmul.f32 %v2233, %v2241
        %v2305 = vmul.f32 %v2233, %v2245
        %v2306 = vmul.f32 %v2234, %v2241
        %v2307 = vmul.f32 %v2234, %v2245
        %v2308 = vmul.f32 %v2235, %v2241
        %v2309 = vmul.f32 %v2235, %v2245
        %v2310 = vmul.f32 %v2236, %v2241
        %v2311 = vmul.f32 %v2236, %v2245
        %v2312 = vmul.f32 %v1917, %v2248
        %v2313 = vmul.f32 %v1918, %v2249
        %v2314 = vmul.f32 %v1919, %v2250
        %v2315 = vmul.f32 %v1920, %v2251
        %v2316 = vmul.f32 %v1921, %v2252
        %v2317 = vmul.f32 %v1922, %v2253
        %v2318 = vmul.f32 %v1923, %v2254
        %v2319 = vmul.f32 %v1924, %v2255
        %v2320 = vmul.f32 %v1925, %v2256
        %v2321 = vmul.f32 %v1926, %v2257
        %v2322 = vmul.f32 %v1927, %v2258
        %v2323 = vmul.f32 %v1928, %v2259
        %v2324 = vmul.f32 %v1929, %v2260
        %v2325 = vmul.f32 %v1930, %v2261
        %v2326 = vmul.f32 %v1931, %v2262
        %v2327 = vmul.f32 %v1932, %v2263
        %v2328 = vmul.f32 %v1933, %v2264
        %v2329 = vmul.f32 %v1934, %v2265
        %v2330 = vmul.f32 %v1935, %v2266
        %v2331 = vmul.f32 %v1936, %v2267
        %v2332 = vmul.f32 %v1937, %v2268
        %v2333 = vmul.f32 %v1938, %v2269
        %v2334 = vmul.f32 %v1939, %v2270
        %v2335 = vmul.f32 %v1940, %v2271
        %v2336 = vmul.f32 %v1941, %v2272
        %v2337 = vmul.f32 %v1942, %v2273
        %v2338 = vmul.f32 %v1943, %v2274
        %v2339 = vmul.f32 %v1944, %v2275
        %v2340 = vmul.f32 %v1945, %v2276
        %v2341 = vmul.f32 %v1946, %v2277
        %v2342 = vmul.f32 %v1947, %v2278
        %v2343 = vmul.f32 %v1948, %v2279
        %v2344 = vmul.f32 %v1949, %v2280
        %v2345 = vmul.f32 %v1950, %v2281
        %v2346 = vmul.f32 %v1951, %v2282
        %v2347 = vmul.f32 %v1952, %v2283
        %v2348 = vmul.f32 %v1953, %v2284
        %v2349 = vmul.f32 %v1954, %v2285
        %v2350 = vmul.f32 %v1955, %v2286
        %v2351 = vmul.f32 %v1956, %v2287
        %v2352 = vmul.f32 %v1957, %v2288
        %v2353 = vmul.f32 %v1958, %v2289
        %v2354 = vmul.f32 %v1959, %v2290
        %v2355 = vmul.f32 %v1960, %v2291
        %v2356 = vmul.f32 %v1961, %v2292
        %v2357 = vmul.f32 %v1962, %v2293
        %v2358 = vmul.f32 %v1963, %v2294
        %v2359 = vmul.f32 %v1964, %v2295
        %v2360 = vmul.f32 %v1965, %v2296
        %v2361 = vmul.f32 %v1966, %v2297
        %v2362 = vmul.f32 %v1967, %v2298
        %v2363 = vmul.f32 %v1968, %v2299
        %v2364 = vmul.f32 %v1969, %v2300
        %v2365 = vmul.f32 %v1970, %v2301
        %v2366 = vmul.f32 %v1971, %v2302
        %v2367 = vmul.f32 %v1972, %v2303
        %v2368 = vmul.f32 %v1973, %v2304
        %v2369 = vmul.f32 %v1974, %v2305
        %v2370 = vmul.f32 %v1975, %v2306
        %v2371 = vmul.f32 %v1976, %v2307
        %v2372 = vmul.f32 %v1977, %v2308
        %v2373 = vmul.f32 %v1978, %v2309
        %v2374 = vmul.f32 %v1979, %v2310
        %v2375 = vmul.f32 %v1980, %v2311
        %v2377 = vlaneseq
        %v2378 = vshrl.u32 %v2377, 7
        %v2379 = vsub.s32 0, %v2378
        %v2380 = vrot.slane %v509, %v2379
        %v2381 = vlaneseq
        %v2382 = vshrl.u32 %v2381, 7
        %v2383 = vsub.s32 1, %v2382
        %v2384 = vrot.slane %v509, %v2383
        %v2387 = vadd.f32 %v2312, %v2380
        %v2388 = vadd.f32 %v2313, %v2384
        %v2389 = vadd.f32 %v2314, %v2380
        %v2390 = vadd.f32 %v2315, %v2384
        %v2391 = vadd.f32 %v2316, %v2380
        %v2392 = vadd.f32 %v2317, %v2384
        %v2393 = vadd.f32 %v2318, %v2380
        %v2394 = vadd.f32 %v2319, %v2384
        %v2395 = vadd.f32 %v2320, %v2380
        %v2396 = vadd.f32 %v2321, %v2384
        %v2397 = vadd.f32 %v2322, %v2380
        %v2398 = vadd.f32 %v2323, %v2384
        %v2399 = vadd.f32 %v2324, %v2380
        %v2400 = vadd.f32 %v2325, %v2384
        %v2401 = vadd.f32 %v2326, %v2380
        %v2402 = vadd.f32 %v2327, %v2384
        %v2403 = vadd.f32 %v2328, %v2380
        %v2404 = vadd.f32 %v2329, %v2384
        %v2405 = vadd.f32 %v2330, %v2380
        %v2406 = vadd.f32 %v2331, %v2384
        %v2407 = vadd.f32 %v2332, %v2380
        %v2408 = vadd.f32 %v2333, %v2384
        %v2409 = vadd.f32 %v2334, %v2380
        %v2410 = vadd.f32 %v2335, %v2384
        %v2411 = vadd.f32 %v2336, %v2380
        %v2412 = vadd.f32 %v2337, %v2384
        %v2413 = vadd.f32 %v2338, %v2380
        %v2414 = vadd.f32 %v2339, %v2384
        %v2415 = vadd.f32 %v2340, %v2380
        %v2416 = vadd.f32 %v2341, %v2384
        %v2417 = vadd.f32 %v2342, %v2380
        %v2418 = vadd.f32 %v2343, %v2384
        %v2419 = vadd.f32 %v2344, %v2380
        %v2420 = vadd.f32 %v2345, %v2384
        %v2421 = vadd.f32 %v2346, %v2380
        %v2422 = vadd.f32 %v2347, %v2384
        %v2423 = vadd.f32 %v2348, %v2380
        %v2424 = vadd.f32 %v2349, %v2384
        %v2425 = vadd.f32 %v2350, %v2380
        %v2426 = vadd.f32 %v2351, %v2384
        %v2427 = vadd.f32 %v2352, %v2380
        %v2428 = vadd.f32 %v2353, %v2384
        %v2429 = vadd.f32 %v2354, %v2380
        %v2430 = vadd.f32 %v2355, %v2384
        %v2431 = vadd.f32 %v2356, %v2380
        %v2432 = vadd.f32 %v2357, %v2384
        %v2433 = vadd.f32 %v2358, %v2380
        %v2434 = vadd.f32 %v2359, %v2384
        %v2435 = vadd.f32 %v2360, %v2380
        %v2436 = vadd.f32 %v2361, %v2384
        %v2437 = vadd.f32 %v2362, %v2380
        %v2438 = vadd.f32 %v2363, %v2384
        %v2439 = vadd.f32 %v2364, %v2380
        %v2440 = vadd.f32 %v2365, %v2384
        %v2441 = vadd.f32 %v2366, %v2380
        %v2442 = vadd.f32 %v2367, %v2384
        %v2443 = vadd.f32 %v2368, %v2380
        %v2444 = vadd.f32 %v2369, %v2384
        %v2445 = vadd.f32 %v2370, %v2380
        %v2446 = vadd.f32 %v2371, %v2384
        %v2447 = vadd.f32 %v2372, %v2380
        %v2448 = vadd.f32 %v2373, %v2384
        %v2449 = vadd.f32 %v2374, %v2380
        %v2450 = vadd.f32 %v2375, %v2384
        %v2451 = vld [vmem:[%s6] sm:$0x3]
        %v2452 = vpack.c.bf16 %v2389, %v2387
        %v2453 = vpack.c.bf16 %v2390, %v2388
        %v2454 = vpack.c.bf16 %v2393, %v2391
        %v2455 = vpack.c.bf16 %v2394, %v2392
        %v2456 = vpack.c.bf16 %v2397, %v2395
        %v2457 = vpack.c.bf16 %v2398, %v2396
        %v2458 = vpack.c.bf16 %v2401, %v2399
        %v2459 = vpack.c.bf16 %v2402, %v2400
        %v2460 = vpack.c.bf16 %v2405, %v2403
        %v2461 = vpack.c.bf16 %v2406, %v2404
        %v2462 = vpack.c.bf16 %v2409, %v2407
        %v2463 = vpack.c.bf16 %v2410, %v2408
        %v2464 = vpack.c.bf16 %v2413, %v2411
        %v2465 = vpack.c.bf16 %v2414, %v2412
        %v2466 = vpack.c.bf16 %v2417, %v2415
        %v2467 = vpack.c.bf16 %v2418, %v2416
        %v2468 = vpack.c.bf16 %v2421, %v2419
        %v2469 = vpack.c.bf16 %v2422, %v2420
        %v2470 = vpack.c.bf16 %v2425, %v2423
        %v2471 = vpack.c.bf16 %v2426, %v2424
        %v2472 = vpack.c.bf16 %v2429, %v2427
        %v2473 = vpack.c.bf16 %v2430, %v2428
        %v2474 = vpack.c.bf16 %v2433, %v2431
        %v2475 = vpack.c.bf16 %v2434, %v2432
        %v2476 = vpack.c.bf16 %v2437, %v2435
        %v2477 = vpack.c.bf16 %v2438, %v2436
        %v2478 = vpack.c.bf16 %v2441, %v2439
        %v2479 = vpack.c.bf16 %v2442, %v2440
        %v2480 = vpack.c.bf16 %v2445, %v2443
        %v2481 = vpack.c.bf16 %v2446, %v2444
        %v2482 = vpack.c.bf16 %v2449, %v2447
        %v2483 = vpack.c.bf16 %v2450, %v2448
        %v2484 = vld [vmem:[#allocation10] sm:$0xff]
        %v2485 = vld [vmem:[#allocation10 + $0x8] sm:$0xff]
        %v2486 = vld [vmem:[#allocation10 + $0x10] sm:$0xff]
        %v2487 = vld [vmem:[#allocation10 + $0x18] sm:$0xff]
        %v2488 = vld [vmem:[#allocation10 + $0x20] sm:$0xff]
        %v2489 = vld [vmem:[#allocation10 + $0x28] sm:$0xff]
        %v2490 = vld [vmem:[#allocation10 + $0x30] sm:$0xff]
        %v2491 = vld [vmem:[#allocation10 + $0x38] sm:$0xff]
        %v2492 = vld [vmem:[#allocation10 + $0x40] sm:$0xff]
        %v2493 = vld [vmem:[#allocation10 + $0x48] sm:$0xff]
        %v2494 = vld [vmem:[#allocation10 + $0x50] sm:$0xff]
        %v2495 = vld [vmem:[#allocation10 + $0x58] sm:$0xff]
        %v2496 = vld [vmem:[#allocation10 + $0x60] sm:$0xff]
        %v2497 = vld [vmem:[#allocation10 + $0x68] sm:$0xff]
        %v2498 = vld [vmem:[#allocation10 + $0x70] sm:$0xff]
        %v2499 = vld [vmem:[#allocation10 + $0x78] sm:$0xff]
        %v2500 = vld [vmem:[#allocation10 + $0x80] sm:$0xff]
        %v2501 = vld [vmem:[#allocation10 + $0x88] sm:$0xff]
        %v2502 = vld [vmem:[#allocation10 + $0x90] sm:$0xff]
        %v2503 = vld [vmem:[#allocation10 + $0x98] sm:$0xff]
        %v2504 = vld [vmem:[#allocation10 + $0xa0] sm:$0xff]
        %v2505 = vld [vmem:[#allocation10 + $0xa8] sm:$0xff]
        %v2506 = vld [vmem:[#allocation10 + $0xb0] sm:$0xff]
        %v2507 = vld [vmem:[#allocation10 + $0xb8] sm:$0xff]
        %v2508 = vld [vmem:[#allocation10 + $0xc0] sm:$0xff]
        %v2509 = vld [vmem:[#allocation10 + $0xc8] sm:$0xff]
        %v2510 = vld [vmem:[#allocation10 + $0xd0] sm:$0xff]
        %v2511 = vld [vmem:[#allocation10 + $0xd8] sm:$0xff]
        %v2512 = vld [vmem:[#allocation10 + $0xe0] sm:$0xff]
        %v2513 = vld [vmem:[#allocation10 + $0xe8] sm:$0xff]
        %v2514 = vld [vmem:[#allocation10 + $0xf0] sm:$0xff]
        %v2515 = vld [vmem:[#allocation10 + $0xf8] sm:$0xff]
        %v2548 = vunpack.c.l.b16 %v2484
        %v2549 = vunpack.c.h.b16 %v2484
        %v2550 = vunpack.c.l.b16 %v2485
        %v2551 = vunpack.c.h.b16 %v2485
        %v2552 = vunpack.c.l.b16 %v2486
        %v2553 = vunpack.c.h.b16 %v2486
        %v2554 = vunpack.c.l.b16 %v2487
        %v2555 = vunpack.c.h.b16 %v2487
        %v2556 = vunpack.c.l.b16 %v2488
        %v2557 = vunpack.c.h.b16 %v2488
        %v2558 = vunpack.c.l.b16 %v2489
        %v2559 = vunpack.c.h.b16 %v2489
        %v2560 = vunpack.c.l.b16 %v2490
        %v2561 = vunpack.c.h.b16 %v2490
        %v2562 = vunpack.c.l.b16 %v2491
        %v2563 = vunpack.c.h.b16 %v2491
        %v2564 = vunpack.c.l.b16 %v2492
        %v2565 = vunpack.c.h.b16 %v2492
        %v2566 = vunpack.c.l.b16 %v2493
        %v2567 = vunpack.c.h.b16 %v2493
        %v2568 = vunpack.c.l.b16 %v2494
        %v2569 = vunpack.c.h.b16 %v2494
        %v2570 = vunpack.c.l.b16 %v2495
        %v2571 = vunpack.c.h.b16 %v2495
        %v2572 = vunpack.c.l.b16 %v2496
        %v2573 = vunpack.c.h.b16 %v2496
        %v2574 = vunpack.c.l.b16 %v2497
        %v2575 = vunpack.c.h.b16 %v2497
        %v2576 = vunpack.c.l.b16 %v2498
        %v2577 = vunpack.c.h.b16 %v2498
        %v2578 = vunpack.c.l.b16 %v2499
        %v2579 = vunpack.c.h.b16 %v2499
        %v2580 = vunpack.c.l.b16 %v2500
        %v2581 = vunpack.c.h.b16 %v2500
        %v2582 = vunpack.c.l.b16 %v2501
        %v2583 = vunpack.c.h.b16 %v2501
        %v2584 = vunpack.c.l.b16 %v2502
        %v2585 = vunpack.c.h.b16 %v2502
        %v2586 = vunpack.c.l.b16 %v2503
        %v2587 = vunpack.c.h.b16 %v2503
        %v2588 = vunpack.c.l.b16 %v2504
        %v2589 = vunpack.c.h.b16 %v2504
        %v2590 = vunpack.c.l.b16 %v2505
        %v2591 = vunpack.c.h.b16 %v2505
        %v2592 = vunpack.c.l.b16 %v2506
        %v2593 = vunpack.c.h.b16 %v2506
        %v2594 = vunpack.c.l.b16 %v2507
        %v2595 = vunpack.c.h.b16 %v2507
        %v2596 = vunpack.c.l.b16 %v2508
        %v2597 = vunpack.c.h.b16 %v2508
        %v2598 = vunpack.c.l.b16 %v2509
        %v2599 = vunpack.c.h.b16 %v2509
        %v2600 = vunpack.c.l.b16 %v2510
        %v2601 = vunpack.c.h.b16 %v2510
        %v2602 = vunpack.c.l.b16 %v2511
        %v2603 = vunpack.c.h.b16 %v2511
        %v2604 = vunpack.c.l.b16 %v2512
        %v2605 = vunpack.c.h.b16 %v2512
        %v2606 = vunpack.c.l.b16 %v2513
        %v2607 = vunpack.c.h.b16 %v2513
        %v2608 = vunpack.c.l.b16 %v2514
        %v2609 = vunpack.c.h.b16 %v2514
        %v2610 = vunpack.c.l.b16 %v2515
        %v2611 = vunpack.c.h.b16 %v2515
        %v2612 = vpack.c.b16 %v2550, %v2548
        %v2613 = vpack.c.b16 %v2551, %v2549
        %v2614 = vpack.c.b16 %v2554, %v2552
        %v2615 = vpack.c.b16 %v2555, %v2553
        %v2616 = vpack.c.b16 %v2558, %v2556
        %v2617 = vpack.c.b16 %v2559, %v2557
        %v2618 = vpack.c.b16 %v2562, %v2560
        %v2619 = vpack.c.b16 %v2563, %v2561
        %v2620 = vpack.c.b16 %v2566, %v2564
        %v2621 = vpack.c.b16 %v2567, %v2565
        %v2622 = vpack.c.b16 %v2570, %v2568
        %v2623 = vpack.c.b16 %v2571, %v2569
        %v2624 = vpack.c.b16 %v2574, %v2572
        %v2625 = vpack.c.b16 %v2575, %v2573
        %v2626 = vpack.c.b16 %v2578, %v2576
        %v2627 = vpack.c.b16 %v2579, %v2577
        %v2628 = vpack.c.b16 %v2582, %v2580
        %v2629 = vpack.c.b16 %v2583, %v2581
        %v2630 = vpack.c.b16 %v2586, %v2584
        %v2631 = vpack.c.b16 %v2587, %v2585
        %v2632 = vpack.c.b16 %v2590, %v2588
        %v2633 = vpack.c.b16 %v2591, %v2589
        %v2634 = vpack.c.b16 %v2594, %v2592
        %v2635 = vpack.c.b16 %v2595, %v2593
        %v2636 = vpack.c.b16 %v2598, %v2596
        %v2637 = vpack.c.b16 %v2599, %v2597
        %v2638 = vpack.c.b16 %v2602, %v2600
        %v2639 = vpack.c.b16 %v2603, %v2601
        %v2640 = vpack.c.b16 %v2606, %v2604
        %v2641 = vpack.c.b16 %v2607, %v2605
        %v2642 = vpack.c.b16 %v2610, %v2608
        %v2643 = vpack.c.b16 %v2611, %v2609
        %2676 = vmatprep.subr.bf16.mxu0 %v2613
        %2677 = vmatpush1.bf16.msra.mxu0 %v2612
        %2678 = vmatprep.subr.bf16.mxu0 %v2615
        %2679 = vmatpush1.bf16.msra.mxu0 %v2614
        %2680 = vmatprep.subr.bf16.mxu0 %v2617
        %2681 = vmatpush1.bf16.msra.mxu0 %v2616
        %2682 = vmatprep.subr.bf16.mxu0 %v2619
        %2683 = vmatpush1.bf16.msra.mxu0 %v2618
        %2684 = vmatprep.subr.bf16.mxu0 %v2621
        %2685 = vmatpush1.bf16.msra.mxu0 %v2620
        %2686 = vmatprep.subr.bf16.mxu0 %v2623
        %2687 = vmatpush1.bf16.msra.mxu0 %v2622
        %2688 = vmatprep.subr.bf16.mxu0 %v2625
        %2689 = vmatpush1.bf16.msra.mxu0 %v2624
        %2690 = vmatprep.subr.bf16.mxu0 %v2627
        %2691 = vmatpush1.bf16.msra.mxu0 %v2626
        %2692 = vmatprep.subr.bf16.mxu0 %v2629
        %2693 = vmatpush1.bf16.msra.mxu0 %v2628
        %2694 = vmatprep.subr.bf16.mxu0 %v2631
        %2695 = vmatpush1.bf16.msra.mxu0 %v2630
        %2696 = vmatprep.subr.bf16.mxu0 %v2633
        %2697 = vmatpush1.bf16.msra.mxu0 %v2632
        %2698 = vmatprep.subr.bf16.mxu0 %v2635
        %2699 = vmatpush1.bf16.msra.mxu0 %v2634
        %2700 = vmatprep.subr.bf16.mxu0 %v2637
        %2701 = vmatpush1.bf16.msra.mxu0 %v2636
        %2702 = vmatprep.subr.bf16.mxu0 %v2639
        %2703 = vmatpush1.bf16.msra.mxu0 %v2638
        %2704 = vmatprep.subr.bf16.mxu0 %v2641
        %2705 = vmatpush1.bf16.msra.mxu0 %v2640
        %2706 = vmatprep.subr.bf16.mxu0 %v2643
        %2707 = vmatpush1.bf16.msra.mxu0 %v2642
        %2708 = vmatprep.mubr.bf16.mxu0 %v2453
        %2709 = vmatmul.mubr.bf16.gmra.mrb[0].mxu0 %v2452
        %v2710 = vpop.f32.mrb[0].mxu0
        %v2711 = vadd.f32 0.0, %v2710
        %v2712 = vpop.f32.mrb[0].mxu0
        %v2713 = vadd.f32 0.0, %v2712
        %v2714 = vpop.f32.mrb[0].mxu0
        %v2715 = vadd.f32 0.0, %v2714
        %v2716 = vpop.f32.mrb[0].mxu0
        %v2717 = vadd.f32 0.0, %v2716
        %2718 = vmatprep.mubr.bf16.mxu0 %v2455
        %2719 = vmatmul.mubr.bf16.gmra.mrb[0].mxu0 %v2454
        %v2720 = vpop.f32.mrb[0].mxu0
        %v2721 = vadd.f32 0.0, %v2720
        %v2722 = vpop.f32.mrb[0].mxu0
        %v2723 = vadd.f32 0.0, %v2722
        %v2724 = vpop.f32.mrb[0].mxu0
        %v2725 = vadd.f32 0.0, %v2724
        %v2726 = vpop.f32.mrb[0].mxu0
        %v2727 = vadd.f32 0.0, %v2726
        %2728 = vmatprep.mubr.bf16.mxu0 %v2457
        %2729 = vmatmul.mubr.bf16.gmra.mrb[0].mxu0 %v2456
        %v2730 = vpop.f32.mrb[0].mxu0
        %v2731 = vadd.f32 0.0, %v2730
        %v2732 = vpop.f32.mrb[0].mxu0
        %v2733 = vadd.f32 0.0, %v2732
        %v2734 = vpop.f32.mrb[0].mxu0
        %v2735 = vadd.f32 0.0, %v2734
        %v2736 = vpop.f32.mrb[0].mxu0
        %v2737 = vadd.f32 0.0, %v2736
        %2738 = vmatprep.mubr.bf16.mxu0 %v2459
        %2739 = vmatmul.mubr.bf16.gmra.mrb[0].mxu0 %v2458
        %v2740 = vpop.f32.mrb[0].mxu0
        %v2741 = vadd.f32 0.0, %v2740
        %v2742 = vpop.f32.mrb[0].mxu0
        %v2743 = vadd.f32 0.0, %v2742
        %v2744 = vpop.f32.mrb[0].mxu0
        %v2745 = vadd.f32 0.0, %v2744
        %v2746 = vpop.f32.mrb[0].mxu0
        %v2747 = vadd.f32 0.0, %v2746
        %2748 = vmatprep.mubr.bf16.mxu0 %v2461
        %2749 = vmatmul.mubr.bf16.gmra.mrb[0].mxu0 %v2460
        %v2750 = vpop.f32.mrb[0].mxu0
        %v2751 = vadd.f32 0.0, %v2750
        %v2752 = vpop.f32.mrb[0].mxu0
        %v2753 = vadd.f32 0.0, %v2752
        %v2754 = vpop.f32.mrb[0].mxu0
        %v2755 = vadd.f32 0.0, %v2754
        %v2756 = vpop.f32.mrb[0].mxu0
        %v2757 = vadd.f32 0.0, %v2756
        %2758 = vmatprep.mubr.bf16.mxu0 %v2463
        %2759 = vmatmul.mubr.bf16.gmra.mrb[0].mxu0 %v2462
        %v2760 = vpop.f32.mrb[0].mxu0
        %v2761 = vadd.f32 0.0, %v2760
        %v2762 = vpop.f32.mrb[0].mxu0
        %v2763 = vadd.f32 0.0, %v2762
        %v2764 = vpop.f32.mrb[0].mxu0
        %v2765 = vadd.f32 0.0, %v2764
        %v2766 = vpop.f32.mrb[0].mxu0
        %v2767 = vadd.f32 0.0, %v2766
        %2768 = vmatprep.mubr.bf16.mxu0 %v2465
        %2769 = vmatmul.mubr.bf16.gmra.mrb[0].mxu0 %v2464
        %v2770 = vpop.f32.mrb[0].mxu0
        %v2771 = vadd.f32 0.0, %v2770
        %v2772 = vpop.f32.mrb[0].mxu0
        %v2773 = vadd.f32 0.0, %v2772
        %v2774 = vpop.f32.mrb[0].mxu0
        %v2775 = vadd.f32 0.0, %v2774
        %v2776 = vpop.f32.mrb[0].mxu0
        %v2777 = vadd.f32 0.0, %v2776
        %2778 = vmatprep.mubr.bf16.mxu0 %v2467
        %2779 = vmatmul.mubr.bf16.gmra.mrb[0].mxu0 %v2466
        %v2780 = vpop.f32.mrb[0].mxu0
        %v2781 = vadd.f32 0.0, %v2780
        %v2782 = vpop.f32.mrb[0].mxu0
        %v2783 = vadd.f32 0.0, %v2782
        %v2784 = vpop.f32.mrb[0].mxu0
        %v2785 = vadd.f32 0.0, %v2784
        %v2786 = vpop.f32.mrb[0].mxu0
        %v2787 = vadd.f32 0.0, %v2786
        %2788 = vmatprep.mubr.bf16.mxu0 %v2469
        %2789 = vmatmul.mubr.bf16.gmra.mrb[0].mxu0 %v2468
        %v2790 = vpop.f32.mrb[0].mxu0
        %v2791 = vadd.f32 0.0, %v2790
        %v2792 = vpop.f32.mrb[0].mxu0
        %v2793 = vadd.f32 0.0, %v2792
        %v2794 = vpop.f32.mrb[0].mxu0
        %v2795 = vadd.f32 0.0, %v2794
        %v2796 = vpop.f32.mrb[0].mxu0
        %v2797 = vadd.f32 0.0, %v2796
        %2798 = vmatprep.mubr.bf16.mxu0 %v2471
        %2799 = vmatmul.mubr.bf16.gmra.mrb[0].mxu0 %v2470
        %v2800 = vpop.f32.mrb[0].mxu0
        %v2801 = vadd.f32 0.0, %v2800
        %v2802 = vpop.f32.mrb[0].mxu0
        %v2803 = vadd.f32 0.0, %v2802
        %v2804 = vpop.f32.mrb[0].mxu0
        %v2805 = vadd.f32 0.0, %v2804
        %v2806 = vpop.f32.mrb[0].mxu0
        %v2807 = vadd.f32 0.0, %v2806
        %2808 = vmatprep.mubr.bf16.mxu0 %v2473
        %2809 = vmatmul.mubr.bf16.gmra.mrb[0].mxu0 %v2472
        %v2810 = vpop.f32.mrb[0].mxu0
        %v2811 = vadd.f32 0.0, %v2810
        %v2812 = vpop.f32.mrb[0].mxu0
        %v2813 = vadd.f32 0.0, %v2812
        %v2814 = vpop.f32.mrb[0].mxu0
        %v2815 = vadd.f32 0.0, %v2814
        %v2816 = vpop.f32.mrb[0].mxu0
        %v2817 = vadd.f32 0.0, %v2816
        %2818 = vmatprep.mubr.bf16.mxu0 %v2475
        %2819 = vmatmul.mubr.bf16.gmra.mrb[0].mxu0 %v2474
        %v2820 = vpop.f32.mrb[0].mxu0
        %v2821 = vadd.f32 0.0, %v2820
        %v2822 = vpop.f32.mrb[0].mxu0
        %v2823 = vadd.f32 0.0, %v2822
        %v2824 = vpop.f32.mrb[0].mxu0
        %v2825 = vadd.f32 0.0, %v2824
        %v2826 = vpop.f32.mrb[0].mxu0
        %v2827 = vadd.f32 0.0, %v2826
        %2828 = vmatprep.mubr.bf16.mxu0 %v2477
        %2829 = vmatmul.mubr.bf16.gmra.mrb[0].mxu0 %v2476
        %v2830 = vpop.f32.mrb[0].mxu0
        %v2831 = vadd.f32 0.0, %v2830
        %v2832 = vpop.f32.mrb[0].mxu0
        %v2833 = vadd.f32 0.0, %v2832
        %v2834 = vpop.f32.mrb[0].mxu0
        %v2835 = vadd.f32 0.0, %v2834
        %v2836 = vpop.f32.mrb[0].mxu0
        %v2837 = vadd.f32 0.0, %v2836
        %2838 = vmatprep.mubr.bf16.mxu0 %v2479
        %2839 = vmatmul.mubr.bf16.gmra.mrb[0].mxu0 %v2478
        %v2840 = vpop.f32.mrb[0].mxu0
        %v2841 = vadd.f32 0.0, %v2840
        %v2842 = vpop.f32.mrb[0].mxu0
        %v2843 = vadd.f32 0.0, %v2842
        %v2844 = vpop.f32.mrb[0].mxu0
        %v2845 = vadd.f32 0.0, %v2844
        %v2846 = vpop.f32.mrb[0].mxu0
        %v2847 = vadd.f32 0.0, %v2846
        %2848 = vmatprep.mubr.bf16.mxu0 %v2481
        %2849 = vmatmul.mubr.bf16.gmra.mrb[0].mxu0 %v2480
        %v2850 = vpop.f32.mrb[0].mxu0
        %v2851 = vadd.f32 0.0, %v2850
        %v2852 = vpop.f32.mrb[0].mxu0
        %v2853 = vadd.f32 0.0, %v2852
        %v2854 = vpop.f32.mrb[0].mxu0
        %v2855 = vadd.f32 0.0, %v2854
        %v2856 = vpop.f32.mrb[0].mxu0
        %v2857 = vadd.f32 0.0, %v2856
        %2858 = vmatprep.mubr.bf16.mxu0 %v2483
        %2859 = vmatmul.mubr.bf16.gmra.mrb[0].mxu0 %v2482
        %v2860 = vpop.f32.mrb[0].mxu0
        %v2861 = vadd.f32 0.0, %v2860
        %v2862 = vpop.f32.mrb[0].mxu0
        %v2863 = vadd.f32 0.0, %v2862
        %v2864 = vpop.f32.mrb[0].mxu0
        %v2865 = vadd.f32 0.0, %v2864
        %v2866 = vpop.f32.mrb[0].mxu0
        %v2867 = vadd.f32 0.0, %v2866
        %2868 = vdwg.mxu0
        %v2870 = vlaneseq
        %v2871 = vshrl.u32 %v2870, 7
        %v2872 = vsub.s32 0, %v2871
        %v2873 = vrot.slane %v2451, %v2872
        %v2874 = vlaneseq
        %v2875 = vshrl.u32 %v2874, 7
        %v2876 = vsub.s32 1, %v2875
        %v2877 = vrot.slane %v2451, %v2876
        %v2880 = vadd.f32 %v2873, %v2711
        %v2881 = vadd.f32 %v2877, %v2713
        %v2882 = vadd.f32 %v2873, %v2715
        %v2883 = vadd.f32 %v2877, %v2717
        %v2884 = vadd.f32 %v2873, %v2721
        %v2885 = vadd.f32 %v2877, %v2723
        %v2886 = vadd.f32 %v2873, %v2725
        %v2887 = vadd.f32 %v2877, %v2727
        %v2888 = vadd.f32 %v2873, %v2731
        %v2889 = vadd.f32 %v2877, %v2733
        %v2890 = vadd.f32 %v2873, %v2735
        %v2891 = vadd.f32 %v2877, %v2737
        %v2892 = vadd.f32 %v2873, %v2741
        %v2893 = vadd.f32 %v2877, %v2743
        %v2894 = vadd.f32 %v2873, %v2745
        %v2895 = vadd.f32 %v2877, %v2747
        %v2896 = vadd.f32 %v2873, %v2751
        %v2897 = vadd.f32 %v2877, %v2753
        %v2898 = vadd.f32 %v2873, %v2755
        %v2899 = vadd.f32 %v2877, %v2757
        %v2900 = vadd.f32 %v2873, %v2761
        %v2901 = vadd.f32 %v2877, %v2763
        %v2902 = vadd.f32 %v2873, %v2765
        %v2903 = vadd.f32 %v2877, %v2767
        %v2904 = vadd.f32 %v2873, %v2771
        %v2905 = vadd.f32 %v2877, %v2773
        %v2906 = vadd.f32 %v2873, %v2775
        %v2907 = vadd.f32 %v2877, %v2777
        %v2908 = vadd.f32 %v2873, %v2781
        %v2909 = vadd.f32 %v2877, %v2783
        %v2910 = vadd.f32 %v2873, %v2785
        %v2911 = vadd.f32 %v2877, %v2787
        %v2912 = vadd.f32 %v2873, %v2791
        %v2913 = vadd.f32 %v2877, %v2793
        %v2914 = vadd.f32 %v2873, %v2795
        %v2915 = vadd.f32 %v2877, %v2797
        %v2916 = vadd.f32 %v2873, %v2801
        %v2917 = vadd.f32 %v2877, %v2803
        %v2918 = vadd.f32 %v2873, %v2805
        %v2919 = vadd.f32 %v2877, %v2807
        %v2920 = vadd.f32 %v2873, %v2811
        %v2921 = vadd.f32 %v2877, %v2813
        %v2922 = vadd.f32 %v2873, %v2815
        %v2923 = vadd.f32 %v2877, %v2817
        %v2924 = vadd.f32 %v2873, %v2821
        %v2925 = vadd.f32 %v2877, %v2823
        %v2926 = vadd.f32 %v2873, %v2825
        %v2927 = vadd.f32 %v2877, %v2827
        %v2928 = vadd.f32 %v2873, %v2831
        %v2929 = vadd.f32 %v2877, %v2833
        %v2930 = vadd.f32 %v2873, %v2835
        %v2931 = vadd.f32 %v2877, %v2837
        %v2932 = vadd.f32 %v2873, %v2841
        %v2933 = vadd.f32 %v2877, %v2843
        %v2934 = vadd.f32 %v2873, %v2845
        %v2935 = vadd.f32 %v2877, %v2847
        %v2936 = vadd.f32 %v2873, %v2851
        %v2937 = vadd.f32 %v2877, %v2853
        %v2938 = vadd.f32 %v2873, %v2855
        %v2939 = vadd.f32 %v2877, %v2857
        %v2940 = vadd.f32 %v2873, %v2861
        %v2941 = vadd.f32 %v2877, %v2863
        %v2942 = vadd.f32 %v2873, %v2865
        %v2943 = vadd.f32 %v2877, %v2867
        %v2944 = vmul.f32 %v2880, 0.5
        %v2945 = vmul.f32 %v2881, 0.5
        %v2946 = vmul.f32 %v2882, 0.5
        %v2947 = vmul.f32 %v2883, 0.5
        %v2948 = vmul.f32 %v2884, 0.5
        %v2949 = vmul.f32 %v2885, 0.5
        %v2950 = vmul.f32 %v2886, 0.5
        %v2951 = vmul.f32 %v2887, 0.5
        %v2952 = vmul.f32 %v2888, 0.5
        %v2953 = vmul.f32 %v2889, 0.5
        %v2954 = vmul.f32 %v2890, 0.5
        %v2955 = vmul.f32 %v2891, 0.5
        %v2956 = vmul.f32 %v2892, 0.5
        %v2957 = vmul.f32 %v2893, 0.5
        %v2958 = vmul.f32 %v2894, 0.5
        %v2959 = vmul.f32 %v2895, 0.5
        %v2960 = vmul.f32 %v2896, 0.5
        %v2961 = vmul.f32 %v2897, 0.5
        %v2962 = vmul.f32 %v2898, 0.5
        %v2963 = vmul.f32 %v2899, 0.5
        %v2964 = vmul.f32 %v2900, 0.5
        %v2965 = vmul.f32 %v2901, 0.5
        %v2966 = vmul.f32 %v2902, 0.5
        %v2967 = vmul.f32 %v2903, 0.5
        %v2968 = vmul.f32 %v2904, 0.5
        %v2969 = vmul.f32 %v2905, 0.5
        %v2970 = vmul.f32 %v2906, 0.5
        %v2971 = vmul.f32 %v2907, 0.5
        %v2972 = vmul.f32 %v2908, 0.5
        %v2973 = vmul.f32 %v2909, 0.5
        %v2974 = vmul.f32 %v2910, 0.5
        %v2975 = vmul.f32 %v2911, 0.5
        %v2976 = vmul.f32 %v2912, 0.5
        %v2977 = vmul.f32 %v2913, 0.5
        %v2978 = vmul.f32 %v2914, 0.5
        %v2979 = vmul.f32 %v2915, 0.5
        %v2980 = vmul.f32 %v2916, 0.5
        %v2981 = vmul.f32 %v2917, 0.5
        %v2982 = vmul.f32 %v2918, 0.5
        %v2983 = vmul.f32 %v2919, 0.5
        %v2984 = vmul.f32 %v2920, 0.5
        %v2985 = vmul.f32 %v2921, 0.5
        %v2986 = vmul.f32 %v2922, 0.5
        %v2987 = vmul.f32 %v2923, 0.5
        %v2988 = vmul.f32 %v2924, 0.5
        %v2989 = vmul.f32 %v2925, 0.5
        %v2990 = vmul.f32 %v2926, 0.5
        %v2991 = vmul.f32 %v2927, 0.5
        %v2992 = vmul.f32 %v2928, 0.5
        %v2993 = vmul.f32 %v2929, 0.5
        %v2994 = vmul.f32 %v2930, 0.5
        %v2995 = vmul.f32 %v2931, 0.5
        %v2996 = vmul.f32 %v2932, 0.5
        %v2997 = vmul.f32 %v2933, 0.5
        %v2998 = vmul.f32 %v2934, 0.5
        %v2999 = vmul.f32 %v2935, 0.5
        %v3000 = vmul.f32 %v2936, 0.5
        %v3001 = vmul.f32 %v2937, 0.5
        %v3002 = vmul.f32 %v2938, 0.5
        %v3003 = vmul.f32 %v2939, 0.5
        %v3004 = vmul.f32 %v2940, 0.5
        %v3005 = vmul.f32 %v2941, 0.5
        %v3006 = vmul.f32 %v2942, 0.5
        %v3007 = vmul.f32 %v2943, 0.5
        %v3008 = vmul.f32 %v2880, 0.70710677
        %v3009 = vmul.f32 %v2881, 0.70710677
        %v3010 = vmul.f32 %v2882, 0.70710677
        %v3011 = vmul.f32 %v2883, 0.70710677
        %v3012 = vmul.f32 %v2884, 0.70710677
        %v3013 = vmul.f32 %v2885, 0.70710677
        %v3014 = vmul.f32 %v2886, 0.70710677
        %v3015 = vmul.f32 %v2887, 0.70710677
        %v3016 = vmul.f32 %v2888, 0.70710677
        %v3017 = vmul.f32 %v2889, 0.70710677
        %v3018 = vmul.f32 %v2890, 0.70710677
        %v3019 = vmul.f32 %v2891, 0.70710677
        %v3020 = vmul.f32 %v2892, 0.70710677
        %v3021 = vmul.f32 %v2893, 0.70710677
        %v3022 = vmul.f32 %v2894, 0.70710677
        %v3023 = vmul.f32 %v2895, 0.70710677
        %v3024 = vmul.f32 %v2896, 0.70710677
        %v3025 = vmul.f32 %v2897, 0.70710677
        %v3026 = vmul.f32 %v2898, 0.70710677
        %v3027 = vmul.f32 %v2899, 0.70710677
        %v3028 = vmul.f32 %v2900, 0.70710677
        %v3029 = vmul.f32 %v2901, 0.70710677
        %v3030 = vmul.f32 %v2902, 0.70710677
        %v3031 = vmul.f32 %v2903, 0.70710677
        %v3032 = vmul.f32 %v2904, 0.70710677
        %v3033 = vmul.f32 %v2905, 0.70710677
        %v3034 = vmul.f32 %v2906, 0.70710677
        %v3035 = vmul.f32 %v2907, 0.70710677
        %v3036 = vmul.f32 %v2908, 0.70710677
        %v3037 = vmul.f32 %v2909, 0.70710677
        %v3038 = vmul.f32 %v2910, 0.70710677
        %v3039 = vmul.f32 %v2911, 0.70710677
        %v3040 = vmul.f32 %v2912, 0.70710677
        %v3041 = vmul.f32 %v2913, 0.70710677
        %v3042 = vmul.f32 %v2914, 0.70710677
        %v3043 = vmul.f32 %v2915, 0.70710677
        %v3044 = vmul.f32 %v2916, 0.70710677
        %v3045 = vmul.f32 %v2917, 0.70710677
        %v3046 = vmul.f32 %v2918, 0.70710677
        %v3047 = vmul.f32 %v2919, 0.70710677
        %v3048 = vmul.f32 %v2920, 0.70710677
        %v3049 = vmul.f32 %v2921, 0.70710677
        %v3050 = vmul.f32 %v2922, 0.70710677
        %v3051 = vmul.f32 %v2923, 0.70710677
        %v3052 = vmul.f32 %v2924, 0.70710677
        %v3053 = vmul.f32 %v2925, 0.70710677
        %v3054 = vmul.f32 %v2926, 0.70710677
        %v3055 = vmul.f32 %v2927, 0.70710677
        %v3056 = vmul.f32 %v2928, 0.70710677
        %v3057 = vmul.f32 %v2929, 0.70710677
        %v3058 = vmul.f32 %v2930, 0.70710677
        %v3059 = vmul.f32 %v2931, 0.70710677
        %v3060 = vmul.f32 %v2932, 0.70710677
        %v3061 = vmul.f32 %v2933, 0.70710677
        %v3062 = vmul.f32 %v2934, 0.70710677
        %v3063 = vmul.f32 %v2935, 0.70710677
        %v3064 = vmul.f32 %v2936, 0.70710677
        %v3065 = vmul.f32 %v2937, 0.70710677
        %v3066 = vmul.f32 %v2938, 0.70710677
        %v3067 = vmul.f32 %v2939, 0.70710677
        %v3068 = vmul.f32 %v2940, 0.70710677
        %v3069 = vmul.f32 %v2941, 0.70710677
        %v3070 = vmul.f32 %v2942, 0.70710677
        %v3071 = vmul.f32 %v2943, 0.70710677
        %v3072 = verf.f32.pop %v3008
        %v3073 = verf.f32.pop %v3009
        %v3074 = verf.f32.pop %v3010
        %v3075 = verf.f32.pop %v3011
        %v3076 = verf.f32.pop %v3012
        %v3077 = verf.f32.pop %v3013
        %v3078 = verf.f32.pop %v3014
        %v3079 = verf.f32.pop %v3015
        %v3080 = verf.f32.pop %v3016
        %v3081 = verf.f32.pop %v3017
        %v3082 = verf.f32.pop %v3018
        %v3083 = verf.f32.pop %v3019
        %v3084 = verf.f32.pop %v3020
        %v3085 = verf.f32.pop %v3021
        %v3086 = verf.f32.pop %v3022
        %v3087 = verf.f32.pop %v3023
        %v3088 = verf.f32.pop %v3024
        %v3089 = verf.f32.pop %v3025
        %v3090 = verf.f32.pop %v3026
        %v3091 = verf.f32.pop %v3027
        %v3092 = verf.f32.pop %v3028
        %v3093 = verf.f32.pop %v3029
        %v3094 = verf.f32.pop %v3030
        %v3095 = verf.f32.pop %v3031
        %v3096 = verf.f32.pop %v3032
        %v3097 = verf.f32.pop %v3033
        %v3098 = verf.f32.pop %v3034
        %v3099 = verf.f32.pop %v3035
        %v3100 = verf.f32.pop %v3036
        %v3101 = verf.f32.pop %v3037
        %v3102 = verf.f32.pop %v3038
        %v3103 = verf.f32.pop %v3039
        %v3104 = verf.f32.pop %v3040
        %v3105 = verf.f32.pop %v3041
        %v3106 = verf.f32.pop %v3042
        %v3107 = verf.f32.pop %v3043
        %v3108 = verf.f32.pop %v3044
        %v3109 = verf.f32.pop %v3045
        %v3110 = verf.f32.pop %v3046
        %v3111 = verf.f32.pop %v3047
        %v3112 = verf.f32.pop %v3048
        %v3113 = verf.f32.pop %v3049
        %v3114 = verf.f32.pop %v3050
        %v3115 = verf.f32.pop %v3051
        %v3116 = verf.f32.pop %v3052
        %v3117 = verf.f32.pop %v3053
        %v3118 = verf.f32.pop %v3054
        %v3119 = verf.f32.pop %v3055
        %v3120 = verf.f32.pop %v3056
        %v3121 = verf.f32.pop %v3057
        %v3122 = verf.f32.pop %v3058
        %v3123 = verf.f32.pop %v3059
        %v3124 = verf.f32.pop %v3060
        %v3125 = verf.f32.pop %v3061
        %v3126 = verf.f32.pop %v3062
        %v3127 = verf.f32.pop %v3063
        %v3128 = verf.f32.pop %v3064
        %v3129 = verf.f32.pop %v3065
        %v3130 = verf.f32.pop %v3066
        %v3131 = verf.f32.pop %v3067
        %v3132 = verf.f32.pop %v3068
        %v3133 = verf.f32.pop %v3069
        %v3134 = verf.f32.pop %v3070
        %v3135 = verf.f32.pop %v3071
        %v3136 = vadd.f32 %v3072, 1.0
        %v3137 = vadd.f32 %v3073, 1.0
        %v3138 = vadd.f32 %v3074, 1.0
        %v3139 = vadd.f32 %v3075, 1.0
        %v3140 = vadd.f32 %v3076, 1.0
        %v3141 = vadd.f32 %v3077, 1.0
        %v3142 = vadd.f32 %v3078, 1.0
        %v3143 = vadd.f32 %v3079, 1.0
        %v3144 = vadd.f32 %v3080, 1.0
        %v3145 = vadd.f32 %v3081, 1.0
        %v3146 = vadd.f32 %v3082, 1.0
        %v3147 = vadd.f32 %v3083, 1.0
        %v3148 = vadd.f32 %v3084, 1.0
        %v3149 = vadd.f32 %v3085, 1.0
        %v3150 = vadd.f32 %v3086, 1.0
        %v3151 = vadd.f32 %v3087, 1.0
        %v3152 = vadd.f32 %v3088, 1.0
        %v3153 = vadd.f32 %v3089, 1.0
        %v3154 = vadd.f32 %v3090, 1.0
        %v3155 = vadd.f32 %v3091, 1.0
        %v3156 = vadd.f32 %v3092, 1.0
        %v3157 = vadd.f32 %v3093, 1.0
        %v3158 = vadd.f32 %v3094, 1.0
        %v3159 = vadd.f32 %v3095, 1.0
        %v3160 = vadd.f32 %v3096, 1.0
        %v3161 = vadd.f32 %v3097, 1.0
        %v3162 = vadd.f32 %v3098, 1.0
        %v3163 = vadd.f32 %v3099, 1.0
        %v3164 = vadd.f32 %v3100, 1.0
        %v3165 = vadd.f32 %v3101, 1.0
        %v3166 = vadd.f32 %v3102, 1.0
        %v3167 = vadd.f32 %v3103, 1.0
        %v3168 = vadd.f32 %v3104, 1.0
        %v3169 = vadd.f32 %v3105, 1.0
        %v3170 = vadd.f32 %v3106, 1.0
        %v3171 = vadd.f32 %v3107, 1.0
        %v3172 = vadd.f32 %v3108, 1.0
        %v3173 = vadd.f32 %v3109, 1.0
        %v3174 = vadd.f32 %v3110, 1.0
        %v3175 = vadd.f32 %v3111, 1.0
        %v3176 = vadd.f32 %v3112, 1.0
        %v3177 = vadd.f32 %v3113, 1.0
        %v3178 = vadd.f32 %v3114, 1.0
        %v3179 = vadd.f32 %v3115, 1.0
        %v3180 = vadd.f32 %v3116, 1.0
        %v3181 = vadd.f32 %v3117, 1.0
        %v3182 = vadd.f32 %v3118, 1.0
        %v3183 = vadd.f32 %v3119, 1.0
        %v3184 = vadd.f32 %v3120, 1.0
        %v3185 = vadd.f32 %v3121, 1.0
        %v3186 = vadd.f32 %v3122, 1.0
        %v3187 = vadd.f32 %v3123, 1.0
        %v3188 = vadd.f32 %v3124, 1.0
        %v3189 = vadd.f32 %v3125, 1.0
        %v3190 = vadd.f32 %v3126, 1.0
        %v3191 = vadd.f32 %v3127, 1.0
        %v3192 = vadd.f32 %v3128, 1.0
        %v3193 = vadd.f32 %v3129, 1.0
        %v3194 = vadd.f32 %v3130, 1.0
        %v3195 = vadd.f32 %v3131, 1.0
        %v3196 = vadd.f32 %v3132, 1.0
        %v3197 = vadd.f32 %v3133, 1.0
        %v3198 = vadd.f32 %v3134, 1.0
        %v3199 = vadd.f32 %v3135, 1.0
        %v3200 = vmul.f32 %v2944, %v3136
        %v3201 = vmul.f32 %v2945, %v3137
        %v3202 = vmul.f32 %v2946, %v3138
        %v3203 = vmul.f32 %v2947, %v3139
        %v3204 = vmul.f32 %v2948, %v3140
        %v3205 = vmul.f32 %v2949, %v3141
        %v3206 = vmul.f32 %v2950, %v3142
        %v3207 = vmul.f32 %v2951, %v3143
        %v3208 = vmul.f32 %v2952, %v3144
        %v3209 = vmul.f32 %v2953, %v3145
        %v3210 = vmul.f32 %v2954, %v3146
        %v3211 = vmul.f32 %v2955, %v3147
        %v3212 = vmul.f32 %v2956, %v3148
        %v3213 = vmul.f32 %v2957, %v3149
        %v3214 = vmul.f32 %v2958, %v3150
        %v3215 = vmul.f32 %v2959, %v3151
        %v3216 = vmul.f32 %v2960, %v3152
        %v3217 = vmul.f32 %v2961, %v3153
        %v3218 = vmul.f32 %v2962, %v3154
        %v3219 = vmul.f32 %v2963, %v3155
        %v3220 = vmul.f32 %v2964, %v3156
        %v3221 = vmul.f32 %v2965, %v3157
        %v3222 = vmul.f32 %v2966, %v3158
        %v3223 = vmul.f32 %v2967, %v3159
        %v3224 = vmul.f32 %v2968, %v3160
        %v3225 = vmul.f32 %v2969, %v3161
        %v3226 = vmul.f32 %v2970, %v3162
        %v3227 = vmul.f32 %v2971, %v3163
        %v3228 = vmul.f32 %v2972, %v3164
        %v3229 = vmul.f32 %v2973, %v3165
        %v3230 = vmul.f32 %v2974, %v3166
        %v3231 = vmul.f32 %v2975, %v3167
        %v3232 = vmul.f32 %v2976, %v3168
        %v3233 = vmul.f32 %v2977, %v3169
        %v3234 = vmul.f32 %v2978, %v3170
        %v3235 = vmul.f32 %v2979, %v3171
        %v3236 = vmul.f32 %v2980, %v3172
        %v3237 = vmul.f32 %v2981, %v3173
        %v3238 = vmul.f32 %v2982, %v3174
        %v3239 = vmul.f32 %v2983, %v3175
        %v3240 = vmul.f32 %v2984, %v3176
        %v3241 = vmul.f32 %v2985, %v3177
        %v3242 = vmul.f32 %v2986, %v3178
        %v3243 = vmul.f32 %v2987, %v3179
        %v3244 = vmul.f32 %v2988, %v3180
        %v3245 = vmul.f32 %v2989, %v3181
        %v3246 = vmul.f32 %v2990, %v3182
        %v3247 = vmul.f32 %v2991, %v3183
        %v3248 = vmul.f32 %v2992, %v3184
        %v3249 = vmul.f32 %v2993, %v3185
        %v3250 = vmul.f32 %v2994, %v3186
        %v3251 = vmul.f32 %v2995, %v3187
        %v3252 = vmul.f32 %v2996, %v3188
        %v3253 = vmul.f32 %v2997, %v3189
        %v3254 = vmul.f32 %v2998, %v3190
        %v3255 = vmul.f32 %v2999, %v3191
        %v3256 = vmul.f32 %v3000, %v3192
        %v3257 = vmul.f32 %v3001, %v3193
        %v3258 = vmul.f32 %v3002, %v3194
        %v3259 = vmul.f32 %v3003, %v3195
        %v3260 = vmul.f32 %v3004, %v3196
        %v3261 = vmul.f32 %v3005, %v3197
        %v3262 = vmul.f32 %v3006, %v3198
        %v3263 = vmul.f32 %v3007, %v3199
        %v3264 = vadd.f32 %v3200, %v3201
        %3265 = vadd.xlane.f32.xlu0 %v3264
        %v3266 = vpop.xlane.xlu0 %3265
        %v3267 = vadd.f32 %v3202, %v3203
        %3268 = vadd.xlane.f32.xlu0 %v3267
        %v3269 = vpop.xlane.xlu0 %3268
        %v3270 = vadd.f32 %v3204, %v3205
        %3271 = vadd.xlane.f32.xlu0 %v3270
        %v3272 = vpop.xlane.xlu0 %3271
        %v3273 = vadd.f32 %v3206, %v3207
        %3274 = vadd.xlane.f32.xlu0 %v3273
        %v3275 = vpop.xlane.xlu0 %3274
        %v3276 = vadd.f32 %v3208, %v3209
        %3277 = vadd.xlane.f32.xlu0 %v3276
        %v3278 = vpop.xlane.xlu0 %3277
        %v3279 = vadd.f32 %v3210, %v3211
        %3280 = vadd.xlane.f32.xlu0 %v3279
        %v3281 = vpop.xlane.xlu0 %3280
        %v3282 = vadd.f32 %v3212, %v3213
        %3283 = vadd.xlane.f32.xlu0 %v3282
        %v3284 = vpop.xlane.xlu0 %3283
        %v3285 = vadd.f32 %v3214, %v3215
        %3286 = vadd.xlane.f32.xlu0 %v3285
        %v3287 = vpop.xlane.xlu0 %3286
        %v3288 = vadd.f32 %v3216, %v3217
        %3289 = vadd.xlane.f32.xlu0 %v3288
        %v3290 = vpop.xlane.xlu0 %3289
        %v3291 = vadd.f32 %v3218, %v3219
        %3292 = vadd.xlane.f32.xlu0 %v3291
        %v3293 = vpop.xlane.xlu0 %3292
        %v3294 = vadd.f32 %v3220, %v3221
        %3295 = vadd.xlane.f32.xlu0 %v3294
        %v3296 = vpop.xlane.xlu0 %3295
        %v3297 = vadd.f32 %v3222, %v3223
        %3298 = vadd.xlane.f32.xlu0 %v3297
        %v3299 = vpop.xlane.xlu0 %3298
        %v3300 = vadd.f32 %v3224, %v3225
        %3301 = vadd.xlane.f32.xlu0 %v3300
        %v3302 = vpop.xlane.xlu0 %3301
        %v3303 = vadd.f32 %v3226, %v3227
        %3304 = vadd.xlane.f32.xlu0 %v3303
        %v3305 = vpop.xlane.xlu0 %3304
        %v3306 = vadd.f32 %v3228, %v3229
        %3307 = vadd.xlane.f32.xlu0 %v3306
        %v3308 = vpop.xlane.xlu0 %3307
        %v3309 = vadd.f32 %v3230, %v3231
        %3310 = vadd.xlane.f32.xlu0 %v3309
        %v3311 = vpop.xlane.xlu0 %3310
        %v3312 = vadd.f32 %v3232, %v3233
        %3313 = vadd.xlane.f32.xlu0 %v3312
        %v3314 = vpop.xlane.xlu0 %3313
        %v3315 = vadd.f32 %v3234, %v3235
        %3316 = vadd.xlane.f32.xlu0 %v3315
        %v3317 = vpop.xlane.xlu0 %3316
        %v3318 = vadd.f32 %v3236, %v3237
        %3319 = vadd.xlane.f32.xlu0 %v3318
        %v3320 = vpop.xlane.xlu0 %3319
        %v3321 = vadd.f32 %v3238, %v3239
        %3322 = vadd.xlane.f32.xlu0 %v3321
        %v3323 = vpop.xlane.xlu0 %3322
        %v3324 = vadd.f32 %v3240, %v3241
        %3325 = vadd.xlane.f32.xlu0 %v3324
        %v3326 = vpop.xlane.xlu0 %3325
        %v3327 = vadd.f32 %v3242, %v3243
        %3328 = vadd.xlane.f32.xlu0 %v3327
        %v3329 = vpop.xlane.xlu0 %3328
        %v3330 = vadd.f32 %v3244, %v3245
        %3331 = vadd.xlane.f32.xlu0 %v3330
        %v3332 = vpop.xlane.xlu0 %3331
        %v3333 = vadd.f32 %v3246, %v3247
        %3334 = vadd.xlane.f32.xlu0 %v3333
        %v3335 = vpop.xlane.xlu0 %3334
        %v3336 = vadd.f32 %v3248, %v3249
        %3337 = vadd.xlane.f32.xlu0 %v3336
        %v3338 = vpop.xlane.xlu0 %3337
        %v3339 = vadd.f32 %v3250, %v3251
        %3340 = vadd.xlane.f32.xlu0 %v3339
        %v3341 = vpop.xlane.xlu0 %3340
        %v3342 = vadd.f32 %v3252, %v3253
        %3343 = vadd.xlane.f32.xlu0 %v3342
        %v3344 = vpop.xlane.xlu0 %3343
        %v3345 = vadd.f32 %v3254, %v3255
        %3346 = vadd.xlane.f32.xlu0 %v3345
        %v3347 = vpop.xlane.xlu0 %3346
        %v3348 = vadd.f32 %v3256, %v3257
        %3349 = vadd.xlane.f32.xlu0 %v3348
        %v3350 = vpop.xlane.xlu0 %3349
        %v3351 = vadd.f32 %v3258, %v3259
        %3352 = vadd.xlane.f32.xlu0 %v3351
        %v3353 = vpop.xlane.xlu0 %3352
        %v3354 = vadd.f32 %v3260, %v3261
        %3355 = vadd.xlane.f32.xlu0 %v3354
        %v3356 = vpop.xlane.xlu0 %3355
        %v3357 = vadd.f32 %v3262, %v3263
        %3358 = vadd.xlane.f32.xlu0 %v3357
        %v3359 = vpop.xlane.xlu0 %3358
        %v3360 = vmul.f32 %v3266, %v1884
        %v3361 = vmul.f32 %v3269, %v1884
        %v3362 = vmul.f32 %v3272, %v1884
        %v3363 = vmul.f32 %v3275, %v1884
        %v3364 = vmul.f32 %v3278, %v1884
        %v3365 = vmul.f32 %v3281, %v1884
        %v3366 = vmul.f32 %v3284, %v1884
        %v3367 = vmul.f32 %v3287, %v1884
        %v3368 = vmul.f32 %v3290, %v1884
        %v3369 = vmul.f32 %v3293, %v1884
        %v3370 = vmul.f32 %v3296, %v1884
        %v3371 = vmul.f32 %v3299, %v1884
        %v3372 = vmul.f32 %v3302, %v1884
        %v3373 = vmul.f32 %v3305, %v1884
        %v3374 = vmul.f32 %v3308, %v1884
        %v3375 = vmul.f32 %v3311, %v1884
        %v3376 = vmul.f32 %v3314, %v1884
        %v3377 = vmul.f32 %v3317, %v1884
        %v3378 = vmul.f32 %v3320, %v1884
        %v3379 = vmul.f32 %v3323, %v1884
        %v3380 = vmul.f32 %v3326, %v1884
        %v3381 = vmul.f32 %v3329, %v1884
        %v3382 = vmul.f32 %v3332, %v1884
        %v3383 = vmul.f32 %v3335, %v1884
        %v3384 = vmul.f32 %v3338, %v1884
        %v3385 = vmul.f32 %v3341, %v1884
        %v3386 = vmul.f32 %v3344, %v1884
        %v3387 = vmul.f32 %v3347, %v1884
        %v3388 = vmul.f32 %v3350, %v1884
        %v3389 = vmul.f32 %v3353, %v1884
        %v3390 = vmul.f32 %v3356, %v1884
        %v3391 = vmul.f32 %v3359, %v1884
        %v3392 = vsub.f32 %v3200, %v3360
        %v3393 = vsub.f32 %v3201, %v3360
        %v3394 = vsub.f32 %v3202, %v3361
        %v3395 = vsub.f32 %v3203, %v3361
        %v3396 = vsub.f32 %v3204, %v3362
        %v3397 = vsub.f32 %v3205, %v3362
        %v3398 = vsub.f32 %v3206, %v3363
        %v3399 = vsub.f32 %v3207, %v3363
        %v3400 = vsub.f32 %v3208, %v3364
        %v3401 = vsub.f32 %v3209, %v3364
        %v3402 = vsub.f32 %v3210, %v3365
        %v3403 = vsub.f32 %v3211, %v3365
        %v3404 = vsub.f32 %v3212, %v3366
        %v3405 = vsub.f32 %v3213, %v3366
        %v3406 = vsub.f32 %v3214, %v3367
        %v3407 = vsub.f32 %v3215, %v3367
        %v3408 = vsub.f32 %v3216, %v3368
        %v3409 = vsub.f32 %v3217, %v3368
        %v3410 = vsub.f32 %v3218, %v3369
        %v3411 = vsub.f32 %v3219, %v3369
        %v3412 = vsub.f32 %v3220, %v3370
        %v3413 = vsub.f32 %v3221, %v3370
        %v3414 = vsub.f32 %v3222, %v3371
        %v3415 = vsub.f32 %v3223, %v3371
        %v3416 = vsub.f32 %v3224, %v3372
        %v3417 = vsub.f32 %v3225, %v3372
        %v3418 = vsub.f32 %v3226, %v3373
        %v3419 = vsub.f32 %v3227, %v3373
        %v3420 = vsub.f32 %v3228, %v3374
        %v3421 = vsub.f32 %v3229, %v3374
        %v3422 = vsub.f32 %v3230, %v3375
        %v3423 = vsub.f32 %v3231, %v3375
        %v3424 = vsub.f32 %v3232, %v3376
        %v3425 = vsub.f32 %v3233, %v3376
        %v3426 = vsub.f32 %v3234, %v3377
        %v3427 = vsub.f32 %v3235, %v3377
        %v3428 = vsub.f32 %v3236, %v3378
        %v3429 = vsub.f32 %v3237, %v3378
        %v3430 = vsub.f32 %v3238, %v3379
        %v3431 = vsub.f32 %v3239, %v3379
        %v3432 = vsub.f32 %v3240, %v3380
        %v3433 = vsub.f32 %v3241, %v3380
        %v3434 = vsub.f32 %v3242, %v3381
        %v3435 = vsub.f32 %v3243, %v3381
        %v3436 = vsub.f32 %v3244, %v3382
        %v3437 = vsub.f32 %v3245, %v3382
        %v3438 = vsub.f32 %v3246, %v3383
        %v3439 = vsub.f32 %v3247, %v3383
        %v3440 = vsub.f32 %v3248, %v3384
        %v3441 = vsub.f32 %v3249, %v3384
        %v3442 = vsub.f32 %v3250, %v3385
        %v3443 = vsub.f32 %v3251, %v3385
        %v3444 = vsub.f32 %v3252, %v3386
        %v3445 = vsub.f32 %v3253, %v3386
        %v3446 = vsub.f32 %v3254, %v3387
        %v3447 = vsub.f32 %v3255, %v3387
        %v3448 = vsub.f32 %v3256, %v3388
        %v3449 = vsub.f32 %v3257, %v3388
        %v3450 = vsub.f32 %v3258, %v3389
        %v3451 = vsub.f32 %v3259, %v3389
        %v3452 = vsub.f32 %v3260, %v3390
        %v3453 = vsub.f32 %v3261, %v3390
        %v3454 = vsub.f32 %v3262, %v3391
        %v3455 = vsub.f32 %v3263, %v3391
        %v3456 = vmul.f32 %v3392, %v3392
        %v3457 = vmul.f32 %v3393, %v3393
        %v3458 = vmul.f32 %v3394, %v3394
        %v3459 = vmul.f32 %v3395, %v3395
        %v3460 = vmul.f32 %v3396, %v3396
        %v3461 = vmul.f32 %v3397, %v3397
        %v3462 = vmul.f32 %v3398, %v3398
        %v3463 = vmul.f32 %v3399, %v3399
        %v3464 = vmul.f32 %v3400, %v3400
        %v3465 = vmul.f32 %v3401, %v3401
        %v3466 = vmul.f32 %v3402, %v3402
        %v3467 = vmul.f32 %v3403, %v3403
        %v3468 = vmul.f32 %v3404, %v3404
        %v3469 = vmul.f32 %v3405, %v3405
        %v3470 = vmul.f32 %v3406, %v3406
        %v3471 = vmul.f32 %v3407, %v3407
        %v3472 = vmul.f32 %v3408, %v3408
        %v3473 = vmul.f32 %v3409, %v3409
        %v3474 = vmul.f32 %v3410, %v3410
        %v3475 = vmul.f32 %v3411, %v3411
        %v3476 = vmul.f32 %v3412, %v3412
        %v3477 = vmul.f32 %v3413, %v3413
        %v3478 = vmul.f32 %v3414, %v3414
        %v3479 = vmul.f32 %v3415, %v3415
        %v3480 = vmul.f32 %v3416, %v3416
        %v3481 = vmul.f32 %v3417, %v3417
        %v3482 = vmul.f32 %v3418, %v3418
        %v3483 = vmul.f32 %v3419, %v3419
        %v3484 = vmul.f32 %v3420, %v3420
        %v3485 = vmul.f32 %v3421, %v3421
        %v3486 = vmul.f32 %v3422, %v3422
        %v3487 = vmul.f32 %v3423, %v3423
        %v3488 = vmul.f32 %v3424, %v3424
        %v3489 = vmul.f32 %v3425, %v3425
        %v3490 = vmul.f32 %v3426, %v3426
        %v3491 = vmul.f32 %v3427, %v3427
        %v3492 = vmul.f32 %v3428, %v3428
        %v3493 = vmul.f32 %v3429, %v3429
        %v3494 = vmul.f32 %v3430, %v3430
        %v3495 = vmul.f32 %v3431, %v3431
        %v3496 = vmul.f32 %v3432, %v3432
        %v3497 = vmul.f32 %v3433, %v3433
        %v3498 = vmul.f32 %v3434, %v3434
        %v3499 = vmul.f32 %v3435, %v3435
        %v3500 = vmul.f32 %v3436, %v3436
        %v3501 = vmul.f32 %v3437, %v3437
        %v3502 = vmul.f32 %v3438, %v3438
        %v3503 = vmul.f32 %v3439, %v3439
        %v3504 = vmul.f32 %v3440, %v3440
        %v3505 = vmul.f32 %v3441, %v3441
        %v3506 = vmul.f32 %v3442, %v3442
        %v3507 = vmul.f32 %v3443, %v3443
        %v3508 = vmul.f32 %v3444, %v3444
        %v3509 = vmul.f32 %v3445, %v3445
        %v3510 = vmul.f32 %v3446, %v3446
        %v3511 = vmul.f32 %v3447, %v3447
        %v3512 = vmul.f32 %v3448, %v3448
        %v3513 = vmul.f32 %v3449, %v3449
        %v3514 = vmul.f32 %v3450, %v3450
        %v3515 = vmul.f32 %v3451, %v3451
        %v3516 = vmul.f32 %v3452, %v3452
        %v3517 = vmul.f32 %v3453, %v3453
        %v3518 = vmul.f32 %v3454, %v3454
        %v3519 = vmul.f32 %v3455, %v3455
        %v3520 = vadd.f32 %v3456, %v3457
        %3521 = vadd.xlane.f32.xlu0 %v3520
        %v3522 = vpop.xlane.xlu0 %3521
        %v3523 = vadd.f32 %v3458, %v3459
        %3524 = vadd.xlane.f32.xlu0 %v3523
        %v3525 = vpop.xlane.xlu0 %3524
        %v3526 = vadd.f32 %v3460, %v3461
        %3527 = vadd.xlane.f32.xlu0 %v3526
        %v3528 = vpop.xlane.xlu0 %3527
        %v3529 = vadd.f32 %v3462, %v3463
        %3530 = vadd.xlane.f32.xlu0 %v3529
        %v3531 = vpop.xlane.xlu0 %3530
        %v3532 = vadd.f32 %v3464, %v3465
        %3533 = vadd.xlane.f32.xlu0 %v3532
        %v3534 = vpop.xlane.xlu0 %3533
        %v3535 = vadd.f32 %v3466, %v3467
        %3536 = vadd.xlane.f32.xlu0 %v3535
        %v3537 = vpop.xlane.xlu0 %3536
        %v3538 = vadd.f32 %v3468, %v3469
        %3539 = vadd.xlane.f32.xlu0 %v3538
        %v3540 = vpop.xlane.xlu0 %3539
        %v3541 = vadd.f32 %v3470, %v3471
        %3542 = vadd.xlane.f32.xlu0 %v3541
        %v3543 = vpop.xlane.xlu0 %3542
        %v3544 = vadd.f32 %v3472, %v3473
        %3545 = vadd.xlane.f32.xlu0 %v3544
        %v3546 = vpop.xlane.xlu0 %3545
        %v3547 = vadd.f32 %v3474, %v3475
        %3548 = vadd.xlane.f32.xlu0 %v3547
        %v3549 = vpop.xlane.xlu0 %3548
        %v3550 = vadd.f32 %v3476, %v3477
        %3551 = vadd.xlane.f32.xlu0 %v3550
        %v3552 = vpop.xlane.xlu0 %3551
        %v3553 = vadd.f32 %v3478, %v3479
        %3554 = vadd.xlane.f32.xlu0 %v3553
        %v3555 = vpop.xlane.xlu0 %3554
        %v3556 = vadd.f32 %v3480, %v3481
        %3557 = vadd.xlane.f32.xlu0 %v3556
        %v3558 = vpop.xlane.xlu0 %3557
        %v3559 = vadd.f32 %v3482, %v3483
        %3560 = vadd.xlane.f32.xlu0 %v3559
        %v3561 = vpop.xlane.xlu0 %3560
        %v3562 = vadd.f32 %v3484, %v3485
        %3563 = vadd.xlane.f32.xlu0 %v3562
        %v3564 = vpop.xlane.xlu0 %3563
        %v3565 = vadd.f32 %v3486, %v3487
        %3566 = vadd.xlane.f32.xlu0 %v3565
        %v3567 = vpop.xlane.xlu0 %3566
        %v3568 = vadd.f32 %v3488, %v3489
        %3569 = vadd.xlane.f32.xlu0 %v3568
        %v3570 = vpop.xlane.xlu0 %3569
        %v3571 = vadd.f32 %v3490, %v3491
        %3572 = vadd.xlane.f32.xlu0 %v3571
        %v3573 = vpop.xlane.xlu0 %3572
        %v3574 = vadd.f32 %v3492, %v3493
        %3575 = vadd.xlane.f32.xlu0 %v3574
        %v3576 = vpop.xlane.xlu0 %3575
        %v3577 = vadd.f32 %v3494, %v3495
        %3578 = vadd.xlane.f32.xlu0 %v3577
        %v3579 = vpop.xlane.xlu0 %3578
        %v3580 = vadd.f32 %v3496, %v3497
        %3581 = vadd.xlane.f32.xlu0 %v3580
        %v3582 = vpop.xlane.xlu0 %3581
        %v3583 = vadd.f32 %v3498, %v3499
        %3584 = vadd.xlane.f32.xlu0 %v3583
        %v3585 = vpop.xlane.xlu0 %3584
        %v3586 = vadd.f32 %v3500, %v3501
        %3587 = vadd.xlane.f32.xlu0 %v3586
        %v3588 = vpop.xlane.xlu0 %3587
        %v3589 = vadd.f32 %v3502, %v3503
        %3590 = vadd.xlane.f32.xlu0 %v3589
        %v3591 = vpop.xlane.xlu0 %3590
        %v3592 = vadd.f32 %v3504, %v3505
        %3593 = vadd.xlane.f32.xlu0 %v3592
        %v3594 = vpop.xlane.xlu0 %3593
        %v3595 = vadd.f32 %v3506, %v3507
        %3596 = vadd.xlane.f32.xlu0 %v3595
        %v3597 = vpop.xlane.xlu0 %3596
        %v3598 = vadd.f32 %v3508, %v3509
        %3599 = vadd.xlane.f32.xlu0 %v3598
        %v3600 = vpop.xlane.xlu0 %3599
        %v3601 = vadd.f32 %v3510, %v3511
        %3602 = vadd.xlane.f32.xlu0 %v3601
        %v3603 = vpop.xlane.xlu0 %3602
        %v3604 = vadd.f32 %v3512, %v3513
        %3605 = vadd.xlane.f32.xlu0 %v3604
        %v3606 = vpop.xlane.xlu0 %3605
        %v3607 = vadd.f32 %v3514, %v3515
        %3608 = vadd.xlane.f32.xlu0 %v3607
        %v3609 = vpop.xlane.xlu0 %3608
        %v3610 = vadd.f32 %v3516, %v3517
        %3611 = vadd.xlane.f32.xlu0 %v3610
        %v3612 = vpop.xlane.xlu0 %3611
        %v3613 = vadd.f32 %v3518, %v3519
        %3614 = vadd.xlane.f32.xlu0 %v3613
        %v3615 = vpop.xlane.xlu0 %3614
        %v3616 = vmul.f32 %v3522, %v1884
        %v3617 = vmul.f32 %v3525, %v1884
        %v3618 = vmul.f32 %v3528, %v1884
        %v3619 = vmul.f32 %v3531, %v1884
        %v3620 = vmul.f32 %v3534, %v1884
        %v3621 = vmul.f32 %v3537, %v1884
        %v3622 = vmul.f32 %v3540, %v1884
        %v3623 = vmul.f32 %v3543, %v1884
        %v3624 = vmul.f32 %v3546, %v1884
        %v3625 = vmul.f32 %v3549, %v1884
        %v3626 = vmul.f32 %v3552, %v1884
        %v3627 = vmul.f32 %v3555, %v1884
        %v3628 = vmul.f32 %v3558, %v1884
        %v3629 = vmul.f32 %v3561, %v1884
        %v3630 = vmul.f32 %v3564, %v1884
        %v3631 = vmul.f32 %v3567, %v1884
        %v3632 = vmul.f32 %v3570, %v1884
        %v3633 = vmul.f32 %v3573, %v1884
        %v3634 = vmul.f32 %v3576, %v1884
        %v3635 = vmul.f32 %v3579, %v1884
        %v3636 = vmul.f32 %v3582, %v1884
        %v3637 = vmul.f32 %v3585, %v1884
        %v3638 = vmul.f32 %v3588, %v1884
        %v3639 = vmul.f32 %v3591, %v1884
        %v3640 = vmul.f32 %v3594, %v1884
        %v3641 = vmul.f32 %v3597, %v1884
        %v3642 = vmul.f32 %v3600, %v1884
        %v3643 = vmul.f32 %v3603, %v1884
        %v3644 = vmul.f32 %v3606, %v1884
        %v3645 = vmul.f32 %v3609, %v1884
        %v3646 = vmul.f32 %v3612, %v1884
        %v3647 = vmul.f32 %v3615, %v1884
        %v3648 = vadd.f32 %v3616, 1e-05
        %v3649 = vadd.f32 %v3617, 1e-05
        %v3650 = vadd.f32 %v3618, 1e-05
        %v3651 = vadd.f32 %v3619, 1e-05
        %v3652 = vadd.f32 %v3620, 1e-05
        %v3653 = vadd.f32 %v3621, 1e-05
        %v3654 = vadd.f32 %v3622, 1e-05
        %v3655 = vadd.f32 %v3623, 1e-05
        %v3656 = vadd.f32 %v3624, 1e-05
        %v3657 = vadd.f32 %v3625, 1e-05
        %v3658 = vadd.f32 %v3626, 1e-05
        %v3659 = vadd.f32 %v3627, 1e-05
        %v3660 = vadd.f32 %v3628, 1e-05
        %v3661 = vadd.f32 %v3629, 1e-05
        %v3662 = vadd.f32 %v3630, 1e-05
        %v3663 = vadd.f32 %v3631, 1e-05
        %v3664 = vadd.f32 %v3632, 1e-05
        %v3665 = vadd.f32 %v3633, 1e-05
        %v3666 = vadd.f32 %v3634, 1e-05
        %v3667 = vadd.f32 %v3635, 1e-05
        %v3668 = vadd.f32 %v3636, 1e-05
        %v3669 = vadd.f32 %v3637, 1e-05
        %v3670 = vadd.f32 %v3638, 1e-05
        %v3671 = vadd.f32 %v3639, 1e-05
        %v3672 = vadd.f32 %v3640, 1e-05
        %v3673 = vadd.f32 %v3641, 1e-05
        %v3674 = vadd.f32 %v3642, 1e-05
        %v3675 = vadd.f32 %v3643, 1e-05
        %v3676 = vadd.f32 %v3644, 1e-05
        %v3677 = vadd.f32 %v3645, 1e-05
        %v3678 = vadd.f32 %v3646, 1e-05
        %v3679 = vadd.f32 %v3647, 1e-05
        %v3680 = vrsqrt.pop %v3648
        %v3681 = vrsqrt.pop %v3649
        %v3682 = vrsqrt.pop %v3650
        %v3683 = vrsqrt.pop %v3651
        %v3684 = vrsqrt.pop %v3652
        %v3685 = vrsqrt.pop %v3653
        %v3686 = vrsqrt.pop %v3654
        %v3687 = vrsqrt.pop %v3655
        %v3688 = vrsqrt.pop %v3656
        %v3689 = vrsqrt.pop %v3657
        %v3690 = vrsqrt.pop %v3658
        %v3691 = vrsqrt.pop %v3659
        %v3692 = vrsqrt.pop %v3660
        %v3693 = vrsqrt.pop %v3661
        %v3694 = vrsqrt.pop %v3662
        %v3695 = vrsqrt.pop %v3663
        %v3696 = vrsqrt.pop %v3664
        %v3697 = vrsqrt.pop %v3665
        %v3698 = vrsqrt.pop %v3666
        %v3699 = vrsqrt.pop %v3667
        %v3700 = vrsqrt.pop %v3668
        %v3701 = vrsqrt.pop %v3669
        %v3702 = vrsqrt.pop %v3670
        %v3703 = vrsqrt.pop %v3671
        %v3704 = vrsqrt.pop %v3672
        %v3705 = vrsqrt.pop %v3673
        %v3706 = vrsqrt.pop %v3674
        %v3707 = vrsqrt.pop %v3675
        %v3708 = vrsqrt.pop %v3676
        %v3709 = vrsqrt.pop %v3677
        %v3710 = vrsqrt.pop %v3678
        %v3711 = vrsqrt.pop %v3679
        %v3712 = vmul.f32 %v3680, %v2241
        %v3713 = vmul.f32 %v3680, %v2245
        %v3714 = vmul.f32 %v3681, %v2241
        %v3715 = vmul.f32 %v3681, %v2245
        %v3716 = vmul.f32 %v3682, %v2241
        %v3717 = vmul.f32 %v3682, %v2245
        %v3718 = vmul.f32 %v3683, %v2241
        %v3719 = vmul.f32 %v3683, %v2245
        %v3720 = vmul.f32 %v3684, %v2241
        %v3721 = vmul.f32 %v3684, %v2245
        %v3722 = vmul.f32 %v3685, %v2241
        %v3723 = vmul.f32 %v3685, %v2245
        %v3724 = vmul.f32 %v3686, %v2241
        %v3725 = vmul.f32 %v3686, %v2245
        %v3726 = vmul.f32 %v3687, %v2241
        %v3727 = vmul.f32 %v3687, %v2245
        %v3728 = vmul.f32 %v3688, %v2241
        %v3729 = vmul.f32 %v3688, %v2245
        %v3730 = vmul.f32 %v3689, %v2241
        %v3731 = vmul.f32 %v3689, %v2245
        %v3732 = vmul.f32 %v3690, %v2241
        %v3733 = vmul.f32 %v3690, %v2245
        %v3734 = vmul.f32 %v3691, %v2241
        %v3735 = vmul.f32 %v3691, %v2245
        %v3736 = vmul.f32 %v3692, %v2241
        %v3737 = vmul.f32 %v3692, %v2245
        %v3738 = vmul.f32 %v3693, %v2241
        %v3739 = vmul.f32 %v3693, %v2245
        %v3740 = vmul.f32 %v3694, %v2241
        %v3741 = vmul.f32 %v3694, %v2245
        %v3742 = vmul.f32 %v3695, %v2241
        %v3743 = vmul.f32 %v3695, %v2245
        %v3744 = vmul.f32 %v3696, %v2241
        %v3745 = vmul.f32 %v3696, %v2245
        %v3746 = vmul.f32 %v3697, %v2241
        %v3747 = vmul.f32 %v3697, %v2245
        %v3748 = vmul.f32 %v3698, %v2241
        %v3749 = vmul.f32 %v3698, %v2245
        %v3750 = vmul.f32 %v3699, %v2241
        %v3751 = vmul.f32 %v3699, %v2245
        %v3752 = vmul.f32 %v3700, %v2241
        %v3753 = vmul.f32 %v3700, %v2245
        %v3754 = vmul.f32 %v3701, %v2241
        %v3755 = vmul.f32 %v3701, %v2245
        %v3756 = vmul.f32 %v3702, %v2241
        %v3757 = vmul.f32 %v3702, %v2245
        %v3758 = vmul.f32 %v3703, %v2241
        %v3759 = vmul.f32 %v3703, %v2245
        %v3760 = vmul.f32 %v3704, %v2241
        %v3761 = vmul.f32 %v3704, %v2245
        %v3762 = vmul.f32 %v3705, %v2241
        %v3763 = vmul.f32 %v3705, %v2245
        %v3764 = vmul.f32 %v3706, %v2241
        %v3765 = vmul.f32 %v3706, %v2245
        %v3766 = vmul.f32 %v3707, %v2241
        %v3767 = vmul.f32 %v3707, %v2245
        %v3768 = vmul.f32 %v3708, %v2241
        %v3769 = vmul.f32 %v3708, %v2245
        %v3770 = vmul.f32 %v3709, %v2241
        %v3771 = vmul.f32 %v3709, %v2245
        %v3772 = vmul.f32 %v3710, %v2241
        %v3773 = vmul.f32 %v3710, %v2245
        %v3774 = vmul.f32 %v3711, %v2241
        %v3775 = vmul.f32 %v3711, %v2245
        %v3776 = vmul.f32 %v3392, %v3712
        %v3777 = vmul.f32 %v3393, %v3713
        %v3778 = vmul.f32 %v3394, %v3714
        %v3779 = vmul.f32 %v3395, %v3715
        %v3780 = vmul.f32 %v3396, %v3716
        %v3781 = vmul.f32 %v3397, %v3717
        %v3782 = vmul.f32 %v3398, %v3718
        %v3783 = vmul.f32 %v3399, %v3719
        %v3784 = vmul.f32 %v3400, %v3720
        %v3785 = vmul.f32 %v3401, %v3721
        %v3786 = vmul.f32 %v3402, %v3722
        %v3787 = vmul.f32 %v3403, %v3723
        %v3788 = vmul.f32 %v3404, %v3724
        %v3789 = vmul.f32 %v3405, %v3725
        %v3790 = vmul.f32 %v3406, %v3726
        %v3791 = vmul.f32 %v3407, %v3727
        %v3792 = vmul.f32 %v3408, %v3728
        %v3793 = vmul.f32 %v3409, %v3729
        %v3794 = vmul.f32 %v3410, %v3730
        %v3795 = vmul.f32 %v3411, %v3731
        %v3796 = vmul.f32 %v3412, %v3732
        %v3797 = vmul.f32 %v3413, %v3733
        %v3798 = vmul.f32 %v3414, %v3734
        %v3799 = vmul.f32 %v3415, %v3735
        %v3800 = vmul.f32 %v3416, %v3736
        %v3801 = vmul.f32 %v3417, %v3737
        %v3802 = vmul.f32 %v3418, %v3738
        %v3803 = vmul.f32 %v3419, %v3739
        %v3804 = vmul.f32 %v3420, %v3740
        %v3805 = vmul.f32 %v3421, %v3741
        %v3806 = vmul.f32 %v3422, %v3742
        %v3807 = vmul.f32 %v3423, %v3743
        %v3808 = vmul.f32 %v3424, %v3744
        %v3809 = vmul.f32 %v3425, %v3745
        %v3810 = vmul.f32 %v3426, %v3746
        %v3811 = vmul.f32 %v3427, %v3747
        %v3812 = vmul.f32 %v3428, %v3748
        %v3813 = vmul.f32 %v3429, %v3749
        %v3814 = vmul.f32 %v3430, %v3750
        %v3815 = vmul.f32 %v3431, %v3751
        %v3816 = vmul.f32 %v3432, %v3752
        %v3817 = vmul.f32 %v3433, %v3753
        %v3818 = vmul.f32 %v3434, %v3754
        %v3819 = vmul.f32 %v3435, %v3755
        %v3820 = vmul.f32 %v3436, %v3756
        %v3821 = vmul.f32 %v3437, %v3757
        %v3822 = vmul.f32 %v3438, %v3758
        %v3823 = vmul.f32 %v3439, %v3759
        %v3824 = vmul.f32 %v3440, %v3760
        %v3825 = vmul.f32 %v3441, %v3761
        %v3826 = vmul.f32 %v3442, %v3762
        %v3827 = vmul.f32 %v3443, %v3763
        %v3828 = vmul.f32 %v3444, %v3764
        %v3829 = vmul.f32 %v3445, %v3765
        %v3830 = vmul.f32 %v3446, %v3766
        %v3831 = vmul.f32 %v3447, %v3767
        %v3832 = vmul.f32 %v3448, %v3768
        %v3833 = vmul.f32 %v3449, %v3769
        %v3834 = vmul.f32 %v3450, %v3770
        %v3835 = vmul.f32 %v3451, %v3771
        %v3836 = vmul.f32 %v3452, %v3772
        %v3837 = vmul.f32 %v3453, %v3773
        %v3838 = vmul.f32 %v3454, %v3774
        %v3839 = vmul.f32 %v3455, %v3775
        %v3840 = vadd.f32 %v3776, %v2380
        %v3841 = vadd.f32 %v3777, %v2384
        %v3842 = vadd.f32 %v3778, %v2380
        %v3843 = vadd.f32 %v3779, %v2384
        %v3844 = vadd.f32 %v3780, %v2380
        %v3845 = vadd.f32 %v3781, %v2384
        %v3846 = vadd.f32 %v3782, %v2380
        %v3847 = vadd.f32 %v3783, %v2384
        %v3848 = vadd.f32 %v3784, %v2380
        %v3849 = vadd.f32 %v3785, %v2384
        %v3850 = vadd.f32 %v3786, %v2380
        %v3851 = vadd.f32 %v3787, %v2384
        %v3852 = vadd.f32 %v3788, %v2380
        %v3853 = vadd.f32 %v3789, %v2384
        %v3854 = vadd.f32 %v3790, %v2380
        %v3855 = vadd.f32 %v3791, %v2384
        %v3856 = vadd.f32 %v3792, %v2380
        %v3857 = vadd.f32 %v3793, %v2384
        %v3858 = vadd.f32 %v3794, %v2380
        %v3859 = vadd.f32 %v3795, %v2384
        %v3860 = vadd.f32 %v3796, %v2380
        %v3861 = vadd.f32 %v3797, %v2384
        %v3862 = vadd.f32 %v3798, %v2380
        %v3863 = vadd.f32 %v3799, %v2384
        %v3864 = vadd.f32 %v3800, %v2380
        %v3865 = vadd.f32 %v3801, %v2384
        %v3866 = vadd.f32 %v3802, %v2380
        %v3867 = vadd.f32 %v3803, %v2384
        %v3868 = vadd.f32 %v3804, %v2380
        %v3869 = vadd.f32 %v3805, %v2384
        %v3870 = vadd.f32 %v3806, %v2380
        %v3871 = vadd.f32 %v3807, %v2384
        %v3872 = vadd.f32 %v3808, %v2380
        %v3873 = vadd.f32 %v3809, %v2384
        %v3874 = vadd.f32 %v3810, %v2380
        %v3875 = vadd.f32 %v3811, %v2384
        %v3876 = vadd.f32 %v3812, %v2380
        %v3877 = vadd.f32 %v3813, %v2384
        %v3878 = vadd.f32 %v3814, %v2380
        %v3879 = vadd.f32 %v3815, %v2384
        %v3880 = vadd.f32 %v3816, %v2380
        %v3881 = vadd.f32 %v3817, %v2384
        %v3882 = vadd.f32 %v3818, %v2380
        %v3883 = vadd.f32 %v3819, %v2384
        %v3884 = vadd.f32 %v3820, %v2380
        %v3885 = vadd.f32 %v3821, %v2384
        %v3886 = vadd.f32 %v3822, %v2380
        %v3887 = vadd.f32 %v3823, %v2384
        %v3888 = vadd.f32 %v3824, %v2380
        %v3889 = vadd.f32 %v3825, %v2384
        %v3890 = vadd.f32 %v3826, %v2380
        %v3891 = vadd.f32 %v3827, %v2384
        %v3892 = vadd.f32 %v3828, %v2380
        %v3893 = vadd.f32 %v3829, %v2384
        %v3894 = vadd.f32 %v3830, %v2380
        %v3895 = vadd.f32 %v3831, %v2384
        %v3896 = vadd.f32 %v3832, %v2380
        %v3897 = vadd.f32 %v3833, %v2384
        %v3898 = vadd.f32 %v3834, %v2380
        %v3899 = vadd.f32 %v3835, %v2384
        %v3900 = vadd.f32 %v3836, %v2380
        %v3901 = vadd.f32 %v3837, %v2384
        %v3902 = vadd.f32 %v3838, %v2380
        %v3903 = vadd.f32 %v3839, %v2384
        %v3904 = vld [vmem:[%s8] sm:$0x3]
        %v3905 = vpack.c.bf16 %v3842, %v3840
        %v3906 = vpack.c.bf16 %v3843, %v3841
        %v3907 = vpack.c.bf16 %v3846, %v3844
        %v3908 = vpack.c.bf16 %v3847, %v3845
        %v3909 = vpack.c.bf16 %v3850, %v3848
        %v3910 = vpack.c.bf16 %v3851, %v3849
        %v3911 = vpack.c.bf16 %v3854, %v3852
        %v3912 = vpack.c.bf16 %v3855, %v3853
        %v3913 = vpack.c.bf16 %v3858, %v3856
        %v3914 = vpack.c.bf16 %v3859, %v3857
        %v3915 = vpack.c.bf16 %v3862, %v3860
        %v3916 = vpack.c.bf16 %v3863, %v3861
        %v3917 = vpack.c.bf16 %v3866, %v3864
        %v3918 = vpack.c.bf16 %v3867, %v3865
        %v3919 = vpack.c.bf16 %v3870, %v3868
        %v3920 = vpack.c.bf16 %v3871, %v3869
        %v3921 = vpack.c.bf16 %v3874, %v3872
        %v3922 = vpack.c.bf16 %v3875, %v3873
        %v3923 = vpack.c.bf16 %v3878, %v3876
        %v3924 = vpack.c.bf16 %v3879, %v3877
        %v3925 = vpack.c.bf16 %v3882, %v3880
        %v3926 = vpack.c.bf16 %v3883, %v3881
        %v3927 = vpack.c.bf16 %v3886, %v3884
        %v3928 = vpack.c.bf16 %v3887, %v3885
        %v3929 = vpack.c.bf16 %v3890, %v3888
        %v3930 = vpack.c.bf16 %v3891, %v3889
        %v3931 = vpack.c.bf16 %v3894, %v3892
        %v3932 = vpack.c.bf16 %v3895, %v3893
        %v3933 = vpack.c.bf16 %v3898, %v3896
        %v3934 = vpack.c.bf16 %v3899, %v3897
        %v3935 = vpack.c.bf16 %v3902, %v3900
        %v3936 = vpack.c.bf16 %v3903, %v3901
        %v3937 = vld [vmem:[#allocation11] sm:$0xff]
        %v3938 = vld [vmem:[#allocation11 + $0x8] sm:$0xff]
        %v3939 = vld [vmem:[#allocation11 + $0x10] sm:$0xff]
        %v3940 = vld [vmem:[#allocation11 + $0x18] sm:$0xff]
        %v3941 = vld [vmem:[#allocation11 + $0x20] sm:$0xff]
        %v3942 = vld [vmem:[#allocation11 + $0x28] sm:$0xff]
        %v3943 = vld [vmem:[#allocation11 + $0x30] sm:$0xff]
        %v3944 = vld [vmem:[#allocation11 + $0x38] sm:$0xff]
        %v3945 = vld [vmem:[#allocation11 + $0x40] sm:$0xff]
        %v3946 = vld [vmem:[#allocation11 + $0x48] sm:$0xff]
        %v3947 = vld [vmem:[#allocation11 + $0x50] sm:$0xff]
        %v3948 = vld [vmem:[#allocation11 + $0x58] sm:$0xff]
        %v3949 = vld [vmem:[#allocation11 + $0x60] sm:$0xff]
        %v3950 = vld [vmem:[#allocation11 + $0x68] sm:$0xff]
        %v3951 = vld [vmem:[#allocation11 + $0x70] sm:$0xff]
        %v3952 = vld [vmem:[#allocation11 + $0x78] sm:$0xff]
        %v3953 = vld [vmem:[#allocation11 + $0x80] sm:$0xff]
        %v3954 = vld [vmem:[#allocation11 + $0x88] sm:$0xff]
        %v3955 = vld [vmem:[#allocation11 + $0x90] sm:$0xff]
        %v3956 = vld [vmem:[#allocation11 + $0x98] sm:$0xff]
        %v3957 = vld [vmem:[#allocation11 + $0xa0] sm:$0xff]
        %v3958 = vld [vmem:[#allocation11 + $0xa8] sm:$0xff]
        %v3959 = vld [vmem:[#allocation11 + $0xb0] sm:$0xff]
        %v3960 = vld [vmem:[#allocation11 + $0xb8] sm:$0xff]
        %v3961 = vld [vmem:[#allocation11 + $0xc0] sm:$0xff]
        %v3962 = vld [vmem:[#allocation11 + $0xc8] sm:$0xff]
        %v3963 = vld [vmem:[#allocation11 + $0xd0] sm:$0xff]
        %v3964 = vld [vmem:[#allocation11 + $0xd8] sm:$0xff]
        %v3965 = vld [vmem:[#allocation11 + $0xe0] sm:$0xff]
        %v3966 = vld [vmem:[#allocation11 + $0xe8] sm:$0xff]
        %v3967 = vld [vmem:[#allocation11 + $0xf0] sm:$0xff]
        %v3968 = vld [vmem:[#allocation11 + $0xf8] sm:$0xff]
        %v4001 = vunpack.c.l.b16 %v3937
        %v4002 = vunpack.c.h.b16 %v3937
        %v4003 = vunpack.c.l.b16 %v3938
        %v4004 = vunpack.c.h.b16 %v3938
        %v4005 = vunpack.c.l.b16 %v3939
        %v4006 = vunpack.c.h.b16 %v3939
        %v4007 = vunpack.c.l.b16 %v3940
        %v4008 = vunpack.c.h.b16 %v3940
        %v4009 = vunpack.c.l.b16 %v3941
        %v4010 = vunpack.c.h.b16 %v3941
        %v4011 = vunpack.c.l.b16 %v3942
        %v4012 = vunpack.c.h.b16 %v3942
        %v4013 = vunpack.c.l.b16 %v3943
        %v4014 = vunpack.c.h.b16 %v3943
        %v4015 = vunpack.c.l.b16 %v3944
        %v4016 = vunpack.c.h.b16 %v3944
        %v4017 = vunpack.c.l.b16 %v3945
        %v4018 = vunpack.c.h.b16 %v3945
        %v4019 = vunpack.c.l.b16 %v3946
        %v4020 = vunpack.c.h.b16 %v3946
        %v4021 = vunpack.c.l.b16 %v3947
        %v4022 = vunpack.c.h.b16 %v3947
        %v4023 = vunpack.c.l.b16 %v3948
        %v4024 = vunpack.c.h.b16 %v3948
        %v4025 = vunpack.c.l.b16 %v3949
        %v4026 = vunpack.c.h.b16 %v3949
        %v4027 = vunpack.c.l.b16 %v3950
        %v4028 = vunpack.c.h.b16 %v3950
        %v4029 = vunpack.c.l.b16 %v3951
        %v4030 = vunpack.c.h.b16 %v3951
        %v4031 = vunpack.c.l.b16 %v3952
        %v4032 = vunpack.c.h.b16 %v3952
        %v4033 = vunpack.c.l.b16 %v3953
        %v4034 = vunpack.c.h.b16 %v3953
        %v4035 = vunpack.c.l.b16 %v3954
        %v4036 = vunpack.c.h.b16 %v3954
        %v4037 = vunpack.c.l.b16 %v3955
        %v4038 = vunpack.c.h.b16 %v3955
        %v4039 = vunpack.c.l.b16 %v3956
        %v4040 = vunpack.c.h.b16 %v3956
        %v4041 = vunpack.c.l.b16 %v3957
        %v4042 = vunpack.c.h.b16 %v3957
        %v4043 = vunpack.c.l.b16 %v3958
        %v4044 = vunpack.c.h.b16 %v3958
        %v4045 = vunpack.c.l.b16 %v3959
        %v4046 = vunpack.c.h.b16 %v3959
        %v4047 = vunpack.c.l.b16 %v3960
        %v4048 = vunpack.c.h.b16 %v3960
        %v4049 = vunpack.c.l.b16 %v3961
        %v4050 = vunpack.c.h.b16 %v3961
        %v4051 = vunpack.c.l.b16 %v3962
        %v4052 = vunpack.c.h.b16 %v3962
        %v4053 = vunpack.c.l.b16 %v3963
        %v4054 = vunpack.c.h.b16 %v3963
        %v4055 = vunpack.c.l.b16 %v3964
        %v4056 = vunpack.c.h.b16 %v3964
        %v4057 = vunpack.c.l.b16 %v3965
        %v4058 = vunpack.c.h.b16 %v3965
        %v4059 = vunpack.c.l.b16 %v3966
        %v4060 = vunpack.c.h.b16 %v3966
        %v4061 = vunpack.c.l.b16 %v3967
        %v4062 = vunpack.c.h.b16 %v3967
        %v4063 = vunpack.c.l.b16 %v3968
        %v4064 = vunpack.c.h.b16 %v3968
        %v4065 = vpack.c.b16 %v4003, %v4001
        %v4066 = vpack.c.b16 %v4004, %v4002
        %v4067 = vpack.c.b16 %v4007, %v4005
        %v4068 = vpack.c.b16 %v4008, %v4006
        %v4069 = vpack.c.b16 %v4011, %v4009
        %v4070 = vpack.c.b16 %v4012, %v4010
        %v4071 = vpack.c.b16 %v4015, %v4013
        %v4072 = vpack.c.b16 %v4016, %v4014
        %v4073 = vpack.c.b16 %v4019, %v4017
        %v4074 = vpack.c.b16 %v4020, %v4018
        %v4075 = vpack.c.b16 %v4023, %v4021
        %v4076 = vpack.c.b16 %v4024, %v4022
        %v4077 = vpack.c.b16 %v4027, %v4025
        %v4078 = vpack.c.b16 %v4028, %v4026
        %v4079 = vpack.c.b16 %v4031, %v4029
        %v4080 = vpack.c.b16 %v4032, %v4030
        %v4081 = vpack.c.b16 %v4035, %v4033
        %v4082 = vpack.c.b16 %v4036, %v4034
        %v4083 = vpack.c.b16 %v4039, %v4037
        %v4084 = vpack.c.b16 %v4040, %v4038
        %v4085 = vpack.c.b16 %v4043, %v4041
        %v4086 = vpack.c.b16 %v4044, %v4042
        %v4087 = vpack.c.b16 %v4047, %v4045
        %v4088 = vpack.c.b16 %v4048, %v4046
        %v4089 = vpack.c.b16 %v4051, %v4049
        %v4090 = vpack.c.b16 %v4052, %v4050
        %v4091 = vpack.c.b16 %v4055, %v4053
        %v4092 = vpack.c.b16 %v4056, %v4054
        %v4093 = vpack.c.b16 %v4059, %v4057
        %v4094 = vpack.c.b16 %v4060, %v4058
        %v4095 = vpack.c.b16 %v4063, %v4061
        %v4096 = vpack.c.b16 %v4064, %v4062
        %4129 = vmatprep.subr.bf16.mxu0 %v4066
        %4130 = vmatpush1.bf16.msra.mxu0 %v4065
        %4131 = vmatprep.subr.bf16.mxu0 %v4068
        %4132 = vmatpush1.bf16.msra.mxu0 %v4067
        %4133 = vmatprep.subr.bf16.mxu0 %v4070
        %4134 = vmatpush1.bf16.msra.mxu0 %v4069
        %4135 = vmatprep.subr.bf16.mxu0 %v4072
        %4136 = vmatpush1.bf16.msra.mxu0 %v4071
        %4137 = vmatprep.subr.bf16.mxu0 %v4074
        %4138 = vmatpush1.bf16.msra.mxu0 %v4073
        %4139 = vmatprep.subr.bf16.mxu0 %v4076
        %4140 = vmatpush1.bf16.msra.mxu0 %v4075
        %4141 = vmatprep.subr.bf16.mxu0 %v4078
        %4142 = vmatpush1.bf16.msra.mxu0 %v4077
        %4143 = vmatprep.subr.bf16.mxu0 %v4080
        %4144 = vmatpush1.bf16.msra.mxu0 %v4079
        %4145 = vmatprep.subr.bf16.mxu0 %v4082
        %4146 = vmatpush1.bf16.msra.mxu0 %v4081
        %4147 = vmatprep.subr.bf16.mxu0 %v4084
        %4148 = vmatpush1.bf16.msra.mxu0 %v4083
        %4149 = vmatprep.subr.bf16.mxu0 %v4086
        %4150 = vmatpush1.bf16.msra.mxu0 %v4085
        %4151 = vmatprep.subr.bf16.mxu0 %v4088
        %4152 = vmatpush1.bf16.msra.mxu0 %v4087
        %4153 = vmatprep.subr.bf16.mxu0 %v4090
        %4154 = vmatpush1.bf16.msra.mxu0 %v4089
        %4155 = vmatprep.subr.bf16.mxu0 %v4092
        %4156 = vmatpush1.bf16.msra.mxu0 %v4091
        %4157 = vmatprep.subr.bf16.mxu0 %v4094
        %4158 = vmatpush1.bf16.msra.mxu0 %v4093
        %4159 = vmatprep.subr.bf16.mxu0 %v4096
        %4160 = vmatpush1.bf16.msra.mxu0 %v4095
        %4161 = vmatprep.mubr.bf16.mxu0 %v3906
        %4162 = vmatmul.mubr.bf16.gmra.mrb[0].mxu0 %v3905
        %v4163 = vpop.f32.mrb[0].mxu0
        %v4164 = vadd.f32 0.0, %v4163
        %v4165 = vpop.f32.mrb[0].mxu0
        %v4166 = vadd.f32 0.0, %v4165
        %v4167 = vpop.f32.mrb[0].mxu0
        %v4168 = vadd.f32 0.0, %v4167
        %v4169 = vpop.f32.mrb[0].mxu0
        %v4170 = vadd.f32 0.0, %v4169
        %4171 = vmatprep.mubr.bf16.mxu0 %v3908
        %4172 = vmatmul.mubr.bf16.gmra.mrb[0].mxu0 %v3907
        %v4173 = vpop.f32.mrb[0].mxu0
        %v4174 = vadd.f32 0.0, %v4173
        %v4175 = vpop.f32.mrb[0].mxu0
        %v4176 = vadd.f32 0.0, %v4175
        %v4177 = vpop.f32.mrb[0].mxu0
        %v4178 = vadd.f32 0.0, %v4177
        %v4179 = vpop.f32.mrb[0].mxu0
        %v4180 = vadd.f32 0.0, %v4179
        %4181 = vmatprep.mubr.bf16.mxu0 %v3910
        %4182 = vmatmul.mubr.bf16.gmra.mrb[0].mxu0 %v3909
        %v4183 = vpop.f32.mrb[0].mxu0
        %v4184 = vadd.f32 0.0, %v4183
        %v4185 = vpop.f32.mrb[0].mxu0
        %v4186 = vadd.f32 0.0, %v4185
        %v4187 = vpop.f32.mrb[0].mxu0
        %v4188 = vadd.f32 0.0, %v4187
        %v4189 = vpop.f32.mrb[0].mxu0
        %v4190 = vadd.f32 0.0, %v4189
        %4191 = vmatprep.mubr.bf16.mxu0 %v3912
        %4192 = vmatmul.mubr.bf16.gmra.mrb[0].mxu0 %v3911
        %v4193 = vpop.f32.mrb[0].mxu0
        %v4194 = vadd.f32 0.0, %v4193
        %v4195 = vpop.f32.mrb[0].mxu0
        %v4196 = vadd.f32 0.0, %v4195
        %v4197 = vpop.f32.mrb[0].mxu0
        %v4198 = vadd.f32 0.0, %v4197
        %v4199 = vpop.f32.mrb[0].mxu0
        %v4200 = vadd.f32 0.0, %v4199
        %4201 = vmatprep.mubr.bf16.mxu0 %v3914
        %4202 = vmatmul.mubr.bf16.gmra.mrb[0].mxu0 %v3913
        %v4203 = vpop.f32.mrb[0].mxu0
        %v4204 = vadd.f32 0.0, %v4203
        %v4205 = vpop.f32.mrb[0].mxu0
        %v4206 = vadd.f32 0.0, %v4205
        %v4207 = vpop.f32.mrb[0].mxu0
        %v4208 = vadd.f32 0.0, %v4207
        %v4209 = vpop.f32.mrb[0].mxu0
        %v4210 = vadd.f32 0.0, %v4209
        %4211 = vmatprep.mubr.bf16.mxu0 %v3916
        %4212 = vmatmul.mubr.bf16.gmra.mrb[0].mxu0 %v3915
        %v4213 = vpop.f32.mrb[0].mxu0
        %v4214 = vadd.f32 0.0, %v4213
        %v4215 = vpop.f32.mrb[0].mxu0
        %v4216 = vadd.f32 0.0, %v4215
        %v4217 = vpop.f32.mrb[0].mxu0
        %v4218 = vadd.f32 0.0, %v4217
        %v4219 = vpop.f32.mrb[0].mxu0
        %v4220 = vadd.f32 0.0, %v4219
        %4221 = vmatprep.mubr.bf16.mxu0 %v3918
        %4222 = vmatmul.mubr.bf16.gmra.mrb[0].mxu0 %v3917
        %v4223 = vpop.f32.mrb[0].mxu0
        %v4224 = vadd.f32 0.0, %v4223
        %v4225 = vpop.f32.mrb[0].mxu0
        %v4226 = vadd.f32 0.0, %v4225
        %v4227 = vpop.f32.mrb[0].mxu0
        %v4228 = vadd.f32 0.0, %v4227
        %v4229 = vpop.f32.mrb[0].mxu0
        %v4230 = vadd.f32 0.0, %v4229
        %4231 = vmatprep.mubr.bf16.mxu0 %v3920
        %4232 = vmatmul.mubr.bf16.gmra.mrb[0].mxu0 %v3919
        %v4233 = vpop.f32.mrb[0].mxu0
        %v4234 = vadd.f32 0.0, %v4233
        %v4235 = vpop.f32.mrb[0].mxu0
        %v4236 = vadd.f32 0.0, %v4235
        %v4237 = vpop.f32.mrb[0].mxu0
        %v4238 = vadd.f32 0.0, %v4237
        %v4239 = vpop.f32.mrb[0].mxu0
        %v4240 = vadd.f32 0.0, %v4239
        %4241 = vmatprep.mubr.bf16.mxu0 %v3922
        %4242 = vmatmul.mubr.bf16.gmra.mrb[0].mxu0 %v3921
        %v4243 = vpop.f32.mrb[0].mxu0
        %v4244 = vadd.f32 0.0, %v4243
        %v4245 = vpop.f32.mrb[0].mxu0
        %v4246 = vadd.f32 0.0, %v4245
        %v4247 = vpop.f32.mrb[0].mxu0
        %v4248 = vadd.f32 0.0, %v4247
        %v4249 = vpop.f32.mrb[0].mxu0
        %v4250 = vadd.f32 0.0, %v4249
        %4251 = vmatprep.mubr.bf16.mxu0 %v3924
        %4252 = vmatmul.mubr.bf16.gmra.mrb[0].mxu0 %v3923
        %v4253 = vpop.f32.mrb[0].mxu0
        %v4254 = vadd.f32 0.0, %v4253
        %v4255 = vpop.f32.mrb[0].mxu0
        %v4256 = vadd.f32 0.0, %v4255
        %v4257 = vpop.f32.mrb[0].mxu0
        %v4258 = vadd.f32 0.0, %v4257
        %v4259 = vpop.f32.mrb[0].mxu0
        %v4260 = vadd.f32 0.0, %v4259
        %4261 = vmatprep.mubr.bf16.mxu0 %v3926
        %4262 = vmatmul.mubr.bf16.gmra.mrb[0].mxu0 %v3925
        %v4263 = vpop.f32.mrb[0].mxu0
        %v4264 = vadd.f32 0.0, %v4263
        %v4265 = vpop.f32.mrb[0].mxu0
        %v4266 = vadd.f32 0.0, %v4265
        %v4267 = vpop.f32.mrb[0].mxu0
        %v4268 = vadd.f32 0.0, %v4267
        %v4269 = vpop.f32.mrb[0].mxu0
        %v4270 = vadd.f32 0.0, %v4269
        %4271 = vmatprep.mubr.bf16.mxu0 %v3928
        %4272 = vmatmul.mubr.bf16.gmra.mrb[0].mxu0 %v3927
        %v4273 = vpop.f32.mrb[0].mxu0
        %v4274 = vadd.f32 0.0, %v4273
        %v4275 = vpop.f32.mrb[0].mxu0
        %v4276 = vadd.f32 0.0, %v4275
        %v4277 = vpop.f32.mrb[0].mxu0
        %v4278 = vadd.f32 0.0, %v4277
        %v4279 = vpop.f32.mrb[0].mxu0
        %v4280 = vadd.f32 0.0, %v4279
        %4281 = vmatprep.mubr.bf16.mxu0 %v3930
        %4282 = vmatmul.mubr.bf16.gmra.mrb[0].mxu0 %v3929
        %v4283 = vpop.f32.mrb[0].mxu0
        %v4284 = vadd.f32 0.0, %v4283
        %v4285 = vpop.f32.mrb[0].mxu0
        %v4286 = vadd.f32 0.0, %v4285
        %v4287 = vpop.f32.mrb[0].mxu0
        %v4288 = vadd.f32 0.0, %v4287
        %v4289 = vpop.f32.mrb[0].mxu0
        %v4290 = vadd.f32 0.0, %v4289
        %4291 = vmatprep.mubr.bf16.mxu0 %v3932
        %4292 = vmatmul.mubr.bf16.gmra.mrb[0].mxu0 %v3931
        %v4293 = vpop.f32.mrb[0].mxu0
        %v4294 = vadd.f32 0.0, %v4293
        %v4295 = vpop.f32.mrb[0].mxu0
        %v4296 = vadd.f32 0.0, %v4295
        %v4297 = vpop.f32.mrb[0].mxu0
        %v4298 = vadd.f32 0.0, %v4297
        %v4299 = vpop.f32.mrb[0].mxu0
        %v4300 = vadd.f32 0.0, %v4299
        %4301 = vmatprep.mubr.bf16.mxu0 %v3934
        %4302 = vmatmul.mubr.bf16.gmra.mrb[0].mxu0 %v3933
        %v4303 = vpop.f32.mrb[0].mxu0
        %v4304 = vadd.f32 0.0, %v4303
        %v4305 = vpop.f32.mrb[0].mxu0
        %v4306 = vadd.f32 0.0, %v4305
        %v4307 = vpop.f32.mrb[0].mxu0
        %v4308 = vadd.f32 0.0, %v4307
        %v4309 = vpop.f32.mrb[0].mxu0
        %v4310 = vadd.f32 0.0, %v4309
        %4311 = vmatprep.mubr.bf16.mxu0 %v3936
        %4312 = vmatmul.mubr.bf16.gmra.mrb[0].mxu0 %v3935
        %v4313 = vpop.f32.mrb[0].mxu0
        %v4314 = vadd.f32 0.0, %v4313
        %v4315 = vpop.f32.mrb[0].mxu0
        %v4316 = vadd.f32 0.0, %v4315
        %v4317 = vpop.f32.mrb[0].mxu0
        %v4318 = vadd.f32 0.0, %v4317
        %v4319 = vpop.f32.mrb[0].mxu0
        %v4320 = vadd.f32 0.0, %v4319
        %4321 = vdwg.mxu0
        %v4323 = vlaneseq
        %v4324 = vshrl.u32 %v4323, 7
        %v4325 = vsub.s32 0, %v4324
        %v4326 = vrot.slane %v3904, %v4325
        %v4327 = vlaneseq
        %v4328 = vshrl.u32 %v4327, 7
        %v4329 = vsub.s32 1, %v4328
        %v4330 = vrot.slane %v3904, %v4329
        %v4333 = vadd.f32 %v4326, %v4164
        %v4334 = vadd.f32 %v4330, %v4166
        %v4335 = vadd.f32 %v4326, %v4168
        %v4336 = vadd.f32 %v4330, %v4170
        %v4337 = vadd.f32 %v4326, %v4174
        %v4338 = vadd.f32 %v4330, %v4176
        %v4339 = vadd.f32 %v4326, %v4178
        %v4340 = vadd.f32 %v4330, %v4180
        %v4341 = vadd.f32 %v4326, %v4184
        %v4342 = vadd.f32 %v4330, %v4186
        %v4343 = vadd.f32 %v4326, %v4188
        %v4344 = vadd.f32 %v4330, %v4190
        %v4345 = vadd.f32 %v4326, %v4194
        %v4346 = vadd.f32 %v4330, %v4196
        %v4347 = vadd.f32 %v4326, %v4198
        %v4348 = vadd.f32 %v4330, %v4200
        %v4349 = vadd.f32 %v4326, %v4204
        %v4350 = vadd.f32 %v4330, %v4206
        %v4351 = vadd.f32 %v4326, %v4208
        %v4352 = vadd.f32 %v4330, %v4210
        %v4353 = vadd.f32 %v4326, %v4214
        %v4354 = vadd.f32 %v4330, %v4216
        %v4355 = vadd.f32 %v4326, %v4218
        %v4356 = vadd.f32 %v4330, %v4220
        %v4357 = vadd.f32 %v4326, %v4224
        %v4358 = vadd.f32 %v4330, %v4226
        %v4359 = vadd.f32 %v4326, %v4228
        %v4360 = vadd.f32 %v4330, %v4230
        %v4361 = vadd.f32 %v4326, %v4234
        %v4362 = vadd.f32 %v4330, %v4236
        %v4363 = vadd.f32 %v4326, %v4238
        %v4364 = vadd.f32 %v4330, %v4240
        %v4365 = vadd.f32 %v4326, %v4244
        %v4366 = vadd.f32 %v4330, %v4246
        %v4367 = vadd.f32 %v4326, %v4248
        %v4368 = vadd.f32 %v4330, %v4250
        %v4369 = vadd.f32 %v4326, %v4254
        %v4370 = vadd.f32 %v4330, %v4256
        %v4371 = vadd.f32 %v4326, %v4258
        %v4372 = vadd.f32 %v4330, %v4260
        %v4373 = vadd.f32 %v4326, %v4264
        %v4374 = vadd.f32 %v4330, %v4266
        %v4375 = vadd.f32 %v4326, %v4268
        %v4376 = vadd.f32 %v4330, %v4270
        %v4377 = vadd.f32 %v4326, %v4274
        %v4378 = vadd.f32 %v4330, %v4276
        %v4379 = vadd.f32 %v4326, %v4278
        %v4380 = vadd.f32 %v4330, %v4280
        %v4381 = vadd.f32 %v4326, %v4284
        %v4382 = vadd.f32 %v4330, %v4286
        %v4383 = vadd.f32 %v4326, %v4288
        %v4384 = vadd.f32 %v4330, %v4290
        %v4385 = vadd.f32 %v4326, %v4294
        %v4386 = vadd.f32 %v4330, %v4296
        %v4387 = vadd.f32 %v4326, %v4298
        %v4388 = vadd.f32 %v4330, %v4300
        %v4389 = vadd.f32 %v4326, %v4304
        %v4390 = vadd.f32 %v4330, %v4306
        %v4391 = vadd.f32 %v4326, %v4308
        %v4392 = vadd.f32 %v4330, %v4310
        %v4393 = vadd.f32 %v4326, %v4314
        %v4394 = vadd.f32 %v4330, %v4316
        %v4395 = vadd.f32 %v4326, %v4318
        %v4396 = vadd.f32 %v4330, %v4320
        %v4397 = vpack.c.bf16 %v4335, %v4333
        %v4398 = vpack.c.bf16 %v4336, %v4334
        %v4399 = vpack.c.bf16 %v4339, %v4337
        %v4400 = vpack.c.bf16 %v4340, %v4338
        %v4401 = vpack.c.bf16 %v4343, %v4341
        %v4402 = vpack.c.bf16 %v4344, %v4342
        %v4403 = vpack.c.bf16 %v4347, %v4345
        %v4404 = vpack.c.bf16 %v4348, %v4346
        %v4405 = vpack.c.bf16 %v4351, %v4349
        %v4406 = vpack.c.bf16 %v4352, %v4350
        %v4407 = vpack.c.bf16 %v4355, %v4353
        %v4408 = vpack.c.bf16 %v4356, %v4354
        %v4409 = vpack.c.bf16 %v4359, %v4357
        %v4410 = vpack.c.bf16 %v4360, %v4358
        %v4411 = vpack.c.bf16 %v4363, %v4361
        %v4412 = vpack.c.bf16 %v4364, %v4362
        %v4413 = vpack.c.bf16 %v4367, %v4365
        %v4414 = vpack.c.bf16 %v4368, %v4366
        %v4415 = vpack.c.bf16 %v4371, %v4369
        %v4416 = vpack.c.bf16 %v4372, %v4370
        %v4417 = vpack.c.bf16 %v4375, %v4373
        %v4418 = vpack.c.bf16 %v4376, %v4374
        %v4419 = vpack.c.bf16 %v4379, %v4377
        %v4420 = vpack.c.bf16 %v4380, %v4378
        %v4421 = vpack.c.bf16 %v4383, %v4381
        %v4422 = vpack.c.bf16 %v4384, %v4382
        %v4423 = vpack.c.bf16 %v4387, %v4385
        %v4424 = vpack.c.bf16 %v4388, %v4386
        %v4425 = vpack.c.bf16 %v4391, %v4389
        %v4426 = vpack.c.bf16 %v4392, %v4390
        %v4427 = vpack.c.bf16 %v4395, %v4393
        %v4428 = vpack.c.bf16 %v4396, %v4394
        %v4461 = vunpack.c.l.b16 %v4397
        %v4462 = vunpack.c.l.b16 %v4398
        %v4463 = vunpack.c.h.b16 %v4397
        %v4464 = vunpack.c.h.b16 %v4398
        %v4465 = vunpack.c.l.b16 %v4399
        %v4466 = vunpack.c.l.b16 %v4400
        %v4467 = vunpack.c.h.b16 %v4399
        %v4468 = vunpack.c.h.b16 %v4400
        %v4469 = vunpack.c.l.b16 %v4401
        %v4470 = vunpack.c.l.b16 %v4402
        %v4471 = vunpack.c.h.b16 %v4401
        %v4472 = vunpack.c.h.b16 %v4402
        %v4473 = vunpack.c.l.b16 %v4403
        %v4474 = vunpack.c.l.b16 %v4404
        %v4475 = vunpack.c.h.b16 %v4403
        %v4476 = vunpack.c.h.b16 %v4404
        %v4477 = vunpack.c.l.b16 %v4405
        %v4478 = vunpack.c.l.b16 %v4406
        %v4479 = vunpack.c.h.b16 %v4405
        %v4480 = vunpack.c.h.b16 %v4406
        %v4481 = vunpack.c.l.b16 %v4407
        %v4482 = vunpack.c.l.b16 %v4408
        %v4483 = vunpack.c.h.b16 %v4407
        %v4484 = vunpack.c.h.b16 %v4408
        %v4485 = vunpack.c.l.b16 %v4409
        %v4486 = vunpack.c.l.b16 %v4410
        %v4487 = vunpack.c.h.b16 %v4409
        %v4488 = vunpack.c.h.b16 %v4410
        %v4489 = vunpack.c.l.b16 %v4411
        %v4490 = vunpack.c.l.b16 %v4412
        %v4491 = vunpack.c.h.b16 %v4411
        %v4492 = vunpack.c.h.b16 %v4412
        %v4493 = vunpack.c.l.b16 %v4413
        %v4494 = vunpack.c.l.b16 %v4414
        %v4495 = vunpack.c.h.b16 %v4413
        %v4496 = vunpack.c.h.b16 %v4414
        %v4497 = vunpack.c.l.b16 %v4415
        %v4498 = vunpack.c.l.b16 %v4416
        %v4499 = vunpack.c.h.b16 %v4415
        %v4500 = vunpack.c.h.b16 %v4416
        %v4501 = vunpack.c.l.b16 %v4417
        %v4502 = vunpack.c.l.b16 %v4418
        %v4503 = vunpack.c.h.b16 %v4417
        %v4504 = vunpack.c.h.b16 %v4418
        %v4505 = vunpack.c.l.b16 %v4419
        %v4506 = vunpack.c.l.b16 %v4420
        %v4507 = vunpack.c.h.b16 %v4419
        %v4508 = vunpack.c.h.b16 %v4420
        %v4509 = vunpack.c.l.b16 %v4421
        %v4510 = vunpack.c.l.b16 %v4422
        %v4511 = vunpack.c.h.b16 %v4421
        %v4512 = vunpack.c.h.b16 %v4422
        %v4513 = vunpack.c.l.b16 %v4423
        %v4514 = vunpack.c.l.b16 %v4424
        %v4515 = vunpack.c.h.b16 %v4423
        %v4516 = vunpack.c.h.b16 %v4424
        %v4517 = vunpack.c.l.b16 %v4425
        %v4518 = vunpack.c.l.b16 %v4426
        %v4519 = vunpack.c.h.b16 %v4425
        %v4520 = vunpack.c.h.b16 %v4426
        %v4521 = vunpack.c.l.b16 %v4427
        %v4522 = vunpack.c.l.b16 %v4428
        %v4523 = vunpack.c.h.b16 %v4427
        %v4524 = vunpack.c.h.b16 %v4428
        %v4525 = vpack.c.b16 %v4462, %v4461
        %v4526 = vpack.c.b16 %v4464, %v4463
        %v4527 = vpack.c.b16 %v4466, %v4465
        %v4528 = vpack.c.b16 %v4468, %v4467
        %v4529 = vpack.c.b16 %v4470, %v4469
        %v4530 = vpack.c.b16 %v4472, %v4471
        %v4531 = vpack.c.b16 %v4474, %v4473
        %v4532 = vpack.c.b16 %v4476, %v4475
        %v4533 = vpack.c.b16 %v4478, %v4477
        %v4534 = vpack.c.b16 %v4480, %v4479
        %v4535 = vpack.c.b16 %v4482, %v4481
        %v4536 = vpack.c.b16 %v4484, %v4483
        %v4537 = vpack.c.b16 %v4486, %v4485
        %v4538 = vpack.c.b16 %v4488, %v4487
        %v4539 = vpack.c.b16 %v4490, %v4489
        %v4540 = vpack.c.b16 %v4492, %v4491
        %v4541 = vpack.c.b16 %v4494, %v4493
        %v4542 = vpack.c.b16 %v4496, %v4495
        %v4543 = vpack.c.b16 %v4498, %v4497
        %v4544 = vpack.c.b16 %v4500, %v4499
        %v4545 = vpack.c.b16 %v4502, %v4501
        %v4546 = vpack.c.b16 %v4504, %v4503
        %v4547 = vpack.c.b16 %v4506, %v4505
        %v4548 = vpack.c.b16 %v4508, %v4507
        %v4549 = vpack.c.b16 %v4510, %v4509
        %v4550 = vpack.c.b16 %v4512, %v4511
        %v4551 = vpack.c.b16 %v4514, %v4513
        %v4552 = vpack.c.b16 %v4516, %v4515
        %v4553 = vpack.c.b16 %v4518, %v4517
        %v4554 = vpack.c.b16 %v4520, %v4519
        %v4555 = vpack.c.b16 %v4522, %v4521
        %v4556 = vpack.c.b16 %v4524, %v4523
        %4589 = vst [vmem:[%s503] sm:$0xff] %v4525
        %4590 = vst [vmem:[%s503 + $0x8] sm:$0xff] %v4526
        %4591 = vst [vmem:[%s503 + $0x10] sm:$0xff] %v4527
        %4592 = vst [vmem:[%s503 + $0x18] sm:$0xff] %v4528
        %4593 = vst [vmem:[%s503 + $0x20] sm:$0xff] %v4529
        %4594 = vst [vmem:[%s503 + $0x28] sm:$0xff] %v4530
        %4595 = vst [vmem:[%s503 + $0x30] sm:$0xff] %v4531
        %4596 = vst [vmem:[%s503 + $0x38] sm:$0xff] %v4532
        %4597 = vst [vmem:[%s503 + $0x40] sm:$0xff] %v4533
        %4598 = vst [vmem:[%s503 + $0x48] sm:$0xff] %v4534
        %4599 = vst [vmem:[%s503 + $0x50] sm:$0xff] %v4535
        %4600 = vst [vmem:[%s503 + $0x58] sm:$0xff] %v4536
        %4601 = vst [vmem:[%s503 + $0x60] sm:$0xff] %v4537
        %4602 = vst [vmem:[%s503 + $0x68] sm:$0xff] %v4538
        %4603 = vst [vmem:[%s503 + $0x70] sm:$0xff] %v4539
        %4604 = vst [vmem:[%s503 + $0x78] sm:$0xff] %v4540
        %4605 = vst [vmem:[%s503 + $0x80] sm:$0xff] %v4541
        %4606 = vst [vmem:[%s503 + $0x88] sm:$0xff] %v4542
        %4607 = vst [vmem:[%s503 + $0x90] sm:$0xff] %v4543
        %4608 = vst [vmem:[%s503 + $0x98] sm:$0xff] %v4544
        %4609 = vst [vmem:[%s503 + $0xa0] sm:$0xff] %v4545
        %4610 = vst [vmem:[%s503 + $0xa8] sm:$0xff] %v4546
        %4611 = vst [vmem:[%s503 + $0xb0] sm:$0xff] %v4547
        %4612 = vst [vmem:[%s503 + $0xb8] sm:$0xff] %v4548
        %4613 = vst [vmem:[%s503 + $0xc0] sm:$0xff] %v4549
        %4614 = vst [vmem:[%s503 + $0xc8] sm:$0xff] %v4550
        %4615 = vst [vmem:[%s503 + $0xd0] sm:$0xff] %v4551
        %4616 = vst [vmem:[%s503 + $0xd8] sm:$0xff] %v4552
        %4617 = vst [vmem:[%s503 + $0xe0] sm:$0xff] %v4553
        %4618 = vst [vmem:[%s503 + $0xe8] sm:$0xff] %v4554
        %4619 = vst [vmem:[%s503 + $0xf0] sm:$0xff] %v4555
        %4620 = vst [vmem:[%s503 + $0xf8] sm:$0xff] %v4556
        %s4621 = sand.u32 %s282, 1
        %s4622 = scalar_lea.sflag [#allocation4], %s4621
        %s4623 = sand.u32 %s282, 1
        %s4624 = smul.addr %s4623, 256
        %s4625 = scalar_lea.vmem [#allocation13], %s4624
        // Predicated region
        $region89: #{tpu_custom_call.1} parent=63 // pred_check
          %p4626 = pneg %p292
        $region90: #{tpu_custom_call.1} parent=63 // pred_check_branch
          %4628 = sbr.rel (%p4626) target = $region92
        $region91: #{tpu_custom_call.1} parent=63 // pred_region
          %s4629 = smul.u32 32, %s33
          %s4631 = ssub.s32 4096, 4096
          %4632 = vsyncadd %s4622, %s4631
          %s4633 = smul.addr %s4629, 2
          %s4634 = smul.addr %s4633, 64
          %s4635 = scalar_lea.hbm %s11, %s4634
          %s4636 = sshll.u32 %s4625, 4
          %s4637 = int_to_ptr.vmem [resolvable:$true] %s4636
          %4642 = dma.vmem_to_hbm [thread:$0]  %s4637, 4096, %s4635, %s4622, 128, 128, 8
        $region92: #{tpu_custom_call.1} parent=63 // pred_fallthru
          _
      $region64: #{tpu_custom_call.1} parent=5 // pred_fallthru
        _
      %p4643 = scmp.le.s32.totalorder 2, %s28
      // Predicated region
      $region93: #{tpu_custom_call.1} parent=5 // pred_check
        %p4644 = pneg %p4643
      $region94: #{tpu_custom_call.1} parent=5 // pred_check_branch
        %4646 = sbr.rel (%p4644) target = $region96
      $region95: #{tpu_custom_call.1} parent=5 // pred_region
        %s4647 = ssub.s32 %s28, 2
        // Predicated region
        $region97: #{tpu_custom_call.1} parent=95 // pred_check
          %p4648 = pneg %p298
        $region98: #{tpu_custom_call.1} parent=95 // pred_check_branch
          %4650 = sbr.rel (%p4648) target = $region100
        $region99: #{tpu_custom_call.1} parent=95 // pred_region
          %s4651 = sand.u32 %s283, 1
          %s4652 = scalar_lea.sflag [#allocation4], %s4651
          %s4653 = sand.u32 %s283, 1
          %s4654 = smul.addr %s4653, 256
          %s4655 = scalar_lea.vmem [#allocation13], %s4654
          %4656 = dma.done %s4652, 4096
        $region100: #{tpu_custom_call.1} parent=95 // pred_fallthru
          _
      $region96: #{tpu_custom_call.1} parent=5 // pred_fallthru
        _
    $region6: #{tpu_custom_call.1} parent=1 // loop_footer
      %s32 = sadd.s32 1, %s28
    $region7: #{tpu_custom_call.1} parent=1 // loop_footer_branch
      %27 = sbr.rel target = $region3
    $region8: #{tpu_custom_call.1} parent=1 // loop_exit
      _
    %4657 = vsyncpa [#allocation3], 1
    %s4658 = scalar_lea.sflag [#allocation3], 1
    %4659 = vsyncpa %s4658, 1
    %4660 = vsyncpa [#allocation6], 1
    %s4661 = scalar_lea.sflag [#allocation6], 1
    %4662 = vsyncpa %s4661, 1
    %4663 = vsyncpa [#allocation9], 1
    %4664 = vsyncpa [#allocation12], 1
    %4665 = vsyncpa [#allocation4], 1
    %s4666 = scalar_lea.sflag [#allocation4], 1
    %4667 = vsyncpa %s4666, 1

// kernel: tpu_custom_call.1
$region0: #{tpu_custom_call.1}
  #allocation0 [shape = 'u32[]', space=smem, size = 0x4, offset = 0x4, fixed_abs, tag = 'smem constant byte address 0x4 - core index']
  #allocation1 [shape = 'u32[144,128]{1,0:T(1,128)}', space=vmem, size = 0x12000, scoped, tag = 'internal scratch']
  %s0 = inlined_call_operand.hbm [shape: f32[512,128], index: 0, kind: input, shape index: {}]
  %s1 = inlined_call_operand.hbm [shape: f32[512,256], index: 1, kind: input, shape index: {}]
  %s2 = inlined_call_operand.hbm [shape: bf16[128,256], index: 2, kind: input, shape index: {}]
  %s3 = inlined_call_operand.hbm [shape: bf16[256,256], index: 3, kind: input, shape index: {}]
  %s4 = inlined_call_operand.vmem [shape: f32[1,256], index: 4, kind: input, shape index: {}]
  %s5 = inlined_call_operand.hbm [shape: bf16[256,256], index: 5, kind: input, shape index: {}]
  %s6 = inlined_call_operand.vmem [shape: f32[1,256], index: 6, kind: input, shape index: {}]
  %s7 = inlined_call_operand.hbm [shape: bf16[256,256], index: 7, kind: input, shape index: {}]
  %s8 = inlined_call_operand.vmem [shape: f32[1,256], index: 8, kind: input, shape index: {}]
  %s9 = inlined_call_operand.vmem [shape: f32[1,256], index: 9, kind: input, shape index: {}]
  %s10 = inlined_call_operand.vmem [shape: f32[1,256], index: 10, kind: input, shape index: {}]
  %s11 = inlined_call_operand.hbm [shape: bf16[512,256], index: 11, kind: output, shape index: {}]
  %s12 = sld [smem:[#allocation0]]
  $region101: #{tpu_custom_call.1} parent=0
    _
  %s14 = ssub.s32 1, %s12
  %s15 = scalar_select 0, %s14, %s12
  $region1: #{tpu_custom_call.1} parent=0
    #allocation2 [shape = 'u8[262144]{0}', space=vmem, size = 0x40000, scoped, tag = 'input window, operand 0']
    #allocation3 [shape = 's32[2]{0}', space=sflag, size = 0x8, scoped, tag = 'scoped memory for tpu_custom_call.1']
    #allocation4 [shape = 's32[2]{0}', space=sflag, size = 0x8, scoped, tag = 'scoped memory for tpu_custom_call.1']
    #allocation5 [shape = 'u8[524288]{0}', space=vmem, size = 0x80000, scoped, tag = 'input window, operand 1']
    #allocation6 [shape = 's32[2]{0}', space=sflag, size = 0x8, scoped, tag = 'scoped memory for tpu_custom_call.1']
    #allocation7 [shape = 'u8[65536]{0}', space=vmem, size = 0x10000, scoped, tag = 'input window, operand 2, single buffered']
    #allocation8 [shape = 'u8[131072]{0}', space=vmem, size = 0x20000, scoped, tag = 'input window, operand 3, single buffered']
    #allocation9 [shape = 's32[1]{0}', space=sflag, size = 0x4, scoped, tag = 'scoped memory for tpu_custom_call.1']
    #allocation10 [shape = 'u8[131072]{0}', space=vmem, size = 0x20000, scoped, tag = 'input window, operand 5, single buffered']
    #allocation11 [shape = 'u8[131072]{0}', space=vmem, size = 0x20000, scoped, tag = 'input window, operand 7, single buffered']
    #allocation12 [shape = 's32[1]{0}', space=sflag, size = 0x4, scoped, tag = 'scoped memory for tpu_custom_call.1']
    #allocation13 [shape = 'u8[262144]{0}', space=vmem, size = 0x40000, scoped, tag = 'output window, operand 0']
    %16 = vsyncpa [#allocation3], 0
    %s17 = scalar_lea.sflag [#allocation3], 1
    %18 = vsyncpa %s17, 0
    %19 = vsyncpa [#allocation6], 0
    %s20 = scalar_lea.sflag [#allocation6], 1
    %21 = vsyncpa %s20, 0
    %22 = vsyncpa [#allocation9], 0
    %23 = vsyncpa [#allocation12], 0
    %24 = vsyncpa [#allocation4], 0
    %s25 = scalar_lea.sflag [#allocation4], 1
    %26 = vsyncpa %s25, 0
    loop: start=0, step=1, limit=4
    $region2: #{tpu_custom_call.1} parent=1 // loop_pre_header
      _
    $region3: #{tpu_custom_call.1} parent=1 // loop_header
      %s28 = sphi 0, %s32
      %p29 = scmp.ge.s32.totalorder %s28, 4
      %s38 = sphi 0, %s40
      %s41 = sphi 0, %s38
      %s42 = sphi 0, %s41
      %s58 = sphi 0, %s42
      %s64 = sphi 0, %s66
      %s67 = sphi 0, %s64
      %s68 = sphi 0, %s67
      %s84 = sphi 0, %s68
      %s88 = sphi 0, %s88
      %s90 = sphi 0, %s88
      %s91 = sphi 0, %s90
      %s105 = sphi 0, %s91
      %s109 = sphi 0, %s109
      %s111 = sphi 0, %s109
      %s112 = sphi 0, %s111
      %s126 = sphi 0, %s112
      %s130 = sphi 0, %s130
      %s132 = sphi 0, %s130
      %s133 = sphi 0, %s132
      %s147 = sphi 0, %s133
      %s151 = sphi 0, %s151
      %s153 = sphi 0, %s151
      %s154 = sphi 0, %s153
      %s168 = sphi 0, %s154
      %s172 = sphi 0, %s172
      %s174 = sphi 0, %s172
      %s175 = sphi 0, %s174
      %s189 = sphi 0, %s175
      %s193 = sphi 0, %s193
      %s195 = sphi 0, %s193
      %s196 = sphi 0, %s195
      %s210 = sphi 0, %s196
      %s214 = sphi 0, %s214
      %s216 = sphi 0, %s214
      %s217 = sphi 0, %s216
      %s231 = sphi 0, %s217
      %s235 = sphi 0, %s235
      %s237 = sphi 0, %s235
      %s238 = sphi 0, %s237
      %s252 = sphi 0, %s238
      %s256 = sphi 0, %s256
      %s258 = sphi 0, %s256
      %s259 = sphi 0, %s258
      %s273 = sphi 0, %s259
      %s279 = sphi 0, %s281
      %s282 = sphi 0, %s279
      %s283 = sphi 0, %s282
      %s299 = sphi 0, %s283
    $region4: #{tpu_custom_call.1} parent=1 // loop_header_branch
      %31 = sbr.rel (%p29) target = $region8
    $region5: #{tpu_custom_call.1} parent=1 // loop_body
      %s33 = ssub.s32 %s28, 1
      %s34 = ssub.s32 %s28, 2
      %s35 = sadd.s32 %s28, 1
      %s36 = ssub.s32 %s28, %s35
      %p37 = scmp.eq.s32.totalorder %s36, 0
      %s39 = sadd.s32 %s38, 1
      %s40 = scalar_select %p37, %s38, %s39
      %p43 = pneg %p37
      %p44 = scmp.eq.s32.totalorder %s28, 1
      %p45 = por %p43, %p44
      %p46 = scmp.ne.s32.totalorder %s38, %s41
      %p47 = scmp.eq.s32.totalorder %s28, 0
      %p48 = por %p46, %p47
      %p49 = scmp.ne.s32.totalorder %s38, %s41
      %p50 = scmp.eq.s32.totalorder %s33, 1
      %p51 = por %p49, %p50
      %p52 = scmp.ne.s32.totalorder %s41, %s42
      %p53 = scmp.eq.s32.totalorder %s33, 0
      %p54 = por %p52, %p53
      %p55 = scmp.ne.s32.totalorder %s41, %s42
      %p56 = scmp.eq.s32.totalorder %s34, 1
      %p57 = por %p55, %p56
      %p59 = scmp.ne.s32.totalorder %s42, %s58
      %p60 = scmp.eq.s32.totalorder %s34, 0
      %p61 = por %p59, %p60
      %s62 = ssub.s32 %s28, %s35
      %p63 = scmp.eq.s32.totalorder %s62, 0
      %s65 = sadd.s32 %s64, 1
      %s66 = scalar_select %p63, %s64, %s65
      %p69 = pneg %p63
      %p70 = scmp.eq.s32.totalorder %s28, 1
      %p71 = por %p69, %p70
      %p72 = scmp.ne.s32.totalorder %s64, %s67
      %p73 = scmp.eq.s32.totalorder %s28, 0
      %p74 = por %p72, %p73
      %p75 = scmp.ne.s32.totalorder %s64, %s67
      %p76 = scmp.eq.s32.totalorder %s33, 1
      %p77 = por %p75, %p76
      %p78 = scmp.ne.s32.totalorder %s67, %s68
      %p79 = scmp.eq.s32.totalorder %s33, 0
      %p80 = por %p78, %p79
      %p81 = scmp.ne.s32.totalorder %s67, %s68
      %p82 = scmp.eq.s32.totalorder %s34, 1
      %p83 = por %p81, %p82
      %p85 = scmp.ne.s32.totalorder %s68, %s84
      %p86 = scmp.eq.s32.totalorder %s34, 0
      %p87 = por %p85, %p86
      %s89 = sadd.s32 %s88, 1
      %p92 = scmp.eq.s32.totalorder %s28, 1
      %p93 = scmp.ne.s32.totalorder %s88, %s90
      %p94 = scmp.eq.s32.totalorder %s28, 0
      %p95 = por %p93, %p94
      %p96 = scmp.ne.s32.totalorder %s88, %s90
      %p97 = scmp.eq.s32.totalorder %s33, 1
      %p98 = por %p96, %p97
      %p99 = scmp.ne.s32.totalorder %s90, %s91
      %p100 = scmp.eq.s32.totalorder %s33, 0
      %p101 = por %p99, %p100
      %p102 = scmp.ne.s32.totalorder %s90, %s91
      %p103 = scmp.eq.s32.totalorder %s34, 1
      %p104 = por %p102, %p103
      %p106 = scmp.ne.s32.totalorder %s91, %s105
      %p107 = scmp.eq.s32.totalorder %s34, 0
      %p108 = por %p106, %p107
      %s110 = sadd.s32 %s109, 1
      %p113 = scmp.eq.s32.totalorder %s28, 1
      %p114 = scmp.ne.s32.totalorder %s109, %s111
      %p115 = scmp.eq.s32.totalorder %s28, 0
      %p116 = por %p114, %p115
      %p117 = scmp.ne.s32.totalorder %s109, %s111
      %p118 = scmp.eq.s32.totalorder %s33, 1
      %p119 = por %p117, %p118
      %p120 = scmp.ne.s32.totalorder %s111, %s112
      %p121 = scmp.eq.s32.totalorder %s33, 0
      %p122 = por %p120, %p121
      %p123 = scmp.ne.s32.totalorder %s111, %s112
      %p124 = scmp.eq.s32.totalorder %s34, 1
      %p125 = por %p123, %p124
      %p127 = scmp.ne.s32.totalorder %s112, %s126
      %p128 = scmp.eq.s32.totalorder %s34, 0
      %p129 = por %p127, %p128
      %s131 = sadd.s32 %s130, 1
      %p134 = scmp.eq.s32.totalorder %s28, 1
      %p135 = scmp.ne.s32.totalorder %s130, %s132
      %p136 = scmp.eq.s32.totalorder %s28, 0
      %p137 = por %p135, %p136
      %p138 = scmp.ne.s32.totalorder %s130, %s132
      %p139 = scmp.eq.s32.totalorder %s33, 1
      %p140 = por %p138, %p139
      %p141 = scmp.ne.s32.totalorder %s132, %s133
      %p142 = scmp.eq.s32.totalorder %s33, 0
      %p143 = por %p141, %p142
      %p144 = scmp.ne.s32.totalorder %s132, %s133
      %p145 = scmp.eq.s32.totalorder %s34, 1
      %p146 = por %p144, %p145
      %p148 = scmp.ne.s32.totalorder %s133, %s147
      %p149 = scmp.eq.s32.totalorder %s34, 0
      %p150 = por %p148, %p149
      %s152 = sadd.s32 %s151, 1
      %p155 = scmp.eq.s32.totalorder %s28, 1
      %p156 = scmp.ne.s32.totalorder %s151, %s153
      %p157 = scmp.eq.s32.totalorder %s28, 0
      %p158 = por %p156, %p157
      %p159 = scmp.ne.s32.totalorder %s151, %s153
      %p160 = scmp.eq.s32.totalorder %s33, 1
      %p161 = por %p159, %p160
      %p162 = scmp.ne.s32.totalorder %s153, %s154
      %p163 = scmp.eq.s32.totalorder %s33, 0
      %p164 = por %p162, %p163
      %p165 = scmp.ne.s32.totalorder %s153, %s154
      %p166 = scmp.eq.s32.totalorder %s34, 1
      %p167 = por %p165, %p166
      %p169 = scmp.ne.s32.totalorder %s154, %s168
      %p170 = scmp.eq.s32.totalorder %s34, 0
      %p171 = por %p169, %p170
      %s173 = sadd.s32 %s172, 1
      %p176 = scmp.eq.s32.totalorder %s28, 1
      %p177 = scmp.ne.s32.totalorder %s172, %s174
      %p178 = scmp.eq.s32.totalorder %s28, 0
      %p179 = por %p177, %p178
      %p180 = scmp.ne.s32.totalorder %s172, %s174
      %p181 = scmp.eq.s32.totalorder %s33, 1
      %p182 = por %p180, %p181
      %p183 = scmp.ne.s32.totalorder %s174, %s175
      %p184 = scmp.eq.s32.totalorder %s33, 0
      %p185 = por %p183, %p184
      %p186 = scmp.ne.s32.totalorder %s174, %s175
      %p187 = scmp.eq.s32.totalorder %s34, 1
      %p188 = por %p186, %p187
      %p190 = scmp.ne.s32.totalorder %s175, %s189
      %p191 = scmp.eq.s32.totalorder %s34, 0
      %p192 = por %p190, %p191
      %s194 = sadd.s32 %s193, 1
      %p197 = scmp.eq.s32.totalorder %s28, 1
      %p198 = scmp.ne.s32.totalorder %s193, %s195
      %p199 = scmp.eq.s32.totalorder %s28, 0
      %p200 = por %p198, %p199
      %p201 = scmp.ne.s32.totalorder %s193, %s195
      %p202 = scmp.eq.s32.totalorder %s33, 1
      %p203 = por %p201, %p202
      %p204 = scmp.ne.s32.totalorder %s195, %s196
      %p205 = scmp.eq.s32.totalorder %s33, 0
      %p206 = por %p204, %p205
      %p207 = scmp.ne.s32.totalorder %s195, %s196
      %p208 = scmp.eq.s32.totalorder %s34, 1
      %p209 = por %p207, %p208
      %p211 = scmp.ne.s32.totalorder %s196, %s210
      %p212 = scmp.eq.s32.totalorder %s34, 0
      %p213 = por %p211, %p212
      %s215 = sadd.s32 %s214, 1
      %p218 = scmp.eq.s32.totalorder %s28, 1
      %p219 = scmp.ne.s32.totalorder %s214, %s216
      %p220 = scmp.eq.s32.totalorder %s28, 0
      %p221 = por %p219, %p220
      %p222 = scmp.ne.s32.totalorder %s214, %s216
      %p223 = scmp.eq.s32.totalorder %s33, 1
      %p224 = por %p222, %p223
      %p225 = scmp.ne.s32.totalorder %s216, %s217
      %p226 = scmp.eq.s32.totalorder %s33, 0
      %p227 = por %p225, %p226
      %p228 = scmp.ne.s32.totalorder %s216, %s217
      %p229 = scmp.eq.s32.totalorder %s34, 1
      %p230 = por %p228, %p229
      %p232 = scmp.ne.s32.totalorder %s217, %s231
      %p233 = scmp.eq.s32.totalorder %s34, 0
      %p234 = por %p232, %p233
      %s236 = sadd.s32 %s235, 1
      %p239 = scmp.eq.s32.totalorder %s28, 1
      %p240 = scmp.ne.s32.totalorder %s235, %s237
      %p241 = scmp.eq.s32.totalorder %s28, 0
      %p242 = por %p240, %p241
      %p243 = scmp.ne.s32.totalorder %s235, %s237
      %p244 = scmp.eq.s32.totalorder %s33, 1
      %p245 = por %p243, %p244
      %p246 = scmp.ne.s32.totalorder %s237, %s238
      %p247 = scmp.eq.s32.totalorder %s33, 0
      %p248 = por %p246, %p247
      %p249 = scmp.ne.s32.totalorder %s237, %s238
      %p250 = scmp.eq.s32.totalorder %s34, 1
      %p251 = por %p249, %p250
      %p253 = scmp.ne.s32.totalorder %s238, %s252
      %p254 = scmp.eq.s32.totalorder %s34, 0
      %p255 = por %p253, %p254
      %s257 = sadd.s32 %s256, 1
      %p260 = scmp.eq.s32.totalorder %s28, 1
      %p261 = scmp.ne.s32.totalorder %s256, %s258
      %p262 = scmp.eq.s32.totalorder %s28, 0
      %p263 = por %p261, %p262
      %p264 = scmp.ne.s32.totalorder %s256, %s258
      %p265 = scmp.eq.s32.totalorder %s33, 1
      %p266 = por %p264, %p265
      %p267 = scmp.ne.s32.totalorder %s258, %s259
      %p268 = scmp.eq.s32.totalorder %s33, 0
      %p269 = por %p267, %p268
      %p270 = scmp.ne.s32.totalorder %s258, %s259
      %p271 = scmp.eq.s32.totalorder %s34, 1
      %p272 = por %p270, %p271
      %p274 = scmp.ne.s32.totalorder %s259, %s273
      %p275 = scmp.eq.s32.totalorder %s34, 0
      %p276 = por %p274, %p275
      %s277 = ssub.s32 %s28, %s35
      %p278 = scmp.eq.s32.totalorder %s277, 0
      %s280 = sadd.s32 %s279, 1
      %s281 = scalar_select %p278, %s279, %s280
      %p284 = pneg %p278
      %p285 = scmp.eq.s32.totalorder %s28, 1
      %p286 = por %p284, %p285
      %p287 = scmp.ne.s32.totalorder %s279, %s282
      %p288 = scmp.eq.s32.totalorder %s28, 0
      %p289 = por %p287, %p288
      %p290 = scmp.ne.s32.totalorder %s279, %s282
      %p291 = scmp.eq.s32.totalorder %s33, 1
      %p292 = por %p290, %p291
      %p293 = scmp.ne.s32.totalorder %s282, %s283
      %p294 = scmp.eq.s32.totalorder %s33, 0
      %p295 = por %p293, %p294
      %p296 = scmp.ne.s32.totalorder %s282, %s283
      %p297 = scmp.eq.s32.totalorder %s34, 1
      %p298 = por %p296, %p297
      %p300 = scmp.ne.s32.totalorder %s283, %s299
      %p301 = scmp.eq.s32.totalorder %s34, 0
      %p302 = por %p300, %p301
      %p303 = scmp.le.s32.totalorder 1, %s28
      %p304 = scmp.lt.s32.totalorder %s28, 3
      %p305 = pnand %p303, %p304
      %p306 = pneg %p305
      // Predicated region
      $region9: #{tpu_custom_call.1} parent=5 // pred_check
        _
      $region10: #{tpu_custom_call.1} parent=5 // pred_check_branch
        %308 = sbr.rel (%p305) target = $region12
      $region11: #{tpu_custom_call.1} parent=5 // pred_region
        %s309 = ssub.s32 %s28, 1
        // Predicated region
        $region13: #{tpu_custom_call.1} parent=11 // pred_check
          %p310 = pneg %p101
        $region14: #{tpu_custom_call.1} parent=11 // pred_check_branch
          %312 = sbr.rel (%p310) target = $region16
        $region15: #{tpu_custom_call.1} parent=11 // pred_region
          %s314 = ssub.s32 2048, 2048
          %315 = vsyncadd [#allocation6], %s314
          %s316 = sshll.u32 [#allocation7], 4
          %s317 = int_to_ptr.vmem [resolvable:$true] %s316
          %322 = dma.hbm_to_vmem [thread:$0]  %s2, 2048, %s317, [#allocation6], 128, 128, 8
        $region16: #{tpu_custom_call.1} parent=11 // pred_fallthru
          _
        // Predicated region
        $region17: #{tpu_custom_call.1} parent=11 // pred_check
          %p323 = pneg %p122
        $region18: #{tpu_custom_call.1} parent=11 // pred_check_branch
          %325 = sbr.rel (%p323) target = $region20
        $region19: #{tpu_custom_call.1} parent=11 // pred_region
          %s327 = ssub.s32 4096, 4096
          %328 = vsyncadd [#allocation9], %s327
          %s329 = sshll.u32 [#allocation8], 4
          %s330 = int_to_ptr.vmem [resolvable:$true] %s329
          %335 = dma.hbm_to_vmem [thread:$0]  %s3, 4096, %s330, [#allocation9], 128, 128, 8
        $region20: #{tpu_custom_call.1} parent=11 // pred_fallthru
          _
        // Predicated region
        $region21: #{tpu_custom_call.1} parent=11 // pred_check
          %p336 = pneg %p143
        $region22: #{tpu_custom_call.1} parent=11 // pred_check_branch
          %338 = sbr.rel (%p336) target = $region24
        $region23: #{tpu_custom_call.1} parent=11 // pred_region
          _
        $region24: #{tpu_custom_call.1} parent=11 // pred_fallthru
          _
        // Predicated region
        $region25: #{tpu_custom_call.1} parent=11 // pred_check
          %p339 = pneg %p164
        $region26: #{tpu_custom_call.1} parent=11 // pred_check_branch
          %341 = sbr.rel (%p339) target = $region28
        $region27: #{tpu_custom_call.1} parent=11 // pred_region
          %s343 = ssub.s32 4096, 4096
          %344 = vsyncadd [#allocation9], %s343
          %s345 = sshll.u32 [#allocation10], 4
          %s346 = int_to_ptr.vmem [resolvable:$true] %s345
          %351 = dma.hbm_to_vmem [thread:$0]  %s5, 4096, %s346, [#allocation9], 128, 128, 8
        $region28: #{tpu_custom_call.1} parent=11 // pred_fallthru
          _
        // Predicated region
        $region29: #{tpu_custom_call.1} parent=11 // pred_check
          %p352 = pneg %p185
        $region30: #{tpu_custom_call.1} parent=11 // pred_check_branch
          %354 = sbr.rel (%p352) target = $region32
        $region31: #{tpu_custom_call.1} parent=11 // pred_region
          _
        $region32: #{tpu_custom_call.1} parent=11 // pred_fallthru
          _
        // Predicated region
        $region33: #{tpu_custom_call.1} parent=11 // pred_check
          %p355 = pneg %p206
        $region34: #{tpu_custom_call.1} parent=11 // pred_check_branch
          %357 = sbr.rel (%p355) target = $region36
        $region35: #{tpu_custom_call.1} parent=11 // pred_region
          %s359 = ssub.s32 4096, 4096
          %360 = vsyncadd [#allocation12], %s359
          %s361 = sshll.u32 [#allocation11], 4
          %s362 = int_to_ptr.vmem [resolvable:$true] %s361
          %367 = dma.hbm_to_vmem [thread:$0]  %s7, 4096, %s362, [#allocation12], 128, 128, 8
        $region36: #{tpu_custom_call.1} parent=11 // pred_fallthru
          _
        // Predicated region
        $region37: #{tpu_custom_call.1} parent=11 // pred_check
          %p368 = pneg %p227
        $region38: #{tpu_custom_call.1} parent=11 // pred_check_branch
          %370 = sbr.rel (%p368) target = $region40
        $region39: #{tpu_custom_call.1} parent=11 // pred_region
          _
        $region40: #{tpu_custom_call.1} parent=11 // pred_fallthru
          _
        // Predicated region
        $region41: #{tpu_custom_call.1} parent=11 // pred_check
          %p371 = pneg %p248
        $region42: #{tpu_custom_call.1} parent=11 // pred_check_branch
          %373 = sbr.rel (%p371) target = $region44
        $region43: #{tpu_custom_call.1} parent=11 // pred_region
          _
        $region44: #{tpu_custom_call.1} parent=11 // pred_fallthru
          _
        // Predicated region
        $region45: #{tpu_custom_call.1} parent=11 // pred_check
          %p374 = pneg %p269
        $region46: #{tpu_custom_call.1} parent=11 // pred_check_branch
          %376 = sbr.rel (%p374) target = $region48
        $region47: #{tpu_custom_call.1} parent=11 // pred_region
          _
        $region48: #{tpu_custom_call.1} parent=11 // pred_fallthru
          _
      $region12: #{tpu_custom_call.1} parent=5 // pred_fallthru
        _
      %p377 = scmp.lt.s32.totalorder %s28, 2
      // Predicated region
      $region49: #{tpu_custom_call.1} parent=5 // pred_check
        %p378 = pneg %p377
      $region50: #{tpu_custom_call.1} parent=5 // pred_check_branch
        %380 = sbr.rel (%p378) target = $region52
      $region51: #{tpu_custom_call.1} parent=5 // pred_region
        // Predicated region
        $region53: #{tpu_custom_call.1} parent=51 // pred_check
          %p381 = pneg %p48
        $region54: #{tpu_custom_call.1} parent=51 // pred_check_branch
          %383 = sbr.rel (%p381) target = $region56
        $region55: #{tpu_custom_call.1} parent=51 // pred_region
          %s384 = sand.u32 %s38, 1
          %s385 = scalar_lea.sflag [#allocation3], %s384
          %s386 = sand.u32 %s38, 1
          %s387 = smul.addr %s386, 256
          %s388 = scalar_lea.vmem [#allocation2], %s387
          %s389 = smul.u32 32, %s28
          %s391 = ssub.s32 4096, 4096
          %392 = vsyncadd %s385, %s391
          %s393 = smul.addr %s389, 128
          %s394 = scalar_lea.hbm %s0, %s393
          %s395 = sshll.u32 %s388, 4
          %s396 = int_to_ptr.vmem [resolvable:$true] %s395
          %401 = dma.hbm_to_vmem [thread:$0]  %s394, 4096, %s396, %s385, 128, 128, 8
        $region56: #{tpu_custom_call.1} parent=51 // pred_fallthru
          _
        // Predicated region
        $region57: #{tpu_custom_call.1} parent=51 // pred_check
          %p402 = pneg %p74
        $region58: #{tpu_custom_call.1} parent=51 // pred_check_branch
          %404 = sbr.rel (%p402) target = $region60
        $region59: #{tpu_custom_call.1} parent=51 // pred_region
          %s405 = sand.u32 %s28, 1
          %s406 = scalar_lea.sflag [#allocation6], %s405
          %s407 = sand.u32 %s64, 1
          %s408 = smul.addr %s407, 512
          %s409 = scalar_lea.vmem [#allocation5], %s408
          %s410 = smul.u32 32, %s28
          %s412 = ssub.s32 8192, 8192
          %413 = vsyncadd %s406, %s412
          %s414 = smul.addr %s410, 2
          %s415 = smul.addr %s414, 128
          %s416 = scalar_lea.hbm %s1, %s415
          %s417 = sshll.u32 %s409, 4
          %s418 = int_to_ptr.vmem [resolvable:$true] %s417
          %423 = dma.hbm_to_vmem [thread:$0]  %s416, 8192, %s418, %s406, 256, 256, 16
        $region60: #{tpu_custom_call.1} parent=51 // pred_fallthru
          _
      $region52: #{tpu_custom_call.1} parent=5 // pred_fallthru
        _
      %p424 = scmp.le.s32.totalorder 1, %s28
      %p425 = scmp.lt.s32.totalorder %s28, 3
      %p426 = pnand %p424, %p425
      %p427 = pneg %p426
      // Predicated region
      $region61: #{tpu_custom_call.1} parent=5 // pred_check
        _
      $region62: #{tpu_custom_call.1} parent=5 // pred_check_branch
        %429 = sbr.rel (%p426) target = $region64
      $region63: #{tpu_custom_call.1} parent=5 // pred_region
        %s430 = ssub.s32 %s28, 1
        %s431 = sand.u32 %s41, 1
        %s432 = scalar_lea.sflag [#allocation3], %s431
        %s433 = sand.u32 %s41, 1
        %s434 = smul.addr %s433, 256
        %s435 = scalar_lea.vmem [#allocation2], %s434
        // Predicated region
        $region65: #{tpu_custom_call.1} parent=63 // pred_check
          %p436 = pneg %p54
        $region66: #{tpu_custom_call.1} parent=63 // pred_check_branch
          %438 = sbr.rel (%p436) target = $region68
        $region67: #{tpu_custom_call.1} parent=63 // pred_region
          %439 = dma.done %s432, 4096
        $region68: #{tpu_custom_call.1} parent=63 // pred_fallthru
          _
        %s440 = sand.u32 %s33, 1
        %s441 = scalar_lea.sflag [#allocation6], %s440
        %s442 = sand.u32 %s67, 1
        %s443 = smul.addr %s442, 512
        %s444 = scalar_lea.vmem [#allocation5], %s443
        // Predicated region
        $region69: #{tpu_custom_call.1} parent=63 // pred_check
          %p445 = pneg %p80
        $region70: #{tpu_custom_call.1} parent=63 // pred_check_branch
          %447 = sbr.rel (%p445) target = $region72
        $region71: #{tpu_custom_call.1} parent=63 // pred_region
          %448 = dma.done %s441, 8192
        $region72: #{tpu_custom_call.1} parent=63 // pred_fallthru
          _
        // Predicated region
        $region73: #{tpu_custom_call.1} parent=63 // pred_check
          %p449 = pneg %p101
        $region74: #{tpu_custom_call.1} parent=63 // pred_check_branch
          %451 = sbr.rel (%p449) target = $region76
        $region75: #{tpu_custom_call.1} parent=63 // pred_region
          %452 = dma.done [#allocation6], 2048
        $region76: #{tpu_custom_call.1} parent=63 // pred_fallthru
          _
        // Predicated region
        $region77: #{tpu_custom_call.1} parent=63 // pred_check
          %p453 = pneg %p122
        $region78: #{tpu_custom_call.1} parent=63 // pred_check_branch
          %455 = sbr.rel (%p453) target = $region80
        $region79: #{tpu_custom_call.1} parent=63 // pred_region
          %456 = dma.done [#allocation9], 4096
        $region80: #{tpu_custom_call.1} parent=63 // pred_fallthru
          _
        // Predicated region
        $region81: #{tpu_custom_call.1} parent=63 // pred_check
          %p457 = pneg %p164
        $region82: #{tpu_custom_call.1} parent=63 // pred_check_branch
          %459 = sbr.rel (%p457) target = $region84
        $region83: #{tpu_custom_call.1} parent=63 // pred_region
          %460 = dma.done [#allocation9], 4096
        $region84: #{tpu_custom_call.1} parent=63 // pred_fallthru
          _
        // Predicated region
        $region85: #{tpu_custom_call.1} parent=63 // pred_check
          %p461 = pneg %p206
        $region86: #{tpu_custom_call.1} parent=63 // pred_check_branch
          %463 = sbr.rel (%p461) target = $region88
        $region87: #{tpu_custom_call.1} parent=63 // pred_region
          %464 = dma.done [#allocation12], 4096
        $region88: #{tpu_custom_call.1} parent=63 // pred_fallthru
          _
        %s465 = sand.u32 %s41, 1
        %s466 = scalar_lea.sflag [#allocation3], %s465
        %s467 = sand.u32 %s41, 1
        %s468 = smul.addr %s467, 256
        %s469 = scalar_lea.vmem [#allocation2], %s468
        %p470 = pneg %p54
        %p471 = pneg %p51
        %s472 = sand.u32 %s33, 1
        %s473 = scalar_lea.sflag [#allocation6], %s472
        %s474 = sand.u32 %s67, 1
        %s475 = smul.addr %s474, 512
        %s476 = scalar_lea.vmem [#allocation5], %s475
        %p477 = pneg %p80
        %p478 = pneg %p77
        %p479 = pneg %p101
        %p480 = pneg %p98
        %p481 = pneg %p122
        %p482 = pneg %p119
        %p483 = pneg %p143
        %p484 = pneg %p140
        %p485 = pneg %p164
        %p486 = pneg %p161
        %p487 = pneg %p185
        %p488 = pneg %p182
        %p489 = pneg %p206
        %p490 = pneg %p203
        %p491 = pneg %p227
        %p492 = pneg %p224
        %p493 = pneg %p248
        %p494 = pneg %p245
        %p495 = pneg %p269
        %p496 = pneg %p266
        %p497 = pneg %p295
        %p498 = pneg %p292
        %s499 = sand.u32 %s282, 1
        %s500 = scalar_lea.sflag [#allocation4], %s499
        %s501 = sand.u32 %s282, 1
        %s502 = smul.addr %s501, 256
        %s503 = scalar_lea.vmem [#allocation13], %s502
        %s504 = smul.u32 32, %s33
        %s505 = smul.u32 32, %s33
        %s506 = smul.u32 32, %s33
        %v508 = vld [vmem:[%s9] sm:$0x3]
        %v509 = vld [vmem:[%s10] sm:$0x3]
        %v510 = vld [vmem:[%s435] sm:$0xff]
        %v511 = vld [vmem:[%s435 + $0x8] sm:$0xff]
        %v512 = vld [vmem:[%s435 + $0x10] sm:$0xff]
        %v513 = vld [vmem:[%s435 + $0x18] sm:$0xff]
        %v514 = vld [vmem:[%s435 + $0x20] sm:$0xff]
        %v515 = vld [vmem:[%s435 + $0x28] sm:$0xff]
        %v516 = vld [vmem:[%s435 + $0x30] sm:$0xff]
        %v517 = vld [vmem:[%s435 + $0x38] sm:$0xff]
        %v518 = vld [vmem:[%s435 + $0x40] sm:$0xff]
        %v519 = vld [vmem:[%s435 + $0x48] sm:$0xff]
        %v520 = vld [vmem:[%s435 + $0x50] sm:$0xff]
        %v521 = vld [vmem:[%s435 + $0x58] sm:$0xff]
        %v522 = vld [vmem:[%s435 + $0x60] sm:$0xff]
        %v523 = vld [vmem:[%s435 + $0x68] sm:$0xff]
        %v524 = vld [vmem:[%s435 + $0x70] sm:$0xff]
        %v525 = vld [vmem:[%s435 + $0x78] sm:$0xff]
        %v526 = vld [vmem:[%s435 + $0x80] sm:$0xff]
        %v527 = vld [vmem:[%s435 + $0x88] sm:$0xff]
        %v528 = vld [vmem:[%s435 + $0x90] sm:$0xff]
        %v529 = vld [vmem:[%s435 + $0x98] sm:$0xff]
        %v530 = vld [vmem:[%s435 + $0xa0] sm:$0xff]
        %v531 = vld [vmem:[%s435 + $0xa8] sm:$0xff]
        %v532 = vld [vmem:[%s435 + $0xb0] sm:$0xff]
        %v533 = vld [vmem:[%s435 + $0xb8] sm:$0xff]
        %v534 = vld [vmem:[%s435 + $0xc0] sm:$0xff]
        %v535 = vld [vmem:[%s435 + $0xc8] sm:$0xff]
        %v536 = vld [vmem:[%s435 + $0xd0] sm:$0xff]
        %v537 = vld [vmem:[%s435 + $0xd8] sm:$0xff]
        %v538 = vld [vmem:[%s435 + $0xe0] sm:$0xff]
        %v539 = vld [vmem:[%s435 + $0xe8] sm:$0xff]
        %v540 = vld [vmem:[%s435 + $0xf0] sm:$0xff]
        %v541 = vld [vmem:[%s435 + $0xf8] sm:$0xff]
        %v542 = vpack.c.bf16 %v511, %v510
        %v543 = vpack.c.bf16 %v513, %v512
        %v544 = vpack.c.bf16 %v515, %v514
        %v545 = vpack.c.bf16 %v517, %v516
        %v546 = vpack.c.bf16 %v519, %v518
        %v547 = vpack.c.bf16 %v521, %v520
        %v548 = vpack.c.bf16 %v523, %v522
        %v549 = vpack.c.bf16 %v525, %v524
        %v550 = vpack.c.bf16 %v527, %v526
        %v551 = vpack.c.bf16 %v529, %v528
        %v552 = vpack.c.bf16 %v531, %v530
        %v553 = vpack.c.bf16 %v533, %v532
        %v554 = vpack.c.bf16 %v535, %v534
        %v555 = vpack.c.bf16 %v537, %v536
        %v556 = vpack.c.bf16 %v539, %v538
        %v557 = vpack.c.bf16 %v541, %v540
        %v558 = vld [vmem:[%s444] sm:$0xff]
        %v559 = vld [vmem:[%s444 + $0x8] sm:$0xff]
        %v560 = vld [vmem:[%s444 + $0x10] sm:$0xff]
        %v561 = vld [vmem:[%s444 + $0x18] sm:$0xff]
        %v562 = vld [vmem:[%s444 + $0x20] sm:$0xff]
        %v563 = vld [vmem:[%s444 + $0x28] sm:$0xff]
        %v564 = vld [vmem:[%s444 + $0x30] sm:$0xff]
        %v565 = vld [vmem:[%s444 + $0x38] sm:$0xff]
        %v566 = vld [vmem:[%s444 + $0x40] sm:$0xff]
        %v567 = vld [vmem:[%s444 + $0x48] sm:$0xff]
        %v568 = vld [vmem:[%s444 + $0x50] sm:$0xff]
        %v569 = vld [vmem:[%s444 + $0x58] sm:$0xff]
        %v570 = vld [vmem:[%s444 + $0x60] sm:$0xff]
        %v571 = vld [vmem:[%s444 + $0x68] sm:$0xff]
        %v572 = vld [vmem:[%s444 + $0x70] sm:$0xff]
        %v573 = vld [vmem:[%s444 + $0x78] sm:$0xff]
        %v574 = vld [vmem:[%s444 + $0x80] sm:$0xff]
        %v575 = vld [vmem:[%s444 + $0x88] sm:$0xff]
        %v576 = vld [vmem:[%s444 + $0x90] sm:$0xff]
        %v577 = vld [vmem:[%s444 + $0x98] sm:$0xff]
        %v578 = vld [vmem:[%s444 + $0xa0] sm:$0xff]
        %v579 = vld [vmem:[%s444 + $0xa8] sm:$0xff]
        %v580 = vld [vmem:[%s444 + $0xb0] sm:$0xff]
        %v581 = vld [vmem:[%s444 + $0xb8] sm:$0xff]
        %v582 = vld [vmem:[%s444 + $0xc0] sm:$0xff]
        %v583 = vld [vmem:[%s444 + $0xc8] sm:$0xff]
        %v584 = vld [vmem:[%s444 + $0xd0] sm:$0xff]
        %v585 = vld [vmem:[%s444 + $0xd8] sm:$0xff]
        %v586 = vld [vmem:[%s444 + $0xe0] sm:$0xff]
        %v587 = vld [vmem:[%s444 + $0xe8] sm:$0xff]
        %v588 = vld [vmem:[%s444 + $0xf0] sm:$0xff]
        %v589 = vld [vmem:[%s444 + $0xf8] sm:$0xff]
        %v590 = vld [vmem:[%s444 + $0x100] sm:$0xff]
        %v591 = vld [vmem:[%s444 + $0x108] sm:$0xff]
        %v592 = vld [vmem:[%s444 + $0x110] sm:$0xff]
        %v593 = vld [vmem:[%s444 + $0x118] sm:$0xff]
        %v594 = vld [vmem:[%s444 + $0x120] sm:$0xff]
        %v595 = vld [vmem:[%s444 + $0x128] sm:$0xff]
        %v596 = vld [vmem:[%s444 + $0x130] sm:$0xff]
        %v597 = vld [vmem:[%s444 + $0x138] sm:$0xff]
        %v598 = vld [vmem:[%s444 + $0x140] sm:$0xff]
        %v599 = vld [vmem:[%s444 + $0x148] sm:$0xff]
        %v600 = vld [vmem:[%s444 + $0x150] sm:$0xff]
        %v601 = vld [vmem:[%s444 + $0x158] sm:$0xff]
        %v602 = vld [vmem:[%s444 + $0x160] sm:$0xff]
        %v603 = vld [vmem:[%s444 + $0x168] sm:$0xff]
        %v604 = vld [vmem:[%s444 + $0x170] sm:$0xff]
        %v605 = vld [vmem:[%s444 + $0x178] sm:$0xff]
        %v606 = vld [vmem:[%s444 + $0x180] sm:$0xff]
        %v607 = vld [vmem:[%s444 + $0x188] sm:$0xff]
        %v608 = vld [vmem:[%s444 + $0x190] sm:$0xff]
        %v609 = vld [vmem:[%s444 + $0x198] sm:$0xff]
        %v610 = vld [vmem:[%s444 + $0x1a0] sm:$0xff]
        %v611 = vld [vmem:[%s444 + $0x1a8] sm:$0xff]
        %v612 = vld [vmem:[%s444 + $0x1b0] sm:$0xff]
        %v613 = vld [vmem:[%s444 + $0x1b8] sm:$0xff]
        %v614 = vld [vmem:[%s444 + $0x1c0] sm:$0xff]
        %v615 = vld [vmem:[%s444 + $0x1c8] sm:$0xff]
        %v616 = vld [vmem:[%s444 + $0x1d0] sm:$0xff]
        %v617 = vld [vmem:[%s444 + $0x1d8] sm:$0xff]
        %v618 = vld [vmem:[%s444 + $0x1e0] sm:$0xff]
        %v619 = vld [vmem:[%s444 + $0x1e8] sm:$0xff]
        %v620 = vld [vmem:[%s444 + $0x1f0] sm:$0xff]
        %v621 = vld [vmem:[%s444 + $0x1f8] sm:$0xff]
        %v622 = vpack.c.bf16 %v560, %v558
        %v623 = vpack.c.bf16 %v561, %v559
        %v624 = vpack.c.bf16 %v564, %v562
        %v625 = vpack.c.bf16 %v565, %v563
        %v626 = vpack.c.bf16 %v568, %v566
        %v627 = vpack.c.bf16 %v569, %v567
        %v628 = vpack.c.bf16 %v572, %v570
        %v629 = vpack.c.bf16 %v573, %v571
        %v630 = vpack.c.bf16 %v576, %v574
        %v631 = vpack.c.bf16 %v577, %v575
        %v632 = vpack.c.bf16 %v580, %v578
        %v633 = vpack.c.bf16 %v581, %v579
        %v634 = vpack.c.bf16 %v584, %v582
        %v635 = vpack.c.bf16 %v585, %v583
        %v636 = vpack.c.bf16 %v588, %v586
        %v637 = vpack.c.bf16 %v589, %v587
        %v638 = vpack.c.bf16 %v592, %v590
        %v639 = vpack.c.bf16 %v593, %v591
        %v640 = vpack.c.bf16 %v596, %v594
        %v641 = vpack.c.bf16 %v597, %v595
        %v642 = vpack.c.bf16 %v600, %v598
        %v643 = vpack.c.bf16 %v601, %v599
        %v644 = vpack.c.bf16 %v604, %v602
        %v645 = vpack.c.bf16 %v605, %v603
        %v646 = vpack.c.bf16 %v608, %v606
        %v647 = vpack.c.bf16 %v609, %v607
        %v648 = vpack.c.bf16 %v612, %v610
        %v649 = vpack.c.bf16 %v613, %v611
        %v650 = vpack.c.bf16 %v616, %v614
        %v651 = vpack.c.bf16 %v617, %v615
        %v652 = vpack.c.bf16 %v620, %v618
        %v653 = vpack.c.bf16 %v621, %v619
        %v654 = vld [vmem:[%s4] sm:$0x3]
        %v655 = vld [vmem:[#allocation7] sm:$0xff]
        %v656 = vld [vmem:[#allocation7 + $0x8] sm:$0xff]
        %v657 = vld [vmem:[#allocation7 + $0x10] sm:$0xff]
        %v658 = vld [vmem:[#allocation7 + $0x18] sm:$0xff]
        %v659 = vld [vmem:[#allocation7 + $0x20] sm:$0xff]
        %v660 = vld [vmem:[#allocation7 + $0x28] sm:$0xff]
        %v661 = vld [vmem:[#allocation7 + $0x30] sm:$0xff]
        %v662 = vld [vmem:[#allocation7 + $0x38] sm:$0xff]
        %v663 = vld [vmem:[#allocation7 + $0x40] sm:$0xff]
        %v664 = vld [vmem:[#allocation7 + $0x48] sm:$0xff]
        %v665 = vld [vmem:[#allocation7 + $0x50] sm:$0xff]
        %v666 = vld [vmem:[#allocation7 + $0x58] sm:$0xff]
        %v667 = vld [vmem:[#allocation7 + $0x60] sm:$0xff]
        %v668 = vld [vmem:[#allocation7 + $0x68] sm:$0xff]
        %v669 = vld [vmem:[#allocation7 + $0x70] sm:$0xff]
        %v670 = vld [vmem:[#allocation7 + $0x78] sm:$0xff]
        %v687 = vunpack.c.l.b16 %v655
        %v688 = vunpack.c.h.b16 %v655
        %v689 = vunpack.c.l.b16 %v656
        %v690 = vunpack.c.h.b16 %v656
        %v691 = vunpack.c.l.b16 %v657
        %v692 = vunpack.c.h.b16 %v657
        %v693 = vunpack.c.l.b16 %v658
        %v694 = vunpack.c.h.b16 %v658
        %v695 = vunpack.c.l.b16 %v659
        %v696 = vunpack.c.h.b16 %v659
        %v697 = vunpack.c.l.b16 %v660
        %v698 = vunpack.c.h.b16 %v660
        %v699 = vunpack.c.l.b16 %v661
        %v700 = vunpack.c.h.b16 %v661
        %v701 = vunpack.c.l.b16 %v662
        %v702 = vunpack.c.h.b16 %v662
        %v703 = vunpack.c.l.b16 %v663
        %v704 = vunpack.c.h.b16 %v663
        %v705 = vunpack.c.l.b16 %v664
        %v706 = vunpack.c.h.b16 %v664
        %v707 = vunpack.c.l.b16 %v665
        %v708 = vunpack.c.h.b16 %v665
        %v709 = vunpack.c.l.b16 %v666
        %v710 = vunpack.c.h.b16 %v666
        %v711 = vunpack.c.l.b16 %v667
        %v712 = vunpack.c.h.b16 %v667
        %v713 = vunpack.c.l.b16 %v668
        %v714 = vunpack.c.h.b16 %v668
        %v715 = vunpack.c.l.b16 %v669
        %v716 = vunpack.c.h.b16 %v669
        %v717 = vunpack.c.l.b16 %v670
        %v718 = vunpack.c.h.b16 %v670
        %v719 = vpack.c.b16 %v689, %v687
        %v720 = vpack.c.b16 %v690, %v688
        %v721 = vpack.c.b16 %v693, %v691
        %v722 = vpack.c.b16 %v694, %v692
        %v723 = vpack.c.b16 %v697, %v695
        %v724 = vpack.c.b16 %v698, %v696
        %v725 = vpack.c.b16 %v701, %v699
        %v726 = vpack.c.b16 %v702, %v700
        %v727 = vpack.c.b16 %v705, %v703
        %v728 = vpack.c.b16 %v706, %v704
        %v729 = vpack.c.b16 %v709, %v707
        %v730 = vpack.c.b16 %v710, %v708
        %v731 = vpack.c.b16 %v713, %v711
        %v732 = vpack.c.b16 %v714, %v712
        %v733 = vpack.c.b16 %v717, %v715
        %v734 = vpack.c.b16 %v718, %v716
        %751 = vmatprep.subr.bf16.mxu0 %v720
        %752 = vmatpush1.bf16.msra.mxu0 %v719
        %753 = vmatprep.subr.bf16.mxu0 %v722
        %754 = vmatpush1.bf16.msra.mxu0 %v721
        %755 = vmatprep.subr.bf16.mxu0 %v724
        %756 = vmatpush1.bf16.msra.mxu0 %v723
        %757 = vmatprep.subr.bf16.mxu0 %v726
        %758 = vmatpush1.bf16.msra.mxu0 %v725
        %759 = vmatprep.subr.bf16.mxu0 %v728
        %760 = vmatpush1.bf16.msra.mxu0 %v727
        %761 = vmatprep.subr.bf16.mxu0 %v730
        %762 = vmatpush1.bf16.msra.mxu0 %v729
        %763 = vmatprep.subr.bf16.mxu0 %v732
        %764 = vmatpush1.bf16.msra.mxu0 %v731
        %765 = vmatprep.subr.bf16.mxu0 %v734
        %766 = vmatpush1.bf16.msra.mxu0 %v733
        %767 = vmatprep.subr.bf16.mxu0 0
        %768 = vmatpush1.bf16.msra.mxu0 0
        %769 = vmatprep.subr.bf16.mxu0 0
        %770 = vmatpush1.bf16.msra.mxu0 0
        %771 = vmatprep.subr.bf16.mxu0 0
        %772 = vmatpush1.bf16.msra.mxu0 0
        %773 = vmatprep.subr.bf16.mxu0 0
        %774 = vmatpush1.bf16.msra.mxu0 0
        %775 = vmatprep.subr.bf16.mxu0 0
        %776 = vmatpush1.bf16.msra.mxu0 0
        %777 = vmatprep.subr.bf16.mxu0 0
        %778 = vmatpush1.bf16.msra.mxu0 0
        %779 = vmatprep.subr.bf16.mxu0 0
        %780 = vmatpush1.bf16.msra.mxu0 0
        %781 = vmatprep.subr.bf16.mxu0 0
        %782 = vmatpush1.bf16.msra.mxu0 0
        %783 = vmatprep.mubr.bf16.mxu0 0
        %784 = vmatmul.mubr.bf16.gmra.mrb[0].mxu0 %v542
        %v785 = vpop.f32.mrb[0].mxu0
        %v786 = vadd.f32 0.0, %v785
        %v787 = vpop.f32.mrb[0].mxu0
        %v788 = vadd.f32 0.0, %v787
        %v789 = vpop.f32.mrb[0].mxu0
        %v790 = vadd.f32 0.0, %v789
        %v791 = vpop.f32.mrb[0].mxu0
        %v792 = vadd.f32 0.0, %v791
        %793 = vmatprep.mubr.bf16.mxu0 0
        %794 = vmatmul.mubr.bf16.gmra.mrb[0].mxu0 %v543
        %v795 = vpop.f32.mrb[0].mxu0
        %v796 = vadd.f32 0.0, %v795
        %v797 = vpop.f32.mrb[0].mxu0
        %v798 = vadd.f32 0.0, %v797
        %v799 = vpop.f32.mrb[0].mxu0
        %v800 = vadd.f32 0.0, %v799
        %v801 = vpop.f32.mrb[0].mxu0
        %v802 = vadd.f32 0.0, %v801
        %803 = vmatprep.mubr.bf16.mxu0 0
        %804 = vmatmul.mubr.bf16.gmra.mrb[0].mxu0 %v544
        %v805 = vpop.f32.mrb[0].mxu0
        %v806 = vadd.f32 0.0, %v805
        %v807 = vpop.f32.mrb[0].mxu0
        %v808 = vadd.f32 0.0, %v807
        %v809 = vpop.f32.mrb[0].mxu0
        %v810 = vadd.f32 0.0, %v809
        %v811 = vpop.f32.mrb[0].mxu0
        %v812 = vadd.f32 0.0, %v811
        %813 = vmatprep.mubr.bf16.mxu0 0
        %814 = vmatmul.mubr.bf16.gmra.mrb[0].mxu0 %v545
        %v815 = vpop.f32.mrb[0].mxu0
        %v816 = vadd.f32 0.0, %v815
        %v817 = vpop.f32.mrb[0].mxu0
        %v818 = vadd.f32 0.0, %v817
        %v819 = vpop.f32.mrb[0].mxu0
        %v820 = vadd.f32 0.0, %v819
        %v821 = vpop.f32.mrb[0].mxu0
        %v822 = vadd.f32 0.0, %v821
        %823 = vmatprep.mubr.bf16.mxu0 0
        %824 = vmatmul.mubr.bf16.gmra.mrb[0].mxu0 %v546
        %v825 = vpop.f32.mrb[0].mxu0
        %v826 = vadd.f32 0.0, %v825
        %v827 = vpop.f32.mrb[0].mxu0
        %v828 = vadd.f32 0.0, %v827
        %v829 = vpop.f32.mrb[0].mxu0
        %v830 = vadd.f32 0.0, %v829
        %v831 = vpop.f32.mrb[0].mxu0
        %v832 = vadd.f32 0.0, %v831
        %833 = vmatprep.mubr.bf16.mxu0 0
        %834 = vmatmul.mubr.bf16.gmra.mrb[0].mxu0 %v547
        %v835 = vpop.f32.mrb[0].mxu0
        %v836 = vadd.f32 0.0, %v835
        %v837 = vpop.f32.mrb[0].mxu0
        %v838 = vadd.f32 0.0, %v837
        %v839 = vpop.f32.mrb[0].mxu0
        %v840 = vadd.f32 0.0, %v839
        %v841 = vpop.f32.mrb[0].mxu0
        %v842 = vadd.f32 0.0, %v841
        %843 = vmatprep.mubr.bf16.mxu0 0
        %844 = vmatmul.mubr.bf16.gmra.mrb[0].mxu0 %v548
        %v845 = vpop.f32.mrb[0].mxu0
        %v846 = vadd.f32 0.0, %v845
        %v847 = vpop.f32.mrb[0].mxu0
        %v848 = vadd.f32 0.0, %v847
        %v849 = vpop.f32.mrb[0].mxu0
        %v850 = vadd.f32 0.0, %v849
        %v851 = vpop.f32.mrb[0].mxu0
        %v852 = vadd.f32 0.0, %v851
        %853 = vmatprep.mubr.bf16.mxu0 0
        %854 = vmatmul.mubr.bf16.gmra.mrb[0].mxu0 %v549
        %v855 = vpop.f32.mrb[0].mxu0
        %v856 = vadd.f32 0.0, %v855
        %v857 = vpop.f32.mrb[0].mxu0
        %v858 = vadd.f32 0.0, %v857
        %v859 = vpop.f32.mrb[0].mxu0
        %v860 = vadd.f32 0.0, %v859
        %v861 = vpop.f32.mrb[0].mxu0
        %v862 = vadd.f32 0.0, %v861
        %863 = vmatprep.mubr.bf16.mxu0 0
        %864 = vmatmul.mubr.bf16.gmra.mrb[0].mxu0 %v550
        %v865 = vpop.f32.mrb[0].mxu0
        %v866 = vadd.f32 0.0, %v865
        %v867 = vpop.f32.mrb[0].mxu0
        %v868 = vadd.f32 0.0, %v867
        %v869 = vpop.f32.mrb[0].mxu0
        %v870 = vadd.f32 0.0, %v869
        %v871 = vpop.f32.mrb[0].mxu0
        %v872 = vadd.f32 0.0, %v871
        %873 = vmatprep.mubr.bf16.mxu0 0
        %874 = vmatmul.mubr.bf16.gmra.mrb[0].mxu0 %v551
        %v875 = vpop.f32.mrb[0].mxu0
        %v876 = vadd.f32 0.0, %v875
        %v877 = vpop.f32.mrb[0].mxu0
        %v878 = vadd.f32 0.0, %v877
        %v879 = vpop.f32.mrb[0].mxu0
        %v880 = vadd.f32 0.0, %v879
        %v881 = vpop.f32.mrb[0].mxu0
        %v882 = vadd.f32 0.0, %v881
        %883 = vmatprep.mubr.bf16.mxu0 0
        %884 = vmatmul.mubr.bf16.gmra.mrb[0].mxu0 %v552
        %v885 = vpop.f32.mrb[0].mxu0
        %v886 = vadd.f32 0.0, %v885
        %v887 = vpop.f32.mrb[0].mxu0
        %v888 = vadd.f32 0.0, %v887
        %v889 = vpop.f32.mrb[0].mxu0
        %v890 = vadd.f32 0.0, %v889
        %v891 = vpop.f32.mrb[0].mxu0
        %v892 = vadd.f32 0.0, %v891
        %893 = vmatprep.mubr.bf16.mxu0 0
        %894 = vmatmul.mubr.bf16.gmra.mrb[0].mxu0 %v553
        %v895 = vpop.f32.mrb[0].mxu0
        %v896 = vadd.f32 0.0, %v895
        %v897 = vpop.f32.mrb[0].mxu0
        %v898 = vadd.f32 0.0, %v897
        %v899 = vpop.f32.mrb[0].mxu0
        %v900 = vadd.f32 0.0, %v899
        %v901 = vpop.f32.mrb[0].mxu0
        %v902 = vadd.f32 0.0, %v901
        %903 = vmatprep.mubr.bf16.mxu0 0
        %904 = vmatmul.mubr.bf16.gmra.mrb[0].mxu0 %v554
        %v905 = vpop.f32.mrb[0].mxu0
        %v906 = vadd.f32 0.0, %v905
        %v907 = vpop.f32.mrb[0].mxu0
        %v908 = vadd.f32 0.0, %v907
        %v909 = vpop.f32.mrb[0].mxu0
        %v910 = vadd.f32 0.0, %v909
        %v911 = vpop.f32.mrb[0].mxu0
        %v912 = vadd.f32 0.0, %v911
        %913 = vmatprep.mubr.bf16.mxu0 0
        %914 = vmatmul.mubr.bf16.gmra.mrb[0].mxu0 %v555
        %v915 = vpop.f32.mrb[0].mxu0
        %v916 = vadd.f32 0.0, %v915
        %v917 = vpop.f32.mrb[0].mxu0
        %v918 = vadd.f32 0.0, %v917
        %v919 = vpop.f32.mrb[0].mxu0
        %v920 = vadd.f32 0.0, %v919
        %v921 = vpop.f32.mrb[0].mxu0
        %v922 = vadd.f32 0.0, %v921
        %923 = vmatprep.mubr.bf16.mxu0 0
        %924 = vmatmul.mubr.bf16.gmra.mrb[0].mxu0 %v556
        %v925 = vpop.f32.mrb[0].mxu0
        %v926 = vadd.f32 0.0, %v925
        %v927 = vpop.f32.mrb[0].mxu0
        %v928 = vadd.f32 0.0, %v927
        %v929 = vpop.f32.mrb[0].mxu0
        %v930 = vadd.f32 0.0, %v929
        %v931 = vpop.f32.mrb[0].mxu0
        %v932 = vadd.f32 0.0, %v931
        %933 = vmatprep.mubr.bf16.mxu0 0
        %934 = vmatmul.mubr.bf16.gmra.mrb[0].mxu0 %v557
        %v935 = vpop.f32.mrb[0].mxu0
        %v936 = vadd.f32 0.0, %v935
        %v937 = vpop.f32.mrb[0].mxu0
        %v938 = vadd.f32 0.0, %v937
        %v939 = vpop.f32.mrb[0].mxu0
        %v940 = vadd.f32 0.0, %v939
        %v941 = vpop.f32.mrb[0].mxu0
        %v942 = vadd.f32 0.0, %v941
        %943 = vdwg.mxu0
        %v945 = vlaneseq
        %v946 = vshrl.u32 %v945, 7
        %v947 = vsub.s32 0, %v946
        %v948 = vrot.slane %v654, %v947
        %v949 = vlaneseq
        %v950 = vshrl.u32 %v949, 7
        %v951 = vsub.s32 1, %v950
        %v952 = vrot.slane %v654, %v951
        %v955 = vadd.f32 %v948, %v786
        %v956 = vadd.f32 %v952, %v788
        %v957 = vadd.f32 %v948, %v790
        %v958 = vadd.f32 %v952, %v792
        %v959 = vadd.f32 %v948, %v796
        %v960 = vadd.f32 %v952, %v798
        %v961 = vadd.f32 %v948, %v800
        %v962 = vadd.f32 %v952, %v802
        %v963 = vadd.f32 %v948, %v806
        %v964 = vadd.f32 %v952, %v808
        %v965 = vadd.f32 %v948, %v810
        %v966 = vadd.f32 %v952, %v812
        %v967 = vadd.f32 %v948, %v816
        %v968 = vadd.f32 %v952, %v818
        %v969 = vadd.f32 %v948, %v820
        %v970 = vadd.f32 %v952, %v822
        %v971 = vadd.f32 %v948, %v826
        %v972 = vadd.f32 %v952, %v828
        %v973 = vadd.f32 %v948, %v830
        %v974 = vadd.f32 %v952, %v832
        %v975 = vadd.f32 %v948, %v836
        %v976 = vadd.f32 %v952, %v838
        %v977 = vadd.f32 %v948, %v840
        %v978 = vadd.f32 %v952, %v842
        %v979 = vadd.f32 %v948, %v846
        %v980 = vadd.f32 %v952, %v848
        %v981 = vadd.f32 %v948, %v850
        %v982 = vadd.f32 %v952, %v852
        %v983 = vadd.f32 %v948, %v856
        %v984 = vadd.f32 %v952, %v858
        %v985 = vadd.f32 %v948, %v860
        %v986 = vadd.f32 %v952, %v862
        %v987 = vadd.f32 %v948, %v866
        %v988 = vadd.f32 %v952, %v868
        %v989 = vadd.f32 %v948, %v870
        %v990 = vadd.f32 %v952, %v872
        %v991 = vadd.f32 %v948, %v876
        %v992 = vadd.f32 %v952, %v878
        %v993 = vadd.f32 %v948, %v880
        %v994 = vadd.f32 %v952, %v882
        %v995 = vadd.f32 %v948, %v886
        %v996 = vadd.f32 %v952, %v888
        %v997 = vadd.f32 %v948, %v890
        %v998 = vadd.f32 %v952, %v892
        %v999 = vadd.f32 %v948, %v896
        %v1000 = vadd.f32 %v952, %v898
        %v1001 = vadd.f32 %v948, %v900
        %v1002 = vadd.f32 %v952, %v902
        %v1003 = vadd.f32 %v948, %v906
        %v1004 = vadd.f32 %v952, %v908
        %v1005 = vadd.f32 %v948, %v910
        %v1006 = vadd.f32 %v952, %v912
        %v1007 = vadd.f32 %v948, %v916
        %v1008 = vadd.f32 %v952, %v918
        %v1009 = vadd.f32 %v948, %v920
        %v1010 = vadd.f32 %v952, %v922
        %v1011 = vadd.f32 %v948, %v926
        %v1012 = vadd.f32 %v952, %v928
        %v1013 = vadd.f32 %v948, %v930
        %v1014 = vadd.f32 %v952, %v932
        %v1015 = vadd.f32 %v948, %v936
        %v1016 = vadd.f32 %v952, %v938
        %v1017 = vadd.f32 %v948, %v940
        %v1018 = vadd.f32 %v952, %v942
        %v1019 = vld [vmem:[#allocation8] sm:$0xff]
        %v1020 = vld [vmem:[#allocation8 + $0x8] sm:$0xff]
        %v1021 = vld [vmem:[#allocation8 + $0x10] sm:$0xff]
        %v1022 = vld [vmem:[#allocation8 + $0x18] sm:$0xff]
        %v1023 = vld [vmem:[#allocation8 + $0x20] sm:$0xff]
        %v1024 = vld [vmem:[#allocation8 + $0x28] sm:$0xff]
        %v1025 = vld [vmem:[#allocation8 + $0x30] sm:$0xff]
        %v1026 = vld [vmem:[#allocation8 + $0x38] sm:$0xff]
        %v1027 = vld [vmem:[#allocation8 + $0x40] sm:$0xff]
        %v1028 = vld [vmem:[#allocation8 + $0x48] sm:$0xff]
        %v1029 = vld [vmem:[#allocation8 + $0x50] sm:$0xff]
        %v1030 = vld [vmem:[#allocation8 + $0x58] sm:$0xff]
        %v1031 = vld [vmem:[#allocation8 + $0x60] sm:$0xff]
        %v1032 = vld [vmem:[#allocation8 + $0x68] sm:$0xff]
        %v1033 = vld [vmem:[#allocation8 + $0x70] sm:$0xff]
        %v1034 = vld [vmem:[#allocation8 + $0x78] sm:$0xff]
        %v1035 = vld [vmem:[#allocation8 + $0x80] sm:$0xff]
        %v1036 = vld [vmem:[#allocation8 + $0x88] sm:$0xff]
        %v1037 = vld [vmem:[#allocation8 + $0x90] sm:$0xff]
        %v1038 = vld [vmem:[#allocation8 + $0x98] sm:$0xff]
        %v1039 = vld [vmem:[#allocation8 + $0xa0] sm:$0xff]
        %v1040 = vld [vmem:[#allocation8 + $0xa8] sm:$0xff]
        %v1041 = vld [vmem:[#allocation8 + $0xb0] sm:$0xff]
        %v1042 = vld [vmem:[#allocation8 + $0xb8] sm:$0xff]
        %v1043 = vld [vmem:[#allocation8 + $0xc0] sm:$0xff]
        %v1044 = vld [vmem:[#allocation8 + $0xc8] sm:$0xff]
        %v1045 = vld [vmem:[#allocation8 + $0xd0] sm:$0xff]
        %v1046 = vld [vmem:[#allocation8 + $0xd8] sm:$0xff]
        %v1047 = vld [vmem:[#allocation8 + $0xe0] sm:$0xff]
        %v1048 = vld [vmem:[#allocation8 + $0xe8] sm:$0xff]
        %v1049 = vld [vmem:[#allocation8 + $0xf0] sm:$0xff]
        %v1050 = vld [vmem:[#allocation8 + $0xf8] sm:$0xff]
        %v1083 = vunpack.c.l.b16 %v1019
        %v1084 = vunpack.c.h.b16 %v1019
        %v1085 = vunpack.c.l.b16 %v1020
        %v1086 = vunpack.c.h.b16 %v1020
        %v1087 = vunpack.c.l.b16 %v1021
        %v1088 = vunpack.c.h.b16 %v1021
        %v1089 = vunpack.c.l.b16 %v1022
        %v1090 = vunpack.c.h.b16 %v1022
        %v1091 = vunpack.c.l.b16 %v1023
        %v1092 = vunpack.c.h.b16 %v1023
        %v1093 = vunpack.c.l.b16 %v1024
        %v1094 = vunpack.c.h.b16 %v1024
        %v1095 = vunpack.c.l.b16 %v1025
        %v1096 = vunpack.c.h.b16 %v1025
        %v1097 = vunpack.c.l.b16 %v1026
        %v1098 = vunpack.c.h.b16 %v1026
        %v1099 = vunpack.c.l.b16 %v1027
        %v1100 = vunpack.c.h.b16 %v1027
        %v1101 = vunpack.c.l.b16 %v1028
        %v1102 = vunpack.c.h.b16 %v1028
        %v1103 = vunpack.c.l.b16 %v1029
        %v1104 = vunpack.c.h.b16 %v1029
        %v1105 = vunpack.c.l.b16 %v1030
        %v1106 = vunpack.c.h.b16 %v1030
        %v1107 = vunpack.c.l.b16 %v1031
        %v1108 = vunpack.c.h.b16 %v1031
        %v1109 = vunpack.c.l.b16 %v1032
        %v1110 = vunpack.c.h.b16 %v1032
        %v1111 = vunpack.c.l.b16 %v1033
        %v1112 = vunpack.c.h.b16 %v1033
        %v1113 = vunpack.c.l.b16 %v1034
        %v1114 = vunpack.c.h.b16 %v1034
        %v1115 = vunpack.c.l.b16 %v1035
        %v1116 = vunpack.c.h.b16 %v1035
        %v1117 = vunpack.c.l.b16 %v1036
        %v1118 = vunpack.c.h.b16 %v1036
        %v1119 = vunpack.c.l.b16 %v1037
        %v1120 = vunpack.c.h.b16 %v1037
        %v1121 = vunpack.c.l.b16 %v1038
        %v1122 = vunpack.c.h.b16 %v1038
        %v1123 = vunpack.c.l.b16 %v1039
        %v1124 = vunpack.c.h.b16 %v1039
        %v1125 = vunpack.c.l.b16 %v1040
        %v1126 = vunpack.c.h.b16 %v1040
        %v1127 = vunpack.c.l.b16 %v1041
        %v1128 = vunpack.c.h.b16 %v1041
        %v1129 = vunpack.c.l.b16 %v1042
        %v1130 = vunpack.c.h.b16 %v1042
        %v1131 = vunpack.c.l.b16 %v1043
        %v1132 = vunpack.c.h.b16 %v1043
        %v1133 = vunpack.c.l.b16 %v1044
        %v1134 = vunpack.c.h.b16 %v1044
        %v1135 = vunpack.c.l.b16 %v1045
        %v1136 = vunpack.c.h.b16 %v1045
        %v1137 = vunpack.c.l.b16 %v1046
        %v1138 = vunpack.c.h.b16 %v1046
        %v1139 = vunpack.c.l.b16 %v1047
        %v1140 = vunpack.c.h.b16 %v1047
        %v1141 = vunpack.c.l.b16 %v1048
        %v1142 = vunpack.c.h.b16 %v1048
        %v1143 = vunpack.c.l.b16 %v1049
        %v1144 = vunpack.c.h.b16 %v1049
        %v1145 = vunpack.c.l.b16 %v1050
        %v1146 = vunpack.c.h.b16 %v1050
        %v1147 = vpack.c.b16 %v1085, %v1083
        %v1148 = vpack.c.b16 %v1086, %v1084
        %v1149 = vpack.c.b16 %v1089, %v1087
        %v1150 = vpack.c.b16 %v1090, %v1088
        %v1151 = vpack.c.b16 %v1093, %v1091
        %v1152 = vpack.c.b16 %v1094, %v1092
        %v1153 = vpack.c.b16 %v1097, %v1095
        %v1154 = vpack.c.b16 %v1098, %v1096
        %v1155 = vpack.c.b16 %v1101, %v1099
        %v1156 = vpack.c.b16 %v1102, %v1100
        %v1157 = vpack.c.b16 %v1105, %v1103
        %v1158 = vpack.c.b16 %v1106, %v1104
        %v1159 = vpack.c.b16 %v1109, %v1107
        %v1160 = vpack.c.b16 %v1110, %v1108
        %v1161 = vpack.c.b16 %v1113, %v1111
        %v1162 = vpack.c.b16 %v1114, %v1112
        %v1163 = vpack.c.b16 %v1117, %v1115
        %v1164 = vpack.c.b16 %v1118, %v1116
        %v1165 = vpack.c.b16 %v1121, %v1119
        %v1166 = vpack.c.b16 %v1122, %v1120
        %v1167 = vpack.c.b16 %v1125, %v1123
        %v1168 = vpack.c.b16 %v1126, %v1124
        %v1169 = vpack.c.b16 %v1129, %v1127
        %v1170 = vpack.c.b16 %v1130, %v1128
        %v1171 = vpack.c.b16 %v1133, %v1131
        %v1172 = vpack.c.b16 %v1134, %v1132
        %v1173 = vpack.c.b16 %v1137, %v1135
        %v1174 = vpack.c.b16 %v1138, %v1136
        %v1175 = vpack.c.b16 %v1141, %v1139
        %v1176 = vpack.c.b16 %v1142, %v1140
        %v1177 = vpack.c.b16 %v1145, %v1143
        %v1178 = vpack.c.b16 %v1146, %v1144
        %1211 = vmatprep.subr.bf16.mxu0 %v1148
        %1212 = vmatpush1.bf16.msra.mxu0 %v1147
        %1213 = vmatprep.subr.bf16.mxu0 %v1150
        %1214 = vmatpush1.bf16.msra.mxu0 %v1149
        %1215 = vmatprep.subr.bf16.mxu0 %v1152
        %1216 = vmatpush1.bf16.msra.mxu0 %v1151
        %1217 = vmatprep.subr.bf16.mxu0 %v1154
        %1218 = vmatpush1.bf16.msra.mxu0 %v1153
        %1219 = vmatprep.subr.bf16.mxu0 %v1156
        %1220 = vmatpush1.bf16.msra.mxu0 %v1155
        %1221 = vmatprep.subr.bf16.mxu0 %v1158
        %1222 = vmatpush1.bf16.msra.mxu0 %v1157
        %1223 = vmatprep.subr.bf16.mxu0 %v1160
        %1224 = vmatpush1.bf16.msra.mxu0 %v1159
        %1225 = vmatprep.subr.bf16.mxu0 %v1162
        %1226 = vmatpush1.bf16.msra.mxu0 %v1161
        %1227 = vmatprep.subr.bf16.mxu0 %v1164
        %1228 = vmatpush1.bf16.msra.mxu0 %v1163
        %1229 = vmatprep.subr.bf16.mxu0 %v1166
        %1230 = vmatpush1.bf16.msra.mxu0 %v1165
        %1231 = vmatprep.subr.bf16.mxu0 %v1168
        %1232 = vmatpush1.bf16.msra.mxu0 %v1167
        %1233 = vmatprep.subr.bf16.mxu0 %v1170
        %1234 = vmatpush1.bf16.msra.mxu0 %v1169
        %1235 = vmatprep.subr.bf16.mxu0 %v1172
        %1236 = vmatpush1.bf16.msra.mxu0 %v1171
        %1237 = vmatprep.subr.bf16.mxu0 %v1174
        %1238 = vmatpush1.bf16.msra.mxu0 %v1173
        %1239 = vmatprep.subr.bf16.mxu0 %v1176
        %1240 = vmatpush1.bf16.msra.mxu0 %v1175
        %1241 = vmatprep.subr.bf16.mxu0 %v1178
        %1242 = vmatpush1.bf16.msra.mxu0 %v1177
        %1243 = vmatprep.mubr.bf16.mxu0 %v623
        %1244 = vmatmul.mubr.bf16.gmra.mrb[0].mxu0 %v622
        %v1245 = vpop.f32.mrb[0].mxu0
        %v1246 = vadd.f32 0.0, %v1245
        %v1247 = vpop.f32.mrb[0].mxu0
        %v1248 = vadd.f32 0.0, %v1247
        %v1249 = vpop.f32.mrb[0].mxu0
        %v1250 = vadd.f32 0.0, %v1249
        %v1251 = vpop.f32.mrb[0].mxu0
        %v1252 = vadd.f32 0.0, %v1251
        %1253 = vmatprep.mubr.bf16.mxu0 %v625
        %1254 = vmatmul.mubr.bf16.gmra.mrb[0].mxu0 %v624
        %v1255 = vpop.f32.mrb[0].mxu0
        %v1256 = vadd.f32 0.0, %v1255
        %v1257 = vpop.f32.mrb[0].mxu0
        %v1258 = vadd.f32 0.0, %v1257
        %v1259 = vpop.f32.mrb[0].mxu0
        %v1260 = vadd.f32 0.0, %v1259
        %v1261 = vpop.f32.mrb[0].mxu0
        %v1262 = vadd.f32 0.0, %v1261
        %1263 = vmatprep.mubr.bf16.mxu0 %v627
        %1264 = vmatmul.mubr.bf16.gmra.mrb[0].mxu0 %v626
        %v1265 = vpop.f32.mrb[0].mxu0
        %v1266 = vadd.f32 0.0, %v1265
        %v1267 = vpop.f32.mrb[0].mxu0
        %v1268 = vadd.f32 0.0, %v1267
        %v1269 = vpop.f32.mrb[0].mxu0
        %v1270 = vadd.f32 0.0, %v1269
        %v1271 = vpop.f32.mrb[0].mxu0
        %v1272 = vadd.f32 0.0, %v1271
        %1273 = vmatprep.mubr.bf16.mxu0 %v629
        %1274 = vmatmul.mubr.bf16.gmra.mrb[0].mxu0 %v628
        %v1275 = vpop.f32.mrb[0].mxu0
        %v1276 = vadd.f32 0.0, %v1275
        %v1277 = vpop.f32.mrb[0].mxu0
        %v1278 = vadd.f32 0.0, %v1277
        %v1279 = vpop.f32.mrb[0].mxu0
        %v1280 = vadd.f32 0.0, %v1279
        %v1281 = vpop.f32.mrb[0].mxu0
        %v1282 = vadd.f32 0.0, %v1281
        %1283 = vmatprep.mubr.bf16.mxu0 %v631
        %1284 = vmatmul.mubr.bf16.gmra.mrb[0].mxu0 %v630
        %v1285 = vpop.f32.mrb[0].mxu0
        %v1286 = vadd.f32 0.0, %v1285
        %v1287 = vpop.f32.mrb[0].mxu0
        %v1288 = vadd.f32 0.0, %v1287
        %v1289 = vpop.f32.mrb[0].mxu0
        %v1290 = vadd.f32 0.0, %v1289
        %v1291 = vpop.f32.mrb[0].mxu0
        %v1292 = vadd.f32 0.0, %v1291
        %1293 = vmatprep.mubr.bf16.mxu0 %v633
        %1294 = vmatmul.mubr.bf16.gmra.mrb[0].mxu0 %v632
        %v1295 = vpop.f32.mrb[0].mxu0
        %v1296 = vadd.f32 0.0, %v1295
        %v1297 = vpop.f32.mrb[0].mxu0
        %v1298 = vadd.f32 0.0, %v1297
        %v1299 = vpop.f32.mrb[0].mxu0
        %v1300 = vadd.f32 0.0, %v1299
        %v1301 = vpop.f32.mrb[0].mxu0
        %v1302 = vadd.f32 0.0, %v1301
        %1303 = vmatprep.mubr.bf16.mxu0 %v635
        %1304 = vmatmul.mubr.bf16.gmra.mrb[0].mxu0 %v634
        %v1305 = vpop.f32.mrb[0].mxu0
        %v1306 = vadd.f32 0.0, %v1305
        %v1307 = vpop.f32.mrb[0].mxu0
        %v1308 = vadd.f32 0.0, %v1307
        %v1309 = vpop.f32.mrb[0].mxu0
        %v1310 = vadd.f32 0.0, %v1309
        %v1311 = vpop.f32.mrb[0].mxu0
        %v1312 = vadd.f32 0.0, %v1311
        %1313 = vmatprep.mubr.bf16.mxu0 %v637
        %1314 = vmatmul.mubr.bf16.gmra.mrb[0].mxu0 %v636
        %v1315 = vpop.f32.mrb[0].mxu0
        %v1316 = vadd.f32 0.0, %v1315
        %v1317 = vpop.f32.mrb[0].mxu0
        %v1318 = vadd.f32 0.0, %v1317
        %v1319 = vpop.f32.mrb[0].mxu0
        %v1320 = vadd.f32 0.0, %v1319
        %v1321 = vpop.f32.mrb[0].mxu0
        %v1322 = vadd.f32 0.0, %v1321
        %1323 = vmatprep.mubr.bf16.mxu0 %v639
        %1324 = vmatmul.mubr.bf16.gmra.mrb[0].mxu0 %v638
        %v1325 = vpop.f32.mrb[0].mxu0
        %v1326 = vadd.f32 0.0, %v1325
        %v1327 = vpop.f32.mrb[0].mxu0
        %v1328 = vadd.f32 0.0, %v1327
        %v1329 = vpop.f32.mrb[0].mxu0
        %v1330 = vadd.f32 0.0, %v1329
        %v1331 = vpop.f32.mrb[0].mxu0
        %v1332 = vadd.f32 0.0, %v1331
        %1333 = vmatprep.mubr.bf16.mxu0 %v641
        %1334 = vmatmul.mubr.bf16.gmra.mrb[0].mxu0 %v640
        %v1335 = vpop.f32.mrb[0].mxu0
        %v1336 = vadd.f32 0.0, %v1335
        %v1337 = vpop.f32.mrb[0].mxu0
        %v1338 = vadd.f32 0.0, %v1337
        %v1339 = vpop.f32.mrb[0].mxu0
        %v1340 = vadd.f32 0.0, %v1339
        %v1341 = vpop.f32.mrb[0].mxu0
        %v1342 = vadd.f32 0.0, %v1341
        %1343 = vmatprep.mubr.bf16.mxu0 %v643
        %1344 = vmatmul.mubr.bf16.gmra.mrb[0].mxu0 %v642
        %v1345 = vpop.f32.mrb[0].mxu0
        %v1346 = vadd.f32 0.0, %v1345
        %v1347 = vpop.f32.mrb[0].mxu0
        %v1348 = vadd.f32 0.0, %v1347
        %v1349 = vpop.f32.mrb[0].mxu0
        %v1350 = vadd.f32 0.0, %v1349
        %v1351 = vpop.f32.mrb[0].mxu0
        %v1352 = vadd.f32 0.0, %v1351
        %1353 = vmatprep.mubr.bf16.mxu0 %v645
        %1354 = vmatmul.mubr.bf16.gmra.mrb[0].mxu0 %v644
        %v1355 = vpop.f32.mrb[0].mxu0
        %v1356 = vadd.f32 0.0, %v1355
        %v1357 = vpop.f32.mrb[0].mxu0
        %v1358 = vadd.f32 0.0, %v1357
        %v1359 = vpop.f32.mrb[0].mxu0
        %v1360 = vadd.f32 0.0, %v1359
        %v1361 = vpop.f32.mrb[0].mxu0
        %v1362 = vadd.f32 0.0, %v1361
        %1363 = vmatprep.mubr.bf16.mxu0 %v647
        %1364 = vmatmul.mubr.bf16.gmra.mrb[0].mxu0 %v646
        %v1365 = vpop.f32.mrb[0].mxu0
        %v1366 = vadd.f32 0.0, %v1365
        %v1367 = vpop.f32.mrb[0].mxu0
        %v1368 = vadd.f32 0.0, %v1367
        %v1369 = vpop.f32.mrb[0].mxu0
        %v1370 = vadd.f32 0.0, %v1369
        %v1371 = vpop.f32.mrb[0].mxu0
        %v1372 = vadd.f32 0.0, %v1371
        %1373 = vmatprep.mubr.bf16.mxu0 %v649
        %1374 = vmatmul.mubr.bf16.gmra.mrb[0].mxu0 %v648
        %v1375 = vpop.f32.mrb[0].mxu0
        %v1376 = vadd.f32 0.0, %v1375
        %v1377 = vpop.f32.mrb[0].mxu0
        %v1378 = vadd.f32 0.0, %v1377
        %v1379 = vpop.f32.mrb[0].mxu0
        %v1380 = vadd.f32 0.0, %v1379
        %v1381 = vpop.f32.mrb[0].mxu0
        %v1382 = vadd.f32 0.0, %v1381
        %1383 = vmatprep.mubr.bf16.mxu0 %v651
        %1384 = vmatmul.mubr.bf16.gmra.mrb[0].mxu0 %v650
        %v1385 = vpop.f32.mrb[0].mxu0
        %v1386 = vadd.f32 0.0, %v1385
        %v1387 = vpop.f32.mrb[0].mxu0
        %v1388 = vadd.f32 0.0, %v1387
        %v1389 = vpop.f32.mrb[0].mxu0
        %v1390 = vadd.f32 0.0, %v1389
        %v1391 = vpop.f32.mrb[0].mxu0
        %v1392 = vadd.f32 0.0, %v1391
        %1393 = vmatprep.mubr.bf16.mxu0 %v653
        %1394 = vmatmul.mubr.bf16.gmra.mrb[0].mxu0 %v652
        %v1395 = vpop.f32.mrb[0].mxu0
        %v1396 = vadd.f32 0.0, %v1395
        %v1397 = vpop.f32.mrb[0].mxu0
        %v1398 = vadd.f32 0.0, %v1397
        %v1399 = vpop.f32.mrb[0].mxu0
        %v1400 = vadd.f32 0.0, %v1399
        %v1401 = vpop.f32.mrb[0].mxu0
        %v1402 = vadd.f32 0.0, %v1401
        %1403 = vdwg.mxu0
        %v1404 = vadd.f32 %v955, %v1246
        %v1405 = vadd.f32 %v956, %v1248
        %v1406 = vadd.f32 %v957, %v1250
        %v1407 = vadd.f32 %v958, %v1252
        %v1408 = vadd.f32 %v959, %v1256
        %v1409 = vadd.f32 %v960, %v1258
        %v1410 = vadd.f32 %v961, %v1260
        %v1411 = vadd.f32 %v962, %v1262
        %v1412 = vadd.f32 %v963, %v1266
        %v1413 = vadd.f32 %v964, %v1268
        %v1414 = vadd.f32 %v965, %v1270
        %v1415 = vadd.f32 %v966, %v1272
        %v1416 = vadd.f32 %v967, %v1276
        %v1417 = vadd.f32 %v968, %v1278
        %v1418 = vadd.f32 %v969, %v1280
        %v1419 = vadd.f32 %v970, %v1282
        %v1420 = vadd.f32 %v971, %v1286
        %v1421 = vadd.f32 %v972, %v1288
        %v1422 = vadd.f32 %v973, %v1290
        %v1423 = vadd.f32 %v974, %v1292
        %v1424 = vadd.f32 %v975, %v1296
        %v1425 = vadd.f32 %v976, %v1298
        %v1426 = vadd.f32 %v977, %v1300
        %v1427 = vadd.f32 %v978, %v1302
        %v1428 = vadd.f32 %v979, %v1306
        %v1429 = vadd.f32 %v980, %v1308
        %v1430 = vadd.f32 %v981, %v1310
        %v1431 = vadd.f32 %v982, %v1312
        %v1432 = vadd.f32 %v983, %v1316
        %v1433 = vadd.f32 %v984, %v1318
        %v1434 = vadd.f32 %v985, %v1320
        %v1435 = vadd.f32 %v986, %v1322
        %v1436 = vadd.f32 %v987, %v1326
        %v1437 = vadd.f32 %v988, %v1328
        %v1438 = vadd.f32 %v989, %v1330
        %v1439 = vadd.f32 %v990, %v1332
        %v1440 = vadd.f32 %v991, %v1336
        %v1441 = vadd.f32 %v992, %v1338
        %v1442 = vadd.f32 %v993, %v1340
        %v1443 = vadd.f32 %v994, %v1342
        %v1444 = vadd.f32 %v995, %v1346
        %v1445 = vadd.f32 %v996, %v1348
        %v1446 = vadd.f32 %v997, %v1350
        %v1447 = vadd.f32 %v998, %v1352
        %v1448 = vadd.f32 %v999, %v1356
        %v1449 = vadd.f32 %v1000, %v1358
        %v1450 = vadd.f32 %v1001, %v1360
        %v1451 = vadd.f32 %v1002, %v1362
        %v1452 = vadd.f32 %v1003, %v1366
        %v1453 = vadd.f32 %v1004, %v1368
        %v1454 = vadd.f32 %v1005, %v1370
        %v1455 = vadd.f32 %v1006, %v1372
        %v1456 = vadd.f32 %v1007, %v1376
        %v1457 = vadd.f32 %v1008, %v1378
        %v1458 = vadd.f32 %v1009, %v1380
        %v1459 = vadd.f32 %v1010, %v1382
        %v1460 = vadd.f32 %v1011, %v1386
        %v1461 = vadd.f32 %v1012, %v1388
        %v1462 = vadd.f32 %v1013, %v1390
        %v1463 = vadd.f32 %v1014, %v1392
        %v1464 = vadd.f32 %v1015, %v1396
        %v1465 = vadd.f32 %v1016, %v1398
        %v1466 = vadd.f32 %v1017, %v1400
        %v1467 = vadd.f32 %v1018, %v1402
        %v1468 = vmul.f32 %v1404, 0.5
        %v1469 = vmul.f32 %v1405, 0.5
        %v1470 = vmul.f32 %v1406, 0.5
        %v1471 = vmul.f32 %v1407, 0.5
        %v1472 = vmul.f32 %v1408, 0.5
        %v1473 = vmul.f32 %v1409, 0.5
        %v1474 = vmul.f32 %v1410, 0.5
        %v1475 = vmul.f32 %v1411, 0.5
        %v1476 = vmul.f32 %v1412, 0.5
        %v1477 = vmul.f32 %v1413, 0.5
        %v1478 = vmul.f32 %v1414, 0.5
        %v1479 = vmul.f32 %v1415, 0.5
        %v1480 = vmul.f32 %v1416, 0.5
        %v1481 = vmul.f32 %v1417, 0.5
        %v1482 = vmul.f32 %v1418, 0.5
        %v1483 = vmul.f32 %v1419, 0.5
        %v1484 = vmul.f32 %v1420, 0.5
        %v1485 = vmul.f32 %v1421, 0.5
        %v1486 = vmul.f32 %v1422, 0.5
        %v1487 = vmul.f32 %v1423, 0.5
        %v1488 = vmul.f32 %v1424, 0.5
        %v1489 = vmul.f32 %v1425, 0.5
        %v1490 = vmul.f32 %v1426, 0.5
        %v1491 = vmul.f32 %v1427, 0.5
        %v1492 = vmul.f32 %v1428, 0.5
        %v1493 = vmul.f32 %v1429, 0.5
        %v1494 = vmul.f32 %v1430, 0.5
        %v1495 = vmul.f32 %v1431, 0.5
        %v1496 = vmul.f32 %v1432, 0.5
        %v1497 = vmul.f32 %v1433, 0.5
        %v1498 = vmul.f32 %v1434, 0.5
        %v1499 = vmul.f32 %v1435, 0.5
        %v1500 = vmul.f32 %v1436, 0.5
        %v1501 = vmul.f32 %v1437, 0.5
        %v1502 = vmul.f32 %v1438, 0.5
        %v1503 = vmul.f32 %v1439, 0.5
        %v1504 = vmul.f32 %v1440, 0.5
        %v1505 = vmul.f32 %v1441, 0.5
        %v1506 = vmul.f32 %v1442, 0.5
        %v1507 = vmul.f32 %v1443, 0.5
        %v1508 = vmul.f32 %v1444, 0.5
        %v1509 = vmul.f32 %v1445, 0.5
        %v1510 = vmul.f32 %v1446, 0.5
        %v1511 = vmul.f32 %v1447, 0.5
        %v1512 = vmul.f32 %v1448, 0.5
        %v1513 = vmul.f32 %v1449, 0.5
        %v1514 = vmul.f32 %v1450, 0.5
        %v1515 = vmul.f32 %v1451, 0.5
        %v1516 = vmul.f32 %v1452, 0.5
        %v1517 = vmul.f32 %v1453, 0.5
        %v1518 = vmul.f32 %v1454, 0.5
        %v1519 = vmul.f32 %v1455, 0.5
        %v1520 = vmul.f32 %v1456, 0.5
        %v1521 = vmul.f32 %v1457, 0.5
        %v1522 = vmul.f32 %v1458, 0.5
        %v1523 = vmul.f32 %v1459, 0.5
        %v1524 = vmul.f32 %v1460, 0.5
        %v1525 = vmul.f32 %v1461, 0.5
        %v1526 = vmul.f32 %v1462, 0.5
        %v1527 = vmul.f32 %v1463, 0.5
        %v1528 = vmul.f32 %v1464, 0.5
        %v1529 = vmul.f32 %v1465, 0.5
        %v1530 = vmul.f32 %v1466, 0.5
        %v1531 = vmul.f32 %v1467, 0.5
        %v1532 = vmul.f32 %v1404, 0.70710677
        %v1533 = vmul.f32 %v1405, 0.70710677
        %v1534 = vmul.f32 %v1406, 0.70710677
        %v1535 = vmul.f32 %v1407, 0.70710677
        %v1536 = vmul.f32 %v1408, 0.70710677
        %v1537 = vmul.f32 %v1409, 0.70710677
        %v1538 = vmul.f32 %v1410, 0.70710677
        %v1539 = vmul.f32 %v1411, 0.70710677
        %v1540 = vmul.f32 %v1412, 0.70710677
        %v1541 = vmul.f32 %v1413, 0.70710677
        %v1542 = vmul.f32 %v1414, 0.70710677
        %v1543 = vmul.f32 %v1415, 0.70710677
        %v1544 = vmul.f32 %v1416, 0.70710677
        %v1545 = vmul.f32 %v1417, 0.70710677
        %v1546 = vmul.f32 %v1418, 0.70710677
        %v1547 = vmul.f32 %v1419, 0.70710677
        %v1548 = vmul.f32 %v1420, 0.70710677
        %v1549 = vmul.f32 %v1421, 0.70710677
        %v1550 = vmul.f32 %v1422, 0.70710677
        %v1551 = vmul.f32 %v1423, 0.70710677
        %v1552 = vmul.f32 %v1424, 0.70710677
        %v1553 = vmul.f32 %v1425, 0.70710677
        %v1554 = vmul.f32 %v1426, 0.70710677
        %v1555 = vmul.f32 %v1427, 0.70710677
        %v1556 = vmul.f32 %v1428, 0.70710677
        %v1557 = vmul.f32 %v1429, 0.70710677
        %v1558 = vmul.f32 %v1430, 0.70710677
        %v1559 = vmul.f32 %v1431, 0.70710677
        %v1560 = vmul.f32 %v1432, 0.70710677
        %v1561 = vmul.f32 %v1433, 0.70710677
        %v1562 = vmul.f32 %v1434, 0.70710677
        %v1563 = vmul.f32 %v1435, 0.70710677
        %v1564 = vmul.f32 %v1436, 0.70710677
        %v1565 = vmul.f32 %v1437, 0.70710677
        %v1566 = vmul.f32 %v1438, 0.70710677
        %v1567 = vmul.f32 %v1439, 0.70710677
        %v1568 = vmul.f32 %v1440, 0.70710677
        %v1569 = vmul.f32 %v1441, 0.70710677
        %v1570 = vmul.f32 %v1442, 0.70710677
        %v1571 = vmul.f32 %v1443, 0.70710677
        %v1572 = vmul.f32 %v1444, 0.70710677
        %v1573 = vmul.f32 %v1445, 0.70710677
        %v1574 = vmul.f32 %v1446, 0.70710677
        %v1575 = vmul.f32 %v1447, 0.70710677
        %v1576 = vmul.f32 %v1448, 0.70710677
        %v1577 = vmul.f32 %v1449, 0.70710677
        %v1578 = vmul.f32 %v1450, 0.70710677
        %v1579 = vmul.f32 %v1451, 0.70710677
        %v1580 = vmul.f32 %v1452, 0.70710677
        %v1581 = vmul.f32 %v1453, 0.70710677
        %v1582 = vmul.f32 %v1454, 0.70710677
        %v1583 = vmul.f32 %v1455, 0.70710677
        %v1584 = vmul.f32 %v1456, 0.70710677
        %v1585 = vmul.f32 %v1457, 0.70710677
        %v1586 = vmul.f32 %v1458, 0.70710677
        %v1587 = vmul.f32 %v1459, 0.70710677
        %v1588 = vmul.f32 %v1460, 0.70710677
        %v1589 = vmul.f32 %v1461, 0.70710677
        %v1590 = vmul.f32 %v1462, 0.70710677
        %v1591 = vmul.f32 %v1463, 0.70710677
        %v1592 = vmul.f32 %v1464, 0.70710677
        %v1593 = vmul.f32 %v1465, 0.70710677
        %v1594 = vmul.f32 %v1466, 0.70710677
        %v1595 = vmul.f32 %v1467, 0.70710677
        %v1596 = verf.f32.pop %v1532
        %v1597 = verf.f32.pop %v1533
        %v1598 = verf.f32.pop %v1534
        %v1599 = verf.f32.pop %v1535
        %v1600 = verf.f32.pop %v1536
        %v1601 = verf.f32.pop %v1537
        %v1602 = verf.f32.pop %v1538
        %v1603 = verf.f32.pop %v1539
        %v1604 = verf.f32.pop %v1540
        %v1605 = verf.f32.pop %v1541
        %v1606 = verf.f32.pop %v1542
        %v1607 = verf.f32.pop %v1543
        %v1608 = verf.f32.pop %v1544
        %v1609 = verf.f32.pop %v1545
        %v1610 = verf.f32.pop %v1546
        %v1611 = verf.f32.pop %v1547
        %v1612 = verf.f32.pop %v1548
        %v1613 = verf.f32.pop %v1549
        %v1614 = verf.f32.pop %v1550
        %v1615 = verf.f32.pop %v1551
        %v1616 = verf.f32.pop %v1552
        %v1617 = verf.f32.pop %v1553
        %v1618 = verf.f32.pop %v1554
        %v1619 = verf.f32.pop %v1555
        %v1620 = verf.f32.pop %v1556
        %v1621 = verf.f32.pop %v1557
        %v1622 = verf.f32.pop %v1558
        %v1623 = verf.f32.pop %v1559
        %v1624 = verf.f32.pop %v1560
        %v1625 = verf.f32.pop %v1561
        %v1626 = verf.f32.pop %v1562
        %v1627 = verf.f32.pop %v1563
        %v1628 = verf.f32.pop %v1564
        %v1629 = verf.f32.pop %v1565
        %v1630 = verf.f32.pop %v1566
        %v1631 = verf.f32.pop %v1567
        %v1632 = verf.f32.pop %v1568
        %v1633 = verf.f32.pop %v1569
        %v1634 = verf.f32.pop %v1570
        %v1635 = verf.f32.pop %v1571
        %v1636 = verf.f32.pop %v1572
        %v1637 = verf.f32.pop %v1573
        %v1638 = verf.f32.pop %v1574
        %v1639 = verf.f32.pop %v1575
        %v1640 = verf.f32.pop %v1576
        %v1641 = verf.f32.pop %v1577
        %v1642 = verf.f32.pop %v1578
        %v1643 = verf.f32.pop %v1579
        %v1644 = verf.f32.pop %v1580
        %v1645 = verf.f32.pop %v1581
        %v1646 = verf.f32.pop %v1582
        %v1647 = verf.f32.pop %v1583
        %v1648 = verf.f32.pop %v1584
        %v1649 = verf.f32.pop %v1585
        %v1650 = verf.f32.pop %v1586
        %v1651 = verf.f32.pop %v1587
        %v1652 = verf.f32.pop %v1588
        %v1653 = verf.f32.pop %v1589
        %v1654 = verf.f32.pop %v1590
        %v1655 = verf.f32.pop %v1591
        %v1656 = verf.f32.pop %v1592
        %v1657 = verf.f32.pop %v1593
        %v1658 = verf.f32.pop %v1594
        %v1659 = verf.f32.pop %v1595
        %v1660 = vadd.f32 %v1596, 1.0
        %v1661 = vadd.f32 %v1597, 1.0
        %v1662 = vadd.f32 %v1598, 1.0
        %v1663 = vadd.f32 %v1599, 1.0
        %v1664 = vadd.f32 %v1600, 1.0
        %v1665 = vadd.f32 %v1601, 1.0
        %v1666 = vadd.f32 %v1602, 1.0
        %v1667 = vadd.f32 %v1603, 1.0
        %v1668 = vadd.f32 %v1604, 1.0
        %v1669 = vadd.f32 %v1605, 1.0
        %v1670 = vadd.f32 %v1606, 1.0
        %v1671 = vadd.f32 %v1607, 1.0
        %v1672 = vadd.f32 %v1608, 1.0
        %v1673 = vadd.f32 %v1609, 1.0
        %v1674 = vadd.f32 %v1610, 1.0
        %v1675 = vadd.f32 %v1611, 1.0
        %v1676 = vadd.f32 %v1612, 1.0
        %v1677 = vadd.f32 %v1613, 1.0
        %v1678 = vadd.f32 %v1614, 1.0
        %v1679 = vadd.f32 %v1615, 1.0
        %v1680 = vadd.f32 %v1616, 1.0
        %v1681 = vadd.f32 %v1617, 1.0
        %v1682 = vadd.f32 %v1618, 1.0
        %v1683 = vadd.f32 %v1619, 1.0
        %v1684 = vadd.f32 %v1620, 1.0
        %v1685 = vadd.f32 %v1621, 1.0
        %v1686 = vadd.f32 %v1622, 1.0
        %v1687 = vadd.f32 %v1623, 1.0
        %v1688 = vadd.f32 %v1624, 1.0
        %v1689 = vadd.f32 %v1625, 1.0
        %v1690 = vadd.f32 %v1626, 1.0
        %v1691 = vadd.f32 %v1627, 1.0
        %v1692 = vadd.f32 %v1628, 1.0
        %v1693 = vadd.f32 %v1629, 1.0
        %v1694 = vadd.f32 %v1630, 1.0
        %v1695 = vadd.f32 %v1631, 1.0
        %v1696 = vadd.f32 %v1632, 1.0
        %v1697 = vadd.f32 %v1633, 1.0
        %v1698 = vadd.f32 %v1634, 1.0
        %v1699 = vadd.f32 %v1635, 1.0
        %v1700 = vadd.f32 %v1636, 1.0
        %v1701 = vadd.f32 %v1637, 1.0
        %v1702 = vadd.f32 %v1638, 1.0
        %v1703 = vadd.f32 %v1639, 1.0
        %v1704 = vadd.f32 %v1640, 1.0
        %v1705 = vadd.f32 %v1641, 1.0
        %v1706 = vadd.f32 %v1642, 1.0
        %v1707 = vadd.f32 %v1643, 1.0
        %v1708 = vadd.f32 %v1644, 1.0
        %v1709 = vadd.f32 %v1645, 1.0
        %v1710 = vadd.f32 %v1646, 1.0
        %v1711 = vadd.f32 %v1647, 1.0
        %v1712 = vadd.f32 %v1648, 1.0
        %v1713 = vadd.f32 %v1649, 1.0
        %v1714 = vadd.f32 %v1650, 1.0
        %v1715 = vadd.f32 %v1651, 1.0
        %v1716 = vadd.f32 %v1652, 1.0
        %v1717 = vadd.f32 %v1653, 1.0
        %v1718 = vadd.f32 %v1654, 1.0
        %v1719 = vadd.f32 %v1655, 1.0
        %v1720 = vadd.f32 %v1656, 1.0
        %v1721 = vadd.f32 %v1657, 1.0
        %v1722 = vadd.f32 %v1658, 1.0
        %v1723 = vadd.f32 %v1659, 1.0
        %v1724 = vmul.f32 %v1468, %v1660
        %v1725 = vmul.f32 %v1469, %v1661
        %v1726 = vmul.f32 %v1470, %v1662
        %v1727 = vmul.f32 %v1471, %v1663
        %v1728 = vmul.f32 %v1472, %v1664
        %v1729 = vmul.f32 %v1473, %v1665
        %v1730 = vmul.f32 %v1474, %v1666
        %v1731 = vmul.f32 %v1475, %v1667
        %v1732 = vmul.f32 %v1476, %v1668
        %v1733 = vmul.f32 %v1477, %v1669
        %v1734 = vmul.f32 %v1478, %v1670
        %v1735 = vmul.f32 %v1479, %v1671
        %v1736 = vmul.f32 %v1480, %v1672
        %v1737 = vmul.f32 %v1481, %v1673
        %v1738 = vmul.f32 %v1482, %v1674
        %v1739 = vmul.f32 %v1483, %v1675
        %v1740 = vmul.f32 %v1484, %v1676
        %v1741 = vmul.f32 %v1485, %v1677
        %v1742 = vmul.f32 %v1486, %v1678
        %v1743 = vmul.f32 %v1487, %v1679
        %v1744 = vmul.f32 %v1488, %v1680
        %v1745 = vmul.f32 %v1489, %v1681
        %v1746 = vmul.f32 %v1490, %v1682
        %v1747 = vmul.f32 %v1491, %v1683
        %v1748 = vmul.f32 %v1492, %v1684
        %v1749 = vmul.f32 %v1493, %v1685
        %v1750 = vmul.f32 %v1494, %v1686
        %v1751 = vmul.f32 %v1495, %v1687
        %v1752 = vmul.f32 %v1496, %v1688
        %v1753 = vmul.f32 %v1497, %v1689
        %v1754 = vmul.f32 %v1498, %v1690
        %v1755 = vmul.f32 %v1499, %v1691
        %v1756 = vmul.f32 %v1500, %v1692
        %v1757 = vmul.f32 %v1501, %v1693
        %v1758 = vmul.f32 %v1502, %v1694
        %v1759 = vmul.f32 %v1503, %v1695
        %v1760 = vmul.f32 %v1504, %v1696
        %v1761 = vmul.f32 %v1505, %v1697
        %v1762 = vmul.f32 %v1506, %v1698
        %v1763 = vmul.f32 %v1507, %v1699
        %v1764 = vmul.f32 %v1508, %v1700
        %v1765 = vmul.f32 %v1509, %v1701
        %v1766 = vmul.f32 %v1510, %v1702
        %v1767 = vmul.f32 %v1511, %v1703
        %v1768 = vmul.f32 %v1512, %v1704
        %v1769 = vmul.f32 %v1513, %v1705
        %v1770 = vmul.f32 %v1514, %v1706
        %v1771 = vmul.f32 %v1515, %v1707
        %v1772 = vmul.f32 %v1516, %v1708
        %v1773 = vmul.f32 %v1517, %v1709
        %v1774 = vmul.f32 %v1518, %v1710
        %v1775 = vmul.f32 %v1519, %v1711
        %v1776 = vmul.f32 %v1520, %v1712
        %v1777 = vmul.f32 %v1521, %v1713
        %v1778 = vmul.f32 %v1522, %v1714
        %v1779 = vmul.f32 %v1523, %v1715
        %v1780 = vmul.f32 %v1524, %v1716
        %v1781 = vmul.f32 %v1525, %v1717
        %v1782 = vmul.f32 %v1526, %v1718
        %v1783 = vmul.f32 %v1527, %v1719
        %v1784 = vmul.f32 %v1528, %v1720
        %v1785 = vmul.f32 %v1529, %v1721
        %v1786 = vmul.f32 %v1530, %v1722
        %v1787 = vmul.f32 %v1531, %v1723
        %v1788 = vadd.f32 %v1724, %v1725
        %1789 = vadd.xlane.f32.xlu0 %v1788
        %v1790 = vpop.xlane.xlu0 %1789
        %v1791 = vadd.f32 %v1726, %v1727
        %1792 = vadd.xlane.f32.xlu0 %v1791
        %v1793 = vpop.xlane.xlu0 %1792
        %v1794 = vadd.f32 %v1728, %v1729
        %1795 = vadd.xlane.f32.xlu0 %v1794
        %v1796 = vpop.xlane.xlu0 %1795
        %v1797 = vadd.f32 %v1730, %v1731
        %1798 = vadd.xlane.f32.xlu0 %v1797
        %v1799 = vpop.xlane.xlu0 %1798
        %v1800 = vadd.f32 %v1732, %v1733
        %1801 = vadd.xlane.f32.xlu0 %v1800
        %v1802 = vpop.xlane.xlu0 %1801
        %v1803 = vadd.f32 %v1734, %v1735
        %1804 = vadd.xlane.f32.xlu0 %v1803
        %v1805 = vpop.xlane.xlu0 %1804
        %v1806 = vadd.f32 %v1736, %v1737
        %1807 = vadd.xlane.f32.xlu0 %v1806
        %v1808 = vpop.xlane.xlu0 %1807
        %v1809 = vadd.f32 %v1738, %v1739
        %1810 = vadd.xlane.f32.xlu0 %v1809
        %v1811 = vpop.xlane.xlu0 %1810
        %v1812 = vadd.f32 %v1740, %v1741
        %1813 = vadd.xlane.f32.xlu0 %v1812
        %v1814 = vpop.xlane.xlu0 %1813
        %v1815 = vadd.f32 %v1742, %v1743
        %1816 = vadd.xlane.f32.xlu0 %v1815
        %v1817 = vpop.xlane.xlu0 %1816
        %v1818 = vadd.f32 %v1744, %v1745
        %1819 = vadd.xlane.f32.xlu0 %v1818
        %v1820 = vpop.xlane.xlu0 %1819
        %v1821 = vadd.f32 %v1746, %v1747
        %1822 = vadd.xlane.f32.xlu0 %v1821
        %v1823 = vpop.xlane.xlu0 %1822
        %v1824 = vadd.f32 %v1748, %v1749
        %1825 = vadd.xlane.f32.xlu0 %v1824
        %v1826 = vpop.xlane.xlu0 %1825
        %v1827 = vadd.f32 %v1750, %v1751
        %1828 = vadd.xlane.f32.xlu0 %v1827
        %v1829 = vpop.xlane.xlu0 %1828
        %v1830 = vadd.f32 %v1752, %v1753
        %1831 = vadd.xlane.f32.xlu0 %v1830
        %v1832 = vpop.xlane.xlu0 %1831
        %v1833 = vadd.f32 %v1754, %v1755
        %1834 = vadd.xlane.f32.xlu0 %v1833
        %v1835 = vpop.xlane.xlu0 %1834
        %v1836 = vadd.f32 %v1756, %v1757
        %1837 = vadd.xlane.f32.xlu0 %v1836
        %v1838 = vpop.xlane.xlu0 %1837
        %v1839 = vadd.f32 %v1758, %v1759
        %1840 = vadd.xlane.f32.xlu0 %v1839
        %v1841 = vpop.xlane.xlu0 %1840
        %v1842 = vadd.f32 %v1760, %v1761
        %1843 = vadd.xlane.f32.xlu0 %v1842
        %v1844 = vpop.xlane.xlu0 %1843
        %v1845 = vadd.f32 %v1762, %v1763
        %1846 = vadd.xlane.f32.xlu0 %v1845
        %v1847 = vpop.xlane.xlu0 %1846
        %v1848 = vadd.f32 %v1764, %v1765
        %1849 = vadd.xlane.f32.xlu0 %v1848
        %v1850 = vpop.xlane.xlu0 %1849
        %v1851 = vadd.f32 %v1766, %v1767
        %1852 = vadd.xlane.f32.xlu0 %v1851
        %v1853 = vpop.xlane.xlu0 %1852
        %v1854 = vadd.f32 %v1768, %v1769
        %1855 = vadd.xlane.f32.xlu0 %v1854
        %v1856 = vpop.xlane.xlu0 %1855
        %v1857 = vadd.f32 %v1770, %v1771
        %1858 = vadd.xlane.f32.xlu0 %v1857
        %v1859 = vpop.xlane.xlu0 %1858
        %v1860 = vadd.f32 %v1772, %v1773
        %1861 = vadd.xlane.f32.xlu0 %v1860
        %v1862 = vpop.xlane.xlu0 %1861
        %v1863 = vadd.f32 %v1774, %v1775
        %1864 = vadd.xlane.f32.xlu0 %v1863
        %v1865 = vpop.xlane.xlu0 %1864
        %v1866 = vadd.f32 %v1776, %v1777
        %1867 = vadd.xlane.f32.xlu0 %v1866
        %v1868 = vpop.xlane.xlu0 %1867
        %v1869 = vadd.f32 %v1778, %v1779
        %1870 = vadd.xlane.f32.xlu0 %v1869
        %v1871 = vpop.xlane.xlu0 %1870
        %v1872 = vadd.f32 %v1780, %v1781
        %1873 = vadd.xlane.f32.xlu0 %v1872
        %v1874 = vpop.xlane.xlu0 %1873
        %v1875 = vadd.f32 %v1782, %v1783
        %1876 = vadd.xlane.f32.xlu0 %v1875
        %v1877 = vpop.xlane.xlu0 %1876
        %v1878 = vadd.f32 %v1784, %v1785
        %1879 = vadd.xlane.f32.xlu0 %v1878
        %v1880 = vpop.xlane.xlu0 %1879
        %v1881 = vadd.f32 %v1786, %v1787
        %1882 = vadd.xlane.f32.xlu0 %v1881
        %v1883 = vpop.xlane.xlu0 %1882
        %v1884 = vrcp.pop 256.0
        %v1885 = vmul.f32 %v1790, %v1884
        %v1886 = vmul.f32 %v1793, %v1884
        %v1887 = vmul.f32 %v1796, %v1884
        %v1888 = vmul.f32 %v1799, %v1884
        %v1889 = vmul.f32 %v1802, %v1884
        %v1890 = vmul.f32 %v1805, %v1884
        %v1891 = vmul.f32 %v1808, %v1884
        %v1892 = vmul.f32 %v1811, %v1884
        %v1893 = vmul.f32 %v1814, %v1884
        %v1894 = vmul.f32 %v1817, %v1884
        %v1895 = vmul.f32 %v1820, %v1884
        %v1896 = vmul.f32 %v1823, %v1884
        %v1897 = vmul.f32 %v1826, %v1884
        %v1898 = vmul.f32 %v1829, %v1884
        %v1899 = vmul.f32 %v1832, %v1884
        %v1900 = vmul.f32 %v1835, %v1884
        %v1901 = vmul.f32 %v1838, %v1884
        %v1902 = vmul.f32 %v1841, %v1884
        %v1903 = vmul.f32 %v1844, %v1884
        %v1904 = vmul.f32 %v1847, %v1884
        %v1905 = vmul.f32 %v1850, %v1884
        %v1906 = vmul.f32 %v1853, %v1884
        %v1907 = vmul.f32 %v1856, %v1884
        %v1908 = vmul.f32 %v1859, %v1884
        %v1909 = vmul.f32 %v1862, %v1884
        %v1910 = vmul.f32 %v1865, %v1884
        %v1911 = vmul.f32 %v1868, %v1884
        %v1912 = vmul.f32 %v1871, %v1884
        %v1913 = vmul.f32 %v1874, %v1884
        %v1914 = vmul.f32 %v1877, %v1884
        %v1915 = vmul.f32 %v1880, %v1884
        %v1916 = vmul.f32 %v1883, %v1884
        %v1917 = vsub.f32 %v1724, %v1885
        %v1918 = vsub.f32 %v1725, %v1885
        %v1919 = vsub.f32 %v1726, %v1886
        %v1920 = vsub.f32 %v1727, %v1886
        %v1921 = vsub.f32 %v1728, %v1887
        %v1922 = vsub.f32 %v1729, %v1887
        %v1923 = vsub.f32 %v1730, %v1888
        %v1924 = vsub.f32 %v1731, %v1888
        %v1925 = vsub.f32 %v1732, %v1889
        %v1926 = vsub.f32 %v1733, %v1889
        %v1927 = vsub.f32 %v1734, %v1890
        %v1928 = vsub.f32 %v1735, %v1890
        %v1929 = vsub.f32 %v1736, %v1891
        %v1930 = vsub.f32 %v1737, %v1891
        %v1931 = vsub.f32 %v1738, %v1892
        %v1932 = vsub.f32 %v1739, %v1892
        %v1933 = vsub.f32 %v1740, %v1893
        %v1934 = vsub.f32 %v1741, %v1893
        %v1935 = vsub.f32 %v1742, %v1894
        %v1936 = vsub.f32 %v1743, %v1894
        %v1937 = vsub.f32 %v1744, %v1895
        %v1938 = vsub.f32 %v1745, %v1895
        %v1939 = vsub.f32 %v1746, %v1896
        %v1940 = vsub.f32 %v1747, %v1896
        %v1941 = vsub.f32 %v1748, %v1897
        %v1942 = vsub.f32 %v1749, %v1897
        %v1943 = vsub.f32 %v1750, %v1898
        %v1944 = vsub.f32 %v1751, %v1898
        %v1945 = vsub.f32 %v1752, %v1899
        %v1946 = vsub.f32 %v1753, %v1899
        %v1947 = vsub.f32 %v1754, %v1900
        %v1948 = vsub.f32 %v1755, %v1900
        %v1949 = vsub.f32 %v1756, %v1901
        %v1950 = vsub.f32 %v1757, %v1901
        %v1951 = vsub.f32 %v1758, %v1902
        %v1952 = vsub.f32 %v1759, %v1902
        %v1953 = vsub.f32 %v1760, %v1903
        %v1954 = vsub.f32 %v1761, %v1903
        %v1955 = vsub.f32 %v1762, %v1904
        %v1956 = vsub.f32 %v1763, %v1904
        %v1957 = vsub.f32 %v1764, %v1905
        %v1958 = vsub.f32 %v1765, %v1905
        %v1959 = vsub.f32 %v1766, %v1906
        %v1960 = vsub.f32 %v1767, %v1906
        %v1961 = vsub.f32 %v1768, %v1907
        %v1962 = vsub.f32 %v1769, %v1907
        %v1963 = vsub.f32 %v1770, %v1908
        %v1964 = vsub.f32 %v1771, %v1908
        %v1965 = vsub.f32 %v1772, %v1909
        %v1966 = vsub.f32 %v1773, %v1909
        %v1967 = vsub.f32 %v1774, %v1910
        %v1968 = vsub.f32 %v1775, %v1910
        %v1969 = vsub.f32 %v1776, %v1911
        %v1970 = vsub.f32 %v1777, %v1911
        %v1971 = vsub.f32 %v1778, %v1912
        %v1972 = vsub.f32 %v1779, %v1912
        %v1973 = vsub.f32 %v1780, %v1913
        %v1974 = vsub.f32 %v1781, %v1913
        %v1975 = vsub.f32 %v1782, %v1914
        %v1976 = vsub.f32 %v1783, %v1914
        %v1977 = vsub.f32 %v1784, %v1915
        %v1978 = vsub.f32 %v1785, %v1915
        %v1979 = vsub.f32 %v1786, %v1916
        %v1980 = vsub.f32 %v1787, %v1916
        %v1981 = vmul.f32 %v1917, %v1917
        %v1982 = vmul.f32 %v1918, %v1918
        %v1983 = vmul.f32 %v1919, %v1919
        %v1984 = vmul.f32 %v1920, %v1920
        %v1985 = vmul.f32 %v1921, %v1921
        %v1986 = vmul.f32 %v1922, %v1922
        %v1987 = vmul.f32 %v1923, %v1923
        %v1988 = vmul.f32 %v1924, %v1924
        %v1989 = vmul.f32 %v1925, %v1925
        %v1990 = vmul.f32 %v1926, %v1926
        %v1991 = vmul.f32 %v1927, %v1927
        %v1992 = vmul.f32 %v1928, %v1928
        %v1993 = vmul.f32 %v1929, %v1929
        %v1994 = vmul.f32 %v1930, %v1930
        %v1995 = vmul.f32 %v1931, %v1931
        %v1996 = vmul.f32 %v1932, %v1932
        %v1997 = vmul.f32 %v1933, %v1933
        %v1998 = vmul.f32 %v1934, %v1934
        %v1999 = vmul.f32 %v1935, %v1935
        %v2000 = vmul.f32 %v1936, %v1936
        %v2001 = vmul.f32 %v1937, %v1937
        %v2002 = vmul.f32 %v1938, %v1938
        %v2003 = vmul.f32 %v1939, %v1939
        %v2004 = vmul.f32 %v1940, %v1940
        %v2005 = vmul.f32 %v1941, %v1941
        %v2006 = vmul.f32 %v1942, %v1942
        %v2007 = vmul.f32 %v1943, %v1943
        %v2008 = vmul.f32 %v1944, %v1944
        %v2009 = vmul.f32 %v1945, %v1945
        %v2010 = vmul.f32 %v1946, %v1946
        %v2011 = vmul.f32 %v1947, %v1947
        %v2012 = vmul.f32 %v1948, %v1948
        %v2013 = vmul.f32 %v1949, %v1949
        %v2014 = vmul.f32 %v1950, %v1950
        %v2015 = vmul.f32 %v1951, %v1951
        %v2016 = vmul.f32 %v1952, %v1952
        %v2017 = vmul.f32 %v1953, %v1953
        %v2018 = vmul.f32 %v1954, %v1954
        %v2019 = vmul.f32 %v1955, %v1955
        %v2020 = vmul.f32 %v1956, %v1956
        %v2021 = vmul.f32 %v1957, %v1957
        %v2022 = vmul.f32 %v1958, %v1958
        %v2023 = vmul.f32 %v1959, %v1959
        %v2024 = vmul.f32 %v1960, %v1960
        %v2025 = vmul.f32 %v1961, %v1961
        %v2026 = vmul.f32 %v1962, %v1962
        %v2027 = vmul.f32 %v1963, %v1963
        %v2028 = vmul.f32 %v1964, %v1964
        %v2029 = vmul.f32 %v1965, %v1965
        %v2030 = vmul.f32 %v1966, %v1966
        %v2031 = vmul.f32 %v1967, %v1967
        %v2032 = vmul.f32 %v1968, %v1968
        %v2033 = vmul.f32 %v1969, %v1969
        %v2034 = vmul.f32 %v1970, %v1970
        %v2035 = vmul.f32 %v1971, %v1971
        %v2036 = vmul.f32 %v1972, %v1972
        %v2037 = vmul.f32 %v1973, %v1973
        %v2038 = vmul.f32 %v1974, %v1974
        %v2039 = vmul.f32 %v1975, %v1975
        %v2040 = vmul.f32 %v1976, %v1976
        %v2041 = vmul.f32 %v1977, %v1977
        %v2042 = vmul.f32 %v1978, %v1978
        %v2043 = vmul.f32 %v1979, %v1979
        %v2044 = vmul.f32 %v1980, %v1980
        %v2045 = vadd.f32 %v1981, %v1982
        %2046 = vadd.xlane.f32.xlu0 %v2045
        %v2047 = vpop.xlane.xlu0 %2046
        %v2048 = vadd.f32 %v1983, %v1984
        %2049 = vadd.xlane.f32.xlu0 %v2048
        %v2050 = vpop.xlane.xlu0 %2049
        %v2051 = vadd.f32 %v1985, %v1986
        %2052 = vadd.xlane.f32.xlu0 %v2051
        %v2053 = vpop.xlane.xlu0 %2052
        %v2054 = vadd.f32 %v1987, %v1988
        %2055 = vadd.xlane.f32.xlu0 %v2054
        %v2056 = vpop.xlane.xlu0 %2055
        %v2057 = vadd.f32 %v1989, %v1990
        %2058 = vadd.xlane.f32.xlu0 %v2057
        %v2059 = vpop.xlane.xlu0 %2058
        %v2060 = vadd.f32 %v1991, %v1992
        %2061 = vadd.xlane.f32.xlu0 %v2060
        %v2062 = vpop.xlane.xlu0 %2061
        %v2063 = vadd.f32 %v1993, %v1994
        %2064 = vadd.xlane.f32.xlu0 %v2063
        %v2065 = vpop.xlane.xlu0 %2064
        %v2066 = vadd.f32 %v1995, %v1996
        %2067 = vadd.xlane.f32.xlu0 %v2066
        %v2068 = vpop.xlane.xlu0 %2067
        %v2069 = vadd.f32 %v1997, %v1998
        %2070 = vadd.xlane.f32.xlu0 %v2069
        %v2071 = vpop.xlane.xlu0 %2070
        %v2072 = vadd.f32 %v1999, %v2000
        %2073 = vadd.xlane.f32.xlu0 %v2072
        %v2074 = vpop.xlane.xlu0 %2073
        %v2075 = vadd.f32 %v2001, %v2002
        %2076 = vadd.xlane.f32.xlu0 %v2075
        %v2077 = vpop.xlane.xlu0 %2076
        %v2078 = vadd.f32 %v2003, %v2004
        %2079 = vadd.xlane.f32.xlu0 %v2078
        %v2080 = vpop.xlane.xlu0 %2079
        %v2081 = vadd.f32 %v2005, %v2006
        %2082 = vadd.xlane.f32.xlu0 %v2081
        %v2083 = vpop.xlane.xlu0 %2082
        %v2084 = vadd.f32 %v2007, %v2008
        %2085 = vadd.xlane.f32.xlu0 %v2084
        %v2086 = vpop.xlane.xlu0 %2085
        %v2087 = vadd.f32 %v2009, %v2010
        %2088 = vadd.xlane.f32.xlu0 %v2087
        %v2089 = vpop.xlane.xlu0 %2088
        %v2090 = vadd.f32 %v2011, %v2012
        %2091 = vadd.xlane.f32.xlu0 %v2090
        %v2092 = vpop.xlane.xlu0 %2091
        %v2093 = vadd.f32 %v2013, %v2014
        %2094 = vadd.xlane.f32.xlu0 %v2093
        %v2095 = vpop.xlane.xlu0 %2094
        %v2096 = vadd.f32 %v2015, %v2016
        %2097 = vadd.xlane.f32.xlu0 %v2096
        %v2098 = vpop.xlane.xlu0 %2097
        %v2099 = vadd.f32 %v2017, %v2018
        %2100 = vadd.xlane.f32.xlu0 %v2099
        %v2101 = vpop.xlane.xlu0 %2100
        %v2102 = vadd.f32 %v2019, %v2020
        %2103 = vadd.xlane.f32.xlu0 %v2102
        %v2104 = vpop.xlane.xlu0 %2103
        %v2105 = vadd.f32 %v2021, %v2022
        %2106 = vadd.xlane.f32.xlu0 %v2105
        %v2107 = vpop.xlane.xlu0 %2106
        %v2108 = vadd.f32 %v2023, %v2024
        %2109 = vadd.xlane.f32.xlu0 %v2108
        %v2110 = vpop.xlane.xlu0 %2109
        %v2111 = vadd.f32 %v2025, %v2026
        %2112 = vadd.xlane.f32.xlu0 %v2111
        %v2113 = vpop.xlane.xlu0 %2112
        %v2114 = vadd.f32 %v2027, %v2028
        %2115 = vadd.xlane.f32.xlu0 %v2114
        %v2116 = vpop.xlane.xlu0 %2115
        %v2117 = vadd.f32 %v2029, %v2030
        %2118 = vadd.xlane.f32.xlu0 %v2117
        %v2119 = vpop.xlane.xlu0 %2118
        %v2120 = vadd.f32 %v2031, %v2032
        %2121 = vadd.xlane.f32.xlu0 %v2120
        %v2122 = vpop.xlane.xlu0 %2121
        %v2123 = vadd.f32 %v2033, %v2034
        %2124 = vadd.xlane.f32.xlu0 %v2123
        %v2125 = vpop.xlane.xlu0 %2124
        %v2126 = vadd.f32 %v2035, %v2036
        %2127 = vadd.xlane.f32.xlu0 %v2126
        %v2128 = vpop.xlane.xlu0 %2127
        %v2129 = vadd.f32 %v2037, %v2038
        %2130 = vadd.xlane.f32.xlu0 %v2129
        %v2131 = vpop.xlane.xlu0 %2130
        %v2132 = vadd.f32 %v2039, %v2040
        %2133 = vadd.xlane.f32.xlu0 %v2132
        %v2134 = vpop.xlane.xlu0 %2133
        %v2135 = vadd.f32 %v2041, %v2042
        %2136 = vadd.xlane.f32.xlu0 %v2135
        %v2137 = vpop.xlane.xlu0 %2136
        %v2138 = vadd.f32 %v2043, %v2044
        %2139 = vadd.xlane.f32.xlu0 %v2138
        %v2140 = vpop.xlane.xlu0 %2139
        %v2141 = vmul.f32 %v2047, %v1884
        %v2142 = vmul.f32 %v2050, %v1884
        %v2143 = vmul.f32 %v2053, %v1884
        %v2144 = vmul.f32 %v2056, %v1884
        %v2145 = vmul.f32 %v2059, %v1884
        %v2146 = vmul.f32 %v2062, %v1884
        %v2147 = vmul.f32 %v2065, %v1884
        %v2148 = vmul.f32 %v2068, %v1884
        %v2149 = vmul.f32 %v2071, %v1884
        %v2150 = vmul.f32 %v2074, %v1884
        %v2151 = vmul.f32 %v2077, %v1884
        %v2152 = vmul.f32 %v2080, %v1884
        %v2153 = vmul.f32 %v2083, %v1884
        %v2154 = vmul.f32 %v2086, %v1884
        %v2155 = vmul.f32 %v2089, %v1884
        %v2156 = vmul.f32 %v2092, %v1884
        %v2157 = vmul.f32 %v2095, %v1884
        %v2158 = vmul.f32 %v2098, %v1884
        %v2159 = vmul.f32 %v2101, %v1884
        %v2160 = vmul.f32 %v2104, %v1884
        %v2161 = vmul.f32 %v2107, %v1884
        %v2162 = vmul.f32 %v2110, %v1884
        %v2163 = vmul.f32 %v2113, %v1884
        %v2164 = vmul.f32 %v2116, %v1884
        %v2165 = vmul.f32 %v2119, %v1884
        %v2166 = vmul.f32 %v2122, %v1884
        %v2167 = vmul.f32 %v2125, %v1884
        %v2168 = vmul.f32 %v2128, %v1884
        %v2169 = vmul.f32 %v2131, %v1884
        %v2170 = vmul.f32 %v2134, %v1884
        %v2171 = vmul.f32 %v2137, %v1884
        %v2172 = vmul.f32 %v2140, %v1884
        %v2173 = vadd.f32 %v2141, 1e-05
        %v2174 = vadd.f32 %v2142, 1e-05
        %v2175 = vadd.f32 %v2143, 1e-05
        %v2176 = vadd.f32 %v2144, 1e-05
        %v2177 = vadd.f32 %v2145, 1e-05
        %v2178 = vadd.f32 %v2146, 1e-05
        %v2179 = vadd.f32 %v2147, 1e-05
        %v2180 = vadd.f32 %v2148, 1e-05
        %v2181 = vadd.f32 %v2149, 1e-05
        %v2182 = vadd.f32 %v2150, 1e-05
        %v2183 = vadd.f32 %v2151, 1e-05
        %v2184 = vadd.f32 %v2152, 1e-05
        %v2185 = vadd.f32 %v2153, 1e-05
        %v2186 = vadd.f32 %v2154, 1e-05
        %v2187 = vadd.f32 %v2155, 1e-05
        %v2188 = vadd.f32 %v2156, 1e-05
        %v2189 = vadd.f32 %v2157, 1e-05
        %v2190 = vadd.f32 %v2158, 1e-05
        %v2191 = vadd.f32 %v2159, 1e-05
        %v2192 = vadd.f32 %v2160, 1e-05
        %v2193 = vadd.f32 %v2161, 1e-05
        %v2194 = vadd.f32 %v2162, 1e-05
        %v2195 = vadd.f32 %v2163, 1e-05
        %v2196 = vadd.f32 %v2164, 1e-05
        %v2197 = vadd.f32 %v2165, 1e-05
        %v2198 = vadd.f32 %v2166, 1e-05
        %v2199 = vadd.f32 %v2167, 1e-05
        %v2200 = vadd.f32 %v2168, 1e-05
        %v2201 = vadd.f32 %v2169, 1e-05
        %v2202 = vadd.f32 %v2170, 1e-05
        %v2203 = vadd.f32 %v2171, 1e-05
        %v2204 = vadd.f32 %v2172, 1e-05
        %v2205 = vrsqrt.pop %v2173
        %v2206 = vrsqrt.pop %v2174
        %v2207 = vrsqrt.pop %v2175
        %v2208 = vrsqrt.pop %v2176
        %v2209 = vrsqrt.pop %v2177
        %v2210 = vrsqrt.pop %v2178
        %v2211 = vrsqrt.pop %v2179
        %v2212 = vrsqrt.pop %v2180
        %v2213 = vrsqrt.pop %v2181
        %v2214 = vrsqrt.pop %v2182
        %v2215 = vrsqrt.pop %v2183
        %v2216 = vrsqrt.pop %v2184
        %v2217 = vrsqrt.pop %v2185
        %v2218 = vrsqrt.pop %v2186
        %v2219 = vrsqrt.pop %v2187
        %v2220 = vrsqrt.pop %v2188
        %v2221 = vrsqrt.pop %v2189
        %v2222 = vrsqrt.pop %v2190
        %v2223 = vrsqrt.pop %v2191
        %v2224 = vrsqrt.pop %v2192
        %v2225 = vrsqrt.pop %v2193
        %v2226 = vrsqrt.pop %v2194
        %v2227 = vrsqrt.pop %v2195
        %v2228 = vrsqrt.pop %v2196
        %v2229 = vrsqrt.pop %v2197
        %v2230 = vrsqrt.pop %v2198
        %v2231 = vrsqrt.pop %v2199
        %v2232 = vrsqrt.pop %v2200
        %v2233 = vrsqrt.pop %v2201
        %v2234 = vrsqrt.pop %v2202
        %v2235 = vrsqrt.pop %v2203
        %v2236 = vrsqrt.pop %v2204
        %v2238 = vlaneseq
        %v2239 = vshrl.u32 %v2238, 7
        %v2240 = vsub.s32 0, %v2239
        %v2241 = vrot.slane %v508, %v2240
        %v2242 = vlaneseq
        %v2243 = vshrl.u32 %v2242, 7
        %v2244 = vsub.s32 1, %v2243
        %v2245 = vrot.slane %v508, %v2244
        %v2248 = vmul.f32 %v2205, %v2241
        %v2249 = vmul.f32 %v2205, %v2245
        %v2250 = vmul.f32 %v2206, %v2241
        %v2251 = vmul.f32 %v2206, %v2245
        %v2252 = vmul.f32 %v2207, %v2241
        %v2253 = vmul.f32 %v2207, %v2245
        %v2254 = vmul.f32 %v2208, %v2241
        %v2255 = vmul.f32 %v2208, %v2245
        %v2256 = vmul.f32 %v2209, %v2241
        %v2257 = vmul.f32 %v2209, %v2245
        %v2258 = vmul.f32 %v2210, %v2241
        %v2259 = vmul.f32 %v2210, %v2245
        %v2260 = vmul.f32 %v2211, %v2241
        %v2261 = vmul.f32 %v2211, %v2245
        %v2262 = vmul.f32 %v2212, %v2241
        %v2263 = vmul.f32 %v2212, %v2245
        %v2264 = vmul.f32 %v2213, %v2241
        %v2265 = vmul.f32 %v2213, %v2245
        %v2266 = vmul.f32 %v2214, %v2241
        %v2267 = vmul.f32 %v2214, %v2245
        %v2268 = vmul.f32 %v2215, %v2241
        %v2269 = vmul.f32 %v2215, %v2245
        %v2270 = vmul.f32 %v2216, %v2241
        %v2271 = vmul.f32 %v2216, %v2245
        %v2272 = vmul.f32 %v2217, %v2241
        %v2273 = vmul.f32 %v2217, %v2245
        %v2274 = vmul.f32 %v2218, %v2241
        %v2275 = vmul.f32 %v2218, %v2245
        %v2276 = vmul.f32 %v2219, %v2241
        %v2277 = vmul.f32 %v2219, %v2245
        %v2278 = vmul.f32 %v2220, %v2241
        %v2279 = vmul.f32 %v2220, %v2245
        %v2280 = vmul.f32 %v2221, %v2241
        %v2281 = vmul.f32 %v2221, %v2245
        %v2282 = vmul.f32 %v2222, %v2241
        %v2283 = vmul.f32 %v2222, %v2245
        %v2284 = vmul.f32 %v2223, %v2241
        %v2285 = vmul.f32 %v2223, %v2245
        %v2286 = vmul.f32 %v2224, %v2241
        %v2287 = vmul.f32 %v2224, %v2245
        %v2288 = vmul.f32 %v2225, %v2241
        %v2289 = vmul.f32 %v2225, %v2245
        %v2290 = vmul.f32 %v2226, %v2241
        %v2291 = vmul.f32 %v2226, %v2245
        %v2292 = vmul.f32 %v2227, %v2241
        %v2293 = vmul.f32 %v2227, %v2245
        %v2294 = vmul.f32 %v2228, %v2241
        %v2295 = vmul.f32 %v2228, %v2245
        %v2296 = vmul.f32 %v2229, %v2241
        %v2297 = vmul.f32 %v2229, %v2245
        %v2298 = vmul.f32 %v2230, %v2241
        %v2299 = vmul.f32 %v2230, %v2245
        %v2300 = vmul.f32 %v2231, %v2241
        %v2301 = vmul.f32 %v2231, %v2245
        %v2302 = vmul.f32 %v2232, %v2241
        %v2303 = vmul.f32 %v2232, %v2245
        %v2304 = vmul.f32 %v2233, %v2241
        %v2305 = vmul.f32 %v2233, %v2245
        %v2306 = vmul.f32 %v2234, %v2241
        %v2307 = vmul.f32 %v2234, %v2245
        %v2308 = vmul.f32 %v2235, %v2241
        %v2309 = vmul.f32 %v2235, %v2245
        %v2310 = vmul.f32 %v2236, %v2241
        %v2311 = vmul.f32 %v2236, %v2245
        %v2312 = vmul.f32 %v1917, %v2248
        %v2313 = vmul.f32 %v1918, %v2249
        %v2314 = vmul.f32 %v1919, %v2250
        %v2315 = vmul.f32 %v1920, %v2251
        %v2316 = vmul.f32 %v1921, %v2252
        %v2317 = vmul.f32 %v1922, %v2253
        %v2318 = vmul.f32 %v1923, %v2254
        %v2319 = vmul.f32 %v1924, %v2255
        %v2320 = vmul.f32 %v1925, %v2256
        %v2321 = vmul.f32 %v1926, %v2257
        %v2322 = vmul.f32 %v1927, %v2258
        %v2323 = vmul.f32 %v1928, %v2259
        %v2324 = vmul.f32 %v1929, %v2260
        %v2325 = vmul.f32 %v1930, %v2261
        %v2326 = vmul.f32 %v1931, %v2262
        %v2327 = vmul.f32 %v1932, %v2263
        %v2328 = vmul.f32 %v1933, %v2264
        %v2329 = vmul.f32 %v1934, %v2265
        %v2330 = vmul.f32 %v1935, %v2266
        %v2331 = vmul.f32 %v1936, %v2267
        %v2332 = vmul.f32 %v1937, %v2268
        %v2333 = vmul.f32 %v1938, %v2269
        %v2334 = vmul.f32 %v1939, %v2270
        %v2335 = vmul.f32 %v1940, %v2271
        %v2336 = vmul.f32 %v1941, %v2272
        %v2337 = vmul.f32 %v1942, %v2273
        %v2338 = vmul.f32 %v1943, %v2274
        %v2339 = vmul.f32 %v1944, %v2275
        %v2340 = vmul.f32 %v1945, %v2276
        %v2341 = vmul.f32 %v1946, %v2277
        %v2342 = vmul.f32 %v1947, %v2278
        %v2343 = vmul.f32 %v1948, %v2279
        %v2344 = vmul.f32 %v1949, %v2280
        %v2345 = vmul.f32 %v1950, %v2281
        %v2346 = vmul.f32 %v1951, %v2282
        %v2347 = vmul.f32 %v1952, %v2283
        %v2348 = vmul.f32 %v1953, %v2284
        %v2349 = vmul.f32 %v1954, %v2285
        %v2350 = vmul.f32 %v1955, %v2286
        %v2351 = vmul.f32 %v1956, %v2287
        %v2352 = vmul.f32 %v1957, %v2288
        %v2353 = vmul.f32 %v1958, %v2289
        %v2354 = vmul.f32 %v1959, %v2290
        %v2355 = vmul.f32 %v1960, %v2291
        %v2356 = vmul.f32 %v1961, %v2292
        %v2357 = vmul.f32 %v1962, %v2293
        %v2358 = vmul.f32 %v1963, %v2294
        %v2359 = vmul.f32 %v1964, %v2295
        %v2360 = vmul.f32 %v1965, %v2296
        %v2361 = vmul.f32 %v1966, %v2297
        %v2362 = vmul.f32 %v1967, %v2298
        %v2363 = vmul.f32 %v1968, %v2299
        %v2364 = vmul.f32 %v1969, %v2300
        %v2365 = vmul.f32 %v1970, %v2301
        %v2366 = vmul.f32 %v1971, %v2302
        %v2367 = vmul.f32 %v1972, %v2303
        %v2368 = vmul.f32 %v1973, %v2304
        %v2369 = vmul.f32 %v1974, %v2305
        %v2370 = vmul.f32 %v1975, %v2306
        %v2371 = vmul.f32 %v1976, %v2307
        %v2372 = vmul.f32 %v1977, %v2308
        %v2373 = vmul.f32 %v1978, %v2309
        %v2374 = vmul.f32 %v1979, %v2310
        %v2375 = vmul.f32 %v1980, %v2311
        %v2377 = vlaneseq
        %v2378 = vshrl.u32 %v2377, 7
        %v2379 = vsub.s32 0, %v2378
        %v2380 = vrot.slane %v509, %v2379
        %v2381 = vlaneseq
        %v2382 = vshrl.u32 %v2381, 7
        %v2383 = vsub.s32 1, %v2382
        %v2384 = vrot.slane %v509, %v2383
        %v2387 = vadd.f32 %v2312, %v2380
        %v2388 = vadd.f32 %v2313, %v2384
        %v2389 = vadd.f32 %v2314, %v2380
        %v2390 = vadd.f32 %v2315, %v2384
        %v2391 = vadd.f32 %v2316, %v2380
        %v2392 = vadd.f32 %v2317, %v2384
        %v2393 = vadd.f32 %v2318, %v2380
        %v2394 = vadd.f32 %v2319, %v2384
        %v2395 = vadd.f32 %v2320, %v2380
        %v2396 = vadd.f32 %v2321, %v2384
        %v2397 = vadd.f32 %v2322, %v2380
        %v2398 = vadd.f32 %v2323, %v2384
        %v2399 = vadd.f32 %v2324, %v2380
        %v2400 = vadd.f32 %v2325, %v2384
        %v2401 = vadd.f32 %v2326, %v2380
        %v2402 = vadd.f32 %v2327, %v2384
        %v2403 = vadd.f32 %v2328, %v2380
        %v2404 = vadd.f32 %v2329, %v2384
        %v2405 = vadd.f32 %v2330, %v2380
        %v2406 = vadd.f32 %v2331, %v2384
        %v2407 = vadd.f32 %v2332, %v2380
        %v2408 = vadd.f32 %v2333, %v2384
        %v2409 = vadd.f32 %v2334, %v2380
        %v2410 = vadd.f32 %v2335, %v2384
        %v2411 = vadd.f32 %v2336, %v2380
        %v2412 = vadd.f32 %v2337, %v2384
        %v2413 = vadd.f32 %v2338, %v2380
        %v2414 = vadd.f32 %v2339, %v2384
        %v2415 = vadd.f32 %v2340, %v2380
        %v2416 = vadd.f32 %v2341, %v2384
        %v2417 = vadd.f32 %v2342, %v2380
        %v2418 = vadd.f32 %v2343, %v2384
        %v2419 = vadd.f32 %v2344, %v2380
        %v2420 = vadd.f32 %v2345, %v2384
        %v2421 = vadd.f32 %v2346, %v2380
        %v2422 = vadd.f32 %v2347, %v2384
        %v2423 = vadd.f32 %v2348, %v2380
        %v2424 = vadd.f32 %v2349, %v2384
        %v2425 = vadd.f32 %v2350, %v2380
        %v2426 = vadd.f32 %v2351, %v2384
        %v2427 = vadd.f32 %v2352, %v2380
        %v2428 = vadd.f32 %v2353, %v2384
        %v2429 = vadd.f32 %v2354, %v2380
        %v2430 = vadd.f32 %v2355, %v2384
        %v2431 = vadd.f32 %v2356, %v2380
        %v2432 = vadd.f32 %v2357, %v2384
        %v2433 = vadd.f32 %v2358, %v2380
        %v2434 = vadd.f32 %v2359, %v2384
        %v2435 = vadd.f32 %v2360, %v2380
        %v2436 = vadd.f32 %v2361, %v2384
        %v2437 = vadd.f32 %v2362, %v2380
        %v2438 = vadd.f32 %v2363, %v2384
        %v2439 = vadd.f32 %v2364, %v2380
        %v2440 = vadd.f32 %v2365, %v2384
        %v2441 = vadd.f32 %v2366, %v2380
        %v2442 = vadd.f32 %v2367, %v2384
        %v2443 = vadd.f32 %v2368, %v2380
        %v2444 = vadd.f32 %v2369, %v2384
        %v2445 = vadd.f32 %v2370, %v2380
        %v2446 = vadd.f32 %v2371, %v2384
        %v2447 = vadd.f32 %v2372, %v2380
        %v2448 = vadd.f32 %v2373, %v2384
        %v2449 = vadd.f32 %v2374, %v2380
        %v2450 = vadd.f32 %v2375, %v2384
        %v2451 = vld [vmem:[%s6] sm:$0x3]
        %v2452 = vpack.c.bf16 %v2389, %v2387
        %v2453 = vpack.c.bf16 %v2390, %v2388
        %v2454 = vpack.c.bf16 %v2393, %v2391
        %v2455 = vpack.c.bf16 %v2394, %v2392
        %v2456 = vpack.c.bf16 %v2397, %v2395
        %v2457 = vpack.c.bf16 %v2398, %v2396
        %v2458 = vpack.c.bf16 %v2401, %v2399
        %v2459 = vpack.c.bf16 %v2402, %v2400
        %v2460 = vpack.c.bf16 %v2405, %v2403
        %v2461 = vpack.c.bf16 %v2406, %v2404
        %v2462 = vpack.c.bf16 %v2409, %v2407
        %v2463 = vpack.c.bf16 %v2410, %v2408
        %v2464 = vpack.c.bf16 %v2413, %v2411
        %v2465 = vpack.c.bf16 %v2414, %v2412
        %v2466 = vpack.c.bf16 %v2417, %v2415
        %v2467 = vpack.c.bf16 %v2418, %v2416
        %v2468 = vpack.c.bf16 %v2421, %v2419
        %v2469 = vpack.c.bf16 %v2422, %v2420
        %v2470 = vpack.c.bf16 %v2425, %v2423
        %v2471 = vpack.c.bf16 %v2426, %v2424
        %v2472 = vpack.c.bf16 %v2429, %v2427
        %v2473 = vpack.c.bf16 %v2430, %v2428
        %v2474 = vpack.c.bf16 %v2433, %v2431
        %v2475 = vpack.c.bf16 %v2434, %v2432
        %v2476 = vpack.c.bf16 %v2437, %v2435
        %v2477 = vpack.c.bf16 %v2438, %v2436
        %v2478 = vpack.c.bf16 %v2441, %v2439
        %v2479 = vpack.c.bf16 %v2442, %v2440
        %v2480 = vpack.c.bf16 %v2445, %v2443
        %v2481 = vpack.c.bf16 %v2446, %v2444
        %v2482 = vpack.c.bf16 %v2449, %v2447
        %v2483 = vpack.c.bf16 %v2450, %v2448
        %v2484 = vld [vmem:[#allocation10] sm:$0xff]
        %v2485 = vld [vmem:[#allocation10 + $0x8] sm:$0xff]
        %v2486 = vld [vmem:[#allocation10 + $0x10] sm:$0xff]
        %v2487 = vld [vmem:[#allocation10 + $0x18] sm:$0xff]
        %v2488 = vld [vmem:[#allocation10 + $0x20] sm:$0xff]
        %v2489 = vld [vmem:[#allocation10 + $0x28] sm:$0xff]
        %v2490 = vld [vmem:[#allocation10 + $0x30] sm:$0xff]
        %v2491 = vld [vmem:[#allocation10 + $0x38] sm:$0xff]
        %v2492 = vld [vmem:[#allocation10 + $0x40] sm:$0xff]
        %v2493 = vld [vmem:[#allocation10 + $0x48] sm:$0xff]
        %v2494 = vld [vmem:[#allocation10 + $0x50] sm:$0xff]
        %v2495 = vld [vmem:[#allocation10 + $0x58] sm:$0xff]
        %v2496 = vld [vmem:[#allocation10 + $0x60] sm:$0xff]
        %v2497 = vld [vmem:[#allocation10 + $0x68] sm:$0xff]
        %v2498 = vld [vmem:[#allocation10 + $0x70] sm:$0xff]
        %v2499 = vld [vmem:[#allocation10 + $0x78] sm:$0xff]
        %v2500 = vld [vmem:[#allocation10 + $0x80] sm:$0xff]
        %v2501 = vld [vmem:[#allocation10 + $0x88] sm:$0xff]
        %v2502 = vld [vmem:[#allocation10 + $0x90] sm:$0xff]
        %v2503 = vld [vmem:[#allocation10 + $0x98] sm:$0xff]
        %v2504 = vld [vmem:[#allocation10 + $0xa0] sm:$0xff]
        %v2505 = vld [vmem:[#allocation10 + $0xa8] sm:$0xff]
        %v2506 = vld [vmem:[#allocation10 + $0xb0] sm:$0xff]
        %v2507 = vld [vmem:[#allocation10 + $0xb8] sm:$0xff]
        %v2508 = vld [vmem:[#allocation10 + $0xc0] sm:$0xff]
        %v2509 = vld [vmem:[#allocation10 + $0xc8] sm:$0xff]
        %v2510 = vld [vmem:[#allocation10 + $0xd0] sm:$0xff]
        %v2511 = vld [vmem:[#allocation10 + $0xd8] sm:$0xff]
        %v2512 = vld [vmem:[#allocation10 + $0xe0] sm:$0xff]
        %v2513 = vld [vmem:[#allocation10 + $0xe8] sm:$0xff]
        %v2514 = vld [vmem:[#allocation10 + $0xf0] sm:$0xff]
        %v2515 = vld [vmem:[#allocation10 + $0xf8] sm:$0xff]
        %v2548 = vunpack.c.l.b16 %v2484
        %v2549 = vunpack.c.h.b16 %v2484
        %v2550 = vunpack.c.l.b16 %v2485
        %v2551 = vunpack.c.h.b16 %v2485
        %v2552 = vunpack.c.l.b16 %v2486
        %v2553 = vunpack.c.h.b16 %v2486
        %v2554 = vunpack.c.l.b16 %v2487
        %v2555 = vunpack.c.h.b16 %v2487
        %v2556 = vunpack.c.l.b16 %v2488
        %v2557 = vunpack.c.h.b16 %v2488
        %v2558 = vunpack.c.l.b16 %v2489
        %v2559 = vunpack.c.h.b16 %v2489
        %v2560 = vunpack.c.l.b16 %v2490
        %v2561 = vunpack.c.h.b16 %v2490
        %v2562 = vunpack.c.l.b16 %v2491
        %v2563 = vunpack.c.h.b16 %v2491
        %v2564 = vunpack.c.l.b16 %v2492
        %v2565 = vunpack.c.h.b16 %v2492
        %v2566 = vunpack.c.l.b16 %v2493
        %v2567 = vunpack.c.h.b16 %v2493
        %v2568 = vunpack.c.l.b16 %v2494
        %v2569 = vunpack.c.h.b16 %v2494
        %v2570 = vunpack.c.l.b16 %v2495
        %v2571 = vunpack.c.h.b16 %v2495
        %v2572 = vunpack.c.l.b16 %v2496
        %v2573 = vunpack.c.h.b16 %v2496
        %v2574 = vunpack.c.l.b16 %v2497
        %v2575 = vunpack.c.h.b16 %v2497
        %v2576 = vunpack.c.l.b16 %v2498
        %v2577 = vunpack.c.h.b16 %v2498
        %v2578 = vunpack.c.l.b16 %v2499
        %v2579 = vunpack.c.h.b16 %v2499
        %v2580 = vunpack.c.l.b16 %v2500
        %v2581 = vunpack.c.h.b16 %v2500
        %v2582 = vunpack.c.l.b16 %v2501
        %v2583 = vunpack.c.h.b16 %v2501
        %v2584 = vunpack.c.l.b16 %v2502
        %v2585 = vunpack.c.h.b16 %v2502
        %v2586 = vunpack.c.l.b16 %v2503
        %v2587 = vunpack.c.h.b16 %v2503
        %v2588 = vunpack.c.l.b16 %v2504
        %v2589 = vunpack.c.h.b16 %v2504
        %v2590 = vunpack.c.l.b16 %v2505
        %v2591 = vunpack.c.h.b16 %v2505
        %v2592 = vunpack.c.l.b16 %v2506
        %v2593 = vunpack.c.h.b16 %v2506
        %v2594 = vunpack.c.l.b16 %v2507
        %v2595 = vunpack.c.h.b16 %v2507
        %v2596 = vunpack.c.l.b16 %v2508
        %v2597 = vunpack.c.h.b16 %v2508
        %v2598 = vunpack.c.l.b16 %v2509
        %v2599 = vunpack.c.h.b16 %v2509
        %v2600 = vunpack.c.l.b16 %v2510
        %v2601 = vunpack.c.h.b16 %v2510
        %v2602 = vunpack.c.l.b16 %v2511
        %v2603 = vunpack.c.h.b16 %v2511
        %v2604 = vunpack.c.l.b16 %v2512
        %v2605 = vunpack.c.h.b16 %v2512
        %v2606 = vunpack.c.l.b16 %v2513
        %v2607 = vunpack.c.h.b16 %v2513
        %v2608 = vunpack.c.l.b16 %v2514
        %v2609 = vunpack.c.h.b16 %v2514
        %v2610 = vunpack.c.l.b16 %v2515
        %v2611 = vunpack.c.h.b16 %v2515
        %v2612 = vpack.c.b16 %v2550, %v2548
        %v2613 = vpack.c.b16 %v2551, %v2549
        %v2614 = vpack.c.b16 %v2554, %v2552
        %v2615 = vpack.c.b16 %v2555, %v2553
        %v2616 = vpack.c.b16 %v2558, %v2556
        %v2617 = vpack.c.b16 %v2559, %v2557
        %v2618 = vpack.c.b16 %v2562, %v2560
        %v2619 = vpack.c.b16 %v2563, %v2561
        %v2620 = vpack.c.b16 %v2566, %v2564
        %v2621 = vpack.c.b16 %v2567, %v2565
        %v2622 = vpack.c.b16 %v2570, %v2568
        %v2623 = vpack.c.b16 %v2571, %v2569
        %v2624 = vpack.c.b16 %v2574, %v2572
        %v2625 = vpack.c.b16 %v2575, %v2573
        %v2626 = vpack.c.b16 %v2578, %v2576
        %v2627 = vpack.c.b16 %v2579, %v2577
        %v2628 = vpack.c.b16 %v2582, %v2580
        %v2629 = vpack.c.b16 %v2583, %v2581
        %v2630 = vpack.c.b16 %v2586, %v2584
        %v2631 = vpack.c.b16 %v2587, %v2585
        %v2632 = vpack.c.b16 %v2590, %v2588
        %v2633 = vpack.c.b16 %v2591, %v2589
        %v2634 = vpack.c.b16 %v2594, %v2592
        %v2635 = vpack.c.b16 %v2595, %v2593
        %v2636 = vpack.c.b16 %v2598, %v2596
        %v2637 = vpack.c.b16 %v2599, %v2597
        %v2638 = vpack.c.b16 %v2602, %v2600
        %v2639 = vpack.c.b16 %v2603, %v2601
        %v2640 = vpack.c.b16 %v2606, %v2604
        %v2641 = vpack.c.b16 %v2607, %v2605
        %v2642 = vpack.c.b16 %v2610, %v2608
        %v2643 = vpack.c.b16 %v2611, %v2609
        %2676 = vmatprep.subr.bf16.mxu0 %v2613
        %2677 = vmatpush1.bf16.msra.mxu0 %v2612
        %2678 = vmatprep.subr.bf16.mxu0 %v2615
        %2679 = vmatpush1.bf16.msra.mxu0 %v2614
        %2680 = vmatprep.subr.bf16.mxu0 %v2617
        %2681 = vmatpush1.bf16.msra.mxu0 %v2616
        %2682 = vmatprep.subr.bf16.mxu0 %v2619
        %2683 = vmatpush1.bf16.msra.mxu0 %v2618
        %2684 = vmatprep.subr.bf16.mxu0 %v2621
        %2685 = vmatpush1.bf16.msra.mxu0 %v2620
        %2686 = vmatprep.subr.bf16.mxu0 %v2623
        %2687 = vmatpush1.bf16.msra.mxu0 %v2622
        %2688 = vmatprep.subr.bf16.mxu0 %v2625
        %2689 = vmatpush1.bf16.msra.mxu0 %v2624
        %2690 = vmatprep.subr.bf16.mxu0 %v2627
        %2691 = vmatpush1.bf16.msra.mxu0 %v2626
        %2692 = vmatprep.subr.bf16.mxu0 %v2629
        %2693 = vmatpush1.bf16.msra.mxu0 %v2628
        %2694 = vmatprep.subr.bf16.mxu0 %v2631
        %2695 = vmatpush1.bf16.msra.mxu0 %v2630
        %2696 = vmatprep.subr.bf16.mxu0 %v2633
        %2697 = vmatpush1.bf16.msra.mxu0 %v2632
        %2698 = vmatprep.subr.bf16.mxu0 %v2635
        %2699 = vmatpush1.bf16.msra.mxu0 %v2634
        %2700 = vmatprep.subr.bf16.mxu0 %v2637
        %2701 = vmatpush1.bf16.msra.mxu0 %v2636
        %2702 = vmatprep.subr.bf16.mxu0 %v2639
        %2703 = vmatpush1.bf16.msra.mxu0 %v2638
        %2704 = vmatprep.subr.bf16.mxu0 %v2641
        %2705 = vmatpush1.bf16.msra.mxu0 %v2640
        %2706 = vmatprep.subr.bf16.mxu0 %v2643
        %2707 = vmatpush1.bf16.msra.mxu0 %v2642
        %2708 = vmatprep.mubr.bf16.mxu0 %v2453
        %2709 = vmatmul.mubr.bf16.gmra.mrb[0].mxu0 %v2452
        %v2710 = vpop.f32.mrb[0].mxu0
        %v2711 = vadd.f32 0.0, %v2710
        %v2712 = vpop.f32.mrb[0].mxu0
        %v2713 = vadd.f32 0.0, %v2712
        %v2714 = vpop.f32.mrb[0].mxu0
        %v2715 = vadd.f32 0.0, %v2714
        %v2716 = vpop.f32.mrb[0].mxu0
        %v2717 = vadd.f32 0.0, %v2716
        %2718 = vmatprep.mubr.bf16.mxu0 %v2455
        %2719 = vmatmul.mubr.bf16.gmra.mrb[0].mxu0 %v2454
        %v2720 = vpop.f32.mrb[0].mxu0
        %v2721 = vadd.f32 0.0, %v2720
        %v2722 = vpop.f32.mrb[0].mxu0
        %v2723 = vadd.f32 0.0, %v2722
        %v2724 = vpop.f32.mrb[0].mxu0
        %v2725 = vadd.f32 0.0, %v2724
        %v2726 = vpop.f32.mrb[0].mxu0
        %v2727 = vadd.f32 0.0, %v2726
        %2728 = vmatprep.mubr.bf16.mxu0 %v2457
        %2729 = vmatmul.mubr.bf16.gmra.mrb[0].mxu0 %v2456
        %v2730 = vpop.f32.mrb[0].mxu0
        %v2731 = vadd.f32 0.0, %v2730
        %v2732 = vpop.f32.mrb[0].mxu0
        %v2733 = vadd.f32 0.0, %v2732
        %v2734 = vpop.f32.mrb[0].mxu0
        %v2735 = vadd.f32 0.0, %v2734
        %v2736 = vpop.f32.mrb[0].mxu0
        %v2737 = vadd.f32 0.0, %v2736
        %2738 = vmatprep.mubr.bf16.mxu0 %v2459
        %2739 = vmatmul.mubr.bf16.gmra.mrb[0].mxu0 %v2458
        %v2740 = vpop.f32.mrb[0].mxu0
        %v2741 = vadd.f32 0.0, %v2740
        %v2742 = vpop.f32.mrb[0].mxu0
        %v2743 = vadd.f32 0.0, %v2742
        %v2744 = vpop.f32.mrb[0].mxu0
        %v2745 = vadd.f32 0.0, %v2744
        %v2746 = vpop.f32.mrb[0].mxu0
        %v2747 = vadd.f32 0.0, %v2746
        %2748 = vmatprep.mubr.bf16.mxu0 %v2461
        %2749 = vmatmul.mubr.bf16.gmra.mrb[0].mxu0 %v2460
        %v2750 = vpop.f32.mrb[0].mxu0
        %v2751 = vadd.f32 0.0, %v2750
        %v2752 = vpop.f32.mrb[0].mxu0
        %v2753 = vadd.f32 0.0, %v2752
        %v2754 = vpop.f32.mrb[0].mxu0
        %v2755 = vadd.f32 0.0, %v2754
        %v2756 = vpop.f32.mrb[0].mxu0
        %v2757 = vadd.f32 0.0, %v2756
        %2758 = vmatprep.mubr.bf16.mxu0 %v2463
        %2759 = vmatmul.mubr.bf16.gmra.mrb[0].mxu0 %v2462
        %v2760 = vpop.f32.mrb[0].mxu0
        %v2761 = vadd.f32 0.0, %v2760
        %v2762 = vpop.f32.mrb[0].mxu0
        %v2763 = vadd.f32 0.0, %v2762
        %v2764 = vpop.f32.mrb[0].mxu0
        %v2765 = vadd.f32 0.0, %v2764
        %v2766 = vpop.f32.mrb[0].mxu0
        %v2767 = vadd.f32 0.0, %v2766
        %2768 = vmatprep.mubr.bf16.mxu0 %v2465
        %2769 = vmatmul.mubr.bf16.gmra.mrb[0].mxu0 %v2464
        %v2770 = vpop.f32.mrb[0].mxu0
        %v2771 = vadd.f32 0.0, %v2770
        %v2772 = vpop.f32.mrb[0].mxu0
        %v2773 = vadd.f32 0.0, %v2772
        %v2774 = vpop.f32.mrb[0].mxu0
        %v2775 = vadd.f32 0.0, %v2774
        %v2776 = vpop.f32.mrb[0].mxu0
        %v2777 = vadd.f32 0.0, %v2776
        %2778 = vmatprep.mubr.bf16.mxu0 %v2467
        %2779 = vmatmul.mubr.bf16.gmra.mrb[0].mxu0 %v2466
        %v2780 = vpop.f32.mrb[0].mxu0
        %v2781 = vadd.f32 0.0, %v2780
        %v2782 = vpop.f32.mrb[0].mxu0
        %v2783 = vadd.f32 0.0, %v2782
        %v2784 = vpop.f32.mrb[0].mxu0
        %v2785 = vadd.f32 0.0, %v2784
        %v2786 = vpop.f32.mrb[0].mxu0
        %v2787 = vadd.f32 0.0, %v2786
        %2788 = vmatprep.mubr.bf16.mxu0 %v2469
        %2789 = vmatmul.mubr.bf16.gmra.mrb[0].mxu0 %v2468
        %v2790 = vpop.f32.mrb[0].mxu0
        %v2791 = vadd.f32 0.0, %v2790
        %v2792 = vpop.f32.mrb[0].mxu0
        %v2793 = vadd.f32 0.0, %v2792
        %v2794 = vpop.f32.mrb[0].mxu0
        %v2795 = vadd.f32 0.0, %v2794
        %v2796 = vpop.f32.mrb[0].mxu0
        %v2797 = vadd.f32 0.0, %v2796
        %2798 = vmatprep.mubr.bf16.mxu0 %v2471
        %2799 = vmatmul.mubr.bf16.gmra.mrb[0].mxu0 %v2470
        %v2800 = vpop.f32.mrb[0].mxu0
        %v2801 = vadd.f32 0.0, %v2800
        %v2802 = vpop.f32.mrb[0].mxu0
        %v2803 = vadd.f32 0.0, %v2802
        %v2804 = vpop.f32.mrb[0].mxu0
        %v2805 = vadd.f32 0.0, %v2804
        %v2806 = vpop.f32.mrb[0].mxu0
        %v2807 = vadd.f32 0.0, %v2806
        %2808 = vmatprep.mubr.bf16.mxu0 %v2473
        %2809 = vmatmul.mubr.bf16.gmra.mrb[0].mxu0 %v2472
        %v2810 = vpop.f32.mrb[0].mxu0
        %v2811 = vadd.f32 0.0, %v2810
        %v2812 = vpop.f32.mrb[0].mxu0
        %v2813 = vadd.f32 0.0, %v2812
        %v2814 = vpop.f32.mrb[0].mxu0
        %v2815 = vadd.f32 0.0, %v2814
        %v2816 = vpop.f32.mrb[0].mxu0
        %v2817 = vadd.f32 0.0, %v2816
        %2818 = vmatprep.mubr.bf16.mxu0 %v2475
        %2819 = vmatmul.mubr.bf16.gmra.mrb[0].mxu0 %v2474
        %v2820 = vpop.f32.mrb[0].mxu0
        %v2821 = vadd.f32 0.0, %v2820
        %v2822 = vpop.f32.mrb[0].mxu0
        %v2823 = vadd.f32 0.0, %v2822
        %v2824 = vpop.f32.mrb[0].mxu0
        %v2825 = vadd.f32 0.0, %v2824
        %v2826 = vpop.f32.mrb[0].mxu0
        %v2827 = vadd.f32 0.0, %v2826
        %2828 = vmatprep.mubr.bf16.mxu0 %v2477
        %2829 = vmatmul.mubr.bf16.gmra.mrb[0].mxu0 %v2476
        %v2830 = vpop.f32.mrb[0].mxu0
        %v2831 = vadd.f32 0.0, %v2830
        %v2832 = vpop.f32.mrb[0].mxu0
        %v2833 = vadd.f32 0.0, %v2832
        %v2834 = vpop.f32.mrb[0].mxu0
        %v2835 = vadd.f32 0.0, %v2834
        %v2836 = vpop.f32.mrb[0].mxu0
        %v2837 = vadd.f32 0.0, %v2836
        %2838 = vmatprep.mubr.bf16.mxu0 %v2479
        %2839 = vmatmul.mubr.bf16.gmra.mrb[0].mxu0 %v2478
        %v2840 = vpop.f32.mrb[0].mxu0
        %v2841 = vadd.f32 0.0, %v2840
        %v2842 = vpop.f32.mrb[0].mxu0
        %v2843 = vadd.f32 0.0, %v2842
        %v2844 = vpop.f32.mrb[0].mxu0
        %v2845 = vadd.f32 0.0, %v2844
        %v2846 = vpop.f32.mrb[0].mxu0
        %v2847 = vadd.f32 0.0, %v2846
        %2848 = vmatprep.mubr.bf16.mxu0 %v2481
        %2849 = vmatmul.mubr.bf16.gmra.mrb[0].mxu0 %v2480
        %v2850 = vpop.f32.mrb[0].mxu0
        %v2851 = vadd.f32 0.0, %v2850
        %v2852 = vpop.f32.mrb[0].mxu0
        %v2853 = vadd.f32 0.0, %v2852
        %v2854 = vpop.f32.mrb[0].mxu0
        %v2855 = vadd.f32 0.0, %v2854
        %v2856 = vpop.f32.mrb[0].mxu0
        %v2857 = vadd.f32 0.0, %v2856
        %2858 = vmatprep.mubr.bf16.mxu0 %v2483
        %2859 = vmatmul.mubr.bf16.gmra.mrb[0].mxu0 %v2482
        %v2860 = vpop.f32.mrb[0].mxu0
        %v2861 = vadd.f32 0.0, %v2860
        %v2862 = vpop.f32.mrb[0].mxu0
        %v2863 = vadd.f32 0.0, %v2862
        %v2864 = vpop.f32.mrb[0].mxu0
        %v2865 = vadd.f32 0.0, %v2864
        %v2866 = vpop.f32.mrb[0].mxu0
        %v2867 = vadd.f32 0.0, %v2866
        %2868 = vdwg.mxu0
        %v2870 = vlaneseq
        %v2871 = vshrl.u32 %v2870, 7
        %v2872 = vsub.s32 0, %v2871
        %v2873 = vrot.slane %v2451, %v2872
        %v2874 = vlaneseq
        %v2875 = vshrl.u32 %v2874, 7
        %v2876 = vsub.s32 1, %v2875
        %v2877 = vrot.slane %v2451, %v2876
        %v2880 = vadd.f32 %v2873, %v2711
        %v2881 = vadd.f32 %v2877, %v2713
        %v2882 = vadd.f32 %v2873, %v2715
        %v2883 = vadd.f32 %v2877, %v2717
        %v2884 = vadd.f32 %v2873, %v2721
        %v2885 = vadd.f32 %v2877, %v2723
        %v2886 = vadd.f32 %v2873, %v2725
        %v2887 = vadd.f32 %v2877, %v2727
        %v2888 = vadd.f32 %v2873, %v2731
        %v2889 = vadd.f32 %v2877, %v2733
        %v2890 = vadd.f32 %v2873, %v2735
        %v2891 = vadd.f32 %v2877, %v2737
        %v2892 = vadd.f32 %v2873, %v2741
        %v2893 = vadd.f32 %v2877, %v2743
        %v2894 = vadd.f32 %v2873, %v2745
        %v2895 = vadd.f32 %v2877, %v2747
        %v2896 = vadd.f32 %v2873, %v2751
        %v2897 = vadd.f32 %v2877, %v2753
        %v2898 = vadd.f32 %v2873, %v2755
        %v2899 = vadd.f32 %v2877, %v2757
        %v2900 = vadd.f32 %v2873, %v2761
        %v2901 = vadd.f32 %v2877, %v2763
        %v2902 = vadd.f32 %v2873, %v2765
        %v2903 = vadd.f32 %v2877, %v2767
        %v2904 = vadd.f32 %v2873, %v2771
        %v2905 = vadd.f32 %v2877, %v2773
        %v2906 = vadd.f32 %v2873, %v2775
        %v2907 = vadd.f32 %v2877, %v2777
        %v2908 = vadd.f32 %v2873, %v2781
        %v2909 = vadd.f32 %v2877, %v2783
        %v2910 = vadd.f32 %v2873, %v2785
        %v2911 = vadd.f32 %v2877, %v2787
        %v2912 = vadd.f32 %v2873, %v2791
        %v2913 = vadd.f32 %v2877, %v2793
        %v2914 = vadd.f32 %v2873, %v2795
        %v2915 = vadd.f32 %v2877, %v2797
        %v2916 = vadd.f32 %v2873, %v2801
        %v2917 = vadd.f32 %v2877, %v2803
        %v2918 = vadd.f32 %v2873, %v2805
        %v2919 = vadd.f32 %v2877, %v2807
        %v2920 = vadd.f32 %v2873, %v2811
        %v2921 = vadd.f32 %v2877, %v2813
        %v2922 = vadd.f32 %v2873, %v2815
        %v2923 = vadd.f32 %v2877, %v2817
        %v2924 = vadd.f32 %v2873, %v2821
        %v2925 = vadd.f32 %v2877, %v2823
        %v2926 = vadd.f32 %v2873, %v2825
        %v2927 = vadd.f32 %v2877, %v2827
        %v2928 = vadd.f32 %v2873, %v2831
        %v2929 = vadd.f32 %v2877, %v2833
        %v2930 = vadd.f32 %v2873, %v2835
        %v2931 = vadd.f32 %v2877, %v2837
        %v2932 = vadd.f32 %v2873, %v2841
        %v2933 = vadd.f32 %v2877, %v2843
        %v2934 = vadd.f32 %v2873, %v2845
        %v2935 = vadd.f32 %v2877, %v2847
        %v2936 = vadd.f32 %v2873, %v2851
        %v2937 = vadd.f32 %v2877, %v2853
        %v2938 = vadd.f32 %v2873, %v2855
        %v2939 = vadd.f32 %v2877, %v2857
        %v2940 = vadd.f32 %v2873, %v2861
        %v2941 = vadd.f32 %v2877, %v2863
        %v2942 = vadd.f32 %v2873, %v2865
        %v2943 = vadd.f32 %v2877, %v2867
        %v2944 = vmul.f32 %v2880, 0.5
        %v2945 = vmul.f32 %v2881, 0.5
        %v2946 = vmul.f32 %v2882, 0.5
        %v2947 = vmul.f32 %v2883, 0.5
        %v2948 = vmul.f32 %v2884, 0.5
        %v2949 = vmul.f32 %v2885, 0.5
        %v2950 = vmul.f32 %v2886, 0.5
        %v2951 = vmul.f32 %v2887, 0.5
        %v2952 = vmul.f32 %v2888, 0.5
        %v2953 = vmul.f32 %v2889, 0.5
        %v2954 = vmul.f32 %v2890, 0.5
        %v2955 = vmul.f32 %v2891, 0.5
        %v2956 = vmul.f32 %v2892, 0.5
        %v2957 = vmul.f32 %v2893, 0.5
        %v2958 = vmul.f32 %v2894, 0.5
        %v2959 = vmul.f32 %v2895, 0.5
        %v2960 = vmul.f32 %v2896, 0.5
        %v2961 = vmul.f32 %v2897, 0.5
        %v2962 = vmul.f32 %v2898, 0.5
        %v2963 = vmul.f32 %v2899, 0.5
        %v2964 = vmul.f32 %v2900, 0.5
        %v2965 = vmul.f32 %v2901, 0.5
        %v2966 = vmul.f32 %v2902, 0.5
        %v2967 = vmul.f32 %v2903, 0.5
        %v2968 = vmul.f32 %v2904, 0.5
        %v2969 = vmul.f32 %v2905, 0.5
        %v2970 = vmul.f32 %v2906, 0.5
        %v2971 = vmul.f32 %v2907, 0.5
        %v2972 = vmul.f32 %v2908, 0.5
        %v2973 = vmul.f32 %v2909, 0.5
        %v2974 = vmul.f32 %v2910, 0.5
        %v2975 = vmul.f32 %v2911, 0.5
        %v2976 = vmul.f32 %v2912, 0.5
        %v2977 = vmul.f32 %v2913, 0.5
        %v2978 = vmul.f32 %v2914, 0.5
        %v2979 = vmul.f32 %v2915, 0.5
        %v2980 = vmul.f32 %v2916, 0.5
        %v2981 = vmul.f32 %v2917, 0.5
        %v2982 = vmul.f32 %v2918, 0.5
        %v2983 = vmul.f32 %v2919, 0.5
        %v2984 = vmul.f32 %v2920, 0.5
        %v2985 = vmul.f32 %v2921, 0.5
        %v2986 = vmul.f32 %v2922, 0.5
        %v2987 = vmul.f32 %v2923, 0.5
        %v2988 = vmul.f32 %v2924, 0.5
        %v2989 = vmul.f32 %v2925, 0.5
        %v2990 = vmul.f32 %v2926, 0.5
        %v2991 = vmul.f32 %v2927, 0.5
        %v2992 = vmul.f32 %v2928, 0.5
        %v2993 = vmul.f32 %v2929, 0.5
        %v2994 = vmul.f32 %v2930, 0.5
        %v2995 = vmul.f32 %v2931, 0.5
        %v2996 = vmul.f32 %v2932, 0.5
        %v2997 = vmul.f32 %v2933, 0.5
        %v2998 = vmul.f32 %v2934, 0.5
        %v2999 = vmul.f32 %v2935, 0.5
        %v3000 = vmul.f32 %v2936, 0.5
        %v3001 = vmul.f32 %v2937, 0.5
        %v3002 = vmul.f32 %v2938, 0.5
        %v3003 = vmul.f32 %v2939, 0.5
        %v3004 = vmul.f32 %v2940, 0.5
        %v3005 = vmul.f32 %v2941, 0.5
        %v3006 = vmul.f32 %v2942, 0.5
        %v3007 = vmul.f32 %v2943, 0.5
        %v3008 = vmul.f32 %v2880, 0.70710677
        %v3009 = vmul.f32 %v2881, 0.70710677
        %v3010 = vmul.f32 %v2882, 0.70710677
        %v3011 = vmul.f32 %v2883, 0.70710677
        %v3012 = vmul.f32 %v2884, 0.70710677
        %v3013 = vmul.f32 %v2885, 0.70710677
        %v3014 = vmul.f32 %v2886, 0.70710677
        %v3015 = vmul.f32 %v2887, 0.70710677
        %v3016 = vmul.f32 %v2888, 0.70710677
        %v3017 = vmul.f32 %v2889, 0.70710677
        %v3018 = vmul.f32 %v2890, 0.70710677
        %v3019 = vmul.f32 %v2891, 0.70710677
        %v3020 = vmul.f32 %v2892, 0.70710677
        %v3021 = vmul.f32 %v2893, 0.70710677
        %v3022 = vmul.f32 %v2894, 0.70710677
        %v3023 = vmul.f32 %v2895, 0.70710677
        %v3024 = vmul.f32 %v2896, 0.70710677
        %v3025 = vmul.f32 %v2897, 0.70710677
        %v3026 = vmul.f32 %v2898, 0.70710677
        %v3027 = vmul.f32 %v2899, 0.70710677
        %v3028 = vmul.f32 %v2900, 0.70710677
        %v3029 = vmul.f32 %v2901, 0.70710677
        %v3030 = vmul.f32 %v2902, 0.70710677
        %v3031 = vmul.f32 %v2903, 0.70710677
        %v3032 = vmul.f32 %v2904, 0.70710677
        %v3033 = vmul.f32 %v2905, 0.70710677
        %v3034 = vmul.f32 %v2906, 0.70710677
        %v3035 = vmul.f32 %v2907, 0.70710677
        %v3036 = vmul.f32 %v2908, 0.70710677
        %v3037 = vmul.f32 %v2909, 0.70710677
        %v3038 = vmul.f32 %v2910, 0.70710677
        %v3039 = vmul.f32 %v2911, 0.70710677
        %v3040 = vmul.f32 %v2912, 0.70710677
        %v3041 = vmul.f32 %v2913, 0.70710677
        %v3042 = vmul.f32 %v2914, 0.70710677
        %v3043 = vmul.f32 %v2915, 0.70710677
        %v3044 = vmul.f32 %v2916, 0.70710677
        %v3045 = vmul.f32 %v2917, 0.70710677
        %v3046 = vmul.f32 %v2918, 0.70710677
        %v3047 = vmul.f32 %v2919, 0.70710677
        %v3048 = vmul.f32 %v2920, 0.70710677
        %v3049 = vmul.f32 %v2921, 0.70710677
        %v3050 = vmul.f32 %v2922, 0.70710677
        %v3051 = vmul.f32 %v2923, 0.70710677
        %v3052 = vmul.f32 %v2924, 0.70710677
        %v3053 = vmul.f32 %v2925, 0.70710677
        %v3054 = vmul.f32 %v2926, 0.70710677
        %v3055 = vmul.f32 %v2927, 0.70710677
        %v3056 = vmul.f32 %v2928, 0.70710677
        %v3057 = vmul.f32 %v2929, 0.70710677
        %v3058 = vmul.f32 %v2930, 0.70710677
        %v3059 = vmul.f32 %v2931, 0.70710677
        %v3060 = vmul.f32 %v2932, 0.70710677
        %v3061 = vmul.f32 %v2933, 0.70710677
        %v3062 = vmul.f32 %v2934, 0.70710677
        %v3063 = vmul.f32 %v2935, 0.70710677
        %v3064 = vmul.f32 %v2936, 0.70710677
        %v3065 = vmul.f32 %v2937, 0.70710677
        %v3066 = vmul.f32 %v2938, 0.70710677
        %v3067 = vmul.f32 %v2939, 0.70710677
        %v3068 = vmul.f32 %v2940, 0.70710677
        %v3069 = vmul.f32 %v2941, 0.70710677
        %v3070 = vmul.f32 %v2942, 0.70710677
        %v3071 = vmul.f32 %v2943, 0.70710677
        %v3072 = verf.f32.pop %v3008
        %v3073 = verf.f32.pop %v3009
        %v3074 = verf.f32.pop %v3010
        %v3075 = verf.f32.pop %v3011
        %v3076 = verf.f32.pop %v3012
        %v3077 = verf.f32.pop %v3013
        %v3078 = verf.f32.pop %v3014
        %v3079 = verf.f32.pop %v3015
        %v3080 = verf.f32.pop %v3016
        %v3081 = verf.f32.pop %v3017
        %v3082 = verf.f32.pop %v3018
        %v3083 = verf.f32.pop %v3019
        %v3084 = verf.f32.pop %v3020
        %v3085 = verf.f32.pop %v3021
        %v3086 = verf.f32.pop %v3022
        %v3087 = verf.f32.pop %v3023
        %v3088 = verf.f32.pop %v3024
        %v3089 = verf.f32.pop %v3025
        %v3090 = verf.f32.pop %v3026
        %v3091 = verf.f32.pop %v3027
        %v3092 = verf.f32.pop %v3028
        %v3093 = verf.f32.pop %v3029
        %v3094 = verf.f32.pop %v3030
        %v3095 = verf.f32.pop %v3031
        %v3096 = verf.f32.pop %v3032
        %v3097 = verf.f32.pop %v3033
        %v3098 = verf.f32.pop %v3034
        %v3099 = verf.f32.pop %v3035
        %v3100 = verf.f32.pop %v3036
        %v3101 = verf.f32.pop %v3037
        %v3102 = verf.f32.pop %v3038
        %v3103 = verf.f32.pop %v3039
        %v3104 = verf.f32.pop %v3040
        %v3105 = verf.f32.pop %v3041
        %v3106 = verf.f32.pop %v3042
        %v3107 = verf.f32.pop %v3043
        %v3108 = verf.f32.pop %v3044
        %v3109 = verf.f32.pop %v3045
        %v3110 = verf.f32.pop %v3046
        %v3111 = verf.f32.pop %v3047
        %v3112 = verf.f32.pop %v3048
        %v3113 = verf.f32.pop %v3049
        %v3114 = verf.f32.pop %v3050
        %v3115 = verf.f32.pop %v3051
        %v3116 = verf.f32.pop %v3052
        %v3117 = verf.f32.pop %v3053
        %v3118 = verf.f32.pop %v3054
        %v3119 = verf.f32.pop %v3055
        %v3120 = verf.f32.pop %v3056
        %v3121 = verf.f32.pop %v3057
        %v3122 = verf.f32.pop %v3058
        %v3123 = verf.f32.pop %v3059
        %v3124 = verf.f32.pop %v3060
        %v3125 = verf.f32.pop %v3061
        %v3126 = verf.f32.pop %v3062
        %v3127 = verf.f32.pop %v3063
        %v3128 = verf.f32.pop %v3064
        %v3129 = verf.f32.pop %v3065
        %v3130 = verf.f32.pop %v3066
        %v3131 = verf.f32.pop %v3067
        %v3132 = verf.f32.pop %v3068
        %v3133 = verf.f32.pop %v3069
        %v3134 = verf.f32.pop %v3070
        %v3135 = verf.f32.pop %v3071
        %v3136 = vadd.f32 %v3072, 1.0
        %v3137 = vadd.f32 %v3073, 1.0
        %v3138 = vadd.f32 %v3074, 1.0
        %v3139 = vadd.f32 %v3075, 1.0
        %v3140 = vadd.f32 %v3076, 1.0
        %v3141 = vadd.f32 %v3077, 1.0
        %v3142 = vadd.f32 %v3078, 1.0
        %v3143 = vadd.f32 %v3079, 1.0
        %v3144 = vadd.f32 %v3080, 1.0
        %v3145 = vadd.f32 %v3081, 1.0
        %v3146 = vadd.f32 %v3082, 1.0
        %v3147 = vadd.f32 %v3083, 1.0
        %v3148 = vadd.f32 %v3084, 1.0
        %v3149 = vadd.f32 %v3085, 1.0
        %v3150 = vadd.f32 %v3086, 1.0
        %v3151 = vadd.f32 %v3087, 1.0
        %v3152 = vadd.f32 %v3088, 1.0
        %v3153 = vadd.f32 %v3089, 1.0
        %v3154 = vadd.f32 %v3090, 1.0
        %v3155 = vadd.f32 %v3091, 1.0
        %v3156 = vadd.f32 %v3092, 1.0
        %v3157 = vadd.f32 %v3093, 1.0
        %v3158 = vadd.f32 %v3094, 1.0
        %v3159 = vadd.f32 %v3095, 1.0
        %v3160 = vadd.f32 %v3096, 1.0
        %v3161 = vadd.f32 %v3097, 1.0
        %v3162 = vadd.f32 %v3098, 1.0
        %v3163 = vadd.f32 %v3099, 1.0
        %v3164 = vadd.f32 %v3100, 1.0
        %v3165 = vadd.f32 %v3101, 1.0
        %v3166 = vadd.f32 %v3102, 1.0
        %v3167 = vadd.f32 %v3103, 1.0
        %v3168 = vadd.f32 %v3104, 1.0
        %v3169 = vadd.f32 %v3105, 1.0
        %v3170 = vadd.f32 %v3106, 1.0
        %v3171 = vadd.f32 %v3107, 1.0
        %v3172 = vadd.f32 %v3108, 1.0
        %v3173 = vadd.f32 %v3109, 1.0
        %v3174 = vadd.f32 %v3110, 1.0
        %v3175 = vadd.f32 %v3111, 1.0
        %v3176 = vadd.f32 %v3112, 1.0
        %v3177 = vadd.f32 %v3113, 1.0
        %v3178 = vadd.f32 %v3114, 1.0
        %v3179 = vadd.f32 %v3115, 1.0
        %v3180 = vadd.f32 %v3116, 1.0
        %v3181 = vadd.f32 %v3117, 1.0
        %v3182 = vadd.f32 %v3118, 1.0
        %v3183 = vadd.f32 %v3119, 1.0
        %v3184 = vadd.f32 %v3120, 1.0
        %v3185 = vadd.f32 %v3121, 1.0
        %v3186 = vadd.f32 %v3122, 1.0
        %v3187 = vadd.f32 %v3123, 1.0
        %v3188 = vadd.f32 %v3124, 1.0
        %v3189 = vadd.f32 %v3125, 1.0
        %v3190 = vadd.f32 %v3126, 1.0
        %v3191 = vadd.f32 %v3127, 1.0
        %v3192 = vadd.f32 %v3128, 1.0
        %v3193 = vadd.f32 %v3129, 1.0
        %v3194 = vadd.f32 %v3130, 1.0
        %v3195 = vadd.f32 %v3131, 1.0
        %v3196 = vadd.f32 %v3132, 1.0
        %v3197 = vadd.f32 %v3133, 1.0
        %v3198 = vadd.f32 %v3134, 1.0
        %v3199 = vadd.f32 %v3135, 1.0
        %v3200 = vmul.f32 %v2944, %v3136
        %v3201 = vmul.f32 %v2945, %v3137
        %v3202 = vmul.f32 %v2946, %v3138
        %v3203 = vmul.f32 %v2947, %v3139
        %v3204 = vmul.f32 %v2948, %v3140
        %v3205 = vmul.f32 %v2949, %v3141
        %v3206 = vmul.f32 %v2950, %v3142
        %v3207 = vmul.f32 %v2951, %v3143
        %v3208 = vmul.f32 %v2952, %v3144
        %v3209 = vmul.f32 %v2953, %v3145
        %v3210 = vmul.f32 %v2954, %v3146
        %v3211 = vmul.f32 %v2955, %v3147
        %v3212 = vmul.f32 %v2956, %v3148
        %v3213 = vmul.f32 %v2957, %v3149
        %v3214 = vmul.f32 %v2958, %v3150
        %v3215 = vmul.f32 %v2959, %v3151
        %v3216 = vmul.f32 %v2960, %v3152
        %v3217 = vmul.f32 %v2961, %v3153
        %v3218 = vmul.f32 %v2962, %v3154
        %v3219 = vmul.f32 %v2963, %v3155
        %v3220 = vmul.f32 %v2964, %v3156
        %v3221 = vmul.f32 %v2965, %v3157
        %v3222 = vmul.f32 %v2966, %v3158
        %v3223 = vmul.f32 %v2967, %v3159
        %v3224 = vmul.f32 %v2968, %v3160
        %v3225 = vmul.f32 %v2969, %v3161
        %v3226 = vmul.f32 %v2970, %v3162
        %v3227 = vmul.f32 %v2971, %v3163
        %v3228 = vmul.f32 %v2972, %v3164
        %v3229 = vmul.f32 %v2973, %v3165
        %v3230 = vmul.f32 %v2974, %v3166
        %v3231 = vmul.f32 %v2975, %v3167
        %v3232 = vmul.f32 %v2976, %v3168
        %v3233 = vmul.f32 %v2977, %v3169
        %v3234 = vmul.f32 %v2978, %v3170
        %v3235 = vmul.f32 %v2979, %v3171
        %v3236 = vmul.f32 %v2980, %v3172
        %v3237 = vmul.f32 %v2981, %v3173
        %v3238 = vmul.f32 %v2982, %v3174
        %v3239 = vmul.f32 %v2983, %v3175
        %v3240 = vmul.f32 %v2984, %v3176
        %v3241 = vmul.f32 %v2985, %v3177
        %v3242 = vmul.f32 %v2986, %v3178
        %v3243 = vmul.f32 %v2987, %v3179
        %v3244 = vmul.f32 %v2988, %v3180
        %v3245 = vmul.f32 %v2989, %v3181
        %v3246 = vmul.f32 %v2990, %v3182
        %v3247 = vmul.f32 %v2991, %v3183
        %v3248 = vmul.f32 %v2992, %v3184
        %v3249 = vmul.f32 %v2993, %v3185
        %v3250 = vmul.f32 %v2994, %v3186
        %v3251 = vmul.f32 %v2995, %v3187
        %v3252 = vmul.f32 %v2996, %v3188
        %v3253 = vmul.f32 %v2997, %v3189
        %v3254 = vmul.f32 %v2998, %v3190
        %v3255 = vmul.f32 %v2999, %v3191
        %v3256 = vmul.f32 %v3000, %v3192
        %v3257 = vmul.f32 %v3001, %v3193
        %v3258 = vmul.f32 %v3002, %v3194
        %v3259 = vmul.f32 %v3003, %v3195
        %v3260 = vmul.f32 %v3004, %v3196
        %v3261 = vmul.f32 %v3005, %v3197
        %v3262 = vmul.f32 %v3006, %v3198
        %v3263 = vmul.f32 %v3007, %v3199
        %v3264 = vadd.f32 %v3200, %v3201
        %3265 = vadd.xlane.f32.xlu0 %v3264
        %v3266 = vpop.xlane.xlu0 %3265
        %v3267 = vadd.f32 %v3202, %v3203
        %3268 = vadd.xlane.f32.xlu0 %v3267
        %v3269 = vpop.xlane.xlu0 %3268
        %v3270 = vadd.f32 %v3204, %v3205
        %3271 = vadd.xlane.f32.xlu0 %v3270
        %v3272 = vpop.xlane.xlu0 %3271
        %v3273 = vadd.f32 %v3206, %v3207
        %3274 = vadd.xlane.f32.xlu0 %v3273
        %v3275 = vpop.xlane.xlu0 %3274
        %v3276 = vadd.f32 %v3208, %v3209
        %3277 = vadd.xlane.f32.xlu0 %v3276
        %v3278 = vpop.xlane.xlu0 %3277
        %v3279 = vadd.f32 %v3210, %v3211
        %3280 = vadd.xlane.f32.xlu0 %v3279
        %v3281 = vpop.xlane.xlu0 %3280
        %v3282 = vadd.f32 %v3212, %v3213
        %3283 = vadd.xlane.f32.xlu0 %v3282
        %v3284 = vpop.xlane.xlu0 %3283
        %v3285 = vadd.f32 %v3214, %v3215
        %3286 = vadd.xlane.f32.xlu0 %v3285
        %v3287 = vpop.xlane.xlu0 %3286
        %v3288 = vadd.f32 %v3216, %v3217
        %3289 = vadd.xlane.f32.xlu0 %v3288
        %v3290 = vpop.xlane.xlu0 %3289
        %v3291 = vadd.f32 %v3218, %v3219
        %3292 = vadd.xlane.f32.xlu0 %v3291
        %v3293 = vpop.xlane.xlu0 %3292
        %v3294 = vadd.f32 %v3220, %v3221
        %3295 = vadd.xlane.f32.xlu0 %v3294
        %v3296 = vpop.xlane.xlu0 %3295
        %v3297 = vadd.f32 %v3222, %v3223
        %3298 = vadd.xlane.f32.xlu0 %v3297
        %v3299 = vpop.xlane.xlu0 %3298
        %v3300 = vadd.f32 %v3224, %v3225
        %3301 = vadd.xlane.f32.xlu0 %v3300
        %v3302 = vpop.xlane.xlu0 %3301
        %v3303 = vadd.f32 %v3226, %v3227
        %3304 = vadd.xlane.f32.xlu0 %v3303
        %v3305 = vpop.xlane.xlu0 %3304
        %v3306 = vadd.f32 %v3228, %v3229
        %3307 = vadd.xlane.f32.xlu0 %v3306
        %v3308 = vpop.xlane.xlu0 %3307
        %v3309 = vadd.f32 %v3230, %v3231
        %3310 = vadd.xlane.f32.xlu0 %v3309
        %v3311 = vpop.xlane.xlu0 %3310
        %v3312 = vadd.f32 %v3232, %v3233
        %3313 = vadd.xlane.f32.xlu0 %v3312
        %v3314 = vpop.xlane.xlu0 %3313
        %v3315 = vadd.f32 %v3234, %v3235
        %3316 = vadd.xlane.f32.xlu0 %v3315
        %v3317 = vpop.xlane.xlu0 %3316
        %v3318 = vadd.f32 %v3236, %v3237
        %3319 = vadd.xlane.f32.xlu0 %v3318
        %v3320 = vpop.xlane.xlu0 %3319
        %v3321 = vadd.f32 %v3238, %v3239
        %3322 = vadd.xlane.f32.xlu0 %v3321
        %v3323 = vpop.xlane.xlu0 %3322
        %v3324 = vadd.f32 %v3240, %v3241
        %3325 = vadd.xlane.f32.xlu0 %v3324
        %v3326 = vpop.xlane.xlu0 %3325
        %v3327 = vadd.f32 %v3242, %v3243
        %3328 = vadd.xlane.f32.xlu0 %v3327
        %v3329 = vpop.xlane.xlu0 %3328
        %v3330 = vadd.f32 %v3244, %v3245
        %3331 = vadd.xlane.f32.xlu0 %v3330
        %v3332 = vpop.xlane.xlu0 %3331
        %v3333 = vadd.f32 %v3246, %v3247
        %3334 = vadd.xlane.f32.xlu0 %v3333
        %v3335 = vpop.xlane.xlu0 %3334
        %v3336 = vadd.f32 %v3248, %v3249
        %3337 = vadd.xlane.f32.xlu0 %v3336
        %v3338 = vpop.xlane.xlu0 %3337
        %v3339 = vadd.f32 %v3250, %v3251
        %3340 = vadd.xlane.f32.xlu0 %v3339
        %v3341 = vpop.xlane.xlu0 %3340
        %v3342 = vadd.f32 %v3252, %v3253
        %3343 = vadd.xlane.f32.xlu0 %v3342
        %v3344 = vpop.xlane.xlu0 %3343
        %v3345 = vadd.f32 %v3254, %v3255
        %3346 = vadd.xlane.f32.xlu0 %v3345
        %v3347 = vpop.xlane.xlu0 %3346
        %v3348 = vadd.f32 %v3256, %v3257
        %3349 = vadd.xlane.f32.xlu0 %v3348
        %v3350 = vpop.xlane.xlu0 %3349
        %v3351 = vadd.f32 %v3258, %v3259
        %3352 = vadd.xlane.f32.xlu0 %v3351
        %v3353 = vpop.xlane.xlu0 %3352
        %v3354 = vadd.f32 %v3260, %v3261
        %3355 = vadd.xlane.f32.xlu0 %v3354
        %v3356 = vpop.xlane.xlu0 %3355
        %v3357 = vadd.f32 %v3262, %v3263
        %3358 = vadd.xlane.f32.xlu0 %v3357
        %v3359 = vpop.xlane.xlu0 %3358
        %v3360 = vmul.f32 %v3266, %v1884
        %v3361 = vmul.f32 %v3269, %v1884
        %v3362 = vmul.f32 %v3272, %v1884
        %v3363 = vmul.f32 %v3275, %v1884
        %v3364 = vmul.f32 %v3278, %v1884
        %v3365 = vmul.f32 %v3281, %v1884
        %v3366 = vmul.f32 %v3284, %v1884
        %v3367 = vmul.f32 %v3287, %v1884
        %v3368 = vmul.f32 %v3290, %v1884
        %v3369 = vmul.f32 %v3293, %v1884
        %v3370 = vmul.f32 %v3296, %v1884
        %v3371 = vmul.f32 %v3299, %v1884
        %v3372 = vmul.f32 %v3302, %v1884
        %v3373 = vmul.f32 %v3305, %v1884
        %v3374 = vmul.f32 %v3308, %v1884
        %v3375 = vmul.f32 %v3311, %v1884
        %v3376 = vmul.f32 %v3314, %v1884
        %v3377 = vmul.f32 %v3317, %v1884
        %v3378 = vmul.f32 %v3320, %v1884
        %v3379 = vmul.f32 %v3323, %v1884
        %v3380 = vmul.f32 %v3326, %v1884
        %v3381 = vmul.f32 %v3329, %v1884
        %v3382 = vmul.f32 %v3332, %v1884
        %v3383 = vmul.f32 %v3335, %v1884
        %v3384 = vmul.f32 %v3338, %v1884
        %v3385 = vmul.f32 %v3341, %v1884
        %v3386 = vmul.f32 %v3344, %v1884
        %v3387 = vmul.f32 %v3347, %v1884
        %v3388 = vmul.f32 %v3350, %v1884
        %v3389 = vmul.f32 %v3353, %v1884
        %v3390 = vmul.f32 %v3356, %v1884
        %v3391 = vmul.f32 %v3359, %v1884
        %v3392 = vsub.f32 %v3200, %v3360
        %v3393 = vsub.f32 %v3201, %v3360
        %v3394 = vsub.f32 %v3202, %v3361
        %v3395 = vsub.f32 %v3203, %v3361
        %v3396 = vsub.f32 %v3204, %v3362
        %v3397 = vsub.f32 %v3205, %v3362
        %v3398 = vsub.f32 %v3206, %v3363
        %v3399 = vsub.f32 %v3207, %v3363
        %v3400 = vsub.f32 %v3208, %v3364
        %v3401 = vsub.f32 %v3209, %v3364
        %v3402 = vsub.f32 %v3210, %v3365
        %v3403 = vsub.f32 %v3211, %v3365
        %v3404 = vsub.f32 %v3212, %v3366
        %v3405 = vsub.f32 %v3213, %v3366
        %v3406 = vsub.f32 %v3214, %v3367
        %v3407 = vsub.f32 %v3215, %v3367
        %v3408 = vsub.f32 %v3216, %v3368
        %v3409 = vsub.f32 %v3217, %v3368
        %v3410 = vsub.f32 %v3218, %v3369
        %v3411 = vsub.f32 %v3219, %v3369
        %v3412 = vsub.f32 %v3220, %v3370
        %v3413 = vsub.f32 %v3221, %v3370
        %v3414 = vsub.f32 %v3222, %v3371
        %v3415 = vsub.f32 %v3223, %v3371
        %v3416 = vsub.f32 %v3224, %v3372
        %v3417 = vsub.f32 %v3225, %v3372
        %v3418 = vsub.f32 %v3226, %v3373
        %v3419 = vsub.f32 %v3227, %v3373
        %v3420 = vsub.f32 %v3228, %v3374
        %v3421 = vsub.f32 %v3229, %v3374
        %v3422 = vsub.f32 %v3230, %v3375
        %v3423 = vsub.f32 %v3231, %v3375
        %v3424 = vsub.f32 %v3232, %v3376
        %v3425 = vsub.f32 %v3233, %v3376
        %v3426 = vsub.f32 %v3234, %v3377
        %v3427 = vsub.f32 %v3235, %v3377
        %v3428 = vsub.f32 %v3236, %v3378
        %v3429 = vsub.f32 %v3237, %v3378
        %v3430 = vsub.f32 %v3238, %v3379
        %v3431 = vsub.f32 %v3239, %v3379
        %v3432 = vsub.f32 %v3240, %v3380
        %v3433 = vsub.f32 %v3241, %v3380
        %v3434 = vsub.f32 %v3242, %v3381
        %v3435 = vsub.f32 %v3243, %v3381
        %v3436 = vsub.f32 %v3244, %v3382
        %v3437 = vsub.f32 %v3245, %v3382
        %v3438 = vsub.f32 %v3246, %v3383
        %v3439 = vsub.f32 %v3247, %v3383
        %v3440 = vsub.f32 %v3248, %v3384
        %v3441 = vsub.f32 %v3249, %v3384
        %v3442 = vsub.f32 %v3250, %v3385
        %v3443 = vsub.f32 %v3251, %v3385
        %v3444 = vsub.f32 %v3252, %v3386
        %v3445 = vsub.f32 %v3253, %v3386
        %v3446 = vsub.f32 %v3254, %v3387
        %v3447 = vsub.f32 %v3255, %v3387
        %v3448 = vsub.f32 %v3256, %v3388
        %v3449 = vsub.f32 %v3257, %v3388
        %v3450 = vsub.f32 %v3258, %v3389
        %v3451 = vsub.f32 %v3259, %v3389
        %v3452 = vsub.f32 %v3260, %v3390
        %v3453 = vsub.f32 %v3261, %v3390
        %v3454 = vsub.f32 %v3262, %v3391
        %v3455 = vsub.f32 %v3263, %v3391
        %v3456 = vmul.f32 %v3392, %v3392
        %v3457 = vmul.f32 %v3393, %v3393
        %v3458 = vmul.f32 %v3394, %v3394
        %v3459 = vmul.f32 %v3395, %v3395
        %v3460 = vmul.f32 %v3396, %v3396
        %v3461 = vmul.f32 %v3397, %v3397
        %v3462 = vmul.f32 %v3398, %v3398
        %v3463 = vmul.f32 %v3399, %v3399
        %v3464 = vmul.f32 %v3400, %v3400
        %v3465 = vmul.f32 %v3401, %v3401
        %v3466 = vmul.f32 %v3402, %v3402
        %v3467 = vmul.f32 %v3403, %v3403
        %v3468 = vmul.f32 %v3404, %v3404
        %v3469 = vmul.f32 %v3405, %v3405
        %v3470 = vmul.f32 %v3406, %v3406
        %v3471 = vmul.f32 %v3407, %v3407
        %v3472 = vmul.f32 %v3408, %v3408
        %v3473 = vmul.f32 %v3409, %v3409
        %v3474 = vmul.f32 %v3410, %v3410
        %v3475 = vmul.f32 %v3411, %v3411
        %v3476 = vmul.f32 %v3412, %v3412
        %v3477 = vmul.f32 %v3413, %v3413
        %v3478 = vmul.f32 %v3414, %v3414
        %v3479 = vmul.f32 %v3415, %v3415
        %v3480 = vmul.f32 %v3416, %v3416
        %v3481 = vmul.f32 %v3417, %v3417
        %v3482 = vmul.f32 %v3418, %v3418
        %v3483 = vmul.f32 %v3419, %v3419
        %v3484 = vmul.f32 %v3420, %v3420
        %v3485 = vmul.f32 %v3421, %v3421
        %v3486 = vmul.f32 %v3422, %v3422
        %v3487 = vmul.f32 %v3423, %v3423
        %v3488 = vmul.f32 %v3424, %v3424
        %v3489 = vmul.f32 %v3425, %v3425
        %v3490 = vmul.f32 %v3426, %v3426
        %v3491 = vmul.f32 %v3427, %v3427
        %v3492 = vmul.f32 %v3428, %v3428
        %v3493 = vmul.f32 %v3429, %v3429
        %v3494 = vmul.f32 %v3430, %v3430
        %v3495 = vmul.f32 %v3431, %v3431
        %v3496 = vmul.f32 %v3432, %v3432
        %v3497 = vmul.f32 %v3433, %v3433
        %v3498 = vmul.f32 %v3434, %v3434
        %v3499 = vmul.f32 %v3435, %v3435
        %v3500 = vmul.f32 %v3436, %v3436
        %v3501 = vmul.f32 %v3437, %v3437
        %v3502 = vmul.f32 %v3438, %v3438
        %v3503 = vmul.f32 %v3439, %v3439
        %v3504 = vmul.f32 %v3440, %v3440
        %v3505 = vmul.f32 %v3441, %v3441
        %v3506 = vmul.f32 %v3442, %v3442
        %v3507 = vmul.f32 %v3443, %v3443
        %v3508 = vmul.f32 %v3444, %v3444
        %v3509 = vmul.f32 %v3445, %v3445
        %v3510 = vmul.f32 %v3446, %v3446
        %v3511 = vmul.f32 %v3447, %v3447
        %v3512 = vmul.f32 %v3448, %v3448
        %v3513 = vmul.f32 %v3449, %v3449
        %v3514 = vmul.f32 %v3450, %v3450
        %v3515 = vmul.f32 %v3451, %v3451
        %v3516 = vmul.f32 %v3452, %v3452
        %v3517 = vmul.f32 %v3453, %v3453
        %v3518 = vmul.f32 %v3454, %v3454
        %v3519 = vmul.f32 %v3455, %v3455
        %v3520 = vadd.f32 %v3456, %v3457
        %3521 = vadd.xlane.f32.xlu0 %v3520
        %v3522 = vpop.xlane.xlu0 %3521
        %v3523 = vadd.f32 %v3458, %v3459
        %3524 = vadd.xlane.f32.xlu0 %v3523
        %v3525 = vpop.xlane.xlu0 %3524
        %v3526 = vadd.f32 %v3460, %v3461
        %3527 = vadd.xlane.f32.xlu0 %v3526
        %v3528 = vpop.xlane.xlu0 %3527
        %v3529 = vadd.f32 %v3462, %v3463
        %3530 = vadd.xlane.f32.xlu0 %v3529
        %v3531 = vpop.xlane.xlu0 %3530
        %v3532 = vadd.f32 %v3464, %v3465
        %3533 = vadd.xlane.f32.xlu0 %v3532
        %v3534 = vpop.xlane.xlu0 %3533
        %v3535 = vadd.f32 %v3466, %v3467
        %3536 = vadd.xlane.f32.xlu0 %v3535
        %v3537 = vpop.xlane.xlu0 %3536
        %v3538 = vadd.f32 %v3468, %v3469
        %3539 = vadd.xlane.f32.xlu0 %v3538
        %v3540 = vpop.xlane.xlu0 %3539
        %v3541 = vadd.f32 %v3470, %v3471
        %3542 = vadd.xlane.f32.xlu0 %v3541
        %v3543 = vpop.xlane.xlu0 %3542
        %v3544 = vadd.f32 %v3472, %v3473
        %3545 = vadd.xlane.f32.xlu0 %v3544
        %v3546 = vpop.xlane.xlu0 %3545
        %v3547 = vadd.f32 %v3474, %v3475
        %3548 = vadd.xlane.f32.xlu0 %v3547
        %v3549 = vpop.xlane.xlu0 %3548
        %v3550 = vadd.f32 %v3476, %v3477
        %3551 = vadd.xlane.f32.xlu0 %v3550
        %v3552 = vpop.xlane.xlu0 %3551
        %v3553 = vadd.f32 %v3478, %v3479
        %3554 = vadd.xlane.f32.xlu0 %v3553
        %v3555 = vpop.xlane.xlu0 %3554
        %v3556 = vadd.f32 %v3480, %v3481
        %3557 = vadd.xlane.f32.xlu0 %v3556
        %v3558 = vpop.xlane.xlu0 %3557
        %v3559 = vadd.f32 %v3482, %v3483
        %3560 = vadd.xlane.f32.xlu0 %v3559
        %v3561 = vpop.xlane.xlu0 %3560
        %v3562 = vadd.f32 %v3484, %v3485
        %3563 = vadd.xlane.f32.xlu0 %v3562
        %v3564 = vpop.xlane.xlu0 %3563
        %v3565 = vadd.f32 %v3486, %v3487
        %3566 = vadd.xlane.f32.xlu0 %v3565
        %v3567 = vpop.xlane.xlu0 %3566
        %v3568 = vadd.f32 %v3488, %v3489
        %3569 = vadd.xlane.f32.xlu0 %v3568
        %v3570 = vpop.xlane.xlu0 %3569
        %v3571 = vadd.f32 %v3490, %v3491
        %3572 = vadd.xlane.f32.xlu0 %v3571
        %v3573 = vpop.xlane.xlu0 %3572
        %v3574 = vadd.f32 %v3492, %v3493
        %3575 = vadd.xlane.f32.xlu0 %v3574
        %v3576 = vpop.xlane.xlu0 %3575
        %v3577 = vadd.f32 %v3494, %v3495
        %3578 = vadd.xlane.f32.xlu0 %v3577
        %v3579 = vpop.xlane.xlu0 %3578
        %v3580 = vadd.f32 %v3496, %v3497
        %3581 = vadd.xlane.f32.xlu0 %v3580
        %v3582 = vpop.xlane.xlu0 %3581
        %v3583 = vadd.f32 %v3498, %v3499
        %3584 = vadd.xlane.f32.xlu0 %v3583
        %v3585 = vpop.xlane.xlu0 %3584
        %v3586 = vadd.f32 %v3500, %v3501
        %3587 = vadd.xlane.f32.xlu0 %v3586
        %v3588 = vpop.xlane.xlu0 %3587
        %v3589 = vadd.f32 %v3502, %v3503
        %3590 = vadd.xlane.f32.xlu0 %v3589
        %v3591 = vpop.xlane.xlu0 %3590
        %v3592 = vadd.f32 %v3504, %v3505
        %3593 = vadd.xlane.f32.xlu0 %v3592
        %v3594 = vpop.xlane.xlu0 %3593
        %v3595 = vadd.f32 %v3506, %v3507
        %3596 = vadd.xlane.f32.xlu0 %v3595
        %v3597 = vpop.xlane.xlu0 %3596
        %v3598 = vadd.f32 %v3508, %v3509
        %3599 = vadd.xlane.f32.xlu0 %v3598
        %v3600 = vpop.xlane.xlu0 %3599
        %v3601 = vadd.f32 %v3510, %v3511
        %3602 = vadd.xlane.f32.xlu0 %v3601
        %v3603 = vpop.xlane.xlu0 %3602
        %v3604 = vadd.f32 %v3512, %v3513
        %3605 = vadd.xlane.f32.xlu0 %v3604
        %v3606 = vpop.xlane.xlu0 %3605
        %v3607 = vadd.f32 %v3514, %v3515
        %3608 = vadd.xlane.f32.xlu0 %v3607
        %v3609 = vpop.xlane.xlu0 %3608
        %v3610 = vadd.f32 %v3516, %v3517
        %3611 = vadd.xlane.f32.xlu0 %v3610
        %v3612 = vpop.xlane.xlu0 %3611
        %v3613 = vadd.f32 %v3518, %v3519
        %3614 = vadd.xlane.f32.xlu0 %v3613
        %v3615 = vpop.xlane.xlu0 %3614
        %v3616 = vmul.f32 %v3522, %v1884
        %v3617 = vmul.f32 %v3525, %v1884
        %v3618 = vmul.f32 %v3528, %v1884
        %v3619 = vmul.f32 %v3531, %v1884
        %v3620 = vmul.f32 %v3534, %v1884
        %v3621 = vmul.f32 %v3537, %v1884
        %v3622 = vmul.f32 %v3540, %v1884
        %v3623 = vmul.f32 %v3543, %v1884
        %v3624 = vmul.f32 %v3546, %v1884
        %v3625 = vmul.f32 %v3549, %v1884
        %v3626 = vmul.f32 %v3552, %v1884
        %v3627 = vmul.f32 %v3555, %v1884
        %v3628 = vmul.f32 %v3558, %v1884
        %v3629 = vmul.f32 %v3561, %v1884
        %v3630 = vmul.f32 %v3564, %v1884
        %v3631 = vmul.f32 %v3567, %v1884
        %v3632 = vmul.f32 %v3570, %v1884
        %v3633 = vmul.f32 %v3573, %v1884
        %v3634 = vmul.f32 %v3576, %v1884
        %v3635 = vmul.f32 %v3579, %v1884
        %v3636 = vmul.f32 %v3582, %v1884
        %v3637 = vmul.f32 %v3585, %v1884
        %v3638 = vmul.f32 %v3588, %v1884
        %v3639 = vmul.f32 %v3591, %v1884
        %v3640 = vmul.f32 %v3594, %v1884
        %v3641 = vmul.f32 %v3597, %v1884
        %v3642 = vmul.f32 %v3600, %v1884
        %v3643 = vmul.f32 %v3603, %v1884
        %v3644 = vmul.f32 %v3606, %v1884
        %v3645 = vmul.f32 %v3609, %v1884
        %v3646 = vmul.f32 %v3612, %v1884
        %v3647 = vmul.f32 %v3615, %v1884
        %v3648 = vadd.f32 %v3616, 1e-05
        %v3649 = vadd.f32 %v3617, 1e-05
        %v3650 = vadd.f32 %v3618, 1e-05
        %v3651 = vadd.f32 %v3619, 1e-05
        %v3652 = vadd.f32 %v3620, 1e-05
        %v3653 = vadd.f32 %v3621, 1e-05
        %v3654 = vadd.f32 %v3622, 1e-05
        %v3655 = vadd.f32 %v3623, 1e-05
        %v3656 = vadd.f32 %v3624, 1e-05
        %v3657 = vadd.f32 %v3625, 1e-05
        %v3658 = vadd.f32 %v3626, 1e-05
        %v3659 = vadd.f32 %v3627, 1e-05
        %v3660 = vadd.f32 %v3628, 1e-05
        %v3661 = vadd.f32 %v3629, 1e-05
        %v3662 = vadd.f32 %v3630, 1e-05
        %v3663 = vadd.f32 %v3631, 1e-05
        %v3664 = vadd.f32 %v3632, 1e-05
        %v3665 = vadd.f32 %v3633, 1e-05
        %v3666 = vadd.f32 %v3634, 1e-05
        %v3667 = vadd.f32 %v3635, 1e-05
        %v3668 = vadd.f32 %v3636, 1e-05
        %v3669 = vadd.f32 %v3637, 1e-05
        %v3670 = vadd.f32 %v3638, 1e-05
        %v3671 = vadd.f32 %v3639, 1e-05
        %v3672 = vadd.f32 %v3640, 1e-05
        %v3673 = vadd.f32 %v3641, 1e-05
        %v3674 = vadd.f32 %v3642, 1e-05
        %v3675 = vadd.f32 %v3643, 1e-05
        %v3676 = vadd.f32 %v3644, 1e-05
        %v3677 = vadd.f32 %v3645, 1e-05
        %v3678 = vadd.f32 %v3646, 1e-05
        %v3679 = vadd.f32 %v3647, 1e-05
        %v3680 = vrsqrt.pop %v3648
        %v3681 = vrsqrt.pop %v3649
        %v3682 = vrsqrt.pop %v3650
        %v3683 = vrsqrt.pop %v3651
        %v3684 = vrsqrt.pop %v3652
        %v3685 = vrsqrt.pop %v3653
        %v3686 = vrsqrt.pop %v3654
        %v3687 = vrsqrt.pop %v3655
        %v3688 = vrsqrt.pop %v3656
        %v3689 = vrsqrt.pop %v3657
        %v3690 = vrsqrt.pop %v3658
        %v3691 = vrsqrt.pop %v3659
        %v3692 = vrsqrt.pop %v3660
        %v3693 = vrsqrt.pop %v3661
        %v3694 = vrsqrt.pop %v3662
        %v3695 = vrsqrt.pop %v3663
        %v3696 = vrsqrt.pop %v3664
        %v3697 = vrsqrt.pop %v3665
        %v3698 = vrsqrt.pop %v3666
        %v3699 = vrsqrt.pop %v3667
        %v3700 = vrsqrt.pop %v3668
        %v3701 = vrsqrt.pop %v3669
        %v3702 = vrsqrt.pop %v3670
        %v3703 = vrsqrt.pop %v3671
        %v3704 = vrsqrt.pop %v3672
        %v3705 = vrsqrt.pop %v3673
        %v3706 = vrsqrt.pop %v3674
        %v3707 = vrsqrt.pop %v3675
        %v3708 = vrsqrt.pop %v3676
        %v3709 = vrsqrt.pop %v3677
        %v3710 = vrsqrt.pop %v3678
        %v3711 = vrsqrt.pop %v3679
        %v3712 = vmul.f32 %v3680, %v2241
        %v3713 = vmul.f32 %v3680, %v2245
        %v3714 = vmul.f32 %v3681, %v2241
        %v3715 = vmul.f32 %v3681, %v2245
        %v3716 = vmul.f32 %v3682, %v2241
        %v3717 = vmul.f32 %v3682, %v2245
        %v3718 = vmul.f32 %v3683, %v2241
        %v3719 = vmul.f32 %v3683, %v2245
        %v3720 = vmul.f32 %v3684, %v2241
        %v3721 = vmul.f32 %v3684, %v2245
        %v3722 = vmul.f32 %v3685, %v2241
        %v3723 = vmul.f32 %v3685, %v2245
        %v3724 = vmul.f32 %v3686, %v2241
        %v3725 = vmul.f32 %v3686, %v2245
        %v3726 = vmul.f32 %v3687, %v2241
        %v3727 = vmul.f32 %v3687, %v2245
        %v3728 = vmul.f32 %v3688, %v2241
        %v3729 = vmul.f32 %v3688, %v2245
        %v3730 = vmul.f32 %v3689, %v2241
        %v3731 = vmul.f32 %v3689, %v2245
        %v3732 = vmul.f32 %v3690, %v2241
        %v3733 = vmul.f32 %v3690, %v2245
        %v3734 = vmul.f32 %v3691, %v2241
        %v3735 = vmul.f32 %v3691, %v2245
        %v3736 = vmul.f32 %v3692, %v2241
        %v3737 = vmul.f32 %v3692, %v2245
        %v3738 = vmul.f32 %v3693, %v2241
        %v3739 = vmul.f32 %v3693, %v2245
        %v3740 = vmul.f32 %v3694, %v2241
        %v3741 = vmul.f32 %v3694, %v2245
        %v3742 = vmul.f32 %v3695, %v2241
        %v3743 = vmul.f32 %v3695, %v2245
        %v3744 = vmul.f32 %v3696, %v2241
        %v3745 = vmul.f32 %v3696, %v2245
        %v3746 = vmul.f32 %v3697, %v2241
        %v3747 = vmul.f32 %v3697, %v2245
        %v3748 = vmul.f32 %v3698, %v2241
        %v3749 = vmul.f32 %v3698, %v2245
        %v3750 = vmul.f32 %v3699, %v2241
        %v3751 = vmul.f32 %v3699, %v2245
        %v3752 = vmul.f32 %v3700, %v2241
        %v3753 = vmul.f32 %v3700, %v2245
        %v3754 = vmul.f32 %v3701, %v2241
        %v3755 = vmul.f32 %v3701, %v2245
        %v3756 = vmul.f32 %v3702, %v2241
        %v3757 = vmul.f32 %v3702, %v2245
        %v3758 = vmul.f32 %v3703, %v2241
        %v3759 = vmul.f32 %v3703, %v2245
        %v3760 = vmul.f32 %v3704, %v2241
        %v3761 = vmul.f32 %v3704, %v2245
        %v3762 = vmul.f32 %v3705, %v2241
        %v3763 = vmul.f32 %v3705, %v2245
        %v3764 = vmul.f32 %v3706, %v2241
        %v3765 = vmul.f32 %v3706, %v2245
        %v3766 = vmul.f32 %v3707, %v2241
        %v3767 = vmul.f32 %v3707, %v2245
        %v3768 = vmul.f32 %v3708, %v2241
        %v3769 = vmul.f32 %v3708, %v2245
        %v3770 = vmul.f32 %v3709, %v2241
        %v3771 = vmul.f32 %v3709, %v2245
        %v3772 = vmul.f32 %v3710, %v2241
        %v3773 = vmul.f32 %v3710, %v2245
        %v3774 = vmul.f32 %v3711, %v2241
        %v3775 = vmul.f32 %v3711, %v2245
        %v3776 = vmul.f32 %v3392, %v3712
        %v3777 = vmul.f32 %v3393, %v3713
        %v3778 = vmul.f32 %v3394, %v3714
        %v3779 = vmul.f32 %v3395, %v3715
        %v3780 = vmul.f32 %v3396, %v3716
        %v3781 = vmul.f32 %v3397, %v3717
        %v3782 = vmul.f32 %v3398, %v3718
        %v3783 = vmul.f32 %v3399, %v3719
        %v3784 = vmul.f32 %v3400, %v3720
        %v3785 = vmul.f32 %v3401, %v3721
        %v3786 = vmul.f32 %v3402, %v3722
        %v3787 = vmul.f32 %v3403, %v3723
        %v3788 = vmul.f32 %v3404, %v3724
        %v3789 = vmul.f32 %v3405, %v3725
        %v3790 = vmul.f32 %v3406, %v3726
        %v3791 = vmul.f32 %v3407, %v3727
        %v3792 = vmul.f32 %v3408, %v3728
        %v3793 = vmul.f32 %v3409, %v3729
        %v3794 = vmul.f32 %v3410, %v3730
        %v3795 = vmul.f32 %v3411, %v3731
        %v3796 = vmul.f32 %v3412, %v3732
        %v3797 = vmul.f32 %v3413, %v3733
        %v3798 = vmul.f32 %v3414, %v3734
        %v3799 = vmul.f32 %v3415, %v3735
        %v3800 = vmul.f32 %v3416, %v3736
        %v3801 = vmul.f32 %v3417, %v3737
        %v3802 = vmul.f32 %v3418, %v3738
        %v3803 = vmul.f32 %v3419, %v3739
        %v3804 = vmul.f32 %v3420, %v3740
        %v3805 = vmul.f32 %v3421, %v3741
        %v3806 = vmul.f32 %v3422, %v3742
        %v3807 = vmul.f32 %v3423, %v3743
        %v3808 = vmul.f32 %v3424, %v3744
        %v3809 = vmul.f32 %v3425, %v3745
        %v3810 = vmul.f32 %v3426, %v3746
        %v3811 = vmul.f32 %v3427, %v3747
        %v3812 = vmul.f32 %v3428, %v3748
        %v3813 = vmul.f32 %v3429, %v3749
        %v3814 = vmul.f32 %v3430, %v3750
        %v3815 = vmul.f32 %v3431, %v3751
        %v3816 = vmul.f32 %v3432, %v3752
        %v3817 = vmul.f32 %v3433, %v3753
        %v3818 = vmul.f32 %v3434, %v3754
        %v3819 = vmul.f32 %v3435, %v3755
        %v3820 = vmul.f32 %v3436, %v3756
        %v3821 = vmul.f32 %v3437, %v3757
        %v3822 = vmul.f32 %v3438, %v3758
        %v3823 = vmul.f32 %v3439, %v3759
        %v3824 = vmul.f32 %v3440, %v3760
        %v3825 = vmul.f32 %v3441, %v3761
        %v3826 = vmul.f32 %v3442, %v3762
        %v3827 = vmul.f32 %v3443, %v3763
        %v3828 = vmul.f32 %v3444, %v3764
        %v3829 = vmul.f32 %v3445, %v3765
        %v3830 = vmul.f32 %v3446, %v3766
        %v3831 = vmul.f32 %v3447, %v3767
        %v3832 = vmul.f32 %v3448, %v3768
        %v3833 = vmul.f32 %v3449, %v3769
        %v3834 = vmul.f32 %v3450, %v3770
        %v3835 = vmul.f32 %v3451, %v3771
        %v3836 = vmul.f32 %v3452, %v3772
        %v3837 = vmul.f32 %v3453, %v3773
        %v3838 = vmul.f32 %v3454, %v3774
        %v3839 = vmul.f32 %v3455, %v3775
        %v3840 = vadd.f32 %v3776, %v2380
        %v3841 = vadd.f32 %v3777, %v2384
        %v3842 = vadd.f32 %v3778, %v2380
        %v3843 = vadd.f32 %v3779, %v2384
        %v3844 = vadd.f32 %v3780, %v2380
        %v3845 = vadd.f32 %v3781, %v2384
        %v3846 = vadd.f32 %v3782, %v2380
        %v3847 = vadd.f32 %v3783, %v2384
        %v3848 = vadd.f32 %v3784, %v2380
        %v3849 = vadd.f32 %v3785, %v2384
        %v3850 = vadd.f32 %v3786, %v2380
        %v3851 = vadd.f32 %v3787, %v2384
        %v3852 = vadd.f32 %v3788, %v2380
        %v3853 = vadd.f32 %v3789, %v2384
        %v3854 = vadd.f32 %v3790, %v2380
        %v3855 = vadd.f32 %v3791, %v2384
        %v3856 = vadd.f32 %v3792, %v2380
        %v3857 = vadd.f32 %v3793, %v2384
        %v3858 = vadd.f32 %v3794, %v2380
        %v3859 = vadd.f32 %v3795, %v2384
        %v3860 = vadd.f32 %v3796, %v2380
        %v3861 = vadd.f32 %v3797, %v2384
        %v3862 = vadd.f32 %v3798, %v2380
        %v3863 = vadd.f32 %v3799, %v2384
        %v3864 = vadd.f32 %v3800, %v2380
        %v3865 = vadd.f32 %v3801, %v2384
        %v3866 = vadd.f32 %v3802, %v2380
        %v3867 = vadd.f32 %v3803, %v2384
        %v3868 = vadd.f32 %v3804, %v2380
        %v3869 = vadd.f32 %v3805, %v2384
        %v3870 = vadd.f32 %v3806, %v2380
        %v3871 = vadd.f32 %v3807, %v2384
        %v3872 = vadd.f32 %v3808, %v2380
        %v3873 = vadd.f32 %v3809, %v2384
        %v3874 = vadd.f32 %v3810, %v2380
        %v3875 = vadd.f32 %v3811, %v2384
        %v3876 = vadd.f32 %v3812, %v2380
        %v3877 = vadd.f32 %v3813, %v2384
        %v3878 = vadd.f32 %v3814, %v2380
        %v3879 = vadd.f32 %v3815, %v2384
        %v3880 = vadd.f32 %v3816, %v2380
        %v3881 = vadd.f32 %v3817, %v2384
        %v3882 = vadd.f32 %v3818, %v2380
        %v3883 = vadd.f32 %v3819, %v2384
        %v3884 = vadd.f32 %v3820, %v2380
        %v3885 = vadd.f32 %v3821, %v2384
        %v3886 = vadd.f32 %v3822, %v2380
        %v3887 = vadd.f32 %v3823, %v2384
        %v3888 = vadd.f32 %v3824, %v2380
        %v3889 = vadd.f32 %v3825, %v2384
        %v3890 = vadd.f32 %v3826, %v2380
        %v3891 = vadd.f32 %v3827, %v2384
        %v3892 = vadd.f32 %v3828, %v2380
        %v3893 = vadd.f32 %v3829, %v2384
        %v3894 = vadd.f32 %v3830, %v2380
        %v3895 = vadd.f32 %v3831, %v2384
        %v3896 = vadd.f32 %v3832, %v2380
        %v3897 = vadd.f32 %v3833, %v2384
        %v3898 = vadd.f32 %v3834, %v2380
        %v3899 = vadd.f32 %v3835, %v2384
        %v3900 = vadd.f32 %v3836, %v2380
        %v3901 = vadd.f32 %v3837, %v2384
        %v3902 = vadd.f32 %v3838, %v2380
        %v3903 = vadd.f32 %v3839, %v2384
        %v3904 = vld [vmem:[%s8] sm:$0x3]
        %v3905 = vpack.c.bf16 %v3842, %v3840
        %v3906 = vpack.c.bf16 %v3843, %v3841
        %v3907 = vpack.c.bf16 %v3846, %v3844
        %v3908 = vpack.c.bf16 %v3847, %v3845
        %v3909 = vpack.c.bf16 %v3850, %v3848
        %v3910 = vpack.c.bf16 %v3851, %v3849
        %v3911 = vpack.c.bf16 %v3854, %v3852
        %v3912 = vpack.c.bf16 %v3855, %v3853
        %v3913 = vpack.c.bf16 %v3858, %v3856
        %v3914 = vpack.c.bf16 %v3859, %v3857
        %v3915 = vpack.c.bf16 %v3862, %v3860
        %v3916 = vpack.c.bf16 %v3863, %v3861
        %v3917 = vpack.c.bf16 %v3866, %v3864
        %v3918 = vpack.c.bf16 %v3867, %v3865
        %v3919 = vpack.c.bf16 %v3870, %v3868
        %v3920 = vpack.c.bf16 %v3871, %v3869
        %v3921 = vpack.c.bf16 %v3874, %v3872
        %v3922 = vpack.c.bf16 %v3875, %v3873
        %v3923 = vpack.c.bf16 %v3878, %v3876
        %v3924 = vpack.c.bf16 %v3879, %v3877
        %v3925 = vpack.c.bf16 %v3882, %v3880
        %v3926 = vpack.c.bf16 %v3883, %v3881
        %v3927 = vpack.c.bf16 %v3886, %v3884
        %v3928 = vpack.c.bf16 %v3887, %v3885
        %v3929 = vpack.c.bf16 %v3890, %v3888
        %v3930 = vpack.c.bf16 %v3891, %v3889
        %v3931 = vpack.c.bf16 %v3894, %v3892
        %v3932 = vpack.c.bf16 %v3895, %v3893
        %v3933 = vpack.c.bf16 %v3898, %v3896
        %v3934 = vpack.c.bf16 %v3899, %v3897
        %v3935 = vpack.c.bf16 %v3902, %v3900
        %v3936 = vpack.c.bf16 %v3903, %v3901
        %v3937 = vld [vmem:[#allocation11] sm:$0xff]
        %v3938 = vld [vmem:[#allocation11 + $0x8] sm:$0xff]
        %v3939 = vld [vmem:[#allocation11 + $0x10] sm:$0xff]
        %v3940 = vld [vmem:[#allocation11 + $0x18] sm:$0xff]
        %v3941 = vld [vmem:[#allocation11 + $0x20] sm:$0xff]
        %v3942 = vld [vmem:[#allocation11 + $0x28] sm:$0xff]
        %v3943 = vld [vmem:[#allocation11 + $0x30] sm:$0xff]
        %v3944 = vld [vmem:[#allocation11 + $0x38] sm:$0xff]
        %v3945 = vld [vmem:[#allocation11 + $0x40] sm:$0xff]
        %v3946 = vld [vmem:[#allocation11 + $0x48] sm:$0xff]
        %v3947 = vld [vmem:[#allocation11 + $0x50] sm:$0xff]
        %v3948 = vld [vmem:[#allocation11 + $0x58] sm:$0xff]
        %v3949 = vld [vmem:[#allocation11 + $0x60] sm:$0xff]
        %v3950 = vld [vmem:[#allocation11 + $0x68] sm:$0xff]
        %v3951 = vld [vmem:[#allocation11 + $0x70] sm:$0xff]
        %v3952 = vld [vmem:[#allocation11 + $0x78] sm:$0xff]
        %v3953 = vld [vmem:[#allocation11 + $0x80] sm:$0xff]
        %v3954 = vld [vmem:[#allocation11 + $0x88] sm:$0xff]
        %v3955 = vld [vmem:[#allocation11 + $0x90] sm:$0xff]
        %v3956 = vld [vmem:[#allocation11 + $0x98] sm:$0xff]
        %v3957 = vld [vmem:[#allocation11 + $0xa0] sm:$0xff]
        %v3958 = vld [vmem:[#allocation11 + $0xa8] sm:$0xff]
        %v3959 = vld [vmem:[#allocation11 + $0xb0] sm:$0xff]
        %v3960 = vld [vmem:[#allocation11 + $0xb8] sm:$0xff]
        %v3961 = vld [vmem:[#allocation11 + $0xc0] sm:$0xff]
        %v3962 = vld [vmem:[#allocation11 + $0xc8] sm:$0xff]
        %v3963 = vld [vmem:[#allocation11 + $0xd0] sm:$0xff]
        %v3964 = vld [vmem:[#allocation11 + $0xd8] sm:$0xff]
        %v3965 = vld [vmem:[#allocation11 + $0xe0] sm:$0xff]
        %v3966 = vld [vmem:[#allocation11 + $0xe8] sm:$0xff]
        %v3967 = vld [vmem:[#allocation11 + $0xf0] sm:$0xff]
        %v3968 = vld [vmem:[#allocation11 + $0xf8] sm:$0xff]
        %v4001 = vunpack.c.l.b16 %v3937
        %v4002 = vunpack.c.h.b16 %v3937
        %v4003 = vunpack.c.l.b16 %v3938
        %v4004 = vunpack.c.h.b16 %v3938
        %v4005 = vunpack.c.l.b16 %v3939
        %v4006 = vunpack.c.h.b16 %v3939
        %v4007 = vunpack.c.l.b16 %v3940
        %v4008 = vunpack.c.h.b16 %v3940
        %v4009 = vunpack.c.l.b16 %v3941
        %v4010 = vunpack.c.h.b16 %v3941
        %v4011 = vunpack.c.l.b16 %v3942
        %v4012 = vunpack.c.h.b16 %v3942
        %v4013 = vunpack.c.l.b16 %v3943
        %v4014 = vunpack.c.h.b16 %v3943
        %v4015 = vunpack.c.l.b16 %v3944
        %v4016 = vunpack.c.h.b16 %v3944
        %v4017 = vunpack.c.l.b16 %v3945
        %v4018 = vunpack.c.h.b16 %v3945
        %v4019 = vunpack.c.l.b16 %v3946
        %v4020 = vunpack.c.h.b16 %v3946
        %v4021 = vunpack.c.l.b16 %v3947
        %v4022 = vunpack.c.h.b16 %v3947
        %v4023 = vunpack.c.l.b16 %v3948
        %v4024 = vunpack.c.h.b16 %v3948
        %v4025 = vunpack.c.l.b16 %v3949
        %v4026 = vunpack.c.h.b16 %v3949
        %v4027 = vunpack.c.l.b16 %v3950
        %v4028 = vunpack.c.h.b16 %v3950
        %v4029 = vunpack.c.l.b16 %v3951
        %v4030 = vunpack.c.h.b16 %v3951
        %v4031 = vunpack.c.l.b16 %v3952
        %v4032 = vunpack.c.h.b16 %v3952
        %v4033 = vunpack.c.l.b16 %v3953
        %v4034 = vunpack.c.h.b16 %v3953
        %v4035 = vunpack.c.l.b16 %v3954
        %v4036 = vunpack.c.h.b16 %v3954
        %v4037 = vunpack.c.l.b16 %v3955
        %v4038 = vunpack.c.h.b16 %v3955
        %v4039 = vunpack.c.l.b16 %v3956
        %v4040 = vunpack.c.h.b16 %v3956
        %v4041 = vunpack.c.l.b16 %v3957
        %v4042 = vunpack.c.h.b16 %v3957
        %v4043 = vunpack.c.l.b16 %v3958
        %v4044 = vunpack.c.h.b16 %v3958
        %v4045 = vunpack.c.l.b16 %v3959
        %v4046 = vunpack.c.h.b16 %v3959
        %v4047 = vunpack.c.l.b16 %v3960
        %v4048 = vunpack.c.h.b16 %v3960
        %v4049 = vunpack.c.l.b16 %v3961
        %v4050 = vunpack.c.h.b16 %v3961
        %v4051 = vunpack.c.l.b16 %v3962
        %v4052 = vunpack.c.h.b16 %v3962
        %v4053 = vunpack.c.l.b16 %v3963
        %v4054 = vunpack.c.h.b16 %v3963
        %v4055 = vunpack.c.l.b16 %v3964
        %v4056 = vunpack.c.h.b16 %v3964
        %v4057 = vunpack.c.l.b16 %v3965
        %v4058 = vunpack.c.h.b16 %v3965
        %v4059 = vunpack.c.l.b16 %v3966
        %v4060 = vunpack.c.h.b16 %v3966
        %v4061 = vunpack.c.l.b16 %v3967
        %v4062 = vunpack.c.h.b16 %v3967
        %v4063 = vunpack.c.l.b16 %v3968
        %v4064 = vunpack.c.h.b16 %v3968
        %v4065 = vpack.c.b16 %v4003, %v4001
        %v4066 = vpack.c.b16 %v4004, %v4002
        %v4067 = vpack.c.b16 %v4007, %v4005
        %v4068 = vpack.c.b16 %v4008, %v4006
        %v4069 = vpack.c.b16 %v4011, %v4009
        %v4070 = vpack.c.b16 %v4012, %v4010
        %v4071 = vpack.c.b16 %v4015, %v4013
        %v4072 = vpack.c.b16 %v4016, %v4014
        %v4073 = vpack.c.b16 %v4019, %v4017
        %v4074 = vpack.c.b16 %v4020, %v4018
        %v4075 = vpack.c.b16 %v4023, %v4021
        %v4076 = vpack.c.b16 %v4024, %v4022
        %v4077 = vpack.c.b16 %v4027, %v4025
        %v4078 = vpack.c.b16 %v4028, %v4026
        %v4079 = vpack.c.b16 %v4031, %v4029
        %v4080 = vpack.c.b16 %v4032, %v4030
        %v4081 = vpack.c.b16 %v4035, %v4033
        %v4082 = vpack.c.b16 %v4036, %v4034
        %v4083 = vpack.c.b16 %v4039, %v4037
        %v4084 = vpack.c.b16 %v4040, %v4038
        %v4085 = vpack.c.b16 %v4043, %v4041
        %v4086 = vpack.c.b16 %v4044, %v4042
        %v4087 = vpack.c.b16 %v4047, %v4045
        %v4088 = vpack.c.b16 %v4048, %v4046
        %v4089 = vpack.c.b16 %v4051, %v4049
        %v4090 = vpack.c.b16 %v4052, %v4050
        %v4091 = vpack.c.b16 %v4055, %v4053
        %v4092 = vpack.c.b16 %v4056, %v4054
        %v4093 = vpack.c.b16 %v4059, %v4057
        %v4094 = vpack.c.b16 %v4060, %v4058
        %v4095 = vpack.c.b16 %v4063, %v4061
        %v4096 = vpack.c.b16 %v4064, %v4062
        %4129 = vmatprep.subr.bf16.mxu0 %v4066
        %4130 = vmatpush1.bf16.msra.mxu0 %v4065
        %4131 = vmatprep.subr.bf16.mxu0 %v4068
        %4132 = vmatpush1.bf16.msra.mxu0 %v4067
        %4133 = vmatprep.subr.bf16.mxu0 %v4070
        %4134 = vmatpush1.bf16.msra.mxu0 %v4069
        %4135 = vmatprep.subr.bf16.mxu0 %v4072
        %4136 = vmatpush1.bf16.msra.mxu0 %v4071
        %4137 = vmatprep.subr.bf16.mxu0 %v4074
        %4138 = vmatpush1.bf16.msra.mxu0 %v4073
        %4139 = vmatprep.subr.bf16.mxu0 %v4076
        %4140 = vmatpush1.bf16.msra.mxu0 %v4075
        %4141 = vmatprep.subr.bf16.mxu0 %v4078
        %4142 = vmatpush1.bf16.msra.mxu0 %v4077
        %4143 = vmatprep.subr.bf16.mxu0 %v4080
        %4144 = vmatpush1.bf16.msra.mxu0 %v4079
        %4145 = vmatprep.subr.bf16.mxu0 %v4082
        %4146 = vmatpush1.bf16.msra.mxu0 %v4081
        %4147 = vmatprep.subr.bf16.mxu0 %v4084
        %4148 = vmatpush1.bf16.msra.mxu0 %v4083
        %4149 = vmatprep.subr.bf16.mxu0 %v4086
        %4150 = vmatpush1.bf16.msra.mxu0 %v4085
        %4151 = vmatprep.subr.bf16.mxu0 %v4088
        %4152 = vmatpush1.bf16.msra.mxu0 %v4087
        %4153 = vmatprep.subr.bf16.mxu0 %v4090
        %4154 = vmatpush1.bf16.msra.mxu0 %v4089
        %4155 = vmatprep.subr.bf16.mxu0 %v4092
        %4156 = vmatpush1.bf16.msra.mxu0 %v4091
        %4157 = vmatprep.subr.bf16.mxu0 %v4094
        %4158 = vmatpush1.bf16.msra.mxu0 %v4093
        %4159 = vmatprep.subr.bf16.mxu0 %v4096
        %4160 = vmatpush1.bf16.msra.mxu0 %v4095
        %4161 = vmatprep.mubr.bf16.mxu0 %v3906
        %4162 = vmatmul.mubr.bf16.gmra.mrb[0].mxu0 %v3905
        %v4163 = vpop.f32.mrb[0].mxu0
        %v4164 = vadd.f32 0.0, %v4163
        %v4165 = vpop.f32.mrb[0].mxu0
        %v4166 = vadd.f32 0.0, %v4165
        %v4167 = vpop.f32.mrb[0].mxu0
        %v4168 = vadd.f32 0.0, %v4167
        %v4169 = vpop.f32.mrb[0].mxu0
        %v4170 = vadd.f32 0.0, %v4169
        %4171 = vmatprep.mubr.bf16.mxu0 %v3908
        %4172 = vmatmul.mubr.bf16.gmra.mrb[0].mxu0 %v3907
        %v4173 = vpop.f32.mrb[0].mxu0
        %v4174 = vadd.f32 0.0, %v4173
        %v4175 = vpop.f32.mrb[0].mxu0
        %v4176 = vadd.f32 0.0, %v4175
        %v4177 = vpop.f32.mrb[0].mxu0
        %v4178 = vadd.f32 0.0, %v4177
        %v4179 = vpop.f32.mrb[0].mxu0
        %v4180 = vadd.f32 0.0, %v4179
        %4181 = vmatprep.mubr.bf16.mxu0 %v3910
        %4182 = vmatmul.mubr.bf16.gmra.mrb[0].mxu0 %v3909
        %v4183 = vpop.f32.mrb[0].mxu0
        %v4184 = vadd.f32 0.0, %v4183
        %v4185 = vpop.f32.mrb[0].mxu0
        %v4186 = vadd.f32 0.0, %v4185
        %v4187 = vpop.f32.mrb[0].mxu0
        %v4188 = vadd.f32 0.0, %v4187
        %v4189 = vpop.f32.mrb[0].mxu0
        %v4190 = vadd.f32 0.0, %v4189
        %4191 = vmatprep.mubr.bf16.mxu0 %v3912
        %4192 = vmatmul.mubr.bf16.gmra.mrb[0].mxu0 %v3911
        %v4193 = vpop.f32.mrb[0].mxu0
        %v4194 = vadd.f32 0.0, %v4193
        %v4195 = vpop.f32.mrb[0].mxu0
        %v4196 = vadd.f32 0.0, %v4195
        %v4197 = vpop.f32.mrb[0].mxu0
        %v4198 = vadd.f32 0.0, %v4197
        %v4199 = vpop.f32.mrb[0].mxu0
        %v4200 = vadd.f32 0.0, %v4199
        %4201 = vmatprep.mubr.bf16.mxu0 %v3914
        %4202 = vmatmul.mubr.bf16.gmra.mrb[0].mxu0 %v3913
        %v4203 = vpop.f32.mrb[0].mxu0
        %v4204 = vadd.f32 0.0, %v4203
        %v4205 = vpop.f32.mrb[0].mxu0
        %v4206 = vadd.f32 0.0, %v4205
        %v4207 = vpop.f32.mrb[0].mxu0
        %v4208 = vadd.f32 0.0, %v4207
        %v4209 = vpop.f32.mrb[0].mxu0
        %v4210 = vadd.f32 0.0, %v4209
        %4211 = vmatprep.mubr.bf16.mxu0 %v3916
        %4212 = vmatmul.mubr.bf16.gmra.mrb[0].mxu0 %v3915
        %v4213 = vpop.f32.mrb[0].mxu0
        %v4214 = vadd.f32 0.0, %v4213
        %v4215 = vpop.f32.mrb[0].mxu0
        %v4216 = vadd.f32 0.0, %v4215
        %v4217 = vpop.f32.mrb[0].mxu0
        %v4218 = vadd.f32 0.0, %v4217
        %v4219 = vpop.f32.mrb[0].mxu0
        %v4220 = vadd.f32 0.0, %v4219
        %4221 = vmatprep.mubr.bf16.mxu0 %v3918
        %4222 = vmatmul.mubr.bf16.gmra.mrb[0].mxu0 %v3917
        %v4223 = vpop.f32.mrb[0].mxu0
        %v4224 = vadd.f32 0.0, %v4223
        %v4225 = vpop.f32.mrb[0].mxu0
        %v4226 = vadd.f32 0.0, %v4225
        %v4227 = vpop.f32.mrb[0].mxu0
        %v4228 = vadd.f32 0.0, %v4227
        %v4229 = vpop.f32.mrb[0].mxu0
        %v4230 = vadd.f32 0.0, %v4229
        %4231 = vmatprep.mubr.bf16.mxu0 %v3920
        %4232 = vmatmul.mubr.bf16.gmra.mrb[0].mxu0 %v3919
        %v4233 = vpop.f32.mrb[0].mxu0
        %v4234 = vadd.f32 0.0, %v4233
        %v4235 = vpop.f32.mrb[0].mxu0
        %v4236 = vadd.f32 0.0, %v4235
        %v4237 = vpop.f32.mrb[0].mxu0
        %v4238 = vadd.f32 0.0, %v4237
        %v4239 = vpop.f32.mrb[0].mxu0
        %v4240 = vadd.f32 0.0, %v4239
        %4241 = vmatprep.mubr.bf16.mxu0 %v3922
        %4242 = vmatmul.mubr.bf16.gmra.mrb[0].mxu0 %v3921
        %v4243 = vpop.f32.mrb[0].mxu0
        %v4244 = vadd.f32 0.0, %v4243
        %v4245 = vpop.f32.mrb[0].mxu0
        %v4246 = vadd.f32 0.0, %v4245
        %v4247 = vpop.f32.mrb[0].mxu0
        %v4248 = vadd.f32 0.0, %v4247
        %v4249 = vpop.f32.mrb[0].mxu0
        %v4250 = vadd.f32 0.0, %v4249
        %4251 = vmatprep.mubr.bf16.mxu0 %v3924
        %4252 = vmatmul.mubr.bf16.gmra.mrb[0].mxu0 %v3923
        %v4253 = vpop.f32.mrb[0].mxu0
        %v4254 = vadd.f32 0.0, %v4253
        %v4255 = vpop.f32.mrb[0].mxu0
        %v4256 = vadd.f32 0.0, %v4255
        %v4257 = vpop.f32.mrb[0].mxu0
        %v4258 = vadd.f32 0.0, %v4257
        %v4259 = vpop.f32.mrb[0].mxu0
        %v4260 = vadd.f32 0.0, %v4259
        %4261 = vmatprep.mubr.bf16.mxu0 %v3926
        %4262 = vmatmul.mubr.bf16.gmra.mrb[0].mxu0 %v3925
        %v4263 = vpop.f32.mrb[0].mxu0
        %v4264 = vadd.f32 0.0, %v4263
        %v4265 = vpop.f32.mrb[0].mxu0
        %v4266 = vadd.f32 0.0, %v4265
        %v4267 = vpop.f32.mrb[0].mxu0
        %v4268 = vadd.f32 0.0, %v4267
        %v4269 = vpop.f32.mrb[0].mxu0
        %v4270 = vadd.f32 0.0, %v4269
        %4271 = vmatprep.mubr.bf16.mxu0 %v3928
        %4272 = vmatmul.mubr.bf16.gmra.mrb[0].mxu0 %v3927
        %v4273 = vpop.f32.mrb[0].mxu0
        %v4274 = vadd.f32 0.0, %v4273
        %v4275 = vpop.f32.mrb[0].mxu0
        %v4276 = vadd.f32 0.0, %v4275
        %v4277 = vpop.f32.mrb[0].mxu0
        %v4278 = vadd.f32 0.0, %v4277
        %v4279 = vpop.f32.mrb[0].mxu0
        %v4280 = vadd.f32 0.0, %v4279
        %4281 = vmatprep.mubr.bf16.mxu0 %v3930
        %4282 = vmatmul.mubr.bf16.gmra.mrb[0].mxu0 %v3929
        %v4283 = vpop.f32.mrb[0].mxu0
        %v4284 = vadd.f32 0.0, %v4283
        %v4285 = vpop.f32.mrb[0].mxu0
        %v4286 = vadd.f32 0.0, %v4285
        %v4287 = vpop.f32.mrb[0].mxu0
        %v4288 = vadd.f32 0.0, %v4287
        %v4289 = vpop.f32.mrb[0].mxu0
        %v4290 = vadd.f32 0.0, %v4289
        %4291 = vmatprep.mubr.bf16.mxu0 %v3932
        %4292 = vmatmul.mubr.bf16.gmra.mrb[0].mxu0 %v3931
        %v4293 = vpop.f32.mrb[0].mxu0
        %v4294 = vadd.f32 0.0, %v4293
        %v4295 = vpop.f32.mrb[0].mxu0
        %v4296 = vadd.f32 0.0, %v4295
        %v4297 = vpop.f32.mrb[0].mxu0
        %v4298 = vadd.f32 0.0, %v4297
        %v4299 = vpop.f32.mrb[0].mxu0
        %v4300 = vadd.f32 0.0, %v4299
        %4301 = vmatprep.mubr.bf16.mxu0 %v3934
        %4302 = vmatmul.mubr.bf16.gmra.mrb[0].mxu0 %v3933
        %v4303 = vpop.f32.mrb[0].mxu0
        %v4304 = vadd.f32 0.0, %v4303
        %v4305 = vpop.f32.mrb[0].mxu0
        %v4306 = vadd.f32 0.0, %v4305
        %v4307 = vpop.f32.mrb[0].mxu0
        %v4308 = vadd.f32 0.0, %v4307
        %v4309 = vpop.f32.mrb[0].mxu0
        %v4310 = vadd.f32 0.0, %v4309
        %4311 = vmatprep.mubr.bf16.mxu0 %v3936
        %4312 = vmatmul.mubr.bf16.gmra.mrb[0].mxu0 %v3935
        %v4313 = vpop.f32.mrb[0].mxu0
        %v4314 = vadd.f32 0.0, %v4313
        %v4315 = vpop.f32.mrb[0].mxu0
        %v4316 = vadd.f32 0.0, %v4315
        %v4317 = vpop.f32.mrb[0].mxu0
        %v4318 = vadd.f32 0.0, %v4317
        %v4319 = vpop.f32.mrb[0].mxu0
        %v4320 = vadd.f32 0.0, %v4319
        %4321 = vdwg.mxu0
        %v4323 = vlaneseq
        %v4324 = vshrl.u32 %v4323, 7
        %v4325 = vsub.s32 0, %v4324
        %v4326 = vrot.slane %v3904, %v4325
        %v4327 = vlaneseq
        %v4328 = vshrl.u32 %v4327, 7
        %v4329 = vsub.s32 1, %v4328
        %v4330 = vrot.slane %v3904, %v4329
        %v4333 = vadd.f32 %v4326, %v4164
        %v4334 = vadd.f32 %v4330, %v4166
        %v4335 = vadd.f32 %v4326, %v4168
        %v4336 = vadd.f32 %v4330, %v4170
        %v4337 = vadd.f32 %v4326, %v4174
        %v4338 = vadd.f32 %v4330, %v4176
        %v4339 = vadd.f32 %v4326, %v4178
        %v4340 = vadd.f32 %v4330, %v4180
        %v4341 = vadd.f32 %v4326, %v4184
        %v4342 = vadd.f32 %v4330, %v4186
        %v4343 = vadd.f32 %v4326, %v4188
        %v4344 = vadd.f32 %v4330, %v4190
        %v4345 = vadd.f32 %v4326, %v4194
        %v4346 = vadd.f32 %v4330, %v4196
        %v4347 = vadd.f32 %v4326, %v4198
        %v4348 = vadd.f32 %v4330, %v4200
        %v4349 = vadd.f32 %v4326, %v4204
        %v4350 = vadd.f32 %v4330, %v4206
        %v4351 = vadd.f32 %v4326, %v4208
        %v4352 = vadd.f32 %v4330, %v4210
        %v4353 = vadd.f32 %v4326, %v4214
        %v4354 = vadd.f32 %v4330, %v4216
        %v4355 = vadd.f32 %v4326, %v4218
        %v4356 = vadd.f32 %v4330, %v4220
        %v4357 = vadd.f32 %v4326, %v4224
        %v4358 = vadd.f32 %v4330, %v4226
        %v4359 = vadd.f32 %v4326, %v4228
        %v4360 = vadd.f32 %v4330, %v4230
        %v4361 = vadd.f32 %v4326, %v4234
        %v4362 = vadd.f32 %v4330, %v4236
        %v4363 = vadd.f32 %v4326, %v4238
        %v4364 = vadd.f32 %v4330, %v4240
        %v4365 = vadd.f32 %v4326, %v4244
        %v4366 = vadd.f32 %v4330, %v4246
        %v4367 = vadd.f32 %v4326, %v4248
        %v4368 = vadd.f32 %v4330, %v4250
        %v4369 = vadd.f32 %v4326, %v4254
        %v4370 = vadd.f32 %v4330, %v4256
        %v4371 = vadd.f32 %v4326, %v4258
        %v4372 = vadd.f32 %v4330, %v4260
        %v4373 = vadd.f32 %v4326, %v4264
        %v4374 = vadd.f32 %v4330, %v4266
        %v4375 = vadd.f32 %v4326, %v4268
        %v4376 = vadd.f32 %v4330, %v4270
        %v4377 = vadd.f32 %v4326, %v4274
        %v4378 = vadd.f32 %v4330, %v4276
        %v4379 = vadd.f32 %v4326, %v4278
        %v4380 = vadd.f32 %v4330, %v4280
        %v4381 = vadd.f32 %v4326, %v4284
        %v4382 = vadd.f32 %v4330, %v4286
        %v4383 = vadd.f32 %v4326, %v4288
        %v4384 = vadd.f32 %v4330, %v4290
        %v4385 = vadd.f32 %v4326, %v4294
        %v4386 = vadd.f32 %v4330, %v4296
        %v4387 = vadd.f32 %v4326, %v4298
        %v4388 = vadd.f32 %v4330, %v4300
        %v4389 = vadd.f32 %v4326, %v4304
        %v4390 = vadd.f32 %v4330, %v4306
        %v4391 = vadd.f32 %v4326, %v4308
        %v4392 = vadd.f32 %v4330, %v4310
        %v4393 = vadd.f32 %v4326, %v4314
        %v4394 = vadd.f32 %v4330, %v4316
        %v4395 = vadd.f32 %v4326, %v4318
        %v4396 = vadd.f32 %v4330, %v4320
        %v4397 = vpack.c.bf16 %v4335, %v4333
        %v4398 = vpack.c.bf16 %v4336, %v4334
        %v4399 = vpack.c.bf16 %v4339, %v4337
        %v4400 = vpack.c.bf16 %v4340, %v4338
        %v4401 = vpack.c.bf16 %v4343, %v4341
        %v4402 = vpack.c.bf16 %v4344, %v4342
        %v4403 = vpack.c.bf16 %v4347, %v4345
        %v4404 = vpack.c.bf16 %v4348, %v4346
        %v4405 = vpack.c.bf16 %v4351, %v4349
        %v4406 = vpack.c.bf16 %v4352, %v4350
        %v4407 = vpack.c.bf16 %v4355, %v4353
        %v4408 = vpack.c.bf16 %v4356, %v4354
        %v4409 = vpack.c.bf16 %v4359, %v4357
        %v4410 = vpack.c.bf16 %v4360, %v4358
        %v4411 = vpack.c.bf16 %v4363, %v4361
        %v4412 = vpack.c.bf16 %v4364, %v4362
        %v4413 = vpack.c.bf16 %v4367, %v4365
        %v4414 = vpack.c.bf16 %v4368, %v4366
        %v4415 = vpack.c.bf16 %v4371, %v4369
        %v4416 = vpack.c.bf16 %v4372, %v4370
        %v4417 = vpack.c.bf16 %v4375, %v4373
        %v4418 = vpack.c.bf16 %v4376, %v4374
        %v4419 = vpack.c.bf16 %v4379, %v4377
        %v4420 = vpack.c.bf16 %v4380, %v4378
        %v4421 = vpack.c.bf16 %v4383, %v4381
        %v4422 = vpack.c.bf16 %v4384, %v4382
        %v4423 = vpack.c.bf16 %v4387, %v4385
        %v4424 = vpack.c.bf16 %v4388, %v4386
        %v4425 = vpack.c.bf16 %v4391, %v4389
        %v4426 = vpack.c.bf16 %v4392, %v4390
        %v4427 = vpack.c.bf16 %v4395, %v4393
        %v4428 = vpack.c.bf16 %v4396, %v4394
        %v4461 = vunpack.c.l.b16 %v4397
        %v4462 = vunpack.c.l.b16 %v4398
        %v4463 = vunpack.c.h.b16 %v4397
        %v4464 = vunpack.c.h.b16 %v4398
        %v4465 = vunpack.c.l.b16 %v4399
        %v4466 = vunpack.c.l.b16 %v4400
        %v4467 = vunpack.c.h.b16 %v4399
        %v4468 = vunpack.c.h.b16 %v4400
        %v4469 = vunpack.c.l.b16 %v4401
        %v4470 = vunpack.c.l.b16 %v4402
        %v4471 = vunpack.c.h.b16 %v4401
        %v4472 = vunpack.c.h.b16 %v4402
        %v4473 = vunpack.c.l.b16 %v4403
        %v4474 = vunpack.c.l.b16 %v4404
        %v4475 = vunpack.c.h.b16 %v4403
        %v4476 = vunpack.c.h.b16 %v4404
        %v4477 = vunpack.c.l.b16 %v4405
        %v4478 = vunpack.c.l.b16 %v4406
        %v4479 = vunpack.c.h.b16 %v4405
        %v4480 = vunpack.c.h.b16 %v4406
        %v4481 = vunpack.c.l.b16 %v4407
        %v4482 = vunpack.c.l.b16 %v4408
        %v4483 = vunpack.c.h.b16 %v4407
        %v4484 = vunpack.c.h.b16 %v4408
        %v4485 = vunpack.c.l.b16 %v4409
        %v4486 = vunpack.c.l.b16 %v4410
        %v4487 = vunpack.c.h.b16 %v4409
        %v4488 = vunpack.c.h.b16 %v4410
        %v4489 = vunpack.c.l.b16 %v4411
        %v4490 = vunpack.c.l.b16 %v4412
        %v4491 = vunpack.c.h.b16 %v4411
        %v4492 = vunpack.c.h.b16 %v4412
        %v4493 = vunpack.c.l.b16 %v4413
        %v4494 = vunpack.c.l.b16 %v4414
        %v4495 = vunpack.c.h.b16 %v4413
        %v4496 = vunpack.c.h.b16 %v4414
        %v4497 = vunpack.c.l.b16 %v4415
        %v4498 = vunpack.c.l.b16 %v4416
        %v4499 = vunpack.c.h.b16 %v4415
        %v4500 = vunpack.c.h.b16 %v4416
        %v4501 = vunpack.c.l.b16 %v4417
        %v4502 = vunpack.c.l.b16 %v4418
        %v4503 = vunpack.c.h.b16 %v4417
        %v4504 = vunpack.c.h.b16 %v4418
        %v4505 = vunpack.c.l.b16 %v4419
        %v4506 = vunpack.c.l.b16 %v4420
        %v4507 = vunpack.c.h.b16 %v4419
        %v4508 = vunpack.c.h.b16 %v4420
        %v4509 = vunpack.c.l.b16 %v4421
        %v4510 = vunpack.c.l.b16 %v4422
        %v4511 = vunpack.c.h.b16 %v4421
        %v4512 = vunpack.c.h.b16 %v4422
        %v4513 = vunpack.c.l.b16 %v4423
        %v4514 = vunpack.c.l.b16 %v4424
        %v4515 = vunpack.c.h.b16 %v4423
        %v4516 = vunpack.c.h.b16 %v4424
        %v4517 = vunpack.c.l.b16 %v4425
        %v4518 = vunpack.c.l.b16 %v4426
        %v4519 = vunpack.c.h.b16 %v4425
        %v4520 = vunpack.c.h.b16 %v4426
        %v4521 = vunpack.c.l.b16 %v4427
        %v4522 = vunpack.c.l.b16 %v4428
        %v4523 = vunpack.c.h.b16 %v4427
        %v4524 = vunpack.c.h.b16 %v4428
        %v4525 = vpack.c.b16 %v4462, %v4461
        %v4526 = vpack.c.b16 %v4464, %v4463
        %v4527 = vpack.c.b16 %v4466, %v4465
        %v4528 = vpack.c.b16 %v4468, %v4467
        %v4529 = vpack.c.b16 %v4470, %v4469
        %v4530 = vpack.c.b16 %v4472, %v4471
        %v4531 = vpack.c.b16 %v4474, %v4473
        %v4532 = vpack.c.b16 %v4476, %v4475
        %v4533 = vpack.c.b16 %v4478, %v4477
        %v4534 = vpack.c.b16 %v4480, %v4479
        %v4535 = vpack.c.b16 %v4482, %v4481
        %v4536 = vpack.c.b16 %v4484, %v4483
        %v4537 = vpack.c.b16 %v4486, %v4485
        %v4538 = vpack.c.b16 %v4488, %v4487
        %v4539 = vpack.c.b16 %v4490, %v4489
        %v4540 = vpack.c.b16 %v4492, %v4491
        %v4541 = vpack.c.b16 %v4494, %v4493
        %v4542 = vpack.c.b16 %v4496, %v4495
        %v4543 = vpack.c.b16 %v4498, %v4497
        %v4544 = vpack.c.b16 %v4500, %v4499
        %v4545 = vpack.c.b16 %v4502, %v4501
        %v4546 = vpack.c.b16 %v4504, %v4503
        %v4547 = vpack.c.b16 %v4506, %v4505
        %v4548 = vpack.c.b16 %v4508, %v4507
        %v4549 = vpack.c.b16 %v4510, %v4509
        %v4550 = vpack.c.b16 %v4512, %v4511
        %v4551 = vpack.c.b16 %v4514, %v4513
        %v4552 = vpack.c.b16 %v4516, %v4515
        %v4553 = vpack.c.b16 %v4518, %v4517
        %v4554 = vpack.c.b16 %v4520, %v4519
        %v4555 = vpack.c.b16 %v4522, %v4521
        %v4556 = vpack.c.b16 %v4524, %v4523
        %4589 = vst [vmem:[%s503] sm:$0xff] %v4525
        %4590 = vst [vmem:[%s503 + $0x8] sm:$0xff] %v4526
        %4591 = vst [vmem:[%s503 + $0x10] sm:$0xff] %v4527
        %4592 = vst [vmem:[%s503 + $0x18] sm:$0xff] %v4528
        %4593 = vst [vmem:[%s503 + $0x20] sm:$0xff] %v4529
        %4594 = vst [vmem:[%s503 + $0x28] sm:$0xff] %v4530
        %4595 = vst [vmem:[%s503 + $0x30] sm:$0xff] %v4531
        %4596 = vst [vmem:[%s503 + $0x38] sm:$0xff] %v4532
        %4597 = vst [vmem:[%s503 + $0x40] sm:$0xff] %v4533
        %4598 = vst [vmem:[%s503 + $0x48] sm:$0xff] %v4534
        %4599 = vst [vmem:[%s503 + $0x50] sm:$0xff] %v4535
        %4600 = vst [vmem:[%s503 + $0x58] sm:$0xff] %v4536
        %4601 = vst [vmem:[%s503 + $0x60] sm:$0xff] %v4537
        %4602 = vst [vmem:[%s503 + $0x68] sm:$0xff] %v4538
        %4603 = vst [vmem:[%s503 + $0x70] sm:$0xff] %v4539
        %4604 = vst [vmem:[%s503 + $0x78] sm:$0xff] %v4540
        %4605 = vst [vmem:[%s503 + $0x80] sm:$0xff] %v4541
        %4606 = vst [vmem:[%s503 + $0x88] sm:$0xff] %v4542
        %4607 = vst [vmem:[%s503 + $0x90] sm:$0xff] %v4543
        %4608 = vst [vmem:[%s503 + $0x98] sm:$0xff] %v4544
        %4609 = vst [vmem:[%s503 + $0xa0] sm:$0xff] %v4545
        %4610 = vst [vmem:[%s503 + $0xa8] sm:$0xff] %v4546
        %4611 = vst [vmem:[%s503 + $0xb0] sm:$0xff] %v4547
        %4612 = vst [vmem:[%s503 + $0xb8] sm:$0xff] %v4548
        %4613 = vst [vmem:[%s503 + $0xc0] sm:$0xff] %v4549
        %4614 = vst [vmem:[%s503 + $0xc8] sm:$0xff] %v4550
        %4615 = vst [vmem:[%s503 + $0xd0] sm:$0xff] %v4551
        %4616 = vst [vmem:[%s503 + $0xd8] sm:$0xff] %v4552
        %4617 = vst [vmem:[%s503 + $0xe0] sm:$0xff] %v4553
        %4618 = vst [vmem:[%s503 + $0xe8] sm:$0xff] %v4554
        %4619 = vst [vmem:[%s503 + $0xf0] sm:$0xff] %v4555
        %4620 = vst [vmem:[%s503 + $0xf8] sm:$0xff] %v4556
        %s4621 = sand.u32 %s282, 1
        %s4622 = scalar_lea.sflag [#allocation4], %s4621
        %s4623 = sand.u32 %s282, 1
        %s4624 = smul.addr %s4623, 256
        %s4625 = scalar_lea.vmem [#allocation13], %s4624
        // Predicated region
        $region89: #{tpu_custom_call.1} parent=63 // pred_check
          %p4626 = pneg %p292
        $region90: #{tpu_custom_call.1} parent=63 // pred_check_branch
          %4628 = sbr.rel (%p4626) target = $region92
        $region91: #{tpu_custom_call.1} parent=63 // pred_region
          %s4629 = smul.u32 32, %s33
          %s4631 = ssub.s32 4096, 4096
          %4632 = vsyncadd %s4622, %s4631
          %s4633 = smul.addr %s4629, 2
          %s4634 = smul.addr %s4633, 64
          %s4635 = scalar_lea.hbm %s11, %s4634
          %s4636 = sshll.u32 %s4625, 4
          %s4637 = int_to_ptr.vmem [resolvable:$true] %s4636
          %4642 = dma.vmem_to_hbm [thread:$0]  %s4637, 4096, %s4635, %s4622, 128, 128, 8
        $region92: #{tpu_custom_call.1} parent=63 // pred_fallthru
          _
      $region64: #{tpu_custom_call.1} parent=5 // pred_fallthru
        _
      %p4643 = scmp.le.s32.totalorder 2, %s28
      // Predicated region
      $region93: #{tpu_custom_call.1} parent=5 // pred_check
        %p4644 = pneg %p4643
      $region94: #{tpu_custom_call.1} parent=5 // pred_check_branch
        %4646 = sbr.rel (%p4644) target = $region96
      $region95: #{tpu_custom_call.1} parent=5 // pred_region
        %s4647 = ssub.s32 %s28, 2
        // Predicated region
        $region97: #{tpu_custom_call.1} parent=95 // pred_check
          %p4648 = pneg %p298
        $region98: #{tpu_custom_call.1} parent=95 // pred_check_branch
          %4650 = sbr.rel (%p4648) target = $region100
        $region99: #{tpu_custom_call.1} parent=95 // pred_region
          %s4651 = sand.u32 %s283, 1
          %s4652 = scalar_lea.sflag [#allocation4], %s4651
          %s4653 = sand.u32 %s283, 1
          %s4654 = smul.addr %s4653, 256
          %s4655 = scalar_lea.vmem [#allocation13], %s4654
          %4656 = dma.done %s4652, 4096
        $region100: #{tpu_custom_call.1} parent=95 // pred_fallthru
          _
      $region96: #{tpu_custom_call.1} parent=5 // pred_fallthru
        _
    $region6: #{tpu_custom_call.1} parent=1 // loop_footer
      %s32 = sadd.s32 1, %s28
    $region7: #{tpu_custom_call.1} parent=1 // loop_footer_branch
      %27 = sbr.rel target = $region3
    $region8: #{tpu_custom_call.1} parent=1 // loop_exit
      _
    %4657 = vsyncpa [#allocation3], 1
    %s4658 = scalar_lea.sflag [#allocation3], 1
    %4659 = vsyncpa %s4658, 1
    %4660 = vsyncpa [#allocation6], 1
    %s4661 = scalar_lea.sflag [#allocation6], 1
    %4662 = vsyncpa %s4661, 1
    %4663 = vsyncpa [#allocation9], 1
    %4664 = vsyncpa [#allocation12], 1
    %4665 = vsyncpa [#allocation4], 1
    %s4666 = scalar_lea.sflag [#allocation4], 1
    %4667 = vsyncpa %s4666, 1

</llo_original>
